<compile_context>
chip_gen: v7x
topology: tpu7x:2x2x1
jax: 0.10.0
libtpu: 0.0.40
codegen_flags: <defaults>
</compile_context>

<pallas_src>
import jax
import jax.numpy as jnp
from jax.experimental import pallas as pl
from jax.experimental.pallas import tpu as pltpu


# ---------------------------- Pallas kernels ----------------------------

def _matmul_kernel(x_ref, w_ref, o_ref):
    o_ref[...] = jnp.dot(x_ref[...], w_ref[...],
                         preferred_element_type=jnp.float32)


def _ln_dualproj_kernel(x_ref, y_ref, g_ref, wx_ref, wy_ref, xo_ref, yo_ref):
    # BiasFree LayerNorm (y = x * rsqrt(var + 1e-5) * gamma) fused with the
    # two 1x1 input projections of the cross-Mamba block.
    g = g_ref[...]

    def ln(v):
        mu = jnp.mean(v, axis=-1, keepdims=True)
        var = jnp.mean((v - mu) ** 2, axis=-1, keepdims=True)
        return v * jax.lax.rsqrt(var + 1e-5) * g

    xo_ref[...] = jnp.dot(ln(x_ref[...]), wx_ref[...],
                          preferred_element_type=jnp.float32)
    yo_ref[...] = jnp.dot(ln(y_ref[...]), wy_ref[...],
                          preferred_element_type=jnp.float32)


def _proj_res_ln_proj_kernel(gated_ref, xf_ref, g_ref, wo_ref, win_ref, p_ref):
    # out-projection of the Mamba branch + residual add + LayerNorm + IEL
    # project_in, all fused over the same row tile.
    x_res = jnp.dot(gated_ref[...], wo_ref[...],
                    preferred_element_type=jnp.float32) + xf_ref[...]
    mu = jnp.mean(x_res, axis=-1, keepdims=True)
    var = jnp.mean((x_res - mu) ** 2, axis=-1, keepdims=True)
    xn = x_res * jax.lax.rsqrt(var + 1e-5) * g_ref[...]
    p_ref[...] = jnp.dot(xn, win_ref[...], preferred_element_type=jnp.float32)


def _mamba_scan_chunk_kernel(xz_ref, yz_ref, a_ref, o_ref, h_carry):
    # Causal per-channel recurrence over the flattened spatial sequence:
    #   h_t = sigmoid(A) * h_{t-1} + xz_t ;  out_t = h_t * silu(yz_t)
    # Chunked: each grid step scans a full (T, D) tile with a log-depth
    # shifted-multiply-add scan; only the chunk-boundary state is carried.
    c = pl.program_id(1)

    @pl.when(c == 0)
    def _():
        h_carry[...] = jnp.zeros_like(h_carry)

    T = xz_ref.shape[1]
    D = xz_ref.shape[2]
    a = jax.nn.sigmoid(a_ref[...])                      # (1, D)
    x = xz_ref[0]                                        # (T, D)
    y = yz_ref[0]                                        # (T, D)

    row = jax.lax.broadcasted_iota(jnp.int32, (T, D), 0)
    # Fold the incoming carry into row 0: x'[0] = x[0] + a * h_carry.
    x = x + jnp.where(row == 0, a * h_carry[...], 0.0)

    # Hillis-Steele inclusive scan with per-channel decay a (log2(T) steps).
    a_pow = a
    d = 1
    while d < T:
        shifted = pltpu.roll(x, shift=d, axis=0)         # XLU sublane rotate
        shifted = jnp.where(row >= d, shifted, 0.0)      # drop wrapped rows
        x = x + a_pow * shifted
        a_pow = a_pow * a_pow
        d *= 2

    h_carry[...] = x[T - 1:T, :]                         # carry to next chunk
    o_ref[0] = x * (y * jax.nn.sigmoid(y))               # gate with silu(yz)


def _iel_fused_kernel(p_ref, wdw_ref, wdw1_ref, wdw2_ref, o_ref,
                      pad_scr, pad1_scr, pad2_scr):
    # Fused IEL middle: dwconv3x3 over 2*hidden channels, channel split,
    # per-half dwconv3x3, tanh residual gate -> (H, W, hidden).
    H, W, Ch = o_ref.shape[1], o_ref.shape[2], o_ref.shape[3]
    C2 = p_ref.shape[3]

    def dwconv(pad_ref, x, w_ref, c):
        # zero halo in VMEM scratch, then 9-tap depthwise conv.
        pad_ref[...] = jnp.zeros_like(pad_ref)
        pad_ref[1:1 + H, 1:1 + W, :] = x
        acc = jnp.zeros((H, W, c), jnp.float32)
        for dy in range(3):
            for dx in range(3):
                acc = acc + pad_ref[dy:dy + H, dx:dx + W, :] * w_ref[dy, dx, :]
        return acc

    p = p_ref[0]                                         # (H, W, 2*hidden)
    dw = dwconv(pad_scr, p, wdw_ref, C2)
    x1 = dw[:, :, :Ch]
    x2 = dw[:, :, Ch:]
    c1 = dwconv(pad1_scr, x1, wdw1_ref, Ch)
    c2 = dwconv(pad2_scr, x2, wdw2_ref, Ch)
    o_ref[0] = (jnp.tanh(c1) + x1) * (jnp.tanh(c2) + x2)


# ---------------------------- helpers / wrappers ----------------------------

def _row_tile(n, cap=512):
    for t in (512, 256, 128, 64, 32, 16, 8):
        if t <= cap and n % t == 0:
            return t
    return n  # fallback: single full block


def _chunk_len(L, cap=128):
    t = 1
    while t < cap and L % (t * 2) == 0:
        t *= 2
    if t < 8:        # keep the sublane (8) block constraint satisfied
        t = L
    return t


def fused_ln_dualproj(xf, yf, gamma, wx, wy):
    N, C = xf.shape
    D = wx.shape[1]
    tm = _row_tile(N)
    params = pltpu.CompilerParams(dimension_semantics=("parallel",))
    return pl.pallas_call(
        _ln_dualproj_kernel,
        out_shape=(jax.ShapeDtypeStruct((N, D), jnp.float32),
                   jax.ShapeDtypeStruct((N, D), jnp.float32)),
        grid=(N // tm,),
        in_specs=[pl.BlockSpec((tm, C), lambda i: (i, 0)),
                  pl.BlockSpec((tm, C), lambda i: (i, 0)),
                  pl.BlockSpec((1, C), lambda i: (0, 0)),
                  pl.BlockSpec((C, D), lambda i: (0, 0)),
                  pl.BlockSpec((C, D), lambda i: (0, 0))],
        out_specs=(pl.BlockSpec((tm, D), lambda i: (i, 0)),
                   pl.BlockSpec((tm, D), lambda i: (i, 0))),
        compiler_params=params,
    )(xf, yf, gamma, wx, wy)


def fused_mamba_out_iel_in(gated2d, xf, gamma, wo, win):
    N, D = gated2d.shape
    C = xf.shape[1]
    H2 = win.shape[1]
    tm = _row_tile(N)
    return pl.pallas_call(
        _proj_res_ln_proj_kernel,
        out_shape=jax.ShapeDtypeStruct((N, H2), jnp.float32),
        grid=(N // tm,),
        in_specs=[pl.BlockSpec((tm, D), lambda i: (i, 0)),
                  pl.BlockSpec((tm, C), lambda i: (i, 0)),
                  pl.BlockSpec((1, C), lambda i: (0, 0)),
                  pl.BlockSpec((D, C), lambda i: (0, 0)),
                  pl.BlockSpec((C, H2), lambda i: (0, 0))],
        out_specs=pl.BlockSpec((tm, H2), lambda i: (i, 0)),
        compiler_params=pltpu.CompilerParams(dimension_semantics=("parallel",)),
    )(gated2d, xf, gamma, wo, win)


def cross_mamba_scan(xz, yz, a_log):
    B, L, D = xz.shape
    T = _chunk_len(L)
    nc = L // T
    return pl.pallas_call(
        _mamba_scan_chunk_kernel,
        out_shape=jax.ShapeDtypeStruct((B, L, D), jnp.float32),
        grid=(B, nc),
        in_specs=[pl.BlockSpec((1, T, D), lambda b, c: (b, c, 0)),
                  pl.BlockSpec((1, T, D), lambda b, c: (b, c, 0)),
                  pl.BlockSpec((1, D), lambda b, c: (0, 0))],
        out_specs=pl.BlockSpec((1, T, D), lambda b, c: (b, c, 0)),
        scratch_shapes=[pltpu.VMEM((1, D), jnp.float32)],
        compiler_params=pltpu.CompilerParams(
            dimension_semantics=("parallel", "arbitrary")),
    )(xz, yz, a_log)


def iel_dw_gate(p4, wdw, wdw1, wdw2):
    B, H, W, C2 = p4.shape
    Ch = C2 // 2
    return pl.pallas_call(
        _iel_fused_kernel,
        out_shape=jax.ShapeDtypeStruct((B, H, W, Ch), jnp.float32),
        grid=(B,),
        in_specs=[pl.BlockSpec((1, H, W, C2), lambda b: (b, 0, 0, 0)),
                  pl.BlockSpec((3, 3, C2), lambda b: (0, 0, 0)),
                  pl.BlockSpec((3, 3, Ch), lambda b: (0, 0, 0)),
                  pl.BlockSpec((3, 3, Ch), lambda b: (0, 0, 0))],
        out_specs=pl.BlockSpec((1, H, W, Ch), lambda b: (b, 0, 0, 0)),
        scratch_shapes=[pltpu.VMEM((H + 2, W + 2, C2), jnp.float32),
                        pltpu.VMEM((H + 2, W + 2, Ch), jnp.float32),
                        pltpu.VMEM((H + 2, W + 2, Ch), jnp.float32)],
        compiler_params=pltpu.CompilerParams(dimension_semantics=("parallel",)),
    )(p4, wdw, wdw1, wdw2)


def conv1x1(x2d, w):
    N, cin = x2d.shape
    cout = w.shape[1]
    tm = _row_tile(N)
    return pl.pallas_call(
        _matmul_kernel,
        out_shape=jax.ShapeDtypeStruct((N, cout), jnp.float32),
        grid=(N // tm,),
        in_specs=[pl.BlockSpec((tm, cin), lambda i: (i, 0)),
                  pl.BlockSpec((cin, cout), lambda i: (0, 0))],
        out_specs=pl.BlockSpec((tm, cout), lambda i: (i, 0)),
        compiler_params=pltpu.CompilerParams(dimension_semantics=("parallel",)),
    )(x2d, w)


# ---------------------------- module forward ----------------------------

def init_params(key, dim):
    hidden = int(dim * 2.66)
    d_inner = 2 * dim
    ks = jax.random.split(key, 9)

    def w(k, shape, scale=0.1):
        return jax.random.normal(k, shape, jnp.float32) * scale

    return {
        "norm_w": jnp.ones((1, dim), jnp.float32),        # shared LayerNorm gamma
        "mamba_wx": w(ks[0], (dim, d_inner)),
        "mamba_wy": w(ks[1], (dim, d_inner)),
        "mamba_a": w(ks[2], (1, d_inner)),
        "mamba_wo": w(ks[3], (d_inner, dim)),
        "iel_w_in": w(ks[4], (dim, 2 * hidden)),
        "iel_w_dw": w(ks[5], (3, 3, 2 * hidden)),
        "iel_w_dw1": w(ks[6], (3, 3, hidden)),
        "iel_w_dw2": w(ks[7], (3, 3, hidden)),
        "iel_w_out": w(ks[8], (hidden, dim)),
    }


def hv_lca_with_mamba(x, y, params):
    # x, y: (B, H, W, C)
    B, H, W, C = x.shape
    N = B * H * W
    L = H * W
    xf = x.reshape(N, C)
    yf = y.reshape(N, C)
    g = params["norm_w"]

    # x = x + ffn(norm(x), norm(y))   (CrossMambaBlock, simplified)
    xz2d, yz2d = fused_ln_dualproj(xf, yf, g,
                                   params["mamba_wx"], params["mamba_wy"])
    D = xz2d.shape[-1]
    gated = cross_mamba_scan(xz2d.reshape(B, L, D), yz2d.reshape(B, L, D),
                             params["mamba_a"])                  # (B, L, D)

    # out-proj + residual + norm + IEL project_in, fused
    p2d = fused_mamba_out_iel_in(gated.reshape(N, D), xf, g,
                                 params["mamba_wo"], params["iel_w_in"])
    hid2 = p2d.shape[-1]
    hid = hid2 // 2

    # IEL: dwconv + chunk + gated dwconvs, fused; then project_out
    gate = iel_dw_gate(p2d.reshape(B, H, W, hid2),
                       params["iel_w_dw"], params["iel_w_dw1"],
                       params["iel_w_dw2"])                      # (B, H, W, hid)
    out = conv1x1(gate.reshape(N, hid), params["iel_w_out"])     # (N, C)
    return out.reshape(B, H, W, C)


if __name__ == "__main__":
    dim = 4
    B, H, W = 2, 16, 16

    key = jax.random.PRNGKey(0)
    kx, ky, kp = jax.random.split(key, 3)
    x = jax.random.normal(kx, (B, H, W, dim), jnp.float32)   # NHWC (== NCHW (2,4,16,16))
    y = jax.random.normal(ky, (B, H, W, dim), jnp.float32)
    params = init_params(kp, dim)

    fwd = jax.jit(hv_lca_with_mamba)
    out = fwd(x, y, params)
    jax.block_until_ready(out)
    assert out.shape == (B, H, W, dim)
    print("KERNEL_OK")
</pallas_src>

<mosaic_0001>
module attributes {stable_mosaic.version = 11 : i64} {
  func.func @_ln_dualproj_kernel(%arg0: i32, %arg1: memref<512x4xf32, #tpu.memory_space<vmem>>, %arg2: memref<512x4xf32, #tpu.memory_space<vmem>>, %arg3: memref<1x4xf32, #tpu.memory_space<vmem>>, %arg4: memref<4x8xf32, #tpu.memory_space<vmem>>, %arg5: memref<4x8xf32, #tpu.memory_space<vmem>>, %arg6: memref<512x8xf32, #tpu.memory_space<vmem>>, %arg7: memref<512x8xf32, #tpu.memory_space<vmem>>) attributes {dimension_semantics = [#tpu.dimension_semantics<parallel>], iteration_bounds = array<i64: 1>, scalar_prefetch = 0 : i64, scratch_operands = 0 : i64, tpu.core_type = #tpu.core_type<tc>, window_params = [{transform_indices = @transform_0, window_bounds = array<i64: 512, 4>}, {transform_indices = @transform_1, window_bounds = array<i64: 512, 4>}, {pipeline_mode = #tpu.pipeline_mode<synchronous>, transform_indices = @transform_2, window_bounds = array<i64: 1, 4>}, {pipeline_mode = #tpu.pipeline_mode<synchronous>, transform_indices = @transform_3, window_bounds = array<i64: 4, 8>}, {pipeline_mode = #tpu.pipeline_mode<synchronous>, transform_indices = @transform_4, window_bounds = array<i64: 4, 8>}, {transform_indices = @transform_5, window_bounds = array<i64: 512, 8>}, {transform_indices = @transform_6, window_bounds = array<i64: 512, 8>}]} {
    %c0 = arith.constant 0 : index
    %c0_0 = arith.constant 0 : index
    %0 = vector.load %arg3[%c0, %c0_0] : memref<1x4xf32, #tpu.memory_space<vmem>>, vector<1x4xf32>
    %c0_1 = arith.constant 0 : index
    %c0_2 = arith.constant 0 : index
    %1 = vector.load %arg1[%c0_1, %c0_2] : memref<512x4xf32, #tpu.memory_space<vmem>>, vector<512x4xf32>
    %cst = arith.constant dense<0.000000e+00> : vector<512xf32>
    %2 = vector.multi_reduction <add>, %1, %cst [1] : vector<512x4xf32> to vector<512xf32>
    %3 = vector.shape_cast %2 : vector<512xf32> to vector<512x1xf32>
    %cst_3 = arith.constant 4.000000e+00 : f32
    %4 = vector.broadcast %cst_3 : f32 to vector<512x1xf32>
    %5 = arith.divf %3, %4 : vector<512x1xf32>
    %6 = vector.broadcast %5 : vector<512x1xf32> to vector<512x4xf32>
    %7 = arith.subf %1, %6 : vector<512x4xf32>
    %8 = arith.mulf %7, %7 : vector<512x4xf32>
    %cst_4 = arith.constant dense<0.000000e+00> : vector<512xf32>
    %9 = vector.multi_reduction <add>, %8, %cst_4 [1] : vector<512x4xf32> to vector<512xf32>
    %10 = vector.shape_cast %9 : vector<512xf32> to vector<512x1xf32>
    %cst_5 = arith.constant 4.000000e+00 : f32
    %11 = vector.broadcast %cst_5 : f32 to vector<512x1xf32>
    %12 = arith.divf %10, %11 : vector<512x1xf32>
    %cst_6 = arith.constant 9.99999974E-6 : f32
    %13 = vector.broadcast %cst_6 : f32 to vector<512x1xf32>
    %14 = arith.addf %12, %13 : vector<512x1xf32>
    %15 = math.rsqrt %14 : vector<512x1xf32>
    %16 = vector.broadcast %15 : vector<512x1xf32> to vector<512x4xf32>
    %17 = arith.mulf %1, %16 : vector<512x4xf32>
    %18 = vector.broadcast %0 : vector<1x4xf32> to vector<512x4xf32>
    %19 = arith.mulf %17, %18 : vector<512x4xf32>
    %c0_7 = arith.constant 0 : index
    %c0_8 = arith.constant 0 : index
    %20 = vector.load %arg4[%c0_7, %c0_8] : memref<4x8xf32, #tpu.memory_space<vmem>>, vector<4x8xf32>
    %cst_9 = arith.constant dense<0.000000e+00> : vector<512x8xf32>
    %21 = tpu.matmul %19, %20, %cst_9 {dimension_numbers = #tpu.dot_dimension_numbers<[1], [0], [0], [1], [0, 0, 1, 1], [], []>} : vector<512x4xf32>, vector<4x8xf32>, vector<512x8xf32> -> vector<512x8xf32>
    %c0_10 = arith.constant 0 : index
    %c0_11 = arith.constant 0 : index
    %22 = vector.load %arg6[%c0_10, %c0_11] : memref<512x8xf32, #tpu.memory_space<vmem>>, vector<512x8xf32>
    tpu.vector_store %arg6[%c0_10, %c0_11], %21 {strides = array<i32>} : memref<512x8xf32, #tpu.memory_space<vmem>>, vector<512x8xf32>,
    %c0_12 = arith.constant 0 : index
    %c0_13 = arith.constant 0 : index
    %23 = vector.load %arg2[%c0_12, %c0_13] : memref<512x4xf32, #tpu.memory_space<vmem>>, vector<512x4xf32>
    %cst_14 = arith.constant dense<0.000000e+00> : vector<512xf32>
    %24 = vector.multi_reduction <add>, %23, %cst_14 [1] : vector<512x4xf32> to vector<512xf32>
    %25 = vector.shape_cast %24 : vector<512xf32> to vector<512x1xf32>
    %cst_15 = arith.constant 4.000000e+00 : f32
    %26 = vector.broadcast %cst_15 : f32 to vector<512x1xf32>
    %27 = arith.divf %25, %26 : vector<512x1xf32>
    %28 = vector.broadcast %27 : vector<512x1xf32> to vector<512x4xf32>
    %29 = arith.subf %23, %28 : vector<512x4xf32>
    %30 = arith.mulf %29, %29 : vector<512x4xf32>
    %cst_16 = arith.constant dense<0.000000e+00> : vector<512xf32>
    %31 = vector.multi_reduction <add>, %30, %cst_16 [1] : vector<512x4xf32> to vector<512xf32>
    %32 = vector.shape_cast %31 : vector<512xf32> to vector<512x1xf32>
    %cst_17 = arith.constant 4.000000e+00 : f32
    %33 = vector.broadcast %cst_17 : f32 to vector<512x1xf32>
    %34 = arith.divf %32, %33 : vector<512x1xf32>
    %cst_18 = arith.constant 9.99999974E-6 : f32
    %35 = vector.broadcast %cst_18 : f32 to vector<512x1xf32>
    %36 = arith.addf %34, %35 : vector<512x1xf32>
    %37 = math.rsqrt %36 : vector<512x1xf32>
    %38 = vector.broadcast %37 : vector<512x1xf32> to vector<512x4xf32>
    %39 = arith.mulf %23, %38 : vector<512x4xf32>
    %40 = vector.broadcast %0 : vector<1x4xf32> to vector<512x4xf32>
    %41 = arith.mulf %39, %40 : vector<512x4xf32>
    %c0_19 = arith.constant 0 : index
    %c0_20 = arith.constant 0 : index
    %42 = vector.load %arg5[%c0_19, %c0_20] : memref<4x8xf32, #tpu.memory_space<vmem>>, vector<4x8xf32>
    %cst_21 = arith.constant dense<0.000000e+00> : vector<512x8xf32>
    %43 = tpu.matmul %41, %42, %cst_21 {dimension_numbers = #tpu.dot_dimension_numbers<[1], [0], [0], [1], [0, 0, 1, 1], [], []>} : vector<512x4xf32>, vector<4x8xf32>, vector<512x8xf32> -> vector<512x8xf32>
    %c0_22 = arith.constant 0 : index
    %c0_23 = arith.constant 0 : index
    %44 = vector.load %arg7[%c0_22, %c0_23] : memref<512x8xf32, #tpu.memory_space<vmem>>, vector<512x8xf32>
    tpu.vector_store %arg7[%c0_22, %c0_23], %43 {strides = array<i32>} : memref<512x8xf32, #tpu.memory_space<vmem>>, vector<512x8xf32>,
    return
  }
  func.func @transform_0(%arg0: i32) -> (i32, i32) {
    %c0_i32 = arith.constant 0 : i32
    %c0_i32_0 = arith.constant 0 : i32
    return %arg0, %c0_i32 : i32, i32
  }
  func.func @transform_1(%arg0: i32) -> (i32, i32) {
    %c0_i32 = arith.constant 0 : i32
    %c0_i32_0 = arith.constant 0 : i32
    return %arg0, %c0_i32 : i32, i32
  }
  func.func @transform_2(%arg0: i32) -> (i32, i32) {
    %c0_i32 = arith.constant 0 : i32
    %c0_i32_0 = arith.constant 0 : i32
    %c0_i32_1 = arith.constant 0 : i32
    return %c0_i32, %c0_i32_0 : i32, i32
  }
  func.func @transform_3(%arg0: i32) -> (i32, i32) {
    %c0_i32 = arith.constant 0 : i32
    %c0_i32_0 = arith.constant 0 : i32
    %c0_i32_1 = arith.constant 0 : i32
    return %c0_i32, %c0_i32_0 : i32, i32
  }
  func.func @transform_4(%arg0: i32) -> (i32, i32) {
    %c0_i32 = arith.constant 0 : i32
    %c0_i32_0 = arith.constant 0 : i32
    %c0_i32_1 = arith.constant 0 : i32
    return %c0_i32, %c0_i32_0 : i32, i32
  }
  func.func @transform_5(%arg0: i32) -> (i32, i32) {
    %c0_i32 = arith.constant 0 : i32
    %c0_i32_0 = arith.constant 0 : i32
    return %arg0, %c0_i32 : i32, i32
  }
  func.func @transform_6(%arg0: i32) -> (i32, i32) {
    %c0_i32 = arith.constant 0 : i32
    %c0_i32_0 = arith.constant 0 : i32
    return %arg0, %c0_i32 : i32, i32
  }
}

module attributes {stable_mosaic.version = 11 : i64} {
  func.func @_mamba_scan_chunk_kernel(%arg0: i32, %arg1: i32, %arg2: memref<1x128x8xf32, #tpu.memory_space<vmem>>, %arg3: memref<1x128x8xf32, #tpu.memory_space<vmem>>, %arg4: memref<1x8xf32, #tpu.memory_space<vmem>>, %arg5: memref<1x128x8xf32, #tpu.memory_space<vmem>>, %arg6: memref<1x8xf32, #tpu.memory_space<vmem>>) attributes {dimension_semantics = [#tpu.dimension_semantics<parallel>, #tpu.dimension_semantics<arbitrary>], iteration_bounds = array<i64: 2, 2>, scalar_prefetch = 0 : i64, scratch_operands = 1 : i64, tpu.core_type = #tpu.core_type<tc>, window_params = [{transform_indices = @transform_0, window_bounds = array<i64: 1, 128, 8>}, {transform_indices = @transform_1, window_bounds = array<i64: 1, 128, 8>}, {pipeline_mode = #tpu.pipeline_mode<synchronous>, transform_indices = @transform_2, window_bounds = array<i64: 1, 8>}, {transform_indices = @transform_3, window_bounds = array<i64: 1, 128, 8>}]} {
    %c0_i32 = arith.constant 0 : i32
    %0 = arith.cmpi eq, %arg1, %c0_i32 : i32
    %1 = arith.extui %0 : i1 to i32
    %c0_i32_0 = arith.constant 0 : i32
    %2 = arith.cmpi ne, %1, %c0_i32_0 : i32
    scf.if %2 {
      %cst_32 = arith.constant 0.000000e+00 : f32
      %97 = vector.broadcast %cst_32 : f32 to vector<1x8xf32>
      %c0_33 = arith.constant 0 : index
      %c0_34 = arith.constant 0 : index
      %98 = vector.load %arg6[%c0_33, %c0_34] : memref<1x8xf32, #tpu.memory_space<vmem>>, vector<1x8xf32>
      tpu.vector_store %arg6[%c0_33, %c0_34], %97 {strides = array<i32>} : memref<1x8xf32, #tpu.memory_space<vmem>>, vector<1x8xf32>,
    } else {
    }
    %c0 = arith.constant 0 : index
    %c0_1 = arith.constant 0 : index
    %3 = vector.load %arg4[%c0, %c0_1] : memref<1x8xf32, #tpu.memory_space<vmem>>, vector<1x8xf32>
    %4 = arith.negf %3 : vector<1x8xf32>
    %5 = math.exp %4 : vector<1x8xf32>
    %cst = arith.constant 1.000000e+00 : f32
    %6 = vector.broadcast %cst : f32 to vector<1x8xf32>
    %7 = arith.addf %6, %5 : vector<1x8xf32>
    %8 = arith.divf %6, %7 : vector<1x8xf32>
    %c0_2 = arith.constant 0 : index
    %c0_3 = arith.constant 0 : index
    %c0_4 = arith.constant 0 : index
    %9 = vector.load %arg2[%c0_2, %c0_3, %c0_4] : memref<1x128x8xf32, #tpu.memory_space<vmem>>, vector<1x128x8xf32>
    %10 = vector.shape_cast %9 : vector<1x128x8xf32> to vector<128x8xf32>
    %c0_5 = arith.constant 0 : index
    %c0_6 = arith.constant 0 : index
    %c0_7 = arith.constant 0 : index
    %11 = vector.load %arg3[%c0_5, %c0_6, %c0_7] : memref<1x128x8xf32, #tpu.memory_space<vmem>>, vector<1x128x8xf32>
    %12 = vector.shape_cast %11 : vector<1x128x8xf32> to vector<128x8xf32>
    %13 = tpu.iota {dimensions = array<i32: 0>} : vector<128x8xi32>
    %c0_i32_8 = arith.constant 0 : i32
    %14 = vector.broadcast %c0_i32_8 : i32 to vector<128x8xi32>
    %15 = arith.cmpi eq, %13, %14 : vector<128x8xi32>
    %c0_9 = arith.constant 0 : index
    %c0_10 = arith.constant 0 : index
    %16 = vector.load %arg6[%c0_9, %c0_10] : memref<1x8xf32, #tpu.memory_space<vmem>>, vector<1x8xf32>
    %17 = arith.mulf %8, %16 : vector<1x8xf32>
    %cst_11 = arith.constant 0.000000e+00 : f32
    %18 = vector.shape_cast %17 : vector<1x8xf32> to vector<1x8xf32>
    %19 = vector.broadcast %18 : vector<1x8xf32> to vector<128x8xf32>
    %20 = vector.broadcast %cst_11 : f32 to vector<128x8xf32>
    %21 = arith.select %15, %19, %20 : vector<128x8xi1>, vector<128x8xf32>
    %22 = arith.addf %10, %21 : vector<128x8xf32>
    %c1_i32 = arith.constant 1 : i32
    %23 = tpu.dynamic_rotate %22 by %c1_i32 dim 0 : vector<128x8xf32>, i32 -> vector<128x8xf32>
    %c1_i32_12 = arith.constant 1 : i32
    %24 = vector.broadcast %c1_i32_12 : i32 to vector<128x8xi32>
    %25 = arith.cmpi sge, %13, %24 : vector<128x8xi32>
    %cst_13 = arith.constant 0.000000e+00 : f32
    %26 = vector.broadcast %cst_13 : f32 to vector<128x8xf32>
    %27 = arith.select %25, %23, %26 : vector<128x8xi1>, vector<128x8xf32>
    %28 = vector.broadcast %8 : vector<1x8xf32> to vector<128x8xf32>
    %29 = arith.mulf %28, %27 : vector<128x8xf32>
    %30 = arith.addf %22, %29 : vector<128x8xf32>
    %31 = arith.mulf %8, %8 : vector<1x8xf32>
    %c2_i32 = arith.constant 2 : i32
    %32 = tpu.dynamic_rotate %30 by %c2_i32 dim 0 : vector<128x8xf32>, i32 -> vector<128x8xf32>
    %c2_i32_14 = arith.constant 2 : i32
    %33 = vector.broadcast %c2_i32_14 : i32 to vector<128x8xi32>
    %34 = arith.cmpi sge, %13, %33 : vector<128x8xi32>
    %cst_15 = arith.constant 0.000000e+00 : f32
    %35 = vector.broadcast %cst_15 : f32 to vector<128x8xf32>
    %36 = arith.select %34, %32, %35 : vector<128x8xi1>, vector<128x8xf32>
    %37 = vector.broadcast %31 : vector<1x8xf32> to vector<128x8xf32>
    %38 = arith.mulf %37, %36 : vector<128x8xf32>
    %39 = arith.addf %30, %38 : vector<128x8xf32>
    %40 = arith.mulf %31, %31 : vector<1x8xf32>
    %c4_i32 = arith.constant 4 : i32
    %41 = tpu.dynamic_rotate %39 by %c4_i32 dim 0 : vector<128x8xf32>, i32 -> vector<128x8xf32>
    %c4_i32_16 = arith.constant 4 : i32
    %42 = vector.broadcast %c4_i32_16 : i32 to vector<128x8xi32>
    %43 = arith.cmpi sge, %13, %42 : vector<128x8xi32>
    %cst_17 = arith.constant 0.000000e+00 : f32
    %44 = vector.broadcast %cst_17 : f32 to vector<128x8xf32>
    %45 = arith.select %43, %41, %44 : vector<128x8xi1>, vector<128x8xf32>
    %46 = vector.broadcast %40 : vector<1x8xf32> to vector<128x8xf32>
    %47 = arith.mulf %46, %45 : vector<128x8xf32>
    %48 = arith.addf %39, %47 : vector<128x8xf32>
    %49 = arith.mulf %40, %40 : vector<1x8xf32>
    %c8_i32 = arith.constant 8 : i32
    %50 = tpu.dynamic_rotate %48 by %c8_i32 dim 0 : vector<128x8xf32>, i32 -> vector<128x8xf32>
    %c8_i32_18 = arith.constant 8 : i32
    %51 = vector.broadcast %c8_i32_18 : i32 to vector<128x8xi32>
    %52 = arith.cmpi sge, %13, %51 : vector<128x8xi32>
    %cst_19 = arith.constant 0.000000e+00 : f32
    %53 = vector.broadcast %cst_19 : f32 to vector<128x8xf32>
    %54 = arith.select %52, %50, %53 : vector<128x8xi1>, vector<128x8xf32>
    %55 = vector.broadcast %49 : vector<1x8xf32> to vector<128x8xf32>
    %56 = arith.mulf %55, %54 : vector<128x8xf32>
    %57 = arith.addf %48, %56 : vector<128x8xf32>
    %58 = arith.mulf %49, %49 : vector<1x8xf32>
    %c16_i32 = arith.constant 16 : i32
    %59 = tpu.dynamic_rotate %57 by %c16_i32 dim 0 : vector<128x8xf32>, i32 -> vector<128x8xf32>
    %c16_i32_20 = arith.constant 16 : i32
    %60 = vector.broadcast %c16_i32_20 : i32 to vector<128x8xi32>
    %61 = arith.cmpi sge, %13, %60 : vector<128x8xi32>
    %cst_21 = arith.constant 0.000000e+00 : f32
    %62 = vector.broadcast %cst_21 : f32 to vector<128x8xf32>
    %63 = arith.select %61, %59, %62 : vector<128x8xi1>, vector<128x8xf32>
    %64 = vector.broadcast %58 : vector<1x8xf32> to vector<128x8xf32>
    %65 = arith.mulf %64, %63 : vector<128x8xf32>
    %66 = arith.addf %57, %65 : vector<128x8xf32>
    %67 = arith.mulf %58, %58 : vector<1x8xf32>
    %c32_i32 = arith.constant 32 : i32
    %68 = tpu.dynamic_rotate %66 by %c32_i32 dim 0 : vector<128x8xf32>, i32 -> vector<128x8xf32>
    %c32_i32_22 = arith.constant 32 : i32
    %69 = vector.broadcast %c32_i32_22 : i32 to vector<128x8xi32>
    %70 = arith.cmpi sge, %13, %69 : vector<128x8xi32>
    %cst_23 = arith.constant 0.000000e+00 : f32
    %71 = vector.broadcast %cst_23 : f32 to vector<128x8xf32>
    %72 = arith.select %70, %68, %71 : vector<128x8xi1>, vector<128x8xf32>
    %73 = vector.broadcast %67 : vector<1x8xf32> to vector<128x8xf32>
    %74 = arith.mulf %73, %72 : vector<128x8xf32>
    %75 = arith.addf %66, %74 : vector<128x8xf32>
    %76 = arith.mulf %67, %67 : vector<1x8xf32>
    %c64_i32 = arith.constant 64 : i32
    %77 = tpu.dynamic_rotate %75 by %c64_i32 dim 0 : vector<128x8xf32>, i32 -> vector<128x8xf32>
    %c64_i32_24 = arith.constant 64 : i32
    %78 = vector.broadcast %c64_i32_24 : i32 to vector<128x8xi32>
    %79 = arith.cmpi sge, %13, %78 : vector<128x8xi32>
    %cst_25 = arith.constant 0.000000e+00 : f32
    %80 = vector.broadcast %cst_25 : f32 to vector<128x8xf32>
    %81 = arith.select %79, %77, %80 : vector<128x8xi1>, vector<128x8xf32>
    %82 = vector.broadcast %76 : vector<1x8xf32> to vector<128x8xf32>
    %83 = arith.mulf %82, %81 : vector<128x8xf32>
    %84 = arith.addf %75, %83 : vector<128x8xf32>
    %85 = vector.extract_strided_slice %84 {offsets = [127, 0], sizes = [1, 8], strides = [1, 1]} : vector<128x8xf32> to vector<1x8xf32>
    %c0_26 = arith.constant 0 : index
    %c0_27 = arith.constant 0 : index
    %86 = vector.load %arg6[%c0_26, %c0_27] : memref<1x8xf32, #tpu.memory_space<vmem>>, vector<1x8xf32>
    tpu.vector_store %arg6[%c0_26, %c0_27], %85 {strides = array<i32>} : memref<1x8xf32, #tpu.memory_space<vmem>>, vector<1x8xf32>,
    %87 = arith.negf %12 : vector<128x8xf32>
    %88 = math.exp %87 : vector<128x8xf32>
    %cst_28 = arith.constant 1.000000e+00 : f32
    %89 = vector.broadcast %cst_28 : f32 to vector<128x8xf32>
    %90 = arith.addf %89, %88 : vector<128x8xf32>
    %91 = arith.divf %89, %90 : vector<128x8xf32>
    %92 = arith.mulf %12, %91 : vector<128x8xf32>
    %93 = arith.mulf %84, %92 : vector<128x8xf32>
    %c0_29 = arith.constant 0 : index
    %c0_30 = arith.constant 0 : index
    %c0_31 = arith.constant 0 : index
    %94 = vector.load %arg5[%c0_29, %c0_30, %c0_31] : memref<1x128x8xf32, #tpu.memory_space<vmem>>, vector<1x128x8xf32>
    %95 = vector.shape_cast %94 : vector<1x128x8xf32> to vector<128x8xf32>
    %96 = vector.shape_cast %93 : vector<128x8xf32> to vector<1x128x8xf32>
    tpu.vector_store %arg5[%c0_29, %c0_30, %c0_31], %96 {strides = array<i32>} : memref<1x128x8xf32, #tpu.memory_space<vmem>>, vector<1x128x8xf32>,
    return
  }
  func.func @transform_0(%arg0: i32, %arg1: i32) -> (i32, i32, i32) {
    %c0_i32 = arith.constant 0 : i32
    %c0_i32_0 = arith.constant 0 : i32
    return %arg0, %arg1, %c0_i32 : i32, i32, i32
  }
  func.func @transform_1(%arg0: i32, %arg1: i32) -> (i32, i32, i32) {
    %c0_i32 = arith.constant 0 : i32
    %c0_i32_0 = arith.constant 0 : i32
    return %arg0, %arg1, %c0_i32 : i32, i32, i32
  }
  func.func @transform_2(%arg0: i32, %arg1: i32) -> (i32, i32) {
    %c0_i32 = arith.constant 0 : i32
    %c0_i32_0 = arith.constant 0 : i32
    %c0_i32_1 = arith.constant 0 : i32
    return %c0_i32, %c0_i32_0 : i32, i32
  }
  func.func @transform_3(%arg0: i32, %arg1: i32) -> (i32, i32, i32) {
    %c0_i32 = arith.constant 0 : i32
    %c0_i32_0 = arith.constant 0 : i32
    return %arg0, %arg1, %c0_i32 : i32, i32, i32
  }
}

module attributes {stable_mosaic.version = 11 : i64} {
  func.func @_proj_res_ln_proj_kernel(%arg0: i32, %arg1: memref<512x8xf32, #tpu.memory_space<vmem>>, %arg2: memref<512x4xf32, #tpu.memory_space<vmem>>, %arg3: memref<1x4xf32, #tpu.memory_space<vmem>>, %arg4: memref<8x4xf32, #tpu.memory_space<vmem>>, %arg5: memref<4x20xf32, #tpu.memory_space<vmem>>, %arg6: memref<512x20xf32, #tpu.memory_space<vmem>>) attributes {dimension_semantics = [#tpu.dimension_semantics<parallel>], iteration_bounds = array<i64: 1>, scalar_prefetch = 0 : i64, scratch_operands = 0 : i64, tpu.core_type = #tpu.core_type<tc>, window_params = [{transform_indices = @transform_0, window_bounds = array<i64: 512, 8>}, {transform_indices = @transform_1, window_bounds = array<i64: 512, 4>}, {pipeline_mode = #tpu.pipeline_mode<synchronous>, transform_indices = @transform_2, window_bounds = array<i64: 1, 4>}, {pipeline_mode = #tpu.pipeline_mode<synchronous>, transform_indices = @transform_3, window_bounds = array<i64: 8, 4>}, {pipeline_mode = #tpu.pipeline_mode<synchronous>, transform_indices = @transform_4, window_bounds = array<i64: 4, 20>}, {transform_indices = @transform_5, window_bounds = array<i64: 512, 20>}]} {
    %c0 = arith.constant 0 : index
    %c0_0 = arith.constant 0 : index
    %0 = vector.load %arg1[%c0, %c0_0] : memref<512x8xf32, #tpu.memory_space<vmem>>, vector<512x8xf32>
    %c0_1 = arith.constant 0 : index
    %c0_2 = arith.constant 0 : index
    %1 = vector.load %arg4[%c0_1, %c0_2] : memref<8x4xf32, #tpu.memory_space<vmem>>, vector<8x4xf32>
    %cst = arith.constant dense<0.000000e+00> : vector<512x4xf32>
    %2 = tpu.matmul %0, %1, %cst {dimension_numbers = #tpu.dot_dimension_numbers<[1], [0], [0], [1], [0, 0, 1, 1], [], []>} : vector<512x8xf32>, vector<8x4xf32>, vector<512x4xf32> -> vector<512x4xf32>
    %c0_3 = arith.constant 0 : index
    %c0_4 = arith.constant 0 : index
    %3 = vector.load %arg2[%c0_3, %c0_4] : memref<512x4xf32, #tpu.memory_space<vmem>>, vector<512x4xf32>
    %4 = arith.addf %2, %3 : vector<512x4xf32>
    %cst_5 = arith.constant dense<0.000000e+00> : vector<512xf32>
    %5 = vector.multi_reduction <add>, %4, %cst_5 [1] : vector<512x4xf32> to vector<512xf32>
    %6 = vector.shape_cast %5 : vector<512xf32> to vector<512x1xf32>
    %cst_6 = arith.constant 4.000000e+00 : f32
    %7 = vector.broadcast %cst_6 : f32 to vector<512x1xf32>
    %8 = arith.divf %6, %7 : vector<512x1xf32>
    %9 = vector.broadcast %8 : vector<512x1xf32> to vector<512x4xf32>
    %10 = arith.subf %4, %9 : vector<512x4xf32>
    %11 = arith.mulf %10, %10 : vector<512x4xf32>
    %cst_7 = arith.constant dense<0.000000e+00> : vector<512xf32>
    %12 = vector.multi_reduction <add>, %11, %cst_7 [1] : vector<512x4xf32> to vector<512xf32>
    %13 = vector.shape_cast %12 : vector<512xf32> to vector<512x1xf32>
    %cst_8 = arith.constant 4.000000e+00 : f32
    %14 = vector.broadcast %cst_8 : f32 to vector<512x1xf32>
    %15 = arith.divf %13, %14 : vector<512x1xf32>
    %cst_9 = arith.constant 9.99999974E-6 : f32
    %16 = vector.broadcast %cst_9 : f32 to vector<512x1xf32>
    %17 = arith.addf %15, %16 : vector<512x1xf32>
    %18 = math.rsqrt %17 : vector<512x1xf32>
    %19 = vector.broadcast %18 : vector<512x1xf32> to vector<512x4xf32>
    %20 = arith.mulf %4, %19 : vector<512x4xf32>
    %c0_10 = arith.constant 0 : index
    %c0_11 = arith.constant 0 : index
    %21 = vector.load %arg3[%c0_10, %c0_11] : memref<1x4xf32, #tpu.memory_space<vmem>>, vector<1x4xf32>
    %22 = vector.broadcast %21 : vector<1x4xf32> to vector<512x4xf32>
    %23 = arith.mulf %20, %22 : vector<512x4xf32>
    %c0_12 = arith.constant 0 : index
    %c0_13 = arith.constant 0 : index
    %24 = vector.load %arg5[%c0_12, %c0_13] : memref<4x20xf32, #tpu.memory_space<vmem>>, vector<4x20xf32>
    %cst_14 = arith.constant dense<0.000000e+00> : vector<512x20xf32>
    %25 = tpu.matmul %23, %24, %cst_14 {dimension_numbers = #tpu.dot_dimension_numbers<[1], [0], [0], [1], [0, 0, 1, 1], [], []>} : vector<512x4xf32>, vector<4x20xf32>, vector<512x20xf32> -> vector<512x20xf32>
    %c0_15 = arith.constant 0 : index
    %c0_16 = arith.constant 0 : index
    %26 = vector.load %arg6[%c0_15, %c0_16] : memref<512x20xf32, #tpu.memory_space<vmem>>, vector<512x20xf32>
    tpu.vector_store %arg6[%c0_15, %c0_16], %25 {strides = array<i32>} : memref<512x20xf32, #tpu.memory_space<vmem>>, vector<512x20xf32>,
    return
  }
  func.func @transform_0(%arg0: i32) -> (i32, i32) {
    %c0_i32 = arith.constant 0 : i32
    %c0_i32_0 = arith.constant 0 : i32
    return %arg0, %c0_i32 : i32, i32
  }
  func.func @transform_1(%arg0: i32) -> (i32, i32) {
    %c0_i32 = arith.constant 0 : i32
    %c0_i32_0 = arith.constant 0 : i32
    return %arg0, %c0_i32 : i32, i32
  }
  func.func @transform_2(%arg0: i32) -> (i32, i32) {
    %c0_i32 = arith.constant 0 : i32
    %c0_i32_0 = arith.constant 0 : i32
    %c0_i32_1 = arith.constant 0 : i32
    return %c0_i32, %c0_i32_0 : i32, i32
  }
  func.func @transform_3(%arg0: i32) -> (i32, i32) {
    %c0_i32 = arith.constant 0 : i32
    %c0_i32_0 = arith.constant 0 : i32
    %c0_i32_1 = arith.constant 0 : i32
    return %c0_i32, %c0_i32_0 : i32, i32
  }
  func.func @transform_4(%arg0: i32) -> (i32, i32) {
    %c0_i32 = arith.constant 0 : i32
    %c0_i32_0 = arith.constant 0 : i32
    %c0_i32_1 = arith.constant 0 : i32
    return %c0_i32, %c0_i32_0 : i32, i32
  }
  func.func @transform_5(%arg0: i32) -> (i32, i32) {
    %c0_i32 = arith.constant 0 : i32
    %c0_i32_0 = arith.constant 0 : i32
    return %arg0, %c0_i32 : i32, i32
  }
}

module attributes {stable_mosaic.version = 11 : i64} {
  func.func @_iel_fused_kernel(%arg0: i32, %arg1: memref<1x16x16x20xf32, #tpu.memory_space<vmem>>, %arg2: memref<3x3x20xf32, #tpu.memory_space<vmem>>, %arg3: memref<3x3x10xf32, #tpu.memory_space<vmem>>, %arg4: memref<3x3x10xf32, #tpu.memory_space<vmem>>, %arg5: memref<1x16x16x10xf32, #tpu.memory_space<vmem>>, %arg6: memref<18x18x20xf32, #tpu.memory_space<vmem>>, %arg7: memref<18x18x10xf32, #tpu.memory_space<vmem>>, %arg8: memref<18x18x10xf32, #tpu.memory_space<vmem>>) attributes {dimension_semantics = [#tpu.dimension_semantics<parallel>], iteration_bounds = array<i64: 2>, scalar_prefetch = 0 : i64, scratch_operands = 3 : i64, tpu.core_type = #tpu.core_type<tc>, window_params = [{transform_indices = @transform_0, window_bounds = array<i64: 1, 16, 16, 20>}, {pipeline_mode = #tpu.pipeline_mode<synchronous>, transform_indices = @transform_1, window_bounds = array<i64: 3, 3, 20>}, {pipeline_mode = #tpu.pipeline_mode<synchronous>, transform_indices = @transform_2, window_bounds = array<i64: 3, 3, 10>}, {pipeline_mode = #tpu.pipeline_mode<synchronous>, transform_indices = @transform_3, window_bounds = array<i64: 3, 3, 10>}, {transform_indices = @transform_4, window_bounds = array<i64: 1, 16, 16, 10>}]} {
    %c0 = arith.constant 0 : index
    %c0_0 = arith.constant 0 : index
    %c0_1 = arith.constant 0 : index
    %c0_2 = arith.constant 0 : index
    %0 = vector.load %arg1[%c0, %c0_0, %c0_1, %c0_2] : memref<1x16x16x20xf32, #tpu.memory_space<vmem>>, vector<1x16x16x20xf32>
    %1 = vector.shape_cast %0 : vector<1x16x16x20xf32> to vector<16x16x20xf32>
    %cst = arith.constant 0.000000e+00 : f32
    %2 = vector.broadcast %cst : f32 to vector<18x18x20xf32>
    %c0_3 = arith.constant 0 : index
    %c0_4 = arith.constant 0 : index
    %c0_5 = arith.constant 0 : index
    %3 = vector.load %arg6[%c0_3, %c0_4, %c0_5] : memref<18x18x20xf32, #tpu.memory_space<vmem>>, vector<18x18x20xf32>
    tpu.vector_store %arg6[%c0_3, %c0_4, %c0_5], %2 {strides = array<i32>} : memref<18x18x20xf32, #tpu.memory_space<vmem>>, vector<18x18x20xf32>,
    %c1 = arith.constant 1 : index
    %c1_6 = arith.constant 1 : index
    %c0_7 = arith.constant 0 : index
    %4 = vector.load %arg6[%c1, %c1_6, %c0_7] : memref<18x18x20xf32, #tpu.memory_space<vmem>>, vector<16x16x20xf32>
    tpu.vector_store %arg6[%c1, %c1_6, %c0_7], %1 {strides = array<i32>} : memref<18x18x20xf32, #tpu.memory_space<vmem>>, vector<16x16x20xf32>,
    %cst_8 = arith.constant 0.000000e+00 : f32
    %5 = vector.broadcast %cst_8 : f32 to vector<16x16x20xf32>
    %c0_9 = arith.constant 0 : index
    %c0_10 = arith.constant 0 : index
    %c0_11 = arith.constant 0 : index
    %6 = vector.load %arg6[%c0_9, %c0_10, %c0_11] : memref<18x18x20xf32, #tpu.memory_space<vmem>>, vector<16x16x20xf32>
    %c0_12 = arith.constant 0 : index
    %c0_13 = arith.constant 0 : index
    %c0_14 = arith.constant 0 : index
    %7 = vector.load %arg2[%c0_12, %c0_13, %c0_14] : memref<3x3x20xf32, #tpu.memory_space<vmem>>, vector<1x1x20xf32>
    %8 = vector.shape_cast %7 : vector<1x1x20xf32> to vector<20xf32>
    %9 = vector.shape_cast %8 : vector<20xf32> to vector<1x1x20xf32>
    %10 = vector.broadcast %9 : vector<1x1x20xf32> to vector<16x16x20xf32>
    %11 = arith.mulf %6, %10 : vector<16x16x20xf32>
    %12 = arith.addf %5, %11 : vector<16x16x20xf32>
    %c0_15 = arith.constant 0 : index
    %c1_16 = arith.constant 1 : index
    %c0_17 = arith.constant 0 : index
    %13 = vector.load %arg6[%c0_15, %c1_16, %c0_17] : memref<18x18x20xf32, #tpu.memory_space<vmem>>, vector<16x16x20xf32>
    %c0_18 = arith.constant 0 : index
    %c1_19 = arith.constant 1 : index
    %c0_20 = arith.constant 0 : index
    %14 = vector.load %arg2[%c0_18, %c1_19, %c0_20] : memref<3x3x20xf32, #tpu.memory_space<vmem>>, vector<1x1x20xf32>
    %15 = vector.shape_cast %14 : vector<1x1x20xf32> to vector<20xf32>
    %16 = vector.shape_cast %15 : vector<20xf32> to vector<1x1x20xf32>
    %17 = vector.broadcast %16 : vector<1x1x20xf32> to vector<16x16x20xf32>
    %18 = arith.mulf %13, %17 : vector<16x16x20xf32>
    %19 = arith.addf %12, %18 : vector<16x16x20xf32>
    %c0_21 = arith.constant 0 : index
    %c2 = arith.constant 2 : index
    %c0_22 = arith.constant 0 : index
    %20 = vector.load %arg6[%c0_21, %c2, %c0_22] : memref<18x18x20xf32, #tpu.memory_space<vmem>>, vector<16x16x20xf32>
    %c0_23 = arith.constant 0 : index
    %c2_24 = arith.constant 2 : index
    %c0_25 = arith.constant 0 : index
    %21 = vector.load %arg2[%c0_23, %c2_24, %c0_25] : memref<3x3x20xf32, #tpu.memory_space<vmem>>, vector<1x1x20xf32>
    %22 = vector.shape_cast %21 : vector<1x1x20xf32> to vector<20xf32>
    %23 = vector.shape_cast %22 : vector<20xf32> to vector<1x1x20xf32>
    %24 = vector.broadcast %23 : vector<1x1x20xf32> to vector<16x16x20xf32>
    %25 = arith.mulf %20, %24 : vector<16x16x20xf32>
    %26 = arith.addf %19, %25 : vector<16x16x20xf32>
    %c1_26 = arith.constant 1 : index
    %c0_27 = arith.constant 0 : index
    %c0_28 = arith.constant 0 : index
    %27 = vector.load %arg6[%c1_26, %c0_27, %c0_28] : memref<18x18x20xf32, #tpu.memory_space<vmem>>, vector<16x16x20xf32>
    %c1_29 = arith.constant 1 : index
    %c0_30 = arith.constant 0 : index
    %c0_31 = arith.constant 0 : index
    %28 = vector.load %arg2[%c1_29, %c0_30, %c0_31] : memref<3x3x20xf32, #tpu.memory_space<vmem>>, vector<1x1x20xf32>
    %29 = vector.shape_cast %28 : vector<1x1x20xf32> to vector<20xf32>
    %30 = vector.shape_cast %29 : vector<20xf32> to vector<1x1x20xf32>
    %31 = vector.broadcast %30 : vector<1x1x20xf32> to vector<16x16x20xf32>
    %32 = arith.mulf %27, %31 : vector<16x16x20xf32>
    %33 = arith.addf %26, %32 : vector<16x16x20xf32>
    %c1_32 = arith.constant 1 : index
    %c1_33 = arith.constant 1 : index
    %c0_34 = arith.constant 0 : index
    %34 = vector.load %arg6[%c1_32, %c1_33, %c0_34] : memref<18x18x20xf32, #tpu.memory_space<vmem>>, vector<16x16x20xf32>
    %c1_35 = arith.constant 1 : index
    %c1_36 = arith.constant 1 : index
    %c0_37 = arith.constant 0 : index
    %35 = vector.load %arg2[%c1_35, %c1_36, %c0_37] : memref<3x3x20xf32, #tpu.memory_space<vmem>>, vector<1x1x20xf32>
    %36 = vector.shape_cast %35 : vector<1x1x20xf32> to vector<20xf32>
    %37 = vector.shape_cast %36 : vector<20xf32> to vector<1x1x20xf32>
    %38 = vector.broadcast %37 : vector<1x1x20xf32> to vector<16x16x20xf32>
    %39 = arith.mulf %34, %38 : vector<16x16x20xf32>
    %40 = arith.addf %33, %39 : vector<16x16x20xf32>
    %c1_38 = arith.constant 1 : index
    %c2_39 = arith.constant 2 : index
    %c0_40 = arith.constant 0 : index
    %41 = vector.load %arg6[%c1_38, %c2_39, %c0_40] : memref<18x18x20xf32, #tpu.memory_space<vmem>>, vector<16x16x20xf32>
    %c1_41 = arith.constant 1 : index
    %c2_42 = arith.constant 2 : index
    %c0_43 = arith.constant 0 : index
    %42 = vector.load %arg2[%c1_41, %c2_42, %c0_43] : memref<3x3x20xf32, #tpu.memory_space<vmem>>, vector<1x1x20xf32>
    %43 = vector.shape_cast %42 : vector<1x1x20xf32> to vector<20xf32>
    %44 = vector.shape_cast %43 : vector<20xf32> to vector<1x1x20xf32>
    %45 = vector.broadcast %44 : vector<1x1x20xf32> to vector<16x16x20xf32>
    %46 = arith.mulf %41, %45 : vector<16x16x20xf32>
    %47 = arith.addf %40, %46 : vector<16x16x20xf32>
    %c2_44 = arith.constant 2 : index
    %c0_45 = arith.constant 0 : index
    %c0_46 = arith.constant 0 : index
    %48 = vector.load %arg6[%c2_44, %c0_45, %c0_46] : memref<18x18x20xf32, #tpu.memory_space<vmem>>, vector<16x16x20xf32>
    %c2_47 = arith.constant 2 : index
    %c0_48 = arith.constant 0 : index
    %c0_49 = arith.constant 0 : index
    %49 = vector.load %arg2[%c2_47, %c0_48, %c0_49] : memref<3x3x20xf32, #tpu.memory_space<vmem>>, vector<1x1x20xf32>
    %50 = vector.shape_cast %49 : vector<1x1x20xf32> to vector<20xf32>
    %51 = vector.shape_cast %50 : vector<20xf32> to vector<1x1x20xf32>
    %52 = vector.broadcast %51 : vector<1x1x20xf32> to vector<16x16x20xf32>
    %53 = arith.mulf %48, %52 : vector<16x16x20xf32>
    %54 = arith.addf %47, %53 : vector<16x16x20xf32>
    %c2_50 = arith.constant 2 : index
    %c1_51 = arith.constant 1 : index
    %c0_52 = arith.constant 0 : index
    %55 = vector.load %arg6[%c2_50, %c1_51, %c0_52] : memref<18x18x20xf32, #tpu.memory_space<vmem>>, vector<16x16x20xf32>
    %c2_53 = arith.constant 2 : index
    %c1_54 = arith.constant 1 : index
    %c0_55 = arith.constant 0 : index
    %56 = vector.load %arg2[%c2_53, %c1_54, %c0_55] : memref<3x3x20xf32, #tpu.memory_space<vmem>>, vector<1x1x20xf32>
    %57 = vector.shape_cast %56 : vector<1x1x20xf32> to vector<20xf32>
    %58 = vector.shape_cast %57 : vector<20xf32> to vector<1x1x20xf32>
    %59 = vector.broadcast %58 : vector<1x1x20xf32> to vector<16x16x20xf32>
    %60 = arith.mulf %55, %59 : vector<16x16x20xf32>
    %61 = arith.addf %54, %60 : vector<16x16x20xf32>
    %c2_56 = arith.constant 2 : index
    %c2_57 = arith.constant 2 : index
    %c0_58 = arith.constant 0 : index
    %62 = vector.load %arg6[%c2_56, %c2_57, %c0_58] : memref<18x18x20xf32, #tpu.memory_space<vmem>>, vector<16x16x20xf32>
    %c2_59 = arith.constant 2 : index
    %c2_60 = arith.constant 2 : index
    %c0_61 = arith.constant 0 : index
    %63 = vector.load %arg2[%c2_59, %c2_60, %c0_61] : memref<3x3x20xf32, #tpu.memory_space<vmem>>, vector<1x1x20xf32>
    %64 = vector.shape_cast %63 : vector<1x1x20xf32> to vector<20xf32>
    %65 = vector.shape_cast %64 : vector<20xf32> to vector<1x1x20xf32>
    %66 = vector.broadcast %65 : vector<1x1x20xf32> to vector<16x16x20xf32>
    %67 = arith.mulf %62, %66 : vector<16x16x20xf32>
    %68 = arith.addf %61, %67 : vector<16x16x20xf32>
    %69 = vector.extract_strided_slice %68 {offsets = [0, 0, 0], sizes = [16, 16, 10], strides = [1, 1, 1]} : vector<16x16x20xf32> to vector<16x16x10xf32>
    %70 = vector.extract_strided_slice %68 {offsets = [0, 0, 10], sizes = [16, 16, 10], strides = [1, 1, 1]} : vector<16x16x20xf32> to vector<16x16x10xf32>
    %cst_62 = arith.constant 0.000000e+00 : f32
    %71 = vector.broadcast %cst_62 : f32 to vector<18x18x10xf32>
    %c0_63 = arith.constant 0 : index
    %c0_64 = arith.constant 0 : index
    %c0_65 = arith.constant 0 : index
    %72 = vector.load %arg7[%c0_63, %c0_64, %c0_65] : memref<18x18x10xf32, #tpu.memory_space<vmem>>, vector<18x18x10xf32>
    tpu.vector_store %arg7[%c0_63, %c0_64, %c0_65], %71 {strides = array<i32>} : memref<18x18x10xf32, #tpu.memory_space<vmem>>, vector<18x18x10xf32>,
    %c1_66 = arith.constant 1 : index
    %c1_67 = arith.constant 1 : index
    %c0_68 = arith.constant 0 : index
    %73 = vector.load %arg7[%c1_66, %c1_67, %c0_68] : memref<18x18x10xf32, #tpu.memory_space<vmem>>, vector<16x16x10xf32>
    tpu.vector_store %arg7[%c1_66, %c1_67, %c0_68], %69 {strides = array<i32>} : memref<18x18x10xf32, #tpu.memory_space<vmem>>, vector<16x16x10xf32>,
    %cst_69 = arith.constant 0.000000e+00 : f32
    %74 = vector.broadcast %cst_69 : f32 to vector<16x16x10xf32>
    %c0_70 = arith.constant 0 : index
    %c0_71 = arith.constant 0 : index
    %c0_72 = arith.constant 0 : index
    %75 = vector.load %arg7[%c0_70, %c0_71, %c0_72] : memref<18x18x10xf32, #tpu.memory_space<vmem>>, vector<16x16x10xf32>
    %c0_73 = arith.constant 0 : index
    %c0_74 = arith.constant 0 : index
    %c0_75 = arith.constant 0 : index
    %76 = vector.load %arg3[%c0_73, %c0_74, %c0_75] : memref<3x3x10xf32, #tpu.memory_space<vmem>>, vector<1x1x10xf32>
    %77 = vector.shape_cast %76 : vector<1x1x10xf32> to vector<10xf32>
    %78 = vector.shape_cast %77 : vector<10xf32> to vector<1x1x10xf32>
    %79 = vector.broadcast %78 : vector<1x1x10xf32> to vector<16x16x10xf32>
    %80 = arith.mulf %75, %79 : vector<16x16x10xf32>
    %81 = arith.addf %74, %80 : vector<16x16x10xf32>
    %c0_76 = arith.constant 0 : index
    %c1_77 = arith.constant 1 : index
    %c0_78 = arith.constant 0 : index
    %82 = vector.load %arg7[%c0_76, %c1_77, %c0_78] : memref<18x18x10xf32, #tpu.memory_space<vmem>>, vector<16x16x10xf32>
    %c0_79 = arith.constant 0 : index
    %c1_80 = arith.constant 1 : index
    %c0_81 = arith.constant 0 : index
    %83 = vector.load %arg3[%c0_79, %c1_80, %c0_81] : memref<3x3x10xf32, #tpu.memory_space<vmem>>, vector<1x1x10xf32>
    %84 = vector.shape_cast %83 : vector<1x1x10xf32> to vector<10xf32>
    %85 = vector.shape_cast %84 : vector<10xf32> to vector<1x1x10xf32>
    %86 = vector.broadcast %85 : vector<1x1x10xf32> to vector<16x16x10xf32>
    %87 = arith.mulf %82, %86 : vector<16x16x10xf32>
    %88 = arith.addf %81, %87 : vector<16x16x10xf32>
    %c0_82 = arith.constant 0 : index
    %c2_83 = arith.constant 2 : index
    %c0_84 = arith.constant 0 : index
    %89 = vector.load %arg7[%c0_82, %c2_83, %c0_84] : memref<18x18x10xf32, #tpu.memory_space<vmem>>, vector<16x16x10xf32>
    %c0_85 = arith.constant 0 : index
    %c2_86 = arith.constant 2 : index
    %c0_87 = arith.constant 0 : index
    %90 = vector.load %arg3[%c0_85, %c2_86, %c0_87] : memref<3x3x10xf32, #tpu.memory_space<vmem>>, vector<1x1x10xf32>
    %91 = vector.shape_cast %90 : vector<1x1x10xf32> to vector<10xf32>
    %92 = vector.shape_cast %91 : vector<10xf32> to vector<1x1x10xf32>
    %93 = vector.broadcast %92 : vector<1x1x10xf32> to vector<16x16x10xf32>
    %94 = arith.mulf %89, %93 : vector<16x16x10xf32>
    %95 = arith.addf %88, %94 : vector<16x16x10xf32>
    %c1_88 = arith.constant 1 : index
    %c0_89 = arith.constant 0 : index
    %c0_90 = arith.constant 0 : index
    %96 = vector.load %arg7[%c1_88, %c0_89, %c0_90] : memref<18x18x10xf32, #tpu.memory_space<vmem>>, vector<16x16x10xf32>
    %c1_91 = arith.constant 1 : index
    %c0_92 = arith.constant 0 : index
    %c0_93 = arith.constant 0 : index
    %97 = vector.load %arg3[%c1_91, %c0_92, %c0_93] : memref<3x3x10xf32, #tpu.memory_space<vmem>>, vector<1x1x10xf32>
    %98 = vector.shape_cast %97 : vector<1x1x10xf32> to vector<10xf32>
    %99 = vector.shape_cast %98 : vector<10xf32> to vector<1x1x10xf32>
    %100 = vector.broadcast %99 : vector<1x1x10xf32> to vector<16x16x10xf32>
    %101 = arith.mulf %96, %100 : vector<16x16x10xf32>
    %102 = arith.addf %95, %101 : vector<16x16x10xf32>
    %c1_94 = arith.constant 1 : index
    %c1_95 = arith.constant 1 : index
    %c0_96 = arith.constant 0 : index
    %103 = vector.load %arg7[%c1_94, %c1_95, %c0_96] : memref<18x18x10xf32, #tpu.memory_space<vmem>>, vector<16x16x10xf32>
    %c1_97 = arith.constant 1 : index
    %c1_98 = arith.constant 1 : index
    %c0_99 = arith.constant 0 : index
    %104 = vector.load %arg3[%c1_97, %c1_98, %c0_99] : memref<3x3x10xf32, #tpu.memory_space<vmem>>, vector<1x1x10xf32>
    %105 = vector.shape_cast %104 : vector<1x1x10xf32> to vector<10xf32>
    %106 = vector.shape_cast %105 : vector<10xf32> to vector<1x1x10xf32>
    %107 = vector.broadcast %106 : vector<1x1x10xf32> to vector<16x16x10xf32>
    %108 = arith.mulf %103, %107 : vector<16x16x10xf32>
    %109 = arith.addf %102, %108 : vector<16x16x10xf32>
    %c1_100 = arith.constant 1 : index
    %c2_101 = arith.constant 2 : index
    %c0_102 = arith.constant 0 : index
    %110 = vector.load %arg7[%c1_100, %c2_101, %c0_102] : memref<18x18x10xf32, #tpu.memory_space<vmem>>, vector<16x16x10xf32>
    %c1_103 = arith.constant 1 : index
    %c2_104 = arith.constant 2 : index
    %c0_105 = arith.constant 0 : index
    %111 = vector.load %arg3[%c1_103, %c2_104, %c0_105] : memref<3x3x10xf32, #tpu.memory_space<vmem>>, vector<1x1x10xf32>
    %112 = vector.shape_cast %111 : vector<1x1x10xf32> to vector<10xf32>
    %113 = vector.shape_cast %112 : vector<10xf32> to vector<1x1x10xf32>
    %114 = vector.broadcast %113 : vector<1x1x10xf32> to vector<16x16x10xf32>
    %115 = arith.mulf %110, %114 : vector<16x16x10xf32>
    %116 = arith.addf %109, %115 : vector<16x16x10xf32>
    %c2_106 = arith.constant 2 : index
    %c0_107 = arith.constant 0 : index
    %c0_108 = arith.constant 0 : index
    %117 = vector.load %arg7[%c2_106, %c0_107, %c0_108] : memref<18x18x10xf32, #tpu.memory_space<vmem>>, vector<16x16x10xf32>
    %c2_109 = arith.constant 2 : index
    %c0_110 = arith.constant 0 : index
    %c0_111 = arith.constant 0 : index
    %118 = vector.load %arg3[%c2_109, %c0_110, %c0_111] : memref<3x3x10xf32, #tpu.memory_space<vmem>>, vector<1x1x10xf32>
    %119 = vector.shape_cast %118 : vector<1x1x10xf32> to vector<10xf32>
    %120 = vector.shape_cast %119 : vector<10xf32> to vector<1x1x10xf32>
    %121 = vector.broadcast %120 : vector<1x1x10xf32> to vector<16x16x10xf32>
    %122 = arith.mulf %117, %121 : vector<16x16x10xf32>
    %123 = arith.addf %116, %122 : vector<16x16x10xf32>
    %c2_112 = arith.constant 2 : index
    %c1_113 = arith.constant 1 : index
    %c0_114 = arith.constant 0 : index
    %124 = vector.load %arg7[%c2_112, %c1_113, %c0_114] : memref<18x18x10xf32, #tpu.memory_space<vmem>>, vector<16x16x10xf32>
    %c2_115 = arith.constant 2 : index
    %c1_116 = arith.constant 1 : index
    %c0_117 = arith.constant 0 : index
    %125 = vector.load %arg3[%c2_115, %c1_116, %c0_117] : memref<3x3x10xf32, #tpu.memory_space<vmem>>, vector<1x1x10xf32>
    %126 = vector.shape_cast %125 : vector<1x1x10xf32> to vector<10xf32>
    %127 = vector.shape_cast %126 : vector<10xf32> to vector<1x1x10xf32>
    %128 = vector.broadcast %127 : vector<1x1x10xf32> to vector<16x16x10xf32>
    %129 = arith.mulf %124, %128 : vector<16x16x10xf32>
    %130 = arith.addf %123, %129 : vector<16x16x10xf32>
    %c2_118 = arith.constant 2 : index
    %c2_119 = arith.constant 2 : index
    %c0_120 = arith.constant 0 : index
    %131 = vector.load %arg7[%c2_118, %c2_119, %c0_120] : memref<18x18x10xf32, #tpu.memory_space<vmem>>, vector<16x16x10xf32>
    %c2_121 = arith.constant 2 : index
    %c2_122 = arith.constant 2 : index
    %c0_123 = arith.constant 0 : index
    %132 = vector.load %arg3[%c2_121, %c2_122, %c0_123] : memref<3x3x10xf32, #tpu.memory_space<vmem>>, vector<1x1x10xf32>
    %133 = vector.shape_cast %132 : vector<1x1x10xf32> to vector<10xf32>
    %134 = vector.shape_cast %133 : vector<10xf32> to vector<1x1x10xf32>
    %135 = vector.broadcast %134 : vector<1x1x10xf32> to vector<16x16x10xf32>
    %136 = arith.mulf %131, %135 : vector<16x16x10xf32>
    %137 = arith.addf %130, %136 : vector<16x16x10xf32>
    %cst_124 = arith.constant 0.000000e+00 : f32
    %138 = vector.broadcast %cst_124 : f32 to vector<18x18x10xf32>
    %c0_125 = arith.constant 0 : index
    %c0_126 = arith.constant 0 : index
    %c0_127 = arith.constant 0 : index
    %139 = vector.load %arg8[%c0_125, %c0_126, %c0_127] : memref<18x18x10xf32, #tpu.memory_space<vmem>>, vector<18x18x10xf32>
    tpu.vector_store %arg8[%c0_125, %c0_126, %c0_127], %138 {strides = array<i32>} : memref<18x18x10xf32, #tpu.memory_space<vmem>>, vector<18x18x10xf32>,
    %c1_128 = arith.constant 1 : index
    %c1_129 = arith.constant 1 : index
    %c0_130 = arith.constant 0 : index
    %140 = vector.load %arg8[%c1_128, %c1_129, %c0_130] : memref<18x18x10xf32, #tpu.memory_space<vmem>>, vector<16x16x10xf32>
    tpu.vector_store %arg8[%c1_128, %c1_129, %c0_130], %70 {strides = array<i32>} : memref<18x18x10xf32, #tpu.memory_space<vmem>>, vector<16x16x10xf32>,
    %cst_131 = arith.constant 0.000000e+00 : f32
    %141 = vector.broadcast %cst_131 : f32 to vector<16x16x10xf32>
    %c0_132 = arith.constant 0 : index
    %c0_133 = arith.constant 0 : index
    %c0_134 = arith.constant 0 : index
    %142 = vector.load %arg8[%c0_132, %c0_133, %c0_134] : memref<18x18x10xf32, #tpu.memory_space<vmem>>, vector<16x16x10xf32>
    %c0_135 = arith.constant 0 : index
    %c0_136 = arith.constant 0 : index
    %c0_137 = arith.constant 0 : index
    %143 = vector.load %arg4[%c0_135, %c0_136, %c0_137] : memref<3x3x10xf32, #tpu.memory_space<vmem>>, vector<1x1x10xf32>
    %144 = vector.shape_cast %143 : vector<1x1x10xf32> to vector<10xf32>
    %145 = vector.shape_cast %144 : vector<10xf32> to vector<1x1x10xf32>
    %146 = vector.broadcast %145 : vector<1x1x10xf32> to vector<16x16x10xf32>
    %147 = arith.mulf %142, %146 : vector<16x16x10xf32>
    %148 = arith.addf %141, %147 : vector<16x16x10xf32>
    %c0_138 = arith.constant 0 : index
    %c1_139 = arith.constant 1 : index
    %c0_140 = arith.constant 0 : index
    %149 = vector.load %arg8[%c0_138, %c1_139, %c0_140] : memref<18x18x10xf32, #tpu.memory_space<vmem>>, vector<16x16x10xf32>
    %c0_141 = arith.constant 0 : index
    %c1_142 = arith.constant 1 : index
    %c0_143 = arith.constant 0 : index
    %150 = vector.load %arg4[%c0_141, %c1_142, %c0_143] : memref<3x3x10xf32, #tpu.memory_space<vmem>>, vector<1x1x10xf32>
    %151 = vector.shape_cast %150 : vector<1x1x10xf32> to vector<10xf32>
    %152 = vector.shape_cast %151 : vector<10xf32> to vector<1x1x10xf32>
    %153 = vector.broadcast %152 : vector<1x1x10xf32> to vector<16x16x10xf32>
    %154 = arith.mulf %149, %153 : vector<16x16x10xf32>
    %155 = arith.addf %148, %154 : vector<16x16x10xf32>
    %c0_144 = arith.constant 0 : index
    %c2_145 = arith.constant 2 : index
    %c0_146 = arith.constant 0 : index
    %156 = vector.load %arg8[%c0_144, %c2_145, %c0_146] : memref<18x18x10xf32, #tpu.memory_space<vmem>>, vector<16x16x10xf32>
    %c0_147 = arith.constant 0 : index
    %c2_148 = arith.constant 2 : index
    %c0_149 = arith.constant 0 : index
    %157 = vector.load %arg4[%c0_147, %c2_148, %c0_149] : memref<3x3x10xf32, #tpu.memory_space<vmem>>, vector<1x1x10xf32>
    %158 = vector.shape_cast %157 : vector<1x1x10xf32> to vector<10xf32>
    %159 = vector.shape_cast %158 : vector<10xf32> to vector<1x1x10xf32>
    %160 = vector.broadcast %159 : vector<1x1x10xf32> to vector<16x16x10xf32>
    %161 = arith.mulf %156, %160 : vector<16x16x10xf32>
    %162 = arith.addf %155, %161 : vector<16x16x10xf32>
    %c1_150 = arith.constant 1 : index
    %c0_151 = arith.constant 0 : index
    %c0_152 = arith.constant 0 : index
    %163 = vector.load %arg8[%c1_150, %c0_151, %c0_152] : memref<18x18x10xf32, #tpu.memory_space<vmem>>, vector<16x16x10xf32>
    %c1_153 = arith.constant 1 : index
    %c0_154 = arith.constant 0 : index
    %c0_155 = arith.constant 0 : index
    %164 = vector.load %arg4[%c1_153, %c0_154, %c0_155] : memref<3x3x10xf32, #tpu.memory_space<vmem>>, vector<1x1x10xf32>
    %165 = vector.shape_cast %164 : vector<1x1x10xf32> to vector<10xf32>
    %166 = vector.shape_cast %165 : vector<10xf32> to vector<1x1x10xf32>
    %167 = vector.broadcast %166 : vector<1x1x10xf32> to vector<16x16x10xf32>
    %168 = arith.mulf %163, %167 : vector<16x16x10xf32>
    %169 = arith.addf %162, %168 : vector<16x16x10xf32>
    %c1_156 = arith.constant 1 : index
    %c1_157 = arith.constant 1 : index
    %c0_158 = arith.constant 0 : index
    %170 = vector.load %arg8[%c1_156, %c1_157, %c0_158] : memref<18x18x10xf32, #tpu.memory_space<vmem>>, vector<16x16x10xf32>
    %c1_159 = arith.constant 1 : index
    %c1_160 = arith.constant 1 : index
    %c0_161 = arith.constant 0 : index
    %171 = vector.load %arg4[%c1_159, %c1_160, %c0_161] : memref<3x3x10xf32, #tpu.memory_space<vmem>>, vector<1x1x10xf32>
    %172 = vector.shape_cast %171 : vector<1x1x10xf32> to vector<10xf32>
    %173 = vector.shape_cast %172 : vector<10xf32> to vector<1x1x10xf32>
    %174 = vector.broadcast %173 : vector<1x1x10xf32> to vector<16x16x10xf32>
    %175 = arith.mulf %170, %174 : vector<16x16x10xf32>
    %176 = arith.addf %169, %175 : vector<16x16x10xf32>
    %c1_162 = arith.constant 1 : index
    %c2_163 = arith.constant 2 : index
    %c0_164 = arith.constant 0 : index
    %177 = vector.load %arg8[%c1_162, %c2_163, %c0_164] : memref<18x18x10xf32, #tpu.memory_space<vmem>>, vector<16x16x10xf32>
    %c1_165 = arith.constant 1 : index
    %c2_166 = arith.constant 2 : index
    %c0_167 = arith.constant 0 : index
    %178 = vector.load %arg4[%c1_165, %c2_166, %c0_167] : memref<3x3x10xf32, #tpu.memory_space<vmem>>, vector<1x1x10xf32>
    %179 = vector.shape_cast %178 : vector<1x1x10xf32> to vector<10xf32>
    %180 = vector.shape_cast %179 : vector<10xf32> to vector<1x1x10xf32>
    %181 = vector.broadcast %180 : vector<1x1x10xf32> to vector<16x16x10xf32>
    %182 = arith.mulf %177, %181 : vector<16x16x10xf32>
    %183 = arith.addf %176, %182 : vector<16x16x10xf32>
    %c2_168 = arith.constant 2 : index
    %c0_169 = arith.constant 0 : index
    %c0_170 = arith.constant 0 : index
    %184 = vector.load %arg8[%c2_168, %c0_169, %c0_170] : memref<18x18x10xf32, #tpu.memory_space<vmem>>, vector<16x16x10xf32>
    %c2_171 = arith.constant 2 : index
    %c0_172 = arith.constant 0 : index
    %c0_173 = arith.constant 0 : index
    %185 = vector.load %arg4[%c2_171, %c0_172, %c0_173] : memref<3x3x10xf32, #tpu.memory_space<vmem>>, vector<1x1x10xf32>
    %186 = vector.shape_cast %185 : vector<1x1x10xf32> to vector<10xf32>
    %187 = vector.shape_cast %186 : vector<10xf32> to vector<1x1x10xf32>
    %188 = vector.broadcast %187 : vector<1x1x10xf32> to vector<16x16x10xf32>
    %189 = arith.mulf %184, %188 : vector<16x16x10xf32>
    %190 = arith.addf %183, %189 : vector<16x16x10xf32>
    %c2_174 = arith.constant 2 : index
    %c1_175 = arith.constant 1 : index
    %c0_176 = arith.constant 0 : index
    %191 = vector.load %arg8[%c2_174, %c1_175, %c0_176] : memref<18x18x10xf32, #tpu.memory_space<vmem>>, vector<16x16x10xf32>
    %c2_177 = arith.constant 2 : index
    %c1_178 = arith.constant 1 : index
    %c0_179 = arith.constant 0 : index
    %192 = vector.load %arg4[%c2_177, %c1_178, %c0_179] : memref<3x3x10xf32, #tpu.memory_space<vmem>>, vector<1x1x10xf32>
    %193 = vector.shape_cast %192 : vector<1x1x10xf32> to vector<10xf32>
    %194 = vector.shape_cast %193 : vector<10xf32> to vector<1x1x10xf32>
    %195 = vector.broadcast %194 : vector<1x1x10xf32> to vector<16x16x10xf32>
    %196 = arith.mulf %191, %195 : vector<16x16x10xf32>
    %197 = arith.addf %190, %196 : vector<16x16x10xf32>
    %c2_180 = arith.constant 2 : index
    %c2_181 = arith.constant 2 : index
    %c0_182 = arith.constant 0 : index
    %198 = vector.load %arg8[%c2_180, %c2_181, %c0_182] : memref<18x18x10xf32, #tpu.memory_space<vmem>>, vector<16x16x10xf32>
    %c2_183 = arith.constant 2 : index
    %c2_184 = arith.constant 2 : index
    %c0_185 = arith.constant 0 : index
    %199 = vector.load %arg4[%c2_183, %c2_184, %c0_185] : memref<3x3x10xf32, #tpu.memory_space<vmem>>, vector<1x1x10xf32>
    %200 = vector.shape_cast %199 : vector<1x1x10xf32> to vector<10xf32>
    %201 = vector.shape_cast %200 : vector<10xf32> to vector<1x1x10xf32>
    %202 = vector.broadcast %201 : vector<1x1x10xf32> to vector<16x16x10xf32>
    %203 = arith.mulf %198, %202 : vector<16x16x10xf32>
    %204 = arith.addf %197, %203 : vector<16x16x10xf32>
    %205 = math.tanh %137 : vector<16x16x10xf32>
    %206 = arith.addf %205, %69 : vector<16x16x10xf32>
    %207 = math.tanh %204 : vector<16x16x10xf32>
    %208 = arith.addf %207, %70 : vector<16x16x10xf32>
    %209 = arith.mulf %206, %208 : vector<16x16x10xf32>
    %c0_186 = arith.constant 0 : index
    %c0_187 = arith.constant 0 : index
    %c0_188 = arith.constant 0 : index
    %c0_189 = arith.constant 0 : index
    %210 = vector.load %arg5[%c0_186, %c0_187, %c0_188, %c0_189] : memref<1x16x16x10xf32, #tpu.memory_space<vmem>>, vector<1x16x16x10xf32>
    %211 = vector.shape_cast %210 : vector<1x16x16x10xf32> to vector<16x16x10xf32>
    %212 = vector.shape_cast %209 : vector<16x16x10xf32> to vector<1x16x16x10xf32>
    tpu.vector_store %arg5[%c0_186, %c0_187, %c0_188, %c0_189], %212 {strides = array<i32>} : memref<1x16x16x10xf32, #tpu.memory_space<vmem>>, vector<1x16x16x10xf32>,
    return
  }
  func.func @transform_0(%arg0: i32) -> (i32, i32, i32, i32) {
    %c0_i32 = arith.constant 0 : i32
    %c0_i32_0 = arith.constant 0 : i32
    %c0_i32_1 = arith.constant 0 : i32
    %c0_i32_2 = arith.constant 0 : i32
    return %arg0, %c0_i32, %c0_i32_0, %c0_i32_1 : i32, i32, i32, i32
  }
  func.func @transform_1(%arg0: i32) -> (i32, i32, i32) {
    %c0_i32 = arith.constant 0 : i32
    %c0_i32_0 = arith.constant 0 : i32
    %c0_i32_1 = arith.constant 0 : i32
    %c0_i32_2 = arith.constant 0 : i32
    return %c0_i32, %c0_i32_0, %c0_i32_1 : i32, i32, i32
  }
  func.func @transform_2(%arg0: i32) -> (i32, i32, i32) {
    %c0_i32 = arith.constant 0 : i32
    %c0_i32_0 = arith.constant 0 : i32
    %c0_i32_1 = arith.constant 0 : i32
    %c0_i32_2 = arith.constant 0 : i32
    return %c0_i32, %c0_i32_0, %c0_i32_1 : i32, i32, i32
  }
  func.func @transform_3(%arg0: i32) -> (i32, i32, i32) {
    %c0_i32 = arith.constant 0 : i32
    %c0_i32_0 = arith.constant 0 : i32
    %c0_i32_1 = arith.constant 0 : i32
    %c0_i32_2 = arith.constant 0 : i32
    return %c0_i32, %c0_i32_0, %c0_i32_1 : i32, i32, i32
  }
  func.func @transform_4(%arg0: i32) -> (i32, i32, i32, i32) {
    %c0_i32 = arith.constant 0 : i32
    %c0_i32_0 = arith.constant 0 : i32
    %c0_i32_1 = arith.constant 0 : i32
    %c0_i32_2 = arith.constant 0 : i32
    return %arg0, %c0_i32, %c0_i32_0, %c0_i32_1 : i32, i32, i32, i32
  }
}

module attributes {stable_mosaic.version = 11 : i64} {
  func.func @_matmul_kernel(%arg0: i32, %arg1: memref<512x10xf32, #tpu.memory_space<vmem>>, %arg2: memref<10x4xf32, #tpu.memory_space<vmem>>, %arg3: memref<512x4xf32, #tpu.memory_space<vmem>>) attributes {dimension_semantics = [#tpu.dimension_semantics<parallel>], iteration_bounds = array<i64: 1>, scalar_prefetch = 0 : i64, scratch_operands = 0 : i64, tpu.core_type = #tpu.core_type<tc>, window_params = [{transform_indices = @transform_0, window_bounds = array<i64: 512, 10>}, {pipeline_mode = #tpu.pipeline_mode<synchronous>, transform_indices = @transform_1, window_bounds = array<i64: 10, 4>}, {transform_indices = @transform_2, window_bounds = array<i64: 512, 4>}]} {
    %c0 = arith.constant 0 : index
    %c0_0 = arith.constant 0 : index
    %0 = vector.load %arg1[%c0, %c0_0] : memref<512x10xf32, #tpu.memory_space<vmem>>, vector<512x10xf32>
    %c0_1 = arith.constant 0 : index
    %c0_2 = arith.constant 0 : index
    %1 = vector.load %arg2[%c0_1, %c0_2] : memref<10x4xf32, #tpu.memory_space<vmem>>, vector<10x4xf32>
    %cst = arith.constant dense<0.000000e+00> : vector<512x4xf32>
    %2 = tpu.matmul %0, %1, %cst {dimension_numbers = #tpu.dot_dimension_numbers<[1], [0], [0], [1], [0, 0, 1, 1], [], []>} : vector<512x10xf32>, vector<10x4xf32>, vector<512x4xf32> -> vector<512x4xf32>
    %c0_3 = arith.constant 0 : index
    %c0_4 = arith.constant 0 : index
    %3 = vector.load %arg3[%c0_3, %c0_4] : memref<512x4xf32, #tpu.memory_space<vmem>>, vector<512x4xf32>
    tpu.vector_store %arg3[%c0_3, %c0_4], %2 {strides = array<i32>} : memref<512x4xf32, #tpu.memory_space<vmem>>, vector<512x4xf32>,
    return
  }
  func.func @transform_0(%arg0: i32) -> (i32, i32) {
    %c0_i32 = arith.constant 0 : i32
    %c0_i32_0 = arith.constant 0 : i32
    return %arg0, %c0_i32 : i32, i32
  }
  func.func @transform_1(%arg0: i32) -> (i32, i32) {
    %c0_i32 = arith.constant 0 : i32
    %c0_i32_0 = arith.constant 0 : i32
    %c0_i32_1 = arith.constant 0 : i32
    return %c0_i32, %c0_i32_0 : i32, i32
  }
  func.func @transform_2(%arg0: i32) -> (i32, i32) {
    %c0_i32 = arith.constant 0 : i32
    %c0_i32_0 = arith.constant 0 : i32
    return %arg0, %c0_i32 : i32, i32
  }
}

</mosaic_0001>

<llo_original>
// kernel: hv_lca_with_mamba.6
$region0: #{hv_lca_with_mamba.6}
  #allocation0 [shape = 'u32[]', space=smem, size = 0x4, offset = 0x4, fixed_abs, tag = 'smem constant byte address 0x4 - core index']
  #allocation1 [shape = 'u32[144,128]{1,0:T(1,128)}', space=vmem, size = 0x12000, scoped, tag = 'internal scratch']
  #allocation2 [shape = 'f32[1,8]{1,0:T(1,128)}', space=vmem, size = 0x200, scoped, tag = 'scratch operand']
  %s0 = inlined_call_operand.vmem [shape: f32[2,256,8], index: 0, kind: input, shape index: {}]
  %s1 = inlined_call_operand.vmem [shape: f32[2,256,8], index: 1, kind: input, shape index: {}]
  %s2 = inlined_call_operand.vmem [shape: f32[1,8], index: 2, kind: input, shape index: {}]
  %s3 = inlined_call_operand.vmem [shape: f32[2,256,8], index: 3, kind: output, shape index: {}]
  %s4 = sld [smem:[#allocation0]]
  $region49: #{hv_lca_with_mamba.6} parent=0
    _
  %s6 = ssub.s32 1, %s4
  %s7 = scalar_select 0, %s6, %s4
  loop: start=0, step=1, limit=6
  $region2: #{hv_lca_with_mamba.6} parent=0 // loop_pre_header
    _
  $region3: #{hv_lca_with_mamba.6} parent=0 // loop_header
    %s9 = sphi 0, %s13
    %p10 = scmp.ge.s32.totalorder %s9, 6
    %s16 = sphi 0, %s28
    %s17 = sphi 0, %s24
    %s18 = sphi 0, %s16
    %s19 = sphi 0, %s17
    %s20 = sphi 0, %s18
    %s21 = sphi 0, %s19
    %s33 = sphi 0, %s35
    %s36 = sphi 0, %s33
    %s37 = sphi 0, %s36
    %s53 = sphi 0, %s37
    %s61 = sphi 0, %s63
    %s64 = sphi 0, %s61
    %s65 = sphi 0, %s64
    %s81 = sphi 0, %s65
    %s85 = sphi 0, %s85
    %s87 = sphi 0, %s85
    %s88 = sphi 0, %s87
    %s102 = sphi 0, %s88
    %s110 = sphi 0, %s112
    %s113 = sphi 0, %s110
    %s114 = sphi 0, %s113
    %s130 = sphi 0, %s114
  $region4: #{hv_lca_with_mamba.6} parent=0 // loop_header_branch
    %12 = sbr.rel (%p10) target = $region8
  $region5: #{hv_lca_with_mamba.6} parent=0 // loop_body
    %s14 = ssub.s32 %s9, 1
    %s15 = ssub.s32 %s9, 2
    %s22 = sadd.s32 1, %s17
    %p23 = scmp.ge.s32.totalorder %s22, 2
    %s24 = scalar_select %p23, 0, %s22
    %s25 = sadd.s32 1, %s16
    %s26 = scalar_select %p23, %s25, %s16
    %p27 = scmp.ge.s32.totalorder %s26, 2
    %s28 = scalar_select %p27, 0, %s26
    %s29 = ssub.s32 %s16, %s28
    %s30 = ssub.s32 %s17, %s24
    %s31 = sor.u32 %s29, %s30
    %p32 = scmp.eq.s32.totalorder %s31, 0
    %s34 = sadd.s32 %s33, 1
    %s35 = scalar_select %p32, %s33, %s34
    %p38 = pneg %p32
    %p39 = scmp.eq.s32.totalorder %s9, 3
    %p40 = por %p38, %p39
    %p41 = scmp.ne.s32.totalorder %s33, %s36
    %p42 = scmp.eq.s32.totalorder %s9, 0
    %p43 = por %p41, %p42
    %p44 = scmp.ne.s32.totalorder %s33, %s36
    %p45 = scmp.eq.s32.totalorder %s14, 3
    %p46 = por %p44, %p45
    %p47 = scmp.ne.s32.totalorder %s36, %s37
    %p48 = scmp.eq.s32.totalorder %s14, 0
    %p49 = por %p47, %p48
    %p50 = scmp.ne.s32.totalorder %s36, %s37
    %p51 = scmp.eq.s32.totalorder %s15, 3
    %p52 = por %p50, %p51
    %p54 = scmp.ne.s32.totalorder %s37, %s53
    %p55 = scmp.eq.s32.totalorder %s15, 0
    %p56 = por %p54, %p55
    %s57 = ssub.s32 %s16, %s28
    %s58 = ssub.s32 %s17, %s24
    %s59 = sor.u32 %s57, %s58
    %p60 = scmp.eq.s32.totalorder %s59, 0
    %s62 = sadd.s32 %s61, 1
    %s63 = scalar_select %p60, %s61, %s62
    %p66 = pneg %p60
    %p67 = scmp.eq.s32.totalorder %s9, 3
    %p68 = por %p66, %p67
    %p69 = scmp.ne.s32.totalorder %s61, %s64
    %p70 = scmp.eq.s32.totalorder %s9, 0
    %p71 = por %p69, %p70
    %p72 = scmp.ne.s32.totalorder %s61, %s64
    %p73 = scmp.eq.s32.totalorder %s14, 3
    %p74 = por %p72, %p73
    %p75 = scmp.ne.s32.totalorder %s64, %s65
    %p76 = scmp.eq.s32.totalorder %s14, 0
    %p77 = por %p75, %p76
    %p78 = scmp.ne.s32.totalorder %s64, %s65
    %p79 = scmp.eq.s32.totalorder %s15, 3
    %p80 = por %p78, %p79
    %p82 = scmp.ne.s32.totalorder %s65, %s81
    %p83 = scmp.eq.s32.totalorder %s15, 0
    %p84 = por %p82, %p83
    %s86 = sadd.s32 %s85, 1
    %p89 = scmp.eq.s32.totalorder %s9, 3
    %p90 = scmp.ne.s32.totalorder %s85, %s87
    %p91 = scmp.eq.s32.totalorder %s9, 0
    %p92 = por %p90, %p91
    %p93 = scmp.ne.s32.totalorder %s85, %s87
    %p94 = scmp.eq.s32.totalorder %s14, 3
    %p95 = por %p93, %p94
    %p96 = scmp.ne.s32.totalorder %s87, %s88
    %p97 = scmp.eq.s32.totalorder %s14, 0
    %p98 = por %p96, %p97
    %p99 = scmp.ne.s32.totalorder %s87, %s88
    %p100 = scmp.eq.s32.totalorder %s15, 3
    %p101 = por %p99, %p100
    %p103 = scmp.ne.s32.totalorder %s88, %s102
    %p104 = scmp.eq.s32.totalorder %s15, 0
    %p105 = por %p103, %p104
    %s106 = ssub.s32 %s16, %s28
    %s107 = ssub.s32 %s17, %s24
    %s108 = sor.u32 %s106, %s107
    %p109 = scmp.eq.s32.totalorder %s108, 0
    %s111 = sadd.s32 %s110, 1
    %s112 = scalar_select %p109, %s110, %s111
    %p115 = pneg %p109
    %p116 = scmp.eq.s32.totalorder %s9, 3
    %p117 = por %p115, %p116
    %p118 = scmp.ne.s32.totalorder %s110, %s113
    %p119 = scmp.eq.s32.totalorder %s9, 0
    %p120 = por %p118, %p119
    %p121 = scmp.ne.s32.totalorder %s110, %s113
    %p122 = scmp.eq.s32.totalorder %s14, 3
    %p123 = por %p121, %p122
    %p124 = scmp.ne.s32.totalorder %s113, %s114
    %p125 = scmp.eq.s32.totalorder %s14, 0
    %p126 = por %p124, %p125
    %p127 = scmp.ne.s32.totalorder %s113, %s114
    %p128 = scmp.eq.s32.totalorder %s15, 3
    %p129 = por %p127, %p128
    %p131 = scmp.ne.s32.totalorder %s114, %s130
    %p132 = scmp.eq.s32.totalorder %s15, 0
    %p133 = por %p131, %p132
    %p134 = scmp.le.s32.totalorder 1, %s9
    %p135 = scmp.lt.s32.totalorder %s9, 5
    %p136 = pnand %p134, %p135
    %p137 = pneg %p136
    // Predicated region
    $region9: #{hv_lca_with_mamba.6} parent=5 // pred_check
      _
    $region10: #{hv_lca_with_mamba.6} parent=5 // pred_check_branch
      %139 = sbr.rel (%p136) target = $region12
    $region11: #{hv_lca_with_mamba.6} parent=5 // pred_region
      %s140 = ssub.s32 %s9, 1
      // Predicated region
      $region13: #{hv_lca_with_mamba.6} parent=11 // pred_check
        %p141 = pneg %p98
      $region14: #{hv_lca_with_mamba.6} parent=11 // pred_check_branch
        %143 = sbr.rel (%p141) target = $region16
      $region15: #{hv_lca_with_mamba.6} parent=11 // pred_region
        _
      $region16: #{hv_lca_with_mamba.6} parent=11 // pred_fallthru
        _
    $region12: #{hv_lca_with_mamba.6} parent=5 // pred_fallthru
      _
    %p144 = scmp.lt.s32.totalorder %s9, 4
    // Predicated region
    $region17: #{hv_lca_with_mamba.6} parent=5 // pred_check
      %p145 = pneg %p144
    $region18: #{hv_lca_with_mamba.6} parent=5 // pred_check_branch
      %147 = sbr.rel (%p145) target = $region20
    $region19: #{hv_lca_with_mamba.6} parent=5 // pred_region
      // Predicated region
      $region21: #{hv_lca_with_mamba.6} parent=19 // pred_check
        %p148 = pneg %p43
      $region22: #{hv_lca_with_mamba.6} parent=19 // pred_check_branch
        %150 = sbr.rel (%p148) target = $region24
      $region23: #{hv_lca_with_mamba.6} parent=19 // pred_region
        %s151 = smul.u32 16, %s17
        %p152 = scmp.lt.s32.totalorder %s16, 1
        %s153 = scalar_select %p152, %s16, 1
        %p154 = scmp.lt.s32.totalorder %s151, 31
        %s155 = scalar_select %p154, %s151, 31
        %s156 = smul.addr %s153, 32
        %s157 = sadd.s32 %s155, %s156
        %s158 = smul.addr %s157, 8
        %s159 = scalar_lea.vmem %s0, %s158
        %s160 = smul.u32 16, %s17
      $region24: #{hv_lca_with_mamba.6} parent=19 // pred_fallthru
        _
      // Predicated region
      $region25: #{hv_lca_with_mamba.6} parent=19 // pred_check
        %p161 = pneg %p71
      $region26: #{hv_lca_with_mamba.6} parent=19 // pred_check_branch
        %163 = sbr.rel (%p161) target = $region28
      $region27: #{hv_lca_with_mamba.6} parent=19 // pred_region
        %s164 = smul.u32 16, %s17
        %p165 = scmp.lt.s32.totalorder %s16, 1
        %s166 = scalar_select %p165, %s16, 1
        %p167 = scmp.lt.s32.totalorder %s164, 31
        %s168 = scalar_select %p167, %s164, 31
        %s169 = smul.addr %s166, 32
        %s170 = sadd.s32 %s168, %s169
        %s171 = smul.addr %s170, 8
        %s172 = scalar_lea.vmem %s1, %s171
        %s173 = smul.u32 16, %s17
      $region28: #{hv_lca_with_mamba.6} parent=19 // pred_fallthru
        _
    $region20: #{hv_lca_with_mamba.6} parent=5 // pred_fallthru
      _
    %p174 = scmp.le.s32.totalorder 1, %s9
    %p175 = scmp.lt.s32.totalorder %s9, 5
    %p176 = pnand %p174, %p175
    %p177 = pneg %p176
    // Predicated region
    $region29: #{hv_lca_with_mamba.6} parent=5 // pred_check
      _
    $region30: #{hv_lca_with_mamba.6} parent=5 // pred_check_branch
      %179 = sbr.rel (%p176) target = $region32
    $region31: #{hv_lca_with_mamba.6} parent=5 // pred_region
      %s180 = ssub.s32 %s9, 1
      %s181 = smul.u32 16, %s19
      %p182 = scmp.lt.s32.totalorder %s18, 1
      %s183 = scalar_select %p182, %s18, 1
      %p184 = scmp.lt.s32.totalorder %s181, 31
      %s185 = scalar_select %p184, %s181, 31
      %s186 = smul.addr %s183, 32
      %s187 = sadd.s32 %s185, %s186
      %s188 = smul.addr %s187, 8
      %s189 = scalar_lea.vmem %s0, %s188
      %p190 = pneg %p49
      %p191 = pneg %p46
      %s192 = smul.u32 16, %s19
      %p193 = scmp.lt.s32.totalorder %s18, 1
      %s194 = scalar_select %p193, %s18, 1
      %p195 = scmp.lt.s32.totalorder %s192, 31
      %s196 = scalar_select %p195, %s192, 31
      %s197 = smul.addr %s194, 32
      %s198 = sadd.s32 %s196, %s197
      %s199 = smul.addr %s198, 8
      %s200 = scalar_lea.vmem %s1, %s199
      %p201 = pneg %p77
      %p202 = pneg %p74
      %p203 = pneg %p98
      %p204 = pneg %p95
      %p205 = pneg %p126
      %p206 = pneg %p123
      %s207 = smul.u32 16, %s19
      %p208 = scmp.lt.s32.totalorder %s18, 1
      %s209 = scalar_select %p208, %s18, 1
      %p210 = scmp.lt.s32.totalorder %s207, 31
      %s211 = scalar_select %p210, %s207, 31
      %s212 = smul.addr %s209, 32
      %s213 = sadd.s32 %s211, %s212
      %s214 = smul.addr %s213, 8
      %s215 = scalar_lea.vmem %s3, %s214
      %s216 = smul.u32 16, %s19
      %p217 = scmp.lt.s32.totalorder %s18, 1
      %s218 = scalar_select %p217, %s18, 1
      %p219 = scmp.lt.s32.totalorder %s216, 31
      %s220 = scalar_select %p219, %s216, 31
      %s221 = smul.addr %s218, 32
      %s222 = sadd.s32 %s220, %s221
      %s223 = smul.addr %s222, 8
      %s224 = scalar_lea.vmem %s0, %s223
      %s225 = smul.u32 16, %s19
      %s226 = smul.u32 16, %s19
      %p227 = scmp.lt.s32.totalorder %s18, 1
      %s228 = scalar_select %p227, %s18, 1
      %p229 = scmp.lt.s32.totalorder %s226, 31
      %s230 = scalar_select %p229, %s226, 31
      %s231 = smul.addr %s228, 32
      %s232 = sadd.s32 %s230, %s231
      %s233 = smul.addr %s232, 8
      %s234 = scalar_lea.vmem %s1, %s233
      %s235 = smul.u32 16, %s19
      %s236 = smul.u32 16, %s19
      %p237 = scmp.lt.s32.totalorder %s18, 1
      %s238 = scalar_select %p237, %s18, 1
      %p239 = scmp.lt.s32.totalorder %s236, 31
      %s240 = scalar_select %p239, %s236, 31
      %s241 = smul.addr %s238, 32
      %s242 = sadd.s32 %s240, %s241
      %s243 = smul.addr %s242, 8
      %s244 = scalar_lea.vmem %s3, %s243
      %s245 = smul.u32 16, %s19
      %p246 = scmp.eq.s32.totalorder %s19, 0
      // Predicated region
      $region33: #{hv_lca_with_mamba.6} parent=31 // pred_check
        %p247 = pneg %p246
      $region34: #{hv_lca_with_mamba.6} parent=31 // pred_check_branch
        %249 = sbr.rel (%p247) target = $region36
      $region35: #{hv_lca_with_mamba.6} parent=31 // pred_region
        %vm250 = vcmask 57344
        %251 = vst.msk [vmem:[#allocation2] sm:$0x1] %vm250, 0.0
      $region36: #{hv_lca_with_mamba.6} parent=31 // pred_fallthru
        _
      %v252 = vld [vmem:[%s2] sm:$0x1]
      %v253 = vxor.u32 %v252, 2147483648
      %v254 = vmul.f32 %v253, 1.442695
      %v255 = vpow.pop %v254
      %v256 = vadd.f32 %v255, 1.0
      %v257 = vrcp.pop %v256
      %v258 = vmul.f32 1.0, %v257
      %v259 = vld [vmem:[%s224] sm:$0xff]
      %v260 = vld [vmem:[%s224 + $0x8] sm:$0xff]
      %v261 = vld [vmem:[%s224 + $0x10] sm:$0xff]
      %v262 = vld [vmem:[%s224 + $0x18] sm:$0xff]
      %v263 = vld [vmem:[%s224 + $0x20] sm:$0xff]
      %v264 = vld [vmem:[%s224 + $0x28] sm:$0xff]
      %v265 = vld [vmem:[%s224 + $0x30] sm:$0xff]
      %v266 = vld [vmem:[%s224 + $0x38] sm:$0xff]
      %v267 = vld [vmem:[%s224 + $0x40] sm:$0xff]
      %v268 = vld [vmem:[%s224 + $0x48] sm:$0xff]
      %v269 = vld [vmem:[%s224 + $0x50] sm:$0xff]
      %v270 = vld [vmem:[%s224 + $0x58] sm:$0xff]
      %v271 = vld [vmem:[%s224 + $0x60] sm:$0xff]
      %v272 = vld [vmem:[%s224 + $0x68] sm:$0xff]
      %v273 = vld [vmem:[%s224 + $0x70] sm:$0xff]
      %v274 = vld [vmem:[%s224 + $0x78] sm:$0xff]
      %v275 = vld [vmem:[%s234] sm:$0xff]
      %v276 = vld [vmem:[%s234 + $0x8] sm:$0xff]
      %v277 = vld [vmem:[%s234 + $0x10] sm:$0xff]
      %v278 = vld [vmem:[%s234 + $0x18] sm:$0xff]
      %v279 = vld [vmem:[%s234 + $0x20] sm:$0xff]
      %v280 = vld [vmem:[%s234 + $0x28] sm:$0xff]
      %v281 = vld [vmem:[%s234 + $0x30] sm:$0xff]
      %v282 = vld [vmem:[%s234 + $0x38] sm:$0xff]
      %v283 = vld [vmem:[%s234 + $0x40] sm:$0xff]
      %v284 = vld [vmem:[%s234 + $0x48] sm:$0xff]
      %v285 = vld [vmem:[%s234 + $0x50] sm:$0xff]
      %v286 = vld [vmem:[%s234 + $0x58] sm:$0xff]
      %v287 = vld [vmem:[%s234 + $0x60] sm:$0xff]
      %v288 = vld [vmem:[%s234 + $0x68] sm:$0xff]
      %v289 = vld [vmem:[%s234 + $0x70] sm:$0xff]
      %v290 = vld [vmem:[%s234 + $0x78] sm:$0xff]
      %v291 = vlaneseq
      %v292 = vshrl.u32 %v291, 7
      %v293 = vadd.s32 %v292, 8
      %v294 = vadd.s32 %v292, 16
      %v295 = vadd.s32 %v292, 24
      %v296 = vadd.s32 %v292, 32
      %v297 = vadd.s32 %v292, 40
      %v298 = vadd.s32 %v292, 48
      %v299 = vadd.s32 %v292, 56
      %v300 = vadd.s32 %v292, 64
      %v301 = vadd.s32 %v292, 72
      %v302 = vadd.s32 %v292, 80
      %v303 = vadd.s32 %v292, 88
      %v304 = vadd.s32 %v292, 96
      %v305 = vadd.s32 %v292, 104
      %v306 = vadd.s32 %v292, 112
      %v307 = vadd.s32 %v292, 120
      %vm308 = vcmp.eq.s32.totalorder %v292, 0
      %vm309 = vcmp.eq.s32.totalorder %v293, 0
      %vm310 = vcmp.eq.s32.totalorder %v294, 0
      %vm311 = vcmp.eq.s32.totalorder %v295, 0
      %vm312 = vcmp.eq.s32.totalorder %v296, 0
      %vm313 = vcmp.eq.s32.totalorder %v297, 0
      %vm314 = vcmp.eq.s32.totalorder %v298, 0
      %vm315 = vcmp.eq.s32.totalorder %v299, 0
      %vm316 = vcmp.eq.s32.totalorder %v300, 0
      %vm317 = vcmp.eq.s32.totalorder %v301, 0
      %vm318 = vcmp.eq.s32.totalorder %v302, 0
      %vm319 = vcmp.eq.s32.totalorder %v303, 0
      %vm320 = vcmp.eq.s32.totalorder %v304, 0
      %vm321 = vcmp.eq.s32.totalorder %v305, 0
      %vm322 = vcmp.eq.s32.totalorder %v306, 0
      %vm323 = vcmp.eq.s32.totalorder %v307, 0
      %v324 = vld [vmem:[#allocation2] sm:$0x1]
      %v325 = vmul.f32 %v258, %v324
      %v327 = vlaneseq
      %v328 = vshrl.u32 %v327, 7
      %v329 = vsub.s32 0, %v328
      %v330 = vrot.slane %v325, %v329
      %v332 = vsel %vm308, %v330, 0.0
      %v333 = vsel %vm309, %v330, 0.0
      %v334 = vsel %vm310, %v330, 0.0
      %v335 = vsel %vm311, %v330, 0.0
      %v336 = vsel %vm312, %v330, 0.0
      %v337 = vsel %vm313, %v330, 0.0
      %v338 = vsel %vm314, %v330, 0.0
      %v339 = vsel %vm315, %v330, 0.0
      %v340 = vsel %vm316, %v330, 0.0
      %v341 = vsel %vm317, %v330, 0.0
      %v342 = vsel %vm318, %v330, 0.0
      %v343 = vsel %vm319, %v330, 0.0
      %v344 = vsel %vm320, %v330, 0.0
      %v345 = vsel %vm321, %v330, 0.0
      %v346 = vsel %vm322, %v330, 0.0
      %v347 = vsel %vm323, %v330, 0.0
      %v348 = vadd.f32 %v259, %v332
      %v349 = vadd.f32 %v260, %v333
      %v350 = vadd.f32 %v261, %v334
      %v351 = vadd.f32 %v262, %v335
      %v352 = vadd.f32 %v263, %v336
      %v353 = vadd.f32 %v264, %v337
      %v354 = vadd.f32 %v265, %v338
      %v355 = vadd.f32 %v266, %v339
      %v356 = vadd.f32 %v267, %v340
      %v357 = vadd.f32 %v268, %v341
      %v358 = vadd.f32 %v269, %v342
      %v359 = vadd.f32 %v270, %v343
      %v360 = vadd.f32 %v271, %v344
      %v361 = vadd.f32 %v272, %v345
      %v362 = vadd.f32 %v273, %v346
      %v363 = vadd.f32 %v274, %v347
      %v364 = vrot.slane %v348, 7
      %v365 = vrot.slane %v349, 7
      %v366 = vrot.slane %v350, 7
      %v367 = vrot.slane %v351, 7
      %v368 = vrot.slane %v352, 7
      %v369 = vrot.slane %v353, 7
      %v370 = vrot.slane %v354, 7
      %v371 = vrot.slane %v355, 7
      %v372 = vrot.slane %v356, 7
      %v373 = vrot.slane %v357, 7
      %v374 = vrot.slane %v358, 7
      %v375 = vrot.slane %v359, 7
      %v376 = vrot.slane %v360, 7
      %v377 = vrot.slane %v361, 7
      %v378 = vrot.slane %v362, 7
      %v379 = vrot.slane %v363, 7
      %vm380 = vcmp.lt.s32.totalorder %v292, 1
      %v381 = vsel %vm380, %v378, %v379
      %v382 = vsel %vm380, %v377, %v378
      %v383 = vsel %vm380, %v376, %v377
      %v384 = vsel %vm380, %v375, %v376
      %v385 = vsel %vm380, %v374, %v375
      %v386 = vsel %vm380, %v373, %v374
      %v387 = vsel %vm380, %v372, %v373
      %v388 = vsel %vm380, %v371, %v372
      %v389 = vsel %vm380, %v370, %v371
      %v390 = vsel %vm380, %v369, %v370
      %v391 = vsel %vm380, %v368, %v369
      %v392 = vsel %vm380, %v367, %v368
      %v393 = vsel %vm380, %v366, %v367
      %v394 = vsel %vm380, %v365, %v366
      %v395 = vsel %vm380, %v364, %v365
      %v396 = vsel %vm380, %v379, %v364
      %vm397 = vcmp.ge.s32.totalorder %v292, 1
      %vm398 = vcmp.ge.s32.totalorder %v293, 1
      %vm399 = vcmp.ge.s32.totalorder %v294, 1
      %vm400 = vcmp.ge.s32.totalorder %v295, 1
      %vm401 = vcmp.ge.s32.totalorder %v296, 1
      %vm402 = vcmp.ge.s32.totalorder %v297, 1
      %vm403 = vcmp.ge.s32.totalorder %v298, 1
      %vm404 = vcmp.ge.s32.totalorder %v299, 1
      %vm405 = vcmp.ge.s32.totalorder %v300, 1
      %vm406 = vcmp.ge.s32.totalorder %v301, 1
      %vm407 = vcmp.ge.s32.totalorder %v302, 1
      %vm408 = vcmp.ge.s32.totalorder %v303, 1
      %vm409 = vcmp.ge.s32.totalorder %v304, 1
      %vm410 = vcmp.ge.s32.totalorder %v305, 1
      %vm411 = vcmp.ge.s32.totalorder %v306, 1
      %vm412 = vcmp.ge.s32.totalorder %v307, 1
      %v413 = vsel %vm397, %v396, 0.0
      %v414 = vsel %vm398, %v395, 0.0
      %v415 = vsel %vm399, %v394, 0.0
      %v416 = vsel %vm400, %v393, 0.0
      %v417 = vsel %vm401, %v392, 0.0
      %v418 = vsel %vm402, %v391, 0.0
      %v419 = vsel %vm403, %v390, 0.0
      %v420 = vsel %vm404, %v389, 0.0
      %v421 = vsel %vm405, %v388, 0.0
      %v422 = vsel %vm406, %v387, 0.0
      %v423 = vsel %vm407, %v386, 0.0
      %v424 = vsel %vm408, %v385, 0.0
      %v425 = vsel %vm409, %v384, 0.0
      %v426 = vsel %vm410, %v383, 0.0
      %v427 = vsel %vm411, %v382, 0.0
      %v428 = vsel %vm412, %v381, 0.0
      %v430 = vlaneseq
      %v431 = vshrl.u32 %v430, 7
      %v432 = vsub.s32 0, %v431
      %v433 = vrot.slane %v258, %v432
      %v435 = vmul.f32 %v433, %v413
      %v436 = vmul.f32 %v433, %v414
      %v437 = vmul.f32 %v433, %v415
      %v438 = vmul.f32 %v433, %v416
      %v439 = vmul.f32 %v433, %v417
      %v440 = vmul.f32 %v433, %v418
      %v441 = vmul.f32 %v433, %v419
      %v442 = vmul.f32 %v433, %v420
      %v443 = vmul.f32 %v433, %v421
      %v444 = vmul.f32 %v433, %v422
      %v445 = vmul.f32 %v433, %v423
      %v446 = vmul.f32 %v433, %v424
      %v447 = vmul.f32 %v433, %v425
      %v448 = vmul.f32 %v433, %v426
      %v449 = vmul.f32 %v433, %v427
      %v450 = vmul.f32 %v433, %v428
      %v451 = vadd.f32 %v348, %v435
      %v452 = vadd.f32 %v349, %v436
      %v453 = vadd.f32 %v350, %v437
      %v454 = vadd.f32 %v351, %v438
      %v455 = vadd.f32 %v352, %v439
      %v456 = vadd.f32 %v353, %v440
      %v457 = vadd.f32 %v354, %v441
      %v458 = vadd.f32 %v355, %v442
      %v459 = vadd.f32 %v356, %v443
      %v460 = vadd.f32 %v357, %v444
      %v461 = vadd.f32 %v358, %v445
      %v462 = vadd.f32 %v359, %v446
      %v463 = vadd.f32 %v360, %v447
      %v464 = vadd.f32 %v361, %v448
      %v465 = vadd.f32 %v362, %v449
      %v466 = vadd.f32 %v363, %v450
      %v467 = vmul.f32 %v258, %v258
      %v468 = vrot.slane %v451, 6
      %v469 = vrot.slane %v452, 6
      %v470 = vrot.slane %v453, 6
      %v471 = vrot.slane %v454, 6
      %v472 = vrot.slane %v455, 6
      %v473 = vrot.slane %v456, 6
      %v474 = vrot.slane %v457, 6
      %v475 = vrot.slane %v458, 6
      %v476 = vrot.slane %v459, 6
      %v477 = vrot.slane %v460, 6
      %v478 = vrot.slane %v461, 6
      %v479 = vrot.slane %v462, 6
      %v480 = vrot.slane %v463, 6
      %v481 = vrot.slane %v464, 6
      %v482 = vrot.slane %v465, 6
      %v483 = vrot.slane %v466, 6
      %vm484 = vcmp.lt.s32.totalorder %v292, 2
      %v485 = vsel %vm484, %v482, %v483
      %v486 = vsel %vm484, %v481, %v482
      %v487 = vsel %vm484, %v480, %v481
      %v488 = vsel %vm484, %v479, %v480
      %v489 = vsel %vm484, %v478, %v479
      %v490 = vsel %vm484, %v477, %v478
      %v491 = vsel %vm484, %v476, %v477
      %v492 = vsel %vm484, %v475, %v476
      %v493 = vsel %vm484, %v474, %v475
      %v494 = vsel %vm484, %v473, %v474
      %v495 = vsel %vm484, %v472, %v473
      %v496 = vsel %vm484, %v471, %v472
      %v497 = vsel %vm484, %v470, %v471
      %v498 = vsel %vm484, %v469, %v470
      %v499 = vsel %vm484, %v468, %v469
      %v500 = vsel %vm484, %v483, %v468
      %vm501 = vcmp.ge.s32.totalorder %v292, 2
      %vm502 = vcmp.ge.s32.totalorder %v293, 2
      %vm503 = vcmp.ge.s32.totalorder %v294, 2
      %vm504 = vcmp.ge.s32.totalorder %v295, 2
      %vm505 = vcmp.ge.s32.totalorder %v296, 2
      %vm506 = vcmp.ge.s32.totalorder %v297, 2
      %vm507 = vcmp.ge.s32.totalorder %v298, 2
      %vm508 = vcmp.ge.s32.totalorder %v299, 2
      %vm509 = vcmp.ge.s32.totalorder %v300, 2
      %vm510 = vcmp.ge.s32.totalorder %v301, 2
      %vm511 = vcmp.ge.s32.totalorder %v302, 2
      %vm512 = vcmp.ge.s32.totalorder %v303, 2
      %vm513 = vcmp.ge.s32.totalorder %v304, 2
      %vm514 = vcmp.ge.s32.totalorder %v305, 2
      %vm515 = vcmp.ge.s32.totalorder %v306, 2
      %vm516 = vcmp.ge.s32.totalorder %v307, 2
      %v517 = vsel %vm501, %v500, 0.0
      %v518 = vsel %vm502, %v499, 0.0
      %v519 = vsel %vm503, %v498, 0.0
      %v520 = vsel %vm504, %v497, 0.0
      %v521 = vsel %vm505, %v496, 0.0
      %v522 = vsel %vm506, %v495, 0.0
      %v523 = vsel %vm507, %v494, 0.0
      %v524 = vsel %vm508, %v493, 0.0
      %v525 = vsel %vm509, %v492, 0.0
      %v526 = vsel %vm510, %v491, 0.0
      %v527 = vsel %vm511, %v490, 0.0
      %v528 = vsel %vm512, %v489, 0.0
      %v529 = vsel %vm513, %v488, 0.0
      %v530 = vsel %vm514, %v487, 0.0
      %v531 = vsel %vm515, %v486, 0.0
      %v532 = vsel %vm516, %v485, 0.0
      %v534 = vlaneseq
      %v535 = vshrl.u32 %v534, 7
      %v536 = vsub.s32 0, %v535
      %v537 = vrot.slane %v467, %v536
      %v539 = vmul.f32 %v537, %v517
      %v540 = vmul.f32 %v537, %v518
      %v541 = vmul.f32 %v537, %v519
      %v542 = vmul.f32 %v537, %v520
      %v543 = vmul.f32 %v537, %v521
      %v544 = vmul.f32 %v537, %v522
      %v545 = vmul.f32 %v537, %v523
      %v546 = vmul.f32 %v537, %v524
      %v547 = vmul.f32 %v537, %v525
      %v548 = vmul.f32 %v537, %v526
      %v549 = vmul.f32 %v537, %v527
      %v550 = vmul.f32 %v537, %v528
      %v551 = vmul.f32 %v537, %v529
      %v552 = vmul.f32 %v537, %v530
      %v553 = vmul.f32 %v537, %v531
      %v554 = vmul.f32 %v537, %v532
      %v555 = vadd.f32 %v451, %v539
      %v556 = vadd.f32 %v452, %v540
      %v557 = vadd.f32 %v453, %v541
      %v558 = vadd.f32 %v454, %v542
      %v559 = vadd.f32 %v455, %v543
      %v560 = vadd.f32 %v456, %v544
      %v561 = vadd.f32 %v457, %v545
      %v562 = vadd.f32 %v458, %v546
      %v563 = vadd.f32 %v459, %v547
      %v564 = vadd.f32 %v460, %v548
      %v565 = vadd.f32 %v461, %v549
      %v566 = vadd.f32 %v462, %v550
      %v567 = vadd.f32 %v463, %v551
      %v568 = vadd.f32 %v464, %v552
      %v569 = vadd.f32 %v465, %v553
      %v570 = vadd.f32 %v466, %v554
      %v571 = vmul.f32 %v467, %v467
      %v572 = vrot.slane %v555, 4
      %v573 = vrot.slane %v556, 4
      %v574 = vrot.slane %v557, 4
      %v575 = vrot.slane %v558, 4
      %v576 = vrot.slane %v559, 4
      %v577 = vrot.slane %v560, 4
      %v578 = vrot.slane %v561, 4
      %v579 = vrot.slane %v562, 4
      %v580 = vrot.slane %v563, 4
      %v581 = vrot.slane %v564, 4
      %v582 = vrot.slane %v565, 4
      %v583 = vrot.slane %v566, 4
      %v584 = vrot.slane %v567, 4
      %v585 = vrot.slane %v568, 4
      %v586 = vrot.slane %v569, 4
      %v587 = vrot.slane %v570, 4
      %vm588 = vcmp.lt.s32.totalorder %v292, 4
      %v589 = vsel %vm588, %v586, %v587
      %v590 = vsel %vm588, %v585, %v586
      %v591 = vsel %vm588, %v584, %v585
      %v592 = vsel %vm588, %v583, %v584
      %v593 = vsel %vm588, %v582, %v583
      %v594 = vsel %vm588, %v581, %v582
      %v595 = vsel %vm588, %v580, %v581
      %v596 = vsel %vm588, %v579, %v580
      %v597 = vsel %vm588, %v578, %v579
      %v598 = vsel %vm588, %v577, %v578
      %v599 = vsel %vm588, %v576, %v577
      %v600 = vsel %vm588, %v575, %v576
      %v601 = vsel %vm588, %v574, %v575
      %v602 = vsel %vm588, %v573, %v574
      %v603 = vsel %vm588, %v572, %v573
      %v604 = vsel %vm588, %v587, %v572
      %vm605 = vcmp.ge.s32.totalorder %v292, 4
      %vm606 = vcmp.ge.s32.totalorder %v293, 4
      %vm607 = vcmp.ge.s32.totalorder %v294, 4
      %vm608 = vcmp.ge.s32.totalorder %v295, 4
      %vm609 = vcmp.ge.s32.totalorder %v296, 4
      %vm610 = vcmp.ge.s32.totalorder %v297, 4
      %vm611 = vcmp.ge.s32.totalorder %v298, 4
      %vm612 = vcmp.ge.s32.totalorder %v299, 4
      %vm613 = vcmp.ge.s32.totalorder %v300, 4
      %vm614 = vcmp.ge.s32.totalorder %v301, 4
      %vm615 = vcmp.ge.s32.totalorder %v302, 4
      %vm616 = vcmp.ge.s32.totalorder %v303, 4
      %vm617 = vcmp.ge.s32.totalorder %v304, 4
      %vm618 = vcmp.ge.s32.totalorder %v305, 4
      %vm619 = vcmp.ge.s32.totalorder %v306, 4
      %vm620 = vcmp.ge.s32.totalorder %v307, 4
      %v621 = vsel %vm605, %v604, 0.0
      %v622 = vsel %vm606, %v603, 0.0
      %v623 = vsel %vm607, %v602, 0.0
      %v624 = vsel %vm608, %v601, 0.0
      %v625 = vsel %vm609, %v600, 0.0
      %v626 = vsel %vm610, %v599, 0.0
      %v627 = vsel %vm611, %v598, 0.0
      %v628 = vsel %vm612, %v597, 0.0
      %v629 = vsel %vm613, %v596, 0.0
      %v630 = vsel %vm614, %v595, 0.0
      %v631 = vsel %vm615, %v594, 0.0
      %v632 = vsel %vm616, %v593, 0.0
      %v633 = vsel %vm617, %v592, 0.0
      %v634 = vsel %vm618, %v591, 0.0
      %v635 = vsel %vm619, %v590, 0.0
      %v636 = vsel %vm620, %v589, 0.0
      %v638 = vlaneseq
      %v639 = vshrl.u32 %v638, 7
      %v640 = vsub.s32 0, %v639
      %v641 = vrot.slane %v571, %v640
      %v643 = vmul.f32 %v641, %v621
      %v644 = vmul.f32 %v641, %v622
      %v645 = vmul.f32 %v641, %v623
      %v646 = vmul.f32 %v641, %v624
      %v647 = vmul.f32 %v641, %v625
      %v648 = vmul.f32 %v641, %v626
      %v649 = vmul.f32 %v641, %v627
      %v650 = vmul.f32 %v641, %v628
      %v651 = vmul.f32 %v641, %v629
      %v652 = vmul.f32 %v641, %v630
      %v653 = vmul.f32 %v641, %v631
      %v654 = vmul.f32 %v641, %v632
      %v655 = vmul.f32 %v641, %v633
      %v656 = vmul.f32 %v641, %v634
      %v657 = vmul.f32 %v641, %v635
      %v658 = vmul.f32 %v641, %v636
      %v659 = vadd.f32 %v555, %v643
      %v660 = vadd.f32 %v556, %v644
      %v661 = vadd.f32 %v557, %v645
      %v662 = vadd.f32 %v558, %v646
      %v663 = vadd.f32 %v559, %v647
      %v664 = vadd.f32 %v560, %v648
      %v665 = vadd.f32 %v561, %v649
      %v666 = vadd.f32 %v562, %v650
      %v667 = vadd.f32 %v563, %v651
      %v668 = vadd.f32 %v564, %v652
      %v669 = vadd.f32 %v565, %v653
      %v670 = vadd.f32 %v566, %v654
      %v671 = vadd.f32 %v567, %v655
      %v672 = vadd.f32 %v568, %v656
      %v673 = vadd.f32 %v569, %v657
      %v674 = vadd.f32 %v570, %v658
      %v675 = vmul.f32 %v571, %v571
      %vm676 = vcmp.ge.s32.totalorder %v292, 8
      %vm677 = vcmp.ge.s32.totalorder %v293, 8
      %vm678 = vcmp.ge.s32.totalorder %v294, 8
      %vm679 = vcmp.ge.s32.totalorder %v295, 8
      %vm680 = vcmp.ge.s32.totalorder %v296, 8
      %vm681 = vcmp.ge.s32.totalorder %v297, 8
      %vm682 = vcmp.ge.s32.totalorder %v298, 8
      %vm683 = vcmp.ge.s32.totalorder %v299, 8
      %vm684 = vcmp.ge.s32.totalorder %v300, 8
      %vm685 = vcmp.ge.s32.totalorder %v301, 8
      %vm686 = vcmp.ge.s32.totalorder %v302, 8
      %vm687 = vcmp.ge.s32.totalorder %v303, 8
      %vm688 = vcmp.ge.s32.totalorder %v304, 8
      %vm689 = vcmp.ge.s32.totalorder %v305, 8
      %vm690 = vcmp.ge.s32.totalorder %v306, 8
      %vm691 = vcmp.ge.s32.totalorder %v307, 8
      %v692 = vsel %vm676, %v674, 0.0
      %v693 = vsel %vm677, %v659, 0.0
      %v694 = vsel %vm678, %v660, 0.0
      %v695 = vsel %vm679, %v661, 0.0
      %v696 = vsel %vm680, %v662, 0.0
      %v697 = vsel %vm681, %v663, 0.0
      %v698 = vsel %vm682, %v664, 0.0
      %v699 = vsel %vm683, %v665, 0.0
      %v700 = vsel %vm684, %v666, 0.0
      %v701 = vsel %vm685, %v667, 0.0
      %v702 = vsel %vm686, %v668, 0.0
      %v703 = vsel %vm687, %v669, 0.0
      %v704 = vsel %vm688, %v670, 0.0
      %v705 = vsel %vm689, %v671, 0.0
      %v706 = vsel %vm690, %v672, 0.0
      %v707 = vsel %vm691, %v673, 0.0
      %v709 = vlaneseq
      %v710 = vshrl.u32 %v709, 7
      %v711 = vsub.s32 0, %v710
      %v712 = vrot.slane %v675, %v711
      %v714 = vmul.f32 %v712, %v692
      %v715 = vmul.f32 %v712, %v693
      %v716 = vmul.f32 %v712, %v694
      %v717 = vmul.f32 %v712, %v695
      %v718 = vmul.f32 %v712, %v696
      %v719 = vmul.f32 %v712, %v697
      %v720 = vmul.f32 %v712, %v698
      %v721 = vmul.f32 %v712, %v699
      %v722 = vmul.f32 %v712, %v700
      %v723 = vmul.f32 %v712, %v701
      %v724 = vmul.f32 %v712, %v702
      %v725 = vmul.f32 %v712, %v703
      %v726 = vmul.f32 %v712, %v704
      %v727 = vmul.f32 %v712, %v705
      %v728 = vmul.f32 %v712, %v706
      %v729 = vmul.f32 %v712, %v707
      %v730 = vadd.f32 %v659, %v714
      %v731 = vadd.f32 %v660, %v715
      %v732 = vadd.f32 %v661, %v716
      %v733 = vadd.f32 %v662, %v717
      %v734 = vadd.f32 %v663, %v718
      %v735 = vadd.f32 %v664, %v719
      %v736 = vadd.f32 %v665, %v720
      %v737 = vadd.f32 %v666, %v721
      %v738 = vadd.f32 %v667, %v722
      %v739 = vadd.f32 %v668, %v723
      %v740 = vadd.f32 %v669, %v724
      %v741 = vadd.f32 %v670, %v725
      %v742 = vadd.f32 %v671, %v726
      %v743 = vadd.f32 %v672, %v727
      %v744 = vadd.f32 %v673, %v728
      %v745 = vadd.f32 %v674, %v729
      %v746 = vmul.f32 %v675, %v675
      %vm747 = vcmp.ge.s32.totalorder %v292, 16
      %vm748 = vcmp.ge.s32.totalorder %v293, 16
      %vm749 = vcmp.ge.s32.totalorder %v294, 16
      %vm750 = vcmp.ge.s32.totalorder %v295, 16
      %vm751 = vcmp.ge.s32.totalorder %v296, 16
      %vm752 = vcmp.ge.s32.totalorder %v297, 16
      %vm753 = vcmp.ge.s32.totalorder %v298, 16
      %vm754 = vcmp.ge.s32.totalorder %v299, 16
      %vm755 = vcmp.ge.s32.totalorder %v300, 16
      %vm756 = vcmp.ge.s32.totalorder %v301, 16
      %vm757 = vcmp.ge.s32.totalorder %v302, 16
      %vm758 = vcmp.ge.s32.totalorder %v303, 16
      %vm759 = vcmp.ge.s32.totalorder %v304, 16
      %vm760 = vcmp.ge.s32.totalorder %v305, 16
      %vm761 = vcmp.ge.s32.totalorder %v306, 16
      %vm762 = vcmp.ge.s32.totalorder %v307, 16
      %v763 = vsel %vm747, %v744, 0.0
      %v764 = vsel %vm748, %v745, 0.0
      %v765 = vsel %vm749, %v730, 0.0
      %v766 = vsel %vm750, %v731, 0.0
      %v767 = vsel %vm751, %v732, 0.0
      %v768 = vsel %vm752, %v733, 0.0
      %v769 = vsel %vm753, %v734, 0.0
      %v770 = vsel %vm754, %v735, 0.0
      %v771 = vsel %vm755, %v736, 0.0
      %v772 = vsel %vm756, %v737, 0.0
      %v773 = vsel %vm757, %v738, 0.0
      %v774 = vsel %vm758, %v739, 0.0
      %v775 = vsel %vm759, %v740, 0.0
      %v776 = vsel %vm760, %v741, 0.0
      %v777 = vsel %vm761, %v742, 0.0
      %v778 = vsel %vm762, %v743, 0.0
      %v780 = vlaneseq
      %v781 = vshrl.u32 %v780, 7
      %v782 = vsub.s32 0, %v781
      %v783 = vrot.slane %v746, %v782
      %v785 = vmul.f32 %v783, %v763
      %v786 = vmul.f32 %v783, %v764
      %v787 = vmul.f32 %v783, %v765
      %v788 = vmul.f32 %v783, %v766
      %v789 = vmul.f32 %v783, %v767
      %v790 = vmul.f32 %v783, %v768
      %v791 = vmul.f32 %v783, %v769
      %v792 = vmul.f32 %v783, %v770
      %v793 = vmul.f32 %v783, %v771
      %v794 = vmul.f32 %v783, %v772
      %v795 = vmul.f32 %v783, %v773
      %v796 = vmul.f32 %v783, %v774
      %v797 = vmul.f32 %v783, %v775
      %v798 = vmul.f32 %v783, %v776
      %v799 = vmul.f32 %v783, %v777
      %v800 = vmul.f32 %v783, %v778
      %v801 = vadd.f32 %v730, %v785
      %v802 = vadd.f32 %v731, %v786
      %v803 = vadd.f32 %v732, %v787
      %v804 = vadd.f32 %v733, %v788
      %v805 = vadd.f32 %v734, %v789
      %v806 = vadd.f32 %v735, %v790
      %v807 = vadd.f32 %v736, %v791
      %v808 = vadd.f32 %v737, %v792
      %v809 = vadd.f32 %v738, %v793
      %v810 = vadd.f32 %v739, %v794
      %v811 = vadd.f32 %v740, %v795
      %v812 = vadd.f32 %v741, %v796
      %v813 = vadd.f32 %v742, %v797
      %v814 = vadd.f32 %v743, %v798
      %v815 = vadd.f32 %v744, %v799
      %v816 = vadd.f32 %v745, %v800
      %v817 = vmul.f32 %v746, %v746
      %vm818 = vcmp.ge.s32.totalorder %v292, 32
      %vm819 = vcmp.ge.s32.totalorder %v293, 32
      %vm820 = vcmp.ge.s32.totalorder %v294, 32
      %vm821 = vcmp.ge.s32.totalorder %v295, 32
      %vm822 = vcmp.ge.s32.totalorder %v296, 32
      %vm823 = vcmp.ge.s32.totalorder %v297, 32
      %vm824 = vcmp.ge.s32.totalorder %v298, 32
      %vm825 = vcmp.ge.s32.totalorder %v299, 32
      %vm826 = vcmp.ge.s32.totalorder %v300, 32
      %vm827 = vcmp.ge.s32.totalorder %v301, 32
      %vm828 = vcmp.ge.s32.totalorder %v302, 32
      %vm829 = vcmp.ge.s32.totalorder %v303, 32
      %vm830 = vcmp.ge.s32.totalorder %v304, 32
      %vm831 = vcmp.ge.s32.totalorder %v305, 32
      %vm832 = vcmp.ge.s32.totalorder %v306, 32
      %vm833 = vcmp.ge.s32.totalorder %v307, 32
      %v834 = vsel %vm818, %v813, 0.0
      %v835 = vsel %vm819, %v814, 0.0
      %v836 = vsel %vm820, %v815, 0.0
      %v837 = vsel %vm821, %v816, 0.0
      %v838 = vsel %vm822, %v801, 0.0
      %v839 = vsel %vm823, %v802, 0.0
      %v840 = vsel %vm824, %v803, 0.0
      %v841 = vsel %vm825, %v804, 0.0
      %v842 = vsel %vm826, %v805, 0.0
      %v843 = vsel %vm827, %v806, 0.0
      %v844 = vsel %vm828, %v807, 0.0
      %v845 = vsel %vm829, %v808, 0.0
      %v846 = vsel %vm830, %v809, 0.0
      %v847 = vsel %vm831, %v810, 0.0
      %v848 = vsel %vm832, %v811, 0.0
      %v849 = vsel %vm833, %v812, 0.0
      %v851 = vlaneseq
      %v852 = vshrl.u32 %v851, 7
      %v853 = vsub.s32 0, %v852
      %v854 = vrot.slane %v817, %v853
      %v856 = vmul.f32 %v854, %v834
      %v857 = vmul.f32 %v854, %v835
      %v858 = vmul.f32 %v854, %v836
      %v859 = vmul.f32 %v854, %v837
      %v860 = vmul.f32 %v854, %v838
      %v861 = vmul.f32 %v854, %v839
      %v862 = vmul.f32 %v854, %v840
      %v863 = vmul.f32 %v854, %v841
      %v864 = vmul.f32 %v854, %v842
      %v865 = vmul.f32 %v854, %v843
      %v866 = vmul.f32 %v854, %v844
      %v867 = vmul.f32 %v854, %v845
      %v868 = vmul.f32 %v854, %v846
      %v869 = vmul.f32 %v854, %v847
      %v870 = vmul.f32 %v854, %v848
      %v871 = vmul.f32 %v854, %v849
      %v872 = vadd.f32 %v801, %v856
      %v873 = vadd.f32 %v802, %v857
      %v874 = vadd.f32 %v803, %v858
      %v875 = vadd.f32 %v804, %v859
      %v876 = vadd.f32 %v805, %v860
      %v877 = vadd.f32 %v806, %v861
      %v878 = vadd.f32 %v807, %v862
      %v879 = vadd.f32 %v808, %v863
      %v880 = vadd.f32 %v809, %v864
      %v881 = vadd.f32 %v810, %v865
      %v882 = vadd.f32 %v811, %v866
      %v883 = vadd.f32 %v812, %v867
      %v884 = vadd.f32 %v813, %v868
      %v885 = vadd.f32 %v814, %v869
      %v886 = vadd.f32 %v815, %v870
      %v887 = vadd.f32 %v816, %v871
      %v888 = vmul.f32 %v817, %v817
      %vm889 = vcmp.ge.s32.totalorder %v292, 64
      %vm890 = vcmp.ge.s32.totalorder %v293, 64
      %vm891 = vcmp.ge.s32.totalorder %v294, 64
      %vm892 = vcmp.ge.s32.totalorder %v295, 64
      %vm893 = vcmp.ge.s32.totalorder %v296, 64
      %vm894 = vcmp.ge.s32.totalorder %v297, 64
      %vm895 = vcmp.ge.s32.totalorder %v298, 64
      %vm896 = vcmp.ge.s32.totalorder %v299, 64
      %vm897 = vcmp.ge.s32.totalorder %v300, 64
      %vm898 = vcmp.ge.s32.totalorder %v301, 64
      %vm899 = vcmp.ge.s32.totalorder %v302, 64
      %vm900 = vcmp.ge.s32.totalorder %v303, 64
      %vm901 = vcmp.ge.s32.totalorder %v304, 64
      %vm902 = vcmp.ge.s32.totalorder %v305, 64
      %vm903 = vcmp.ge.s32.totalorder %v306, 64
      %vm904 = vcmp.ge.s32.totalorder %v307, 64
      %v905 = vsel %vm889, %v880, 0.0
      %v906 = vsel %vm890, %v881, 0.0
      %v907 = vsel %vm891, %v882, 0.0
      %v908 = vsel %vm892, %v883, 0.0
      %v909 = vsel %vm893, %v884, 0.0
      %v910 = vsel %vm894, %v885, 0.0
      %v911 = vsel %vm895, %v886, 0.0
      %v912 = vsel %vm896, %v887, 0.0
      %v913 = vsel %vm897, %v872, 0.0
      %v914 = vsel %vm898, %v873, 0.0
      %v915 = vsel %vm899, %v874, 0.0
      %v916 = vsel %vm900, %v875, 0.0
      %v917 = vsel %vm901, %v876, 0.0
      %v918 = vsel %vm902, %v877, 0.0
      %v919 = vsel %vm903, %v878, 0.0
      %v920 = vsel %vm904, %v879, 0.0
      %v922 = vlaneseq
      %v923 = vshrl.u32 %v922, 7
      %v924 = vsub.s32 0, %v923
      %v925 = vrot.slane %v888, %v924
      %v927 = vmul.f32 %v925, %v905
      %v928 = vmul.f32 %v925, %v906
      %v929 = vmul.f32 %v925, %v907
      %v930 = vmul.f32 %v925, %v908
      %v931 = vmul.f32 %v925, %v909
      %v932 = vmul.f32 %v925, %v910
      %v933 = vmul.f32 %v925, %v911
      %v934 = vmul.f32 %v925, %v912
      %v935 = vmul.f32 %v925, %v913
      %v936 = vmul.f32 %v925, %v914
      %v937 = vmul.f32 %v925, %v915
      %v938 = vmul.f32 %v925, %v916
      %v939 = vmul.f32 %v925, %v917
      %v940 = vmul.f32 %v925, %v918
      %v941 = vmul.f32 %v925, %v919
      %v942 = vmul.f32 %v925, %v920
      %v943 = vadd.f32 %v872, %v927
      %v944 = vadd.f32 %v873, %v928
      %v945 = vadd.f32 %v874, %v929
      %v946 = vadd.f32 %v875, %v930
      %v947 = vadd.f32 %v876, %v931
      %v948 = vadd.f32 %v877, %v932
      %v949 = vadd.f32 %v878, %v933
      %v950 = vadd.f32 %v879, %v934
      %v951 = vadd.f32 %v880, %v935
      %v952 = vadd.f32 %v881, %v936
      %v953 = vadd.f32 %v882, %v937
      %v954 = vadd.f32 %v883, %v938
      %v955 = vadd.f32 %v884, %v939
      %v956 = vadd.f32 %v885, %v940
      %v957 = vadd.f32 %v886, %v941
      %v958 = vadd.f32 %v887, %v942
      %vm959 = vcmask 64519
      %960 = vst.msk [vmem:[#allocation2 - $0x7] sm:$0x80] %vm959, %v958
      %v961 = vxor.u32 %v275, 2147483648
      %v962 = vxor.u32 %v276, 2147483648
      %v963 = vxor.u32 %v277, 2147483648
      %v964 = vxor.u32 %v278, 2147483648
      %v965 = vxor.u32 %v279, 2147483648
      %v966 = vxor.u32 %v280, 2147483648
      %v967 = vxor.u32 %v281, 2147483648
      %v968 = vxor.u32 %v282, 2147483648
      %v969 = vxor.u32 %v283, 2147483648
      %v970 = vxor.u32 %v284, 2147483648
      %v971 = vxor.u32 %v285, 2147483648
      %v972 = vxor.u32 %v286, 2147483648
      %v973 = vxor.u32 %v287, 2147483648
      %v974 = vxor.u32 %v288, 2147483648
      %v975 = vxor.u32 %v289, 2147483648
      %v976 = vxor.u32 %v290, 2147483648
      %v977 = vmul.f32 %v961, 1.442695
      %v978 = vpow.pop %v977
      %v979 = vmul.f32 %v962, 1.442695
      %v980 = vpow.pop %v979
      %v981 = vmul.f32 %v963, 1.442695
      %v982 = vpow.pop %v981
      %v983 = vmul.f32 %v964, 1.442695
      %v984 = vpow.pop %v983
      %v985 = vmul.f32 %v965, 1.442695
      %v986 = vpow.pop %v985
      %v987 = vmul.f32 %v966, 1.442695
      %v988 = vpow.pop %v987
      %v989 = vmul.f32 %v967, 1.442695
      %v990 = vpow.pop %v989
      %v991 = vmul.f32 %v968, 1.442695
      %v992 = vpow.pop %v991
      %v993 = vmul.f32 %v969, 1.442695
      %v994 = vpow.pop %v993
      %v995 = vmul.f32 %v970, 1.442695
      %v996 = vpow.pop %v995
      %v997 = vmul.f32 %v971, 1.442695
      %v998 = vpow.pop %v997
      %v999 = vmul.f32 %v972, 1.442695
      %v1000 = vpow.pop %v999
      %v1001 = vmul.f32 %v973, 1.442695
      %v1002 = vpow.pop %v1001
      %v1003 = vmul.f32 %v974, 1.442695
      %v1004 = vpow.pop %v1003
      %v1005 = vmul.f32 %v975, 1.442695
      %v1006 = vpow.pop %v1005
      %v1007 = vmul.f32 %v976, 1.442695
      %v1008 = vpow.pop %v1007
      %v1009 = vadd.f32 %v978, 1.0
      %v1010 = vadd.f32 %v980, 1.0
      %v1011 = vadd.f32 %v982, 1.0
      %v1012 = vadd.f32 %v984, 1.0
      %v1013 = vadd.f32 %v986, 1.0
      %v1014 = vadd.f32 %v988, 1.0
      %v1015 = vadd.f32 %v990, 1.0
      %v1016 = vadd.f32 %v992, 1.0
      %v1017 = vadd.f32 %v994, 1.0
      %v1018 = vadd.f32 %v996, 1.0
      %v1019 = vadd.f32 %v998, 1.0
      %v1020 = vadd.f32 %v1000, 1.0
      %v1021 = vadd.f32 %v1002, 1.0
      %v1022 = vadd.f32 %v1004, 1.0
      %v1023 = vadd.f32 %v1006, 1.0
      %v1024 = vadd.f32 %v1008, 1.0
      %v1025 = vrcp.pop %v1009
      %v1026 = vmul.f32 1.0, %v1025
      %v1027 = vrcp.pop %v1010
      %v1028 = vmul.f32 1.0, %v1027
      %v1029 = vrcp.pop %v1011
      %v1030 = vmul.f32 1.0, %v1029
      %v1031 = vrcp.pop %v1012
      %v1032 = vmul.f32 1.0, %v1031
      %v1033 = vrcp.pop %v1013
      %v1034 = vmul.f32 1.0, %v1033
      %v1035 = vrcp.pop %v1014
      %v1036 = vmul.f32 1.0, %v1035
      %v1037 = vrcp.pop %v1015
      %v1038 = vmul.f32 1.0, %v1037
      %v1039 = vrcp.pop %v1016
      %v1040 = vmul.f32 1.0, %v1039
      %v1041 = vrcp.pop %v1017
      %v1042 = vmul.f32 1.0, %v1041
      %v1043 = vrcp.pop %v1018
      %v1044 = vmul.f32 1.0, %v1043
      %v1045 = vrcp.pop %v1019
      %v1046 = vmul.f32 1.0, %v1045
      %v1047 = vrcp.pop %v1020
      %v1048 = vmul.f32 1.0, %v1047
      %v1049 = vrcp.pop %v1021
      %v1050 = vmul.f32 1.0, %v1049
      %v1051 = vrcp.pop %v1022
      %v1052 = vmul.f32 1.0, %v1051
      %v1053 = vrcp.pop %v1023
      %v1054 = vmul.f32 1.0, %v1053
      %v1055 = vrcp.pop %v1024
      %v1056 = vmul.f32 1.0, %v1055
      %v1057 = vmul.f32 %v275, %v1026
      %v1058 = vmul.f32 %v276, %v1028
      %v1059 = vmul.f32 %v277, %v1030
      %v1060 = vmul.f32 %v278, %v1032
      %v1061 = vmul.f32 %v279, %v1034
      %v1062 = vmul.f32 %v280, %v1036
      %v1063 = vmul.f32 %v281, %v1038
      %v1064 = vmul.f32 %v282, %v1040
      %v1065 = vmul.f32 %v283, %v1042
      %v1066 = vmul.f32 %v284, %v1044
      %v1067 = vmul.f32 %v285, %v1046
      %v1068 = vmul.f32 %v286, %v1048
      %v1069 = vmul.f32 %v287, %v1050
      %v1070 = vmul.f32 %v288, %v1052
      %v1071 = vmul.f32 %v289, %v1054
      %v1072 = vmul.f32 %v290, %v1056
      %v1073 = vmul.f32 %v943, %v1057
      %v1074 = vmul.f32 %v944, %v1058
      %v1075 = vmul.f32 %v945, %v1059
      %v1076 = vmul.f32 %v946, %v1060
      %v1077 = vmul.f32 %v947, %v1061
      %v1078 = vmul.f32 %v948, %v1062
      %v1079 = vmul.f32 %v949, %v1063
      %v1080 = vmul.f32 %v950, %v1064
      %v1081 = vmul.f32 %v951, %v1065
      %v1082 = vmul.f32 %v952, %v1066
      %v1083 = vmul.f32 %v953, %v1067
      %v1084 = vmul.f32 %v954, %v1068
      %v1085 = vmul.f32 %v955, %v1069
      %v1086 = vmul.f32 %v956, %v1070
      %v1087 = vmul.f32 %v957, %v1071
      %v1088 = vmul.f32 %v958, %v1072
      %vm1089 = vcmask 64512
      %1090 = vst.msk [vmem:[%s244] sm:$0xff] %vm1089, %v1073
      %1091 = vst.msk [vmem:[%s244 + $0x8] sm:$0xff] %vm1089, %v1074
      %1092 = vst.msk [vmem:[%s244 + $0x10] sm:$0xff] %vm1089, %v1075
      %1093 = vst.msk [vmem:[%s244 + $0x18] sm:$0xff] %vm1089, %v1076
      %1094 = vst.msk [vmem:[%s244 + $0x20] sm:$0xff] %vm1089, %v1077
      %1095 = vst.msk [vmem:[%s244 + $0x28] sm:$0xff] %vm1089, %v1078
      %1096 = vst.msk [vmem:[%s244 + $0x30] sm:$0xff] %vm1089, %v1079
      %1097 = vst.msk [vmem:[%s244 + $0x38] sm:$0xff] %vm1089, %v1080
      %1098 = vst.msk [vmem:[%s244 + $0x40] sm:$0xff] %vm1089, %v1081
      %1099 = vst.msk [vmem:[%s244 + $0x48] sm:$0xff] %vm1089, %v1082
      %1100 = vst.msk [vmem:[%s244 + $0x50] sm:$0xff] %vm1089, %v1083
      %1101 = vst.msk [vmem:[%s244 + $0x58] sm:$0xff] %vm1089, %v1084
      %1102 = vst.msk [vmem:[%s244 + $0x60] sm:$0xff] %vm1089, %v1085
      %1103 = vst.msk [vmem:[%s244 + $0x68] sm:$0xff] %vm1089, %v1086
      %1104 = vst.msk [vmem:[%s244 + $0x70] sm:$0xff] %vm1089, %v1087
      %1105 = vst.msk [vmem:[%s244 + $0x78] sm:$0xff] %vm1089, %v1088
      %s1106 = smul.u32 16, %s19
      %p1107 = scmp.lt.s32.totalorder %s18, 1
      %s1108 = scalar_select %p1107, %s18, 1
      %p1109 = scmp.lt.s32.totalorder %s1106, 31
      %s1110 = scalar_select %p1109, %s1106, 31
      %s1111 = smul.addr %s1108, 32
      %s1112 = sadd.s32 %s1110, %s1111
      %s1113 = smul.addr %s1112, 8
      %s1114 = scalar_lea.vmem %s3, %s1113
      // Predicated region
      $region37: #{hv_lca_with_mamba.6} parent=31 // pred_check
        %p1115 = pneg %p123
      $region38: #{hv_lca_with_mamba.6} parent=31 // pred_check_branch
        %1117 = sbr.rel (%p1115) target = $region40
      $region39: #{hv_lca_with_mamba.6} parent=31 // pred_region
        %s1118 = smul.u32 16, %s19
      $region40: #{hv_lca_with_mamba.6} parent=31 // pred_fallthru
        _
    $region32: #{hv_lca_with_mamba.6} parent=5 // pred_fallthru
      _
    %p1119 = scmp.le.s32.totalorder 2, %s9
    // Predicated region
    $region41: #{hv_lca_with_mamba.6} parent=5 // pred_check
      %p1120 = pneg %p1119
    $region42: #{hv_lca_with_mamba.6} parent=5 // pred_check_branch
      %1122 = sbr.rel (%p1120) target = $region44
    $region43: #{hv_lca_with_mamba.6} parent=5 // pred_region
      %s1123 = ssub.s32 %s9, 2
      // Predicated region
      $region45: #{hv_lca_with_mamba.6} parent=43 // pred_check
        %p1124 = pneg %p129
      $region46: #{hv_lca_with_mamba.6} parent=43 // pred_check_branch
        %1126 = sbr.rel (%p1124) target = $region48
      $region47: #{hv_lca_with_mamba.6} parent=43 // pred_region
        %s1127 = smul.u32 16, %s21
        %p1128 = scmp.lt.s32.totalorder %s20, 1
        %s1129 = scalar_select %p1128, %s20, 1
        %p1130 = scmp.lt.s32.totalorder %s1127, 31
        %s1131 = scalar_select %p1130, %s1127, 31
        %s1132 = smul.addr %s1129, 32
        %s1133 = sadd.s32 %s1131, %s1132
        %s1134 = smul.addr %s1133, 8
        %s1135 = scalar_lea.vmem %s3, %s1134
      $region48: #{hv_lca_with_mamba.6} parent=43 // pred_fallthru
        _
    $region44: #{hv_lca_with_mamba.6} parent=5 // pred_fallthru
      _
  $region6: #{hv_lca_with_mamba.6} parent=0 // loop_footer
    %s13 = sadd.s32 1, %s9
  $region7: #{hv_lca_with_mamba.6} parent=0 // loop_footer_branch
    %8 = sbr.rel target = $region3
  $region8: #{hv_lca_with_mamba.6} parent=0 // loop_exit
    _

// kernel: hv_lca_with_mamba.7
$region0: #{hv_lca_with_mamba.7}
  #allocation0 [shape = 'u32[]', space=smem, size = 0x4, offset = 0x4, fixed_abs, tag = 'smem constant byte address 0x4 - core index']
  #allocation1 [shape = 'u32[144,128]{1,0:T(1,128)}', space=vmem, size = 0x12000, scoped, tag = 'internal scratch']
  %s0 = inlined_call_operand.vmem [shape: f32[512,8], index: 0, kind: input, shape index: {}]
  %s1 = inlined_call_operand.vmem [shape: f32[512,4], index: 1, kind: input, shape index: {}]
  %s2 = inlined_call_operand.vmem [shape: f32[1,4], index: 2, kind: input, shape index: {}]
  %s3 = inlined_call_operand.vmem [shape: f32[8,4], index: 3, kind: input, shape index: {}]
  %s4 = inlined_call_operand.vmem [shape: f32[4,20], index: 4, kind: input, shape index: {}]
  %s5 = inlined_call_operand.vmem [shape: f32[512,20], index: 5, kind: output, shape index: {}]
  %s6 = sld [smem:[#allocation0]]
  $region30: #{hv_lca_with_mamba.7} parent=0
    _
  %s8 = ssub.s32 1, %s6
  %s9 = scalar_select 0, %s8, %s6
  // Predicated region
  $region2: #{hv_lca_with_mamba.7} parent=0 // pred_check
    _
  $region3: #{hv_lca_with_mamba.7} parent=0 // pred_check_branch
    %11 = sbr.rel (0) target = $region5
  $region4: #{hv_lca_with_mamba.7} parent=0 // pred_region
    _
  $region5: #{hv_lca_with_mamba.7} parent=0 // pred_fallthru
    _
  // Predicated region
  $region6: #{hv_lca_with_mamba.7} parent=0 // pred_check
    _
  $region7: #{hv_lca_with_mamba.7} parent=0 // pred_check_branch
    %13 = sbr.rel (0) target = $region9
  $region8: #{hv_lca_with_mamba.7} parent=0 // pred_region
    _
  $region9: #{hv_lca_with_mamba.7} parent=0 // pred_fallthru
    _
  // Predicated region
  $region10: #{hv_lca_with_mamba.7} parent=0 // pred_check
    _
  $region11: #{hv_lca_with_mamba.7} parent=0 // pred_check_branch
    %15 = sbr.rel (0) target = $region13
  $region12: #{hv_lca_with_mamba.7} parent=0 // pred_region
    _
  $region13: #{hv_lca_with_mamba.7} parent=0 // pred_fallthru
    _
  // Predicated region
  $region14: #{hv_lca_with_mamba.7} parent=0 // pred_check
    _
  $region15: #{hv_lca_with_mamba.7} parent=0 // pred_check_branch
    %17 = sbr.rel (0) target = $region17
  $region16: #{hv_lca_with_mamba.7} parent=0 // pred_region
    _
  $region17: #{hv_lca_with_mamba.7} parent=0 // pred_fallthru
    _
  // Predicated region
  $region18: #{hv_lca_with_mamba.7} parent=0 // pred_check
    _
  $region19: #{hv_lca_with_mamba.7} parent=0 // pred_check_branch
    %19 = sbr.rel (0) target = $region21
  $region20: #{hv_lca_with_mamba.7} parent=0 // pred_region
    _
  $region21: #{hv_lca_with_mamba.7} parent=0 // pred_fallthru
    _
  %v20 = vld [vmem:[%s0] sm:$0xff]
  %v21 = vld [vmem:[%s0 + $0x8] sm:$0xff]
  %v22 = vld [vmem:[%s0 + $0x10] sm:$0xff]
  %v23 = vld [vmem:[%s0 + $0x18] sm:$0xff]
  %v24 = vld [vmem:[%s0 + $0x20] sm:$0xff]
  %v25 = vld [vmem:[%s0 + $0x28] sm:$0xff]
  %v26 = vld [vmem:[%s0 + $0x30] sm:$0xff]
  %v27 = vld [vmem:[%s0 + $0x38] sm:$0xff]
  %v28 = vld [vmem:[%s0 + $0x40] sm:$0xff]
  %v29 = vld [vmem:[%s0 + $0x48] sm:$0xff]
  %v30 = vld [vmem:[%s0 + $0x50] sm:$0xff]
  %v31 = vld [vmem:[%s0 + $0x58] sm:$0xff]
  %v32 = vld [vmem:[%s0 + $0x60] sm:$0xff]
  %v33 = vld [vmem:[%s0 + $0x68] sm:$0xff]
  %v34 = vld [vmem:[%s0 + $0x70] sm:$0xff]
  %v35 = vld [vmem:[%s0 + $0x78] sm:$0xff]
  %v36 = vld [vmem:[%s0 + $0x80] sm:$0xff]
  %v37 = vld [vmem:[%s0 + $0x88] sm:$0xff]
  %v38 = vld [vmem:[%s0 + $0x90] sm:$0xff]
  %v39 = vld [vmem:[%s0 + $0x98] sm:$0xff]
  %v40 = vld [vmem:[%s0 + $0xa0] sm:$0xff]
  %v41 = vld [vmem:[%s0 + $0xa8] sm:$0xff]
  %v42 = vld [vmem:[%s0 + $0xb0] sm:$0xff]
  %v43 = vld [vmem:[%s0 + $0xb8] sm:$0xff]
  %v44 = vld [vmem:[%s0 + $0xc0] sm:$0xff]
  %v45 = vld [vmem:[%s0 + $0xc8] sm:$0xff]
  %v46 = vld [vmem:[%s0 + $0xd0] sm:$0xff]
  %v47 = vld [vmem:[%s0 + $0xd8] sm:$0xff]
  %v48 = vld [vmem:[%s0 + $0xe0] sm:$0xff]
  %v49 = vld [vmem:[%s0 + $0xe8] sm:$0xff]
  %v50 = vld [vmem:[%s0 + $0xf0] sm:$0xff]
  %v51 = vld [vmem:[%s0 + $0xf8] sm:$0xff]
  %v52 = vld [vmem:[%s0 + $0x100] sm:$0xff]
  %v53 = vld [vmem:[%s0 + $0x108] sm:$0xff]
  %v54 = vld [vmem:[%s0 + $0x110] sm:$0xff]
  %v55 = vld [vmem:[%s0 + $0x118] sm:$0xff]
  %v56 = vld [vmem:[%s0 + $0x120] sm:$0xff]
  %v57 = vld [vmem:[%s0 + $0x128] sm:$0xff]
  %v58 = vld [vmem:[%s0 + $0x130] sm:$0xff]
  %v59 = vld [vmem:[%s0 + $0x138] sm:$0xff]
  %v60 = vld [vmem:[%s0 + $0x140] sm:$0xff]
  %v61 = vld [vmem:[%s0 + $0x148] sm:$0xff]
  %v62 = vld [vmem:[%s0 + $0x150] sm:$0xff]
  %v63 = vld [vmem:[%s0 + $0x158] sm:$0xff]
  %v64 = vld [vmem:[%s0 + $0x160] sm:$0xff]
  %v65 = vld [vmem:[%s0 + $0x168] sm:$0xff]
  %v66 = vld [vmem:[%s0 + $0x170] sm:$0xff]
  %v67 = vld [vmem:[%s0 + $0x178] sm:$0xff]
  %v68 = vld [vmem:[%s0 + $0x180] sm:$0xff]
  %v69 = vld [vmem:[%s0 + $0x188] sm:$0xff]
  %v70 = vld [vmem:[%s0 + $0x190] sm:$0xff]
  %v71 = vld [vmem:[%s0 + $0x198] sm:$0xff]
  %v72 = vld [vmem:[%s0 + $0x1a0] sm:$0xff]
  %v73 = vld [vmem:[%s0 + $0x1a8] sm:$0xff]
  %v74 = vld [vmem:[%s0 + $0x1b0] sm:$0xff]
  %v75 = vld [vmem:[%s0 + $0x1b8] sm:$0xff]
  %v76 = vld [vmem:[%s0 + $0x1c0] sm:$0xff]
  %v77 = vld [vmem:[%s0 + $0x1c8] sm:$0xff]
  %v78 = vld [vmem:[%s0 + $0x1d0] sm:$0xff]
  %v79 = vld [vmem:[%s0 + $0x1d8] sm:$0xff]
  %v80 = vld [vmem:[%s0 + $0x1e0] sm:$0xff]
  %v81 = vld [vmem:[%s0 + $0x1e8] sm:$0xff]
  %v82 = vld [vmem:[%s0 + $0x1f0] sm:$0xff]
  %v83 = vld [vmem:[%s0 + $0x1f8] sm:$0xff]
  %v84 = vld [vmem:[%s3] sm:$0xff]
  %v85 = vld [vmem:[%s1] sm:$0xff]
  %v86 = vld [vmem:[%s1 + $0x8] sm:$0xff]
  %v87 = vld [vmem:[%s1 + $0x10] sm:$0xff]
  %v88 = vld [vmem:[%s1 + $0x18] sm:$0xff]
  %v89 = vld [vmem:[%s1 + $0x20] sm:$0xff]
  %v90 = vld [vmem:[%s1 + $0x28] sm:$0xff]
  %v91 = vld [vmem:[%s1 + $0x30] sm:$0xff]
  %v92 = vld [vmem:[%s1 + $0x38] sm:$0xff]
  %v93 = vld [vmem:[%s1 + $0x40] sm:$0xff]
  %v94 = vld [vmem:[%s1 + $0x48] sm:$0xff]
  %v95 = vld [vmem:[%s1 + $0x50] sm:$0xff]
  %v96 = vld [vmem:[%s1 + $0x58] sm:$0xff]
  %v97 = vld [vmem:[%s1 + $0x60] sm:$0xff]
  %v98 = vld [vmem:[%s1 + $0x68] sm:$0xff]
  %v99 = vld [vmem:[%s1 + $0x70] sm:$0xff]
  %v100 = vld [vmem:[%s1 + $0x78] sm:$0xff]
  %v101 = vld [vmem:[%s1 + $0x80] sm:$0xff]
  %v102 = vld [vmem:[%s1 + $0x88] sm:$0xff]
  %v103 = vld [vmem:[%s1 + $0x90] sm:$0xff]
  %v104 = vld [vmem:[%s1 + $0x98] sm:$0xff]
  %v105 = vld [vmem:[%s1 + $0xa0] sm:$0xff]
  %v106 = vld [vmem:[%s1 + $0xa8] sm:$0xff]
  %v107 = vld [vmem:[%s1 + $0xb0] sm:$0xff]
  %v108 = vld [vmem:[%s1 + $0xb8] sm:$0xff]
  %v109 = vld [vmem:[%s1 + $0xc0] sm:$0xff]
  %v110 = vld [vmem:[%s1 + $0xc8] sm:$0xff]
  %v111 = vld [vmem:[%s1 + $0xd0] sm:$0xff]
  %v112 = vld [vmem:[%s1 + $0xd8] sm:$0xff]
  %v113 = vld [vmem:[%s1 + $0xe0] sm:$0xff]
  %v114 = vld [vmem:[%s1 + $0xe8] sm:$0xff]
  %v115 = vld [vmem:[%s1 + $0xf0] sm:$0xff]
  %v116 = vld [vmem:[%s1 + $0xf8] sm:$0xff]
  %v117 = vld [vmem:[%s1 + $0x100] sm:$0xff]
  %v118 = vld [vmem:[%s1 + $0x108] sm:$0xff]
  %v119 = vld [vmem:[%s1 + $0x110] sm:$0xff]
  %v120 = vld [vmem:[%s1 + $0x118] sm:$0xff]
  %v121 = vld [vmem:[%s1 + $0x120] sm:$0xff]
  %v122 = vld [vmem:[%s1 + $0x128] sm:$0xff]
  %v123 = vld [vmem:[%s1 + $0x130] sm:$0xff]
  %v124 = vld [vmem:[%s1 + $0x138] sm:$0xff]
  %v125 = vld [vmem:[%s1 + $0x140] sm:$0xff]
  %v126 = vld [vmem:[%s1 + $0x148] sm:$0xff]
  %v127 = vld [vmem:[%s1 + $0x150] sm:$0xff]
  %v128 = vld [vmem:[%s1 + $0x158] sm:$0xff]
  %v129 = vld [vmem:[%s1 + $0x160] sm:$0xff]
  %v130 = vld [vmem:[%s1 + $0x168] sm:$0xff]
  %v131 = vld [vmem:[%s1 + $0x170] sm:$0xff]
  %v132 = vld [vmem:[%s1 + $0x178] sm:$0xff]
  %v133 = vld [vmem:[%s1 + $0x180] sm:$0xff]
  %v134 = vld [vmem:[%s1 + $0x188] sm:$0xff]
  %v135 = vld [vmem:[%s1 + $0x190] sm:$0xff]
  %v136 = vld [vmem:[%s1 + $0x198] sm:$0xff]
  %v137 = vld [vmem:[%s1 + $0x1a0] sm:$0xff]
  %v138 = vld [vmem:[%s1 + $0x1a8] sm:$0xff]
  %v139 = vld [vmem:[%s1 + $0x1b0] sm:$0xff]
  %v140 = vld [vmem:[%s1 + $0x1b8] sm:$0xff]
  %v141 = vld [vmem:[%s1 + $0x1c0] sm:$0xff]
  %v142 = vld [vmem:[%s1 + $0x1c8] sm:$0xff]
  %v143 = vld [vmem:[%s1 + $0x1d0] sm:$0xff]
  %v144 = vld [vmem:[%s1 + $0x1d8] sm:$0xff]
  %v145 = vld [vmem:[%s1 + $0x1e0] sm:$0xff]
  %v146 = vld [vmem:[%s1 + $0x1e8] sm:$0xff]
  %v147 = vld [vmem:[%s1 + $0x1f0] sm:$0xff]
  %v148 = vld [vmem:[%s1 + $0x1f8] sm:$0xff]
  %vm149 = vcmask 64512
  %v151 = vsel %vm149, %v20, 0
  %v154 = vsel %vm149, %v21, 0
  %v157 = vsel %vm149, %v22, 0
  %v160 = vsel %vm149, %v23, 0
  %v163 = vsel %vm149, %v24, 0
  %v166 = vsel %vm149, %v25, 0
  %v169 = vsel %vm149, %v26, 0
  %v172 = vsel %vm149, %v27, 0
  %v175 = vsel %vm149, %v28, 0
  %v178 = vsel %vm149, %v29, 0
  %v181 = vsel %vm149, %v30, 0
  %v184 = vsel %vm149, %v31, 0
  %v187 = vsel %vm149, %v32, 0
  %v190 = vsel %vm149, %v33, 0
  %v193 = vsel %vm149, %v34, 0
  %v196 = vsel %vm149, %v35, 0
  %v199 = vsel %vm149, %v36, 0
  %v202 = vsel %vm149, %v37, 0
  %v205 = vsel %vm149, %v38, 0
  %v208 = vsel %vm149, %v39, 0
  %v211 = vsel %vm149, %v40, 0
  %v214 = vsel %vm149, %v41, 0
  %v217 = vsel %vm149, %v42, 0
  %v220 = vsel %vm149, %v43, 0
  %v223 = vsel %vm149, %v44, 0
  %v226 = vsel %vm149, %v45, 0
  %v229 = vsel %vm149, %v46, 0
  %v232 = vsel %vm149, %v47, 0
  %v235 = vsel %vm149, %v48, 0
  %v238 = vsel %vm149, %v49, 0
  %v241 = vsel %vm149, %v50, 0
  %v244 = vsel %vm149, %v51, 0
  %v247 = vsel %vm149, %v52, 0
  %v250 = vsel %vm149, %v53, 0
  %v253 = vsel %vm149, %v54, 0
  %v256 = vsel %vm149, %v55, 0
  %v259 = vsel %vm149, %v56, 0
  %v262 = vsel %vm149, %v57, 0
  %v265 = vsel %vm149, %v58, 0
  %v268 = vsel %vm149, %v59, 0
  %v271 = vsel %vm149, %v60, 0
  %v274 = vsel %vm149, %v61, 0
  %v277 = vsel %vm149, %v62, 0
  %v280 = vsel %vm149, %v63, 0
  %v283 = vsel %vm149, %v64, 0
  %v286 = vsel %vm149, %v65, 0
  %v289 = vsel %vm149, %v66, 0
  %v292 = vsel %vm149, %v67, 0
  %v295 = vsel %vm149, %v68, 0
  %v298 = vsel %vm149, %v69, 0
  %v301 = vsel %vm149, %v70, 0
  %v304 = vsel %vm149, %v71, 0
  %v307 = vsel %vm149, %v72, 0
  %v310 = vsel %vm149, %v73, 0
  %v313 = vsel %vm149, %v74, 0
  %v316 = vsel %vm149, %v75, 0
  %v319 = vsel %vm149, %v76, 0
  %v322 = vsel %vm149, %v77, 0
  %v325 = vsel %vm149, %v78, 0
  %v328 = vsel %vm149, %v79, 0
  %v331 = vsel %vm149, %v80, 0
  %v334 = vsel %vm149, %v81, 0
  %v337 = vsel %vm149, %v82, 0
  %v340 = vsel %vm149, %v83, 0
  %342 = vmatprep.subr.mxu0 0.0
  %343 = vmatpush1.msra.mxu0 %v84
  %344 = vmatprep.subr.mxu0 0.0
  %345 = vmatpush1.msra.mxu0 0.0
  %346 = vmatprep.subr.mxu0 0.0
  %347 = vmatpush1.msra.mxu0 0.0
  %348 = vmatprep.subr.mxu0 0.0
  %349 = vmatpush1.msra.mxu0 0.0
  %350 = vmatprep.subr.mxu0 0.0
  %351 = vmatpush1.msra.mxu0 0.0
  %352 = vmatprep.subr.mxu0 0.0
  %353 = vmatpush1.msra.mxu0 0.0
  %354 = vmatprep.subr.mxu0 0.0
  %355 = vmatpush1.msra.mxu0 0.0
  %356 = vmatprep.subr.mxu0 0.0
  %357 = vmatpush1.msra.mxu0 0.0
  %358 = vmatprep.subr.mxu0 0.0
  %359 = vmatpush1.msra.mxu0 0.0
  %360 = vmatprep.subr.mxu0 0.0
  %361 = vmatpush1.msra.mxu0 0.0
  %362 = vmatprep.subr.mxu0 0.0
  %363 = vmatpush1.msra.mxu0 0.0
  %364 = vmatprep.subr.mxu0 0.0
  %365 = vmatpush1.msra.mxu0 0.0
  %366 = vmatprep.subr.mxu0 0.0
  %367 = vmatpush1.msra.mxu0 0.0
  %368 = vmatprep.subr.mxu0 0.0
  %369 = vmatpush1.msra.mxu0 0.0
  %370 = vmatprep.subr.mxu0 0.0
  %371 = vmatpush1.msra.mxu0 0.0
  %372 = vmatprep.subr.mxu0 0.0
  %373 = vmatpush1.msra.mxu0 0.0
  %374 = vmatprep.subr.mxu0 0.0
  %375 = vmatpush1.msra.mxu0 0.0
  %376 = vmatprep.subr.mxu0 0.0
  %377 = vmatpush1.msra.mxu0 0.0
  %378 = vmatprep.subr.mxu0 0.0
  %379 = vmatpush1.msra.mxu0 0.0
  %380 = vmatprep.subr.mxu0 0.0
  %381 = vmatpush1.msra.mxu0 0.0
  %382 = vmatprep.subr.mxu0 0.0
  %383 = vmatpush1.msra.mxu0 0.0
  %384 = vmatprep.subr.mxu0 0.0
  %385 = vmatpush1.msra.mxu0 0.0
  %386 = vmatprep.subr.mxu0 0.0
  %387 = vmatpush1.msra.mxu0 0.0
  %388 = vmatprep.subr.mxu0 0.0
  %389 = vmatpush1.msra.mxu0 0.0
  %390 = vmatprep.subr.mxu0 0.0
  %391 = vmatpush1.msra.mxu0 0.0
  %392 = vmatprep.subr.mxu0 0.0
  %393 = vmatpush1.msra.mxu0 0.0
  %394 = vmatprep.subr.mxu0 0.0
  %395 = vmatpush1.msra.mxu0 0.0
  %396 = vmatprep.subr.mxu0 0.0
  %397 = vmatpush1.msra.mxu0 0.0
  %398 = vmatprep.subr.mxu0 0.0
  %399 = vmatpush1.msra.mxu0 0.0
  %400 = vmatprep.subr.mxu0 0.0
  %401 = vmatpush1.msra.mxu0 0.0
  %402 = vmatprep.subr.mxu0 0.0
  %403 = vmatpush1.msra.mxu0 0.0
  %404 = vmatprep.subr.mxu0 0.0
  %405 = vmatpush1.msra.mxu0 0.0
  %406 = vmatprep.mubr.f32.mxu0 0.0
  %407 = vmatmul.mubr.f32.gmra.mrb[0].mxu0 %v151
  %v408 = vpop.f32.mrb[0].mxu0
  %v409 = vadd.f32 %v85, %v408
  %v410 = vpop.f32.mrb[0].mxu0
  %411 = vmatprep.mubr.f32.mxu0 0.0
  %412 = vmatmul.mubr.f32.gmra.mrb[0].mxu0 %v154
  %v413 = vpop.f32.mrb[0].mxu0
  %v414 = vadd.f32 %v86, %v413
  %v415 = vpop.f32.mrb[0].mxu0
  %416 = vmatprep.mubr.f32.mxu0 0.0
  %417 = vmatmul.mubr.f32.gmra.mrb[0].mxu0 %v157
  %v418 = vpop.f32.mrb[0].mxu0
  %v419 = vadd.f32 %v87, %v418
  %v420 = vpop.f32.mrb[0].mxu0
  %421 = vmatprep.mubr.f32.mxu0 0.0
  %422 = vmatmul.mubr.f32.gmra.mrb[0].mxu0 %v160
  %v423 = vpop.f32.mrb[0].mxu0
  %v424 = vadd.f32 %v88, %v423
  %v425 = vpop.f32.mrb[0].mxu0
  %426 = vmatprep.mubr.f32.mxu0 0.0
  %427 = vmatmul.mubr.f32.gmra.mrb[0].mxu0 %v163
  %v428 = vpop.f32.mrb[0].mxu0
  %v429 = vadd.f32 %v89, %v428
  %v430 = vpop.f32.mrb[0].mxu0
  %431 = vmatprep.mubr.f32.mxu0 0.0
  %432 = vmatmul.mubr.f32.gmra.mrb[0].mxu0 %v166
  %v433 = vpop.f32.mrb[0].mxu0
  %v434 = vadd.f32 %v90, %v433
  %v435 = vpop.f32.mrb[0].mxu0
  %436 = vmatprep.mubr.f32.mxu0 0.0
  %437 = vmatmul.mubr.f32.gmra.mrb[0].mxu0 %v169
  %v438 = vpop.f32.mrb[0].mxu0
  %v439 = vadd.f32 %v91, %v438
  %v440 = vpop.f32.mrb[0].mxu0
  %441 = vmatprep.mubr.f32.mxu0 0.0
  %442 = vmatmul.mubr.f32.gmra.mrb[0].mxu0 %v172
  %v443 = vpop.f32.mrb[0].mxu0
  %v444 = vadd.f32 %v92, %v443
  %v445 = vpop.f32.mrb[0].mxu0
  %446 = vmatprep.mubr.f32.mxu0 0.0
  %447 = vmatmul.mubr.f32.gmra.mrb[0].mxu0 %v175
  %v448 = vpop.f32.mrb[0].mxu0
  %v449 = vadd.f32 %v93, %v448
  %v450 = vpop.f32.mrb[0].mxu0
  %451 = vmatprep.mubr.f32.mxu0 0.0
  %452 = vmatmul.mubr.f32.gmra.mrb[0].mxu0 %v178
  %v453 = vpop.f32.mrb[0].mxu0
  %v454 = vadd.f32 %v94, %v453
  %v455 = vpop.f32.mrb[0].mxu0
  %456 = vmatprep.mubr.f32.mxu0 0.0
  %457 = vmatmul.mubr.f32.gmra.mrb[0].mxu0 %v181
  %v458 = vpop.f32.mrb[0].mxu0
  %v459 = vadd.f32 %v95, %v458
  %v460 = vpop.f32.mrb[0].mxu0
  %461 = vmatprep.mubr.f32.mxu0 0.0
  %462 = vmatmul.mubr.f32.gmra.mrb[0].mxu0 %v184
  %v463 = vpop.f32.mrb[0].mxu0
  %v464 = vadd.f32 %v96, %v463
  %v465 = vpop.f32.mrb[0].mxu0
  %466 = vmatprep.mubr.f32.mxu0 0.0
  %467 = vmatmul.mubr.f32.gmra.mrb[0].mxu0 %v187
  %v468 = vpop.f32.mrb[0].mxu0
  %v469 = vadd.f32 %v97, %v468
  %v470 = vpop.f32.mrb[0].mxu0
  %471 = vmatprep.mubr.f32.mxu0 0.0
  %472 = vmatmul.mubr.f32.gmra.mrb[0].mxu0 %v190
  %v473 = vpop.f32.mrb[0].mxu0
  %v474 = vadd.f32 %v98, %v473
  %v475 = vpop.f32.mrb[0].mxu0
  %476 = vmatprep.mubr.f32.mxu0 0.0
  %477 = vmatmul.mubr.f32.gmra.mrb[0].mxu0 %v193
  %v478 = vpop.f32.mrb[0].mxu0
  %v479 = vadd.f32 %v99, %v478
  %v480 = vpop.f32.mrb[0].mxu0
  %481 = vmatprep.mubr.f32.mxu0 0.0
  %482 = vmatmul.mubr.f32.gmra.mrb[0].mxu0 %v196
  %v483 = vpop.f32.mrb[0].mxu0
  %v484 = vadd.f32 %v100, %v483
  %v485 = vpop.f32.mrb[0].mxu0
  %486 = vmatprep.mubr.f32.mxu0 0.0
  %487 = vmatmul.mubr.f32.gmra.mrb[0].mxu0 %v199
  %v488 = vpop.f32.mrb[0].mxu0
  %v489 = vadd.f32 %v101, %v488
  %v490 = vpop.f32.mrb[0].mxu0
  %491 = vmatprep.mubr.f32.mxu0 0.0
  %492 = vmatmul.mubr.f32.gmra.mrb[0].mxu0 %v202
  %v493 = vpop.f32.mrb[0].mxu0
  %v494 = vadd.f32 %v102, %v493
  %v495 = vpop.f32.mrb[0].mxu0
  %496 = vmatprep.mubr.f32.mxu0 0.0
  %497 = vmatmul.mubr.f32.gmra.mrb[0].mxu0 %v205
  %v498 = vpop.f32.mrb[0].mxu0
  %v499 = vadd.f32 %v103, %v498
  %v500 = vpop.f32.mrb[0].mxu0
  %501 = vmatprep.mubr.f32.mxu0 0.0
  %502 = vmatmul.mubr.f32.gmra.mrb[0].mxu0 %v208
  %v503 = vpop.f32.mrb[0].mxu0
  %v504 = vadd.f32 %v104, %v503
  %v505 = vpop.f32.mrb[0].mxu0
  %506 = vmatprep.mubr.f32.mxu0 0.0
  %507 = vmatmul.mubr.f32.gmra.mrb[0].mxu0 %v211
  %v508 = vpop.f32.mrb[0].mxu0
  %v509 = vadd.f32 %v105, %v508
  %v510 = vpop.f32.mrb[0].mxu0
  %511 = vmatprep.mubr.f32.mxu0 0.0
  %512 = vmatmul.mubr.f32.gmra.mrb[0].mxu0 %v214
  %v513 = vpop.f32.mrb[0].mxu0
  %v514 = vadd.f32 %v106, %v513
  %v515 = vpop.f32.mrb[0].mxu0
  %516 = vmatprep.mubr.f32.mxu0 0.0
  %517 = vmatmul.mubr.f32.gmra.mrb[0].mxu0 %v217
  %v518 = vpop.f32.mrb[0].mxu0
  %v519 = vadd.f32 %v107, %v518
  %v520 = vpop.f32.mrb[0].mxu0
  %521 = vmatprep.mubr.f32.mxu0 0.0
  %522 = vmatmul.mubr.f32.gmra.mrb[0].mxu0 %v220
  %v523 = vpop.f32.mrb[0].mxu0
  %v524 = vadd.f32 %v108, %v523
  %v525 = vpop.f32.mrb[0].mxu0
  %526 = vmatprep.mubr.f32.mxu0 0.0
  %527 = vmatmul.mubr.f32.gmra.mrb[0].mxu0 %v223
  %v528 = vpop.f32.mrb[0].mxu0
  %v529 = vadd.f32 %v109, %v528
  %v530 = vpop.f32.mrb[0].mxu0
  %531 = vmatprep.mubr.f32.mxu0 0.0
  %532 = vmatmul.mubr.f32.gmra.mrb[0].mxu0 %v226
  %v533 = vpop.f32.mrb[0].mxu0
  %v534 = vadd.f32 %v110, %v533
  %v535 = vpop.f32.mrb[0].mxu0
  %536 = vmatprep.mubr.f32.mxu0 0.0
  %537 = vmatmul.mubr.f32.gmra.mrb[0].mxu0 %v229
  %v538 = vpop.f32.mrb[0].mxu0
  %v539 = vadd.f32 %v111, %v538
  %v540 = vpop.f32.mrb[0].mxu0
  %541 = vmatprep.mubr.f32.mxu0 0.0
  %542 = vmatmul.mubr.f32.gmra.mrb[0].mxu0 %v232
  %v543 = vpop.f32.mrb[0].mxu0
  %v544 = vadd.f32 %v112, %v543
  %v545 = vpop.f32.mrb[0].mxu0
  %546 = vmatprep.mubr.f32.mxu0 0.0
  %547 = vmatmul.mubr.f32.gmra.mrb[0].mxu0 %v235
  %v548 = vpop.f32.mrb[0].mxu0
  %v549 = vadd.f32 %v113, %v548
  %v550 = vpop.f32.mrb[0].mxu0
  %551 = vmatprep.mubr.f32.mxu0 0.0
  %552 = vmatmul.mubr.f32.gmra.mrb[0].mxu0 %v238
  %v553 = vpop.f32.mrb[0].mxu0
  %v554 = vadd.f32 %v114, %v553
  %v555 = vpop.f32.mrb[0].mxu0
  %556 = vmatprep.mubr.f32.mxu0 0.0
  %557 = vmatmul.mubr.f32.gmra.mrb[0].mxu0 %v241
  %v558 = vpop.f32.mrb[0].mxu0
  %v559 = vadd.f32 %v115, %v558
  %v560 = vpop.f32.mrb[0].mxu0
  %561 = vmatprep.mubr.f32.mxu0 0.0
  %562 = vmatmul.mubr.f32.gmra.mrb[0].mxu0 %v244
  %v563 = vpop.f32.mrb[0].mxu0
  %v564 = vadd.f32 %v116, %v563
  %v565 = vpop.f32.mrb[0].mxu0
  %566 = vmatprep.mubr.f32.mxu0 0.0
  %567 = vmatmul.mubr.f32.gmra.mrb[0].mxu0 %v247
  %v568 = vpop.f32.mrb[0].mxu0
  %v569 = vadd.f32 %v117, %v568
  %v570 = vpop.f32.mrb[0].mxu0
  %571 = vmatprep.mubr.f32.mxu0 0.0
  %572 = vmatmul.mubr.f32.gmra.mrb[0].mxu0 %v250
  %v573 = vpop.f32.mrb[0].mxu0
  %v574 = vadd.f32 %v118, %v573
  %v575 = vpop.f32.mrb[0].mxu0
  %576 = vmatprep.mubr.f32.mxu0 0.0
  %577 = vmatmul.mubr.f32.gmra.mrb[0].mxu0 %v253
  %v578 = vpop.f32.mrb[0].mxu0
  %v579 = vadd.f32 %v119, %v578
  %v580 = vpop.f32.mrb[0].mxu0
  %581 = vmatprep.mubr.f32.mxu0 0.0
  %582 = vmatmul.mubr.f32.gmra.mrb[0].mxu0 %v256
  %v583 = vpop.f32.mrb[0].mxu0
  %v584 = vadd.f32 %v120, %v583
  %v585 = vpop.f32.mrb[0].mxu0
  %586 = vmatprep.mubr.f32.mxu0 0.0
  %587 = vmatmul.mubr.f32.gmra.mrb[0].mxu0 %v259
  %v588 = vpop.f32.mrb[0].mxu0
  %v589 = vadd.f32 %v121, %v588
  %v590 = vpop.f32.mrb[0].mxu0
  %591 = vmatprep.mubr.f32.mxu0 0.0
  %592 = vmatmul.mubr.f32.gmra.mrb[0].mxu0 %v262
  %v593 = vpop.f32.mrb[0].mxu0
  %v594 = vadd.f32 %v122, %v593
  %v595 = vpop.f32.mrb[0].mxu0
  %596 = vmatprep.mubr.f32.mxu0 0.0
  %597 = vmatmul.mubr.f32.gmra.mrb[0].mxu0 %v265
  %v598 = vpop.f32.mrb[0].mxu0
  %v599 = vadd.f32 %v123, %v598
  %v600 = vpop.f32.mrb[0].mxu0
  %601 = vmatprep.mubr.f32.mxu0 0.0
  %602 = vmatmul.mubr.f32.gmra.mrb[0].mxu0 %v268
  %v603 = vpop.f32.mrb[0].mxu0
  %v604 = vadd.f32 %v124, %v603
  %v605 = vpop.f32.mrb[0].mxu0
  %606 = vmatprep.mubr.f32.mxu0 0.0
  %607 = vmatmul.mubr.f32.gmra.mrb[0].mxu0 %v271
  %v608 = vpop.f32.mrb[0].mxu0
  %v609 = vadd.f32 %v125, %v608
  %v610 = vpop.f32.mrb[0].mxu0
  %611 = vmatprep.mubr.f32.mxu0 0.0
  %612 = vmatmul.mubr.f32.gmra.mrb[0].mxu0 %v274
  %v613 = vpop.f32.mrb[0].mxu0
  %v614 = vadd.f32 %v126, %v613
  %v615 = vpop.f32.mrb[0].mxu0
  %616 = vmatprep.mubr.f32.mxu0 0.0
  %617 = vmatmul.mubr.f32.gmra.mrb[0].mxu0 %v277
  %v618 = vpop.f32.mrb[0].mxu0
  %v619 = vadd.f32 %v127, %v618
  %v620 = vpop.f32.mrb[0].mxu0
  %621 = vmatprep.mubr.f32.mxu0 0.0
  %622 = vmatmul.mubr.f32.gmra.mrb[0].mxu0 %v280
  %v623 = vpop.f32.mrb[0].mxu0
  %v624 = vadd.f32 %v128, %v623
  %v625 = vpop.f32.mrb[0].mxu0
  %626 = vmatprep.mubr.f32.mxu0 0.0
  %627 = vmatmul.mubr.f32.gmra.mrb[0].mxu0 %v283
  %v628 = vpop.f32.mrb[0].mxu0
  %v629 = vadd.f32 %v129, %v628
  %v630 = vpop.f32.mrb[0].mxu0
  %631 = vmatprep.mubr.f32.mxu0 0.0
  %632 = vmatmul.mubr.f32.gmra.mrb[0].mxu0 %v286
  %v633 = vpop.f32.mrb[0].mxu0
  %v634 = vadd.f32 %v130, %v633
  %v635 = vpop.f32.mrb[0].mxu0
  %636 = vmatprep.mubr.f32.mxu0 0.0
  %637 = vmatmul.mubr.f32.gmra.mrb[0].mxu0 %v289
  %v638 = vpop.f32.mrb[0].mxu0
  %v639 = vadd.f32 %v131, %v638
  %v640 = vpop.f32.mrb[0].mxu0
  %641 = vmatprep.mubr.f32.mxu0 0.0
  %642 = vmatmul.mubr.f32.gmra.mrb[0].mxu0 %v292
  %v643 = vpop.f32.mrb[0].mxu0
  %v644 = vadd.f32 %v132, %v643
  %v645 = vpop.f32.mrb[0].mxu0
  %646 = vmatprep.mubr.f32.mxu0 0.0
  %647 = vmatmul.mubr.f32.gmra.mrb[0].mxu0 %v295
  %v648 = vpop.f32.mrb[0].mxu0
  %v649 = vadd.f32 %v133, %v648
  %v650 = vpop.f32.mrb[0].mxu0
  %651 = vmatprep.mubr.f32.mxu0 0.0
  %652 = vmatmul.mubr.f32.gmra.mrb[0].mxu0 %v298
  %v653 = vpop.f32.mrb[0].mxu0
  %v654 = vadd.f32 %v134, %v653
  %v655 = vpop.f32.mrb[0].mxu0
  %656 = vmatprep.mubr.f32.mxu0 0.0
  %657 = vmatmul.mubr.f32.gmra.mrb[0].mxu0 %v301
  %v658 = vpop.f32.mrb[0].mxu0
  %v659 = vadd.f32 %v135, %v658
  %v660 = vpop.f32.mrb[0].mxu0
  %661 = vmatprep.mubr.f32.mxu0 0.0
  %662 = vmatmul.mubr.f32.gmra.mrb[0].mxu0 %v304
  %v663 = vpop.f32.mrb[0].mxu0
  %v664 = vadd.f32 %v136, %v663
  %v665 = vpop.f32.mrb[0].mxu0
  %666 = vmatprep.mubr.f32.mxu0 0.0
  %667 = vmatmul.mubr.f32.gmra.mrb[0].mxu0 %v307
  %v668 = vpop.f32.mrb[0].mxu0
  %v669 = vadd.f32 %v137, %v668
  %v670 = vpop.f32.mrb[0].mxu0
  %671 = vmatprep.mubr.f32.mxu0 0.0
  %672 = vmatmul.mubr.f32.gmra.mrb[0].mxu0 %v310
  %v673 = vpop.f32.mrb[0].mxu0
  %v674 = vadd.f32 %v138, %v673
  %v675 = vpop.f32.mrb[0].mxu0
  %676 = vmatprep.mubr.f32.mxu0 0.0
  %677 = vmatmul.mubr.f32.gmra.mrb[0].mxu0 %v313
  %v678 = vpop.f32.mrb[0].mxu0
  %v679 = vadd.f32 %v139, %v678
  %v680 = vpop.f32.mrb[0].mxu0
  %681 = vmatprep.mubr.f32.mxu0 0.0
  %682 = vmatmul.mubr.f32.gmra.mrb[0].mxu0 %v316
  %v683 = vpop.f32.mrb[0].mxu0
  %v684 = vadd.f32 %v140, %v683
  %v685 = vpop.f32.mrb[0].mxu0
  %686 = vmatprep.mubr.f32.mxu0 0.0
  %687 = vmatmul.mubr.f32.gmra.mrb[0].mxu0 %v319
  %v688 = vpop.f32.mrb[0].mxu0
  %v689 = vadd.f32 %v141, %v688
  %v690 = vpop.f32.mrb[0].mxu0
  %691 = vmatprep.mubr.f32.mxu0 0.0
  %692 = vmatmul.mubr.f32.gmra.mrb[0].mxu0 %v322
  %v693 = vpop.f32.mrb[0].mxu0
  %v694 = vadd.f32 %v142, %v693
  %v695 = vpop.f32.mrb[0].mxu0
  %696 = vmatprep.mubr.f32.mxu0 0.0
  %697 = vmatmul.mubr.f32.gmra.mrb[0].mxu0 %v325
  %v698 = vpop.f32.mrb[0].mxu0
  %v699 = vadd.f32 %v143, %v698
  %v700 = vpop.f32.mrb[0].mxu0
  %701 = vmatprep.mubr.f32.mxu0 0.0
  %702 = vmatmul.mubr.f32.gmra.mrb[0].mxu0 %v328
  %v703 = vpop.f32.mrb[0].mxu0
  %v704 = vadd.f32 %v144, %v703
  %v705 = vpop.f32.mrb[0].mxu0
  %706 = vmatprep.mubr.f32.mxu0 0.0
  %707 = vmatmul.mubr.f32.gmra.mrb[0].mxu0 %v331
  %v708 = vpop.f32.mrb[0].mxu0
  %v709 = vadd.f32 %v145, %v708
  %v710 = vpop.f32.mrb[0].mxu0
  %711 = vmatprep.mubr.f32.mxu0 0.0
  %712 = vmatmul.mubr.f32.gmra.mrb[0].mxu0 %v334
  %v713 = vpop.f32.mrb[0].mxu0
  %v714 = vadd.f32 %v146, %v713
  %v715 = vpop.f32.mrb[0].mxu0
  %716 = vmatprep.mubr.f32.mxu0 0.0
  %717 = vmatmul.mubr.f32.gmra.mrb[0].mxu0 %v337
  %v718 = vpop.f32.mrb[0].mxu0
  %v719 = vadd.f32 %v147, %v718
  %v720 = vpop.f32.mrb[0].mxu0
  %721 = vmatprep.mubr.f32.mxu0 0.0
  %722 = vmatmul.mubr.f32.gmra.mrb[0].mxu0 %v340
  %v723 = vpop.f32.mrb[0].mxu0
  %v724 = vadd.f32 %v148, %v723
  %v725 = vpop.f32.mrb[0].mxu0
  %726 = vdwg.mxu0
  %vm727 = vcmask 31744
  %v728 = vsel %vm727, %v409, 0.0
  %729 = vadd.xlane.f32.xlu0 %v728
  %v730 = vpop.xlane.xlu0 %729
  %v731 = vsel %vm727, %v414, 0.0
  %732 = vadd.xlane.f32.xlu0 %v731
  %v733 = vpop.xlane.xlu0 %732
  %v734 = vsel %vm727, %v419, 0.0
  %735 = vadd.xlane.f32.xlu0 %v734
  %v736 = vpop.xlane.xlu0 %735
  %v737 = vsel %vm727, %v424, 0.0
  %738 = vadd.xlane.f32.xlu0 %v737
  %v739 = vpop.xlane.xlu0 %738
  %v740 = vsel %vm727, %v429, 0.0
  %741 = vadd.xlane.f32.xlu0 %v740
  %v742 = vpop.xlane.xlu0 %741
  %v743 = vsel %vm727, %v434, 0.0
  %744 = vadd.xlane.f32.xlu0 %v743
  %v745 = vpop.xlane.xlu0 %744
  %v746 = vsel %vm727, %v439, 0.0
  %747 = vadd.xlane.f32.xlu0 %v746
  %v748 = vpop.xlane.xlu0 %747
  %v749 = vsel %vm727, %v444, 0.0
  %750 = vadd.xlane.f32.xlu0 %v749
  %v751 = vpop.xlane.xlu0 %750
  %v752 = vsel %vm727, %v449, 0.0
  %753 = vadd.xlane.f32.xlu0 %v752
  %v754 = vpop.xlane.xlu0 %753
  %v755 = vsel %vm727, %v454, 0.0
  %756 = vadd.xlane.f32.xlu0 %v755
  %v757 = vpop.xlane.xlu0 %756
  %v758 = vsel %vm727, %v459, 0.0
  %759 = vadd.xlane.f32.xlu0 %v758
  %v760 = vpop.xlane.xlu0 %759
  %v761 = vsel %vm727, %v464, 0.0
  %762 = vadd.xlane.f32.xlu0 %v761
  %v763 = vpop.xlane.xlu0 %762
  %v764 = vsel %vm727, %v469, 0.0
  %765 = vadd.xlane.f32.xlu0 %v764
  %v766 = vpop.xlane.xlu0 %765
  %v767 = vsel %vm727, %v474, 0.0
  %768 = vadd.xlane.f32.xlu0 %v767
  %v769 = vpop.xlane.xlu0 %768
  %v770 = vsel %vm727, %v479, 0.0
  %771 = vadd.xlane.f32.xlu0 %v770
  %v772 = vpop.xlane.xlu0 %771
  %v773 = vsel %vm727, %v484, 0.0
  %774 = vadd.xlane.f32.xlu0 %v773
  %v775 = vpop.xlane.xlu0 %774
  %v776 = vsel %vm727, %v489, 0.0
  %777 = vadd.xlane.f32.xlu0 %v776
  %v778 = vpop.xlane.xlu0 %777
  %v779 = vsel %vm727, %v494, 0.0
  %780 = vadd.xlane.f32.xlu0 %v779
  %v781 = vpop.xlane.xlu0 %780
  %v782 = vsel %vm727, %v499, 0.0
  %783 = vadd.xlane.f32.xlu0 %v782
  %v784 = vpop.xlane.xlu0 %783
  %v785 = vsel %vm727, %v504, 0.0
  %786 = vadd.xlane.f32.xlu0 %v785
  %v787 = vpop.xlane.xlu0 %786
  %v788 = vsel %vm727, %v509, 0.0
  %789 = vadd.xlane.f32.xlu0 %v788
  %v790 = vpop.xlane.xlu0 %789
  %v791 = vsel %vm727, %v514, 0.0
  %792 = vadd.xlane.f32.xlu0 %v791
  %v793 = vpop.xlane.xlu0 %792
  %v794 = vsel %vm727, %v519, 0.0
  %795 = vadd.xlane.f32.xlu0 %v794
  %v796 = vpop.xlane.xlu0 %795
  %v797 = vsel %vm727, %v524, 0.0
  %798 = vadd.xlane.f32.xlu0 %v797
  %v799 = vpop.xlane.xlu0 %798
  %v800 = vsel %vm727, %v529, 0.0
  %801 = vadd.xlane.f32.xlu0 %v800
  %v802 = vpop.xlane.xlu0 %801
  %v803 = vsel %vm727, %v534, 0.0
  %804 = vadd.xlane.f32.xlu0 %v803
  %v805 = vpop.xlane.xlu0 %804
  %v806 = vsel %vm727, %v539, 0.0
  %807 = vadd.xlane.f32.xlu0 %v806
  %v808 = vpop.xlane.xlu0 %807
  %v809 = vsel %vm727, %v544, 0.0
  %810 = vadd.xlane.f32.xlu0 %v809
  %v811 = vpop.xlane.xlu0 %810
  %v812 = vsel %vm727, %v549, 0.0
  %813 = vadd.xlane.f32.xlu0 %v812
  %v814 = vpop.xlane.xlu0 %813
  %v815 = vsel %vm727, %v554, 0.0
  %816 = vadd.xlane.f32.xlu0 %v815
  %v817 = vpop.xlane.xlu0 %816
  %v818 = vsel %vm727, %v559, 0.0
  %819 = vadd.xlane.f32.xlu0 %v818
  %v820 = vpop.xlane.xlu0 %819
  %v821 = vsel %vm727, %v564, 0.0
  %822 = vadd.xlane.f32.xlu0 %v821
  %v823 = vpop.xlane.xlu0 %822
  %v824 = vsel %vm727, %v569, 0.0
  %825 = vadd.xlane.f32.xlu0 %v824
  %v826 = vpop.xlane.xlu0 %825
  %v827 = vsel %vm727, %v574, 0.0
  %828 = vadd.xlane.f32.xlu0 %v827
  %v829 = vpop.xlane.xlu0 %828
  %v830 = vsel %vm727, %v579, 0.0
  %831 = vadd.xlane.f32.xlu0 %v830
  %v832 = vpop.xlane.xlu0 %831
  %v833 = vsel %vm727, %v584, 0.0
  %834 = vadd.xlane.f32.xlu0 %v833
  %v835 = vpop.xlane.xlu0 %834
  %v836 = vsel %vm727, %v589, 0.0
  %837 = vadd.xlane.f32.xlu0 %v836
  %v838 = vpop.xlane.xlu0 %837
  %v839 = vsel %vm727, %v594, 0.0
  %840 = vadd.xlane.f32.xlu0 %v839
  %v841 = vpop.xlane.xlu0 %840
  %v842 = vsel %vm727, %v599, 0.0
  %843 = vadd.xlane.f32.xlu0 %v842
  %v844 = vpop.xlane.xlu0 %843
  %v845 = vsel %vm727, %v604, 0.0
  %846 = vadd.xlane.f32.xlu0 %v845
  %v847 = vpop.xlane.xlu0 %846
  %v848 = vsel %vm727, %v609, 0.0
  %849 = vadd.xlane.f32.xlu0 %v848
  %v850 = vpop.xlane.xlu0 %849
  %v851 = vsel %vm727, %v614, 0.0
  %852 = vadd.xlane.f32.xlu0 %v851
  %v853 = vpop.xlane.xlu0 %852
  %v854 = vsel %vm727, %v619, 0.0
  %855 = vadd.xlane.f32.xlu0 %v854
  %v856 = vpop.xlane.xlu0 %855
  %v857 = vsel %vm727, %v624, 0.0
  %858 = vadd.xlane.f32.xlu0 %v857
  %v859 = vpop.xlane.xlu0 %858
  %v860 = vsel %vm727, %v629, 0.0
  %861 = vadd.xlane.f32.xlu0 %v860
  %v862 = vpop.xlane.xlu0 %861
  %v863 = vsel %vm727, %v634, 0.0
  %864 = vadd.xlane.f32.xlu0 %v863
  %v865 = vpop.xlane.xlu0 %864
  %v866 = vsel %vm727, %v639, 0.0
  %867 = vadd.xlane.f32.xlu0 %v866
  %v868 = vpop.xlane.xlu0 %867
  %v869 = vsel %vm727, %v644, 0.0
  %870 = vadd.xlane.f32.xlu0 %v869
  %v871 = vpop.xlane.xlu0 %870
  %v872 = vsel %vm727, %v649, 0.0
  %873 = vadd.xlane.f32.xlu0 %v872
  %v874 = vpop.xlane.xlu0 %873
  %v875 = vsel %vm727, %v654, 0.0
  %876 = vadd.xlane.f32.xlu0 %v875
  %v877 = vpop.xlane.xlu0 %876
  %v878 = vsel %vm727, %v659, 0.0
  %879 = vadd.xlane.f32.xlu0 %v878
  %v880 = vpop.xlane.xlu0 %879
  %v881 = vsel %vm727, %v664, 0.0
  %882 = vadd.xlane.f32.xlu0 %v881
  %v883 = vpop.xlane.xlu0 %882
  %v884 = vsel %vm727, %v669, 0.0
  %885 = vadd.xlane.f32.xlu0 %v884
  %v886 = vpop.xlane.xlu0 %885
  %v887 = vsel %vm727, %v674, 0.0
  %888 = vadd.xlane.f32.xlu0 %v887
  %v889 = vpop.xlane.xlu0 %888
  %v890 = vsel %vm727, %v679, 0.0
  %891 = vadd.xlane.f32.xlu0 %v890
  %v892 = vpop.xlane.xlu0 %891
  %v893 = vsel %vm727, %v684, 0.0
  %894 = vadd.xlane.f32.xlu0 %v893
  %v895 = vpop.xlane.xlu0 %894
  %v896 = vsel %vm727, %v689, 0.0
  %897 = vadd.xlane.f32.xlu0 %v896
  %v898 = vpop.xlane.xlu0 %897
  %v899 = vsel %vm727, %v694, 0.0
  %900 = vadd.xlane.f32.xlu0 %v899
  %v901 = vpop.xlane.xlu0 %900
  %v902 = vsel %vm727, %v699, 0.0
  %903 = vadd.xlane.f32.xlu0 %v902
  %v904 = vpop.xlane.xlu0 %903
  %v905 = vsel %vm727, %v704, 0.0
  %906 = vadd.xlane.f32.xlu0 %v905
  %v907 = vpop.xlane.xlu0 %906
  %v908 = vsel %vm727, %v709, 0.0
  %909 = vadd.xlane.f32.xlu0 %v908
  %v910 = vpop.xlane.xlu0 %909
  %v911 = vsel %vm727, %v714, 0.0
  %912 = vadd.xlane.f32.xlu0 %v911
  %v913 = vpop.xlane.xlu0 %912
  %v914 = vsel %vm727, %v719, 0.0
  %915 = vadd.xlane.f32.xlu0 %v914
  %v916 = vpop.xlane.xlu0 %915
  %v917 = vsel %vm727, %v724, 0.0
  %918 = vadd.xlane.f32.xlu0 %v917
  %v919 = vpop.xlane.xlu0 %918
  %v920 = vrcp.pop 4.0
  %v921 = vmul.f32 %v730, %v920
  %v922 = vmul.f32 %v733, %v920
  %v923 = vmul.f32 %v736, %v920
  %v924 = vmul.f32 %v739, %v920
  %v925 = vmul.f32 %v742, %v920
  %v926 = vmul.f32 %v745, %v920
  %v927 = vmul.f32 %v748, %v920
  %v928 = vmul.f32 %v751, %v920
  %v929 = vmul.f32 %v754, %v920
  %v930 = vmul.f32 %v757, %v920
  %v931 = vmul.f32 %v760, %v920
  %v932 = vmul.f32 %v763, %v920
  %v933 = vmul.f32 %v766, %v920
  %v934 = vmul.f32 %v769, %v920
  %v935 = vmul.f32 %v772, %v920
  %v936 = vmul.f32 %v775, %v920
  %v937 = vmul.f32 %v778, %v920
  %v938 = vmul.f32 %v781, %v920
  %v939 = vmul.f32 %v784, %v920
  %v940 = vmul.f32 %v787, %v920
  %v941 = vmul.f32 %v790, %v920
  %v942 = vmul.f32 %v793, %v920
  %v943 = vmul.f32 %v796, %v920
  %v944 = vmul.f32 %v799, %v920
  %v945 = vmul.f32 %v802, %v920
  %v946 = vmul.f32 %v805, %v920
  %v947 = vmul.f32 %v808, %v920
  %v948 = vmul.f32 %v811, %v920
  %v949 = vmul.f32 %v814, %v920
  %v950 = vmul.f32 %v817, %v920
  %v951 = vmul.f32 %v820, %v920
  %v952 = vmul.f32 %v823, %v920
  %v953 = vmul.f32 %v826, %v920
  %v954 = vmul.f32 %v829, %v920
  %v955 = vmul.f32 %v832, %v920
  %v956 = vmul.f32 %v835, %v920
  %v957 = vmul.f32 %v838, %v920
  %v958 = vmul.f32 %v841, %v920
  %v959 = vmul.f32 %v844, %v920
  %v960 = vmul.f32 %v847, %v920
  %v961 = vmul.f32 %v850, %v920
  %v962 = vmul.f32 %v853, %v920
  %v963 = vmul.f32 %v856, %v920
  %v964 = vmul.f32 %v859, %v920
  %v965 = vmul.f32 %v862, %v920
  %v966 = vmul.f32 %v865, %v920
  %v967 = vmul.f32 %v868, %v920
  %v968 = vmul.f32 %v871, %v920
  %v969 = vmul.f32 %v874, %v920
  %v970 = vmul.f32 %v877, %v920
  %v971 = vmul.f32 %v880, %v920
  %v972 = vmul.f32 %v883, %v920
  %v973 = vmul.f32 %v886, %v920
  %v974 = vmul.f32 %v889, %v920
  %v975 = vmul.f32 %v892, %v920
  %v976 = vmul.f32 %v895, %v920
  %v977 = vmul.f32 %v898, %v920
  %v978 = vmul.f32 %v901, %v920
  %v979 = vmul.f32 %v904, %v920
  %v980 = vmul.f32 %v907, %v920
  %v981 = vmul.f32 %v910, %v920
  %v982 = vmul.f32 %v913, %v920
  %v983 = vmul.f32 %v916, %v920
  %v984 = vmul.f32 %v919, %v920
  %v985 = vsub.f32 %v409, %v921
  %v986 = vsub.f32 %v414, %v922
  %v987 = vsub.f32 %v419, %v923
  %v988 = vsub.f32 %v424, %v924
  %v989 = vsub.f32 %v429, %v925
  %v990 = vsub.f32 %v434, %v926
  %v991 = vsub.f32 %v439, %v927
  %v992 = vsub.f32 %v444, %v928
  %v993 = vsub.f32 %v449, %v929
  %v994 = vsub.f32 %v454, %v930
  %v995 = vsub.f32 %v459, %v931
  %v996 = vsub.f32 %v464, %v932
  %v997 = vsub.f32 %v469, %v933
  %v998 = vsub.f32 %v474, %v934
  %v999 = vsub.f32 %v479, %v935
  %v1000 = vsub.f32 %v484, %v936
  %v1001 = vsub.f32 %v489, %v937
  %v1002 = vsub.f32 %v494, %v938
  %v1003 = vsub.f32 %v499, %v939
  %v1004 = vsub.f32 %v504, %v940
  %v1005 = vsub.f32 %v509, %v941
  %v1006 = vsub.f32 %v514, %v942
  %v1007 = vsub.f32 %v519, %v943
  %v1008 = vsub.f32 %v524, %v944
  %v1009 = vsub.f32 %v529, %v945
  %v1010 = vsub.f32 %v534, %v946
  %v1011 = vsub.f32 %v539, %v947
  %v1012 = vsub.f32 %v544, %v948
  %v1013 = vsub.f32 %v549, %v949
  %v1014 = vsub.f32 %v554, %v950
  %v1015 = vsub.f32 %v559, %v951
  %v1016 = vsub.f32 %v564, %v952
  %v1017 = vsub.f32 %v569, %v953
  %v1018 = vsub.f32 %v574, %v954
  %v1019 = vsub.f32 %v579, %v955
  %v1020 = vsub.f32 %v584, %v956
  %v1021 = vsub.f32 %v589, %v957
  %v1022 = vsub.f32 %v594, %v958
  %v1023 = vsub.f32 %v599, %v959
  %v1024 = vsub.f32 %v604, %v960
  %v1025 = vsub.f32 %v609, %v961
  %v1026 = vsub.f32 %v614, %v962
  %v1027 = vsub.f32 %v619, %v963
  %v1028 = vsub.f32 %v624, %v964
  %v1029 = vsub.f32 %v629, %v965
  %v1030 = vsub.f32 %v634, %v966
  %v1031 = vsub.f32 %v639, %v967
  %v1032 = vsub.f32 %v644, %v968
  %v1033 = vsub.f32 %v649, %v969
  %v1034 = vsub.f32 %v654, %v970
  %v1035 = vsub.f32 %v659, %v971
  %v1036 = vsub.f32 %v664, %v972
  %v1037 = vsub.f32 %v669, %v973
  %v1038 = vsub.f32 %v674, %v974
  %v1039 = vsub.f32 %v679, %v975
  %v1040 = vsub.f32 %v684, %v976
  %v1041 = vsub.f32 %v689, %v977
  %v1042 = vsub.f32 %v694, %v978
  %v1043 = vsub.f32 %v699, %v979
  %v1044 = vsub.f32 %v704, %v980
  %v1045 = vsub.f32 %v709, %v981
  %v1046 = vsub.f32 %v714, %v982
  %v1047 = vsub.f32 %v719, %v983
  %v1048 = vsub.f32 %v724, %v984
  %v1049 = vmul.f32 %v985, %v985
  %v1050 = vmul.f32 %v986, %v986
  %v1051 = vmul.f32 %v987, %v987
  %v1052 = vmul.f32 %v988, %v988
  %v1053 = vmul.f32 %v989, %v989
  %v1054 = vmul.f32 %v990, %v990
  %v1055 = vmul.f32 %v991, %v991
  %v1056 = vmul.f32 %v992, %v992
  %v1057 = vmul.f32 %v993, %v993
  %v1058 = vmul.f32 %v994, %v994
  %v1059 = vmul.f32 %v995, %v995
  %v1060 = vmul.f32 %v996, %v996
  %v1061 = vmul.f32 %v997, %v997
  %v1062 = vmul.f32 %v998, %v998
  %v1063 = vmul.f32 %v999, %v999
  %v1064 = vmul.f32 %v1000, %v1000
  %v1065 = vmul.f32 %v1001, %v1001
  %v1066 = vmul.f32 %v1002, %v1002
  %v1067 = vmul.f32 %v1003, %v1003
  %v1068 = vmul.f32 %v1004, %v1004
  %v1069 = vmul.f32 %v1005, %v1005
  %v1070 = vmul.f32 %v1006, %v1006
  %v1071 = vmul.f32 %v1007, %v1007
  %v1072 = vmul.f32 %v1008, %v1008
  %v1073 = vmul.f32 %v1009, %v1009
  %v1074 = vmul.f32 %v1010, %v1010
  %v1075 = vmul.f32 %v1011, %v1011
  %v1076 = vmul.f32 %v1012, %v1012
  %v1077 = vmul.f32 %v1013, %v1013
  %v1078 = vmul.f32 %v1014, %v1014
  %v1079 = vmul.f32 %v1015, %v1015
  %v1080 = vmul.f32 %v1016, %v1016
  %v1081 = vmul.f32 %v1017, %v1017
  %v1082 = vmul.f32 %v1018, %v1018
  %v1083 = vmul.f32 %v1019, %v1019
  %v1084 = vmul.f32 %v1020, %v1020
  %v1085 = vmul.f32 %v1021, %v1021
  %v1086 = vmul.f32 %v1022, %v1022
  %v1087 = vmul.f32 %v1023, %v1023
  %v1088 = vmul.f32 %v1024, %v1024
  %v1089 = vmul.f32 %v1025, %v1025
  %v1090 = vmul.f32 %v1026, %v1026
  %v1091 = vmul.f32 %v1027, %v1027
  %v1092 = vmul.f32 %v1028, %v1028
  %v1093 = vmul.f32 %v1029, %v1029
  %v1094 = vmul.f32 %v1030, %v1030
  %v1095 = vmul.f32 %v1031, %v1031
  %v1096 = vmul.f32 %v1032, %v1032
  %v1097 = vmul.f32 %v1033, %v1033
  %v1098 = vmul.f32 %v1034, %v1034
  %v1099 = vmul.f32 %v1035, %v1035
  %v1100 = vmul.f32 %v1036, %v1036
  %v1101 = vmul.f32 %v1037, %v1037
  %v1102 = vmul.f32 %v1038, %v1038
  %v1103 = vmul.f32 %v1039, %v1039
  %v1104 = vmul.f32 %v1040, %v1040
  %v1105 = vmul.f32 %v1041, %v1041
  %v1106 = vmul.f32 %v1042, %v1042
  %v1107 = vmul.f32 %v1043, %v1043
  %v1108 = vmul.f32 %v1044, %v1044
  %v1109 = vmul.f32 %v1045, %v1045
  %v1110 = vmul.f32 %v1046, %v1046
  %v1111 = vmul.f32 %v1047, %v1047
  %v1112 = vmul.f32 %v1048, %v1048
  %v1113 = vsel %vm727, %v1049, 0.0
  %1114 = vadd.xlane.f32.xlu0 %v1113
  %v1115 = vpop.xlane.xlu0 %1114
  %v1116 = vsel %vm727, %v1050, 0.0
  %1117 = vadd.xlane.f32.xlu0 %v1116
  %v1118 = vpop.xlane.xlu0 %1117
  %v1119 = vsel %vm727, %v1051, 0.0
  %1120 = vadd.xlane.f32.xlu0 %v1119
  %v1121 = vpop.xlane.xlu0 %1120
  %v1122 = vsel %vm727, %v1052, 0.0
  %1123 = vadd.xlane.f32.xlu0 %v1122
  %v1124 = vpop.xlane.xlu0 %1123
  %v1125 = vsel %vm727, %v1053, 0.0
  %1126 = vadd.xlane.f32.xlu0 %v1125
  %v1127 = vpop.xlane.xlu0 %1126
  %v1128 = vsel %vm727, %v1054, 0.0
  %1129 = vadd.xlane.f32.xlu0 %v1128
  %v1130 = vpop.xlane.xlu0 %1129
  %v1131 = vsel %vm727, %v1055, 0.0
  %1132 = vadd.xlane.f32.xlu0 %v1131
  %v1133 = vpop.xlane.xlu0 %1132
  %v1134 = vsel %vm727, %v1056, 0.0
  %1135 = vadd.xlane.f32.xlu0 %v1134
  %v1136 = vpop.xlane.xlu0 %1135
  %v1137 = vsel %vm727, %v1057, 0.0
  %1138 = vadd.xlane.f32.xlu0 %v1137
  %v1139 = vpop.xlane.xlu0 %1138
  %v1140 = vsel %vm727, %v1058, 0.0
  %1141 = vadd.xlane.f32.xlu0 %v1140
  %v1142 = vpop.xlane.xlu0 %1141
  %v1143 = vsel %vm727, %v1059, 0.0
  %1144 = vadd.xlane.f32.xlu0 %v1143
  %v1145 = vpop.xlane.xlu0 %1144
  %v1146 = vsel %vm727, %v1060, 0.0
  %1147 = vadd.xlane.f32.xlu0 %v1146
  %v1148 = vpop.xlane.xlu0 %1147
  %v1149 = vsel %vm727, %v1061, 0.0
  %1150 = vadd.xlane.f32.xlu0 %v1149
  %v1151 = vpop.xlane.xlu0 %1150
  %v1152 = vsel %vm727, %v1062, 0.0
  %1153 = vadd.xlane.f32.xlu0 %v1152
  %v1154 = vpop.xlane.xlu0 %1153
  %v1155 = vsel %vm727, %v1063, 0.0
  %1156 = vadd.xlane.f32.xlu0 %v1155
  %v1157 = vpop.xlane.xlu0 %1156
  %v1158 = vsel %vm727, %v1064, 0.0
  %1159 = vadd.xlane.f32.xlu0 %v1158
  %v1160 = vpop.xlane.xlu0 %1159
  %v1161 = vsel %vm727, %v1065, 0.0
  %1162 = vadd.xlane.f32.xlu0 %v1161
  %v1163 = vpop.xlane.xlu0 %1162
  %v1164 = vsel %vm727, %v1066, 0.0
  %1165 = vadd.xlane.f32.xlu0 %v1164
  %v1166 = vpop.xlane.xlu0 %1165
  %v1167 = vsel %vm727, %v1067, 0.0
  %1168 = vadd.xlane.f32.xlu0 %v1167
  %v1169 = vpop.xlane.xlu0 %1168
  %v1170 = vsel %vm727, %v1068, 0.0
  %1171 = vadd.xlane.f32.xlu0 %v1170
  %v1172 = vpop.xlane.xlu0 %1171
  %v1173 = vsel %vm727, %v1069, 0.0
  %1174 = vadd.xlane.f32.xlu0 %v1173
  %v1175 = vpop.xlane.xlu0 %1174
  %v1176 = vsel %vm727, %v1070, 0.0
  %1177 = vadd.xlane.f32.xlu0 %v1176
  %v1178 = vpop.xlane.xlu0 %1177
  %v1179 = vsel %vm727, %v1071, 0.0
  %1180 = vadd.xlane.f32.xlu0 %v1179
  %v1181 = vpop.xlane.xlu0 %1180
  %v1182 = vsel %vm727, %v1072, 0.0
  %1183 = vadd.xlane.f32.xlu0 %v1182
  %v1184 = vpop.xlane.xlu0 %1183
  %v1185 = vsel %vm727, %v1073, 0.0
  %1186 = vadd.xlane.f32.xlu0 %v1185
  %v1187 = vpop.xlane.xlu0 %1186
  %v1188 = vsel %vm727, %v1074, 0.0
  %1189 = vadd.xlane.f32.xlu0 %v1188
  %v1190 = vpop.xlane.xlu0 %1189
  %v1191 = vsel %vm727, %v1075, 0.0
  %1192 = vadd.xlane.f32.xlu0 %v1191
  %v1193 = vpop.xlane.xlu0 %1192
  %v1194 = vsel %vm727, %v1076, 0.0
  %1195 = vadd.xlane.f32.xlu0 %v1194
  %v1196 = vpop.xlane.xlu0 %1195
  %v1197 = vsel %vm727, %v1077, 0.0
  %1198 = vadd.xlane.f32.xlu0 %v1197
  %v1199 = vpop.xlane.xlu0 %1198
  %v1200 = vsel %vm727, %v1078, 0.0
  %1201 = vadd.xlane.f32.xlu0 %v1200
  %v1202 = vpop.xlane.xlu0 %1201
  %v1203 = vsel %vm727, %v1079, 0.0
  %1204 = vadd.xlane.f32.xlu0 %v1203
  %v1205 = vpop.xlane.xlu0 %1204
  %v1206 = vsel %vm727, %v1080, 0.0
  %1207 = vadd.xlane.f32.xlu0 %v1206
  %v1208 = vpop.xlane.xlu0 %1207
  %v1209 = vsel %vm727, %v1081, 0.0
  %1210 = vadd.xlane.f32.xlu0 %v1209
  %v1211 = vpop.xlane.xlu0 %1210
  %v1212 = vsel %vm727, %v1082, 0.0
  %1213 = vadd.xlane.f32.xlu0 %v1212
  %v1214 = vpop.xlane.xlu0 %1213
  %v1215 = vsel %vm727, %v1083, 0.0
  %1216 = vadd.xlane.f32.xlu0 %v1215
  %v1217 = vpop.xlane.xlu0 %1216
  %v1218 = vsel %vm727, %v1084, 0.0
  %1219 = vadd.xlane.f32.xlu0 %v1218
  %v1220 = vpop.xlane.xlu0 %1219
  %v1221 = vsel %vm727, %v1085, 0.0
  %1222 = vadd.xlane.f32.xlu0 %v1221
  %v1223 = vpop.xlane.xlu0 %1222
  %v1224 = vsel %vm727, %v1086, 0.0
  %1225 = vadd.xlane.f32.xlu0 %v1224
  %v1226 = vpop.xlane.xlu0 %1225
  %v1227 = vsel %vm727, %v1087, 0.0
  %1228 = vadd.xlane.f32.xlu0 %v1227
  %v1229 = vpop.xlane.xlu0 %1228
  %v1230 = vsel %vm727, %v1088, 0.0
  %1231 = vadd.xlane.f32.xlu0 %v1230
  %v1232 = vpop.xlane.xlu0 %1231
  %v1233 = vsel %vm727, %v1089, 0.0
  %1234 = vadd.xlane.f32.xlu0 %v1233
  %v1235 = vpop.xlane.xlu0 %1234
  %v1236 = vsel %vm727, %v1090, 0.0
  %1237 = vadd.xlane.f32.xlu0 %v1236
  %v1238 = vpop.xlane.xlu0 %1237
  %v1239 = vsel %vm727, %v1091, 0.0
  %1240 = vadd.xlane.f32.xlu0 %v1239
  %v1241 = vpop.xlane.xlu0 %1240
  %v1242 = vsel %vm727, %v1092, 0.0
  %1243 = vadd.xlane.f32.xlu0 %v1242
  %v1244 = vpop.xlane.xlu0 %1243
  %v1245 = vsel %vm727, %v1093, 0.0
  %1246 = vadd.xlane.f32.xlu0 %v1245
  %v1247 = vpop.xlane.xlu0 %1246
  %v1248 = vsel %vm727, %v1094, 0.0
  %1249 = vadd.xlane.f32.xlu0 %v1248
  %v1250 = vpop.xlane.xlu0 %1249
  %v1251 = vsel %vm727, %v1095, 0.0
  %1252 = vadd.xlane.f32.xlu0 %v1251
  %v1253 = vpop.xlane.xlu0 %1252
  %v1254 = vsel %vm727, %v1096, 0.0
  %1255 = vadd.xlane.f32.xlu0 %v1254
  %v1256 = vpop.xlane.xlu0 %1255
  %v1257 = vsel %vm727, %v1097, 0.0
  %1258 = vadd.xlane.f32.xlu0 %v1257
  %v1259 = vpop.xlane.xlu0 %1258
  %v1260 = vsel %vm727, %v1098, 0.0
  %1261 = vadd.xlane.f32.xlu0 %v1260
  %v1262 = vpop.xlane.xlu0 %1261
  %v1263 = vsel %vm727, %v1099, 0.0
  %1264 = vadd.xlane.f32.xlu0 %v1263
  %v1265 = vpop.xlane.xlu0 %1264
  %v1266 = vsel %vm727, %v1100, 0.0
  %1267 = vadd.xlane.f32.xlu0 %v1266
  %v1268 = vpop.xlane.xlu0 %1267
  %v1269 = vsel %vm727, %v1101, 0.0
  %1270 = vadd.xlane.f32.xlu0 %v1269
  %v1271 = vpop.xlane.xlu0 %1270
  %v1272 = vsel %vm727, %v1102, 0.0
  %1273 = vadd.xlane.f32.xlu0 %v1272
  %v1274 = vpop.xlane.xlu0 %1273
  %v1275 = vsel %vm727, %v1103, 0.0
  %1276 = vadd.xlane.f32.xlu0 %v1275
  %v1277 = vpop.xlane.xlu0 %1276
  %v1278 = vsel %vm727, %v1104, 0.0
  %1279 = vadd.xlane.f32.xlu0 %v1278
  %v1280 = vpop.xlane.xlu0 %1279
  %v1281 = vsel %vm727, %v1105, 0.0
  %1282 = vadd.xlane.f32.xlu0 %v1281
  %v1283 = vpop.xlane.xlu0 %1282
  %v1284 = vsel %vm727, %v1106, 0.0
  %1285 = vadd.xlane.f32.xlu0 %v1284
  %v1286 = vpop.xlane.xlu0 %1285
  %v1287 = vsel %vm727, %v1107, 0.0
  %1288 = vadd.xlane.f32.xlu0 %v1287
  %v1289 = vpop.xlane.xlu0 %1288
  %v1290 = vsel %vm727, %v1108, 0.0
  %1291 = vadd.xlane.f32.xlu0 %v1290
  %v1292 = vpop.xlane.xlu0 %1291
  %v1293 = vsel %vm727, %v1109, 0.0
  %1294 = vadd.xlane.f32.xlu0 %v1293
  %v1295 = vpop.xlane.xlu0 %1294
  %v1296 = vsel %vm727, %v1110, 0.0
  %1297 = vadd.xlane.f32.xlu0 %v1296
  %v1298 = vpop.xlane.xlu0 %1297
  %v1299 = vsel %vm727, %v1111, 0.0
  %1300 = vadd.xlane.f32.xlu0 %v1299
  %v1301 = vpop.xlane.xlu0 %1300
  %v1302 = vsel %vm727, %v1112, 0.0
  %1303 = vadd.xlane.f32.xlu0 %v1302
  %v1304 = vpop.xlane.xlu0 %1303
  %v1305 = vmul.f32 %v1115, %v920
  %v1306 = vmul.f32 %v1118, %v920
  %v1307 = vmul.f32 %v1121, %v920
  %v1308 = vmul.f32 %v1124, %v920
  %v1309 = vmul.f32 %v1127, %v920
  %v1310 = vmul.f32 %v1130, %v920
  %v1311 = vmul.f32 %v1133, %v920
  %v1312 = vmul.f32 %v1136, %v920
  %v1313 = vmul.f32 %v1139, %v920
  %v1314 = vmul.f32 %v1142, %v920
  %v1315 = vmul.f32 %v1145, %v920
  %v1316 = vmul.f32 %v1148, %v920
  %v1317 = vmul.f32 %v1151, %v920
  %v1318 = vmul.f32 %v1154, %v920
  %v1319 = vmul.f32 %v1157, %v920
  %v1320 = vmul.f32 %v1160, %v920
  %v1321 = vmul.f32 %v1163, %v920
  %v1322 = vmul.f32 %v1166, %v920
  %v1323 = vmul.f32 %v1169, %v920
  %v1324 = vmul.f32 %v1172, %v920
  %v1325 = vmul.f32 %v1175, %v920
  %v1326 = vmul.f32 %v1178, %v920
  %v1327 = vmul.f32 %v1181, %v920
  %v1328 = vmul.f32 %v1184, %v920
  %v1329 = vmul.f32 %v1187, %v920
  %v1330 = vmul.f32 %v1190, %v920
  %v1331 = vmul.f32 %v1193, %v920
  %v1332 = vmul.f32 %v1196, %v920
  %v1333 = vmul.f32 %v1199, %v920
  %v1334 = vmul.f32 %v1202, %v920
  %v1335 = vmul.f32 %v1205, %v920
  %v1336 = vmul.f32 %v1208, %v920
  %v1337 = vmul.f32 %v1211, %v920
  %v1338 = vmul.f32 %v1214, %v920
  %v1339 = vmul.f32 %v1217, %v920
  %v1340 = vmul.f32 %v1220, %v920
  %v1341 = vmul.f32 %v1223, %v920
  %v1342 = vmul.f32 %v1226, %v920
  %v1343 = vmul.f32 %v1229, %v920
  %v1344 = vmul.f32 %v1232, %v920
  %v1345 = vmul.f32 %v1235, %v920
  %v1346 = vmul.f32 %v1238, %v920
  %v1347 = vmul.f32 %v1241, %v920
  %v1348 = vmul.f32 %v1244, %v920
  %v1349 = vmul.f32 %v1247, %v920
  %v1350 = vmul.f32 %v1250, %v920
  %v1351 = vmul.f32 %v1253, %v920
  %v1352 = vmul.f32 %v1256, %v920
  %v1353 = vmul.f32 %v1259, %v920
  %v1354 = vmul.f32 %v1262, %v920
  %v1355 = vmul.f32 %v1265, %v920
  %v1356 = vmul.f32 %v1268, %v920
  %v1357 = vmul.f32 %v1271, %v920
  %v1358 = vmul.f32 %v1274, %v920
  %v1359 = vmul.f32 %v1277, %v920
  %v1360 = vmul.f32 %v1280, %v920
  %v1361 = vmul.f32 %v1283, %v920
  %v1362 = vmul.f32 %v1286, %v920
  %v1363 = vmul.f32 %v1289, %v920
  %v1364 = vmul.f32 %v1292, %v920
  %v1365 = vmul.f32 %v1295, %v920
  %v1366 = vmul.f32 %v1298, %v920
  %v1367 = vmul.f32 %v1301, %v920
  %v1368 = vmul.f32 %v1304, %v920
  %v1369 = vadd.f32 %v1305, 1e-05
  %v1370 = vadd.f32 %v1306, 1e-05
  %v1371 = vadd.f32 %v1307, 1e-05
  %v1372 = vadd.f32 %v1308, 1e-05
  %v1373 = vadd.f32 %v1309, 1e-05
  %v1374 = vadd.f32 %v1310, 1e-05
  %v1375 = vadd.f32 %v1311, 1e-05
  %v1376 = vadd.f32 %v1312, 1e-05
  %v1377 = vadd.f32 %v1313, 1e-05
  %v1378 = vadd.f32 %v1314, 1e-05
  %v1379 = vadd.f32 %v1315, 1e-05
  %v1380 = vadd.f32 %v1316, 1e-05
  %v1381 = vadd.f32 %v1317, 1e-05
  %v1382 = vadd.f32 %v1318, 1e-05
  %v1383 = vadd.f32 %v1319, 1e-05
  %v1384 = vadd.f32 %v1320, 1e-05
  %v1385 = vadd.f32 %v1321, 1e-05
  %v1386 = vadd.f32 %v1322, 1e-05
  %v1387 = vadd.f32 %v1323, 1e-05
  %v1388 = vadd.f32 %v1324, 1e-05
  %v1389 = vadd.f32 %v1325, 1e-05
  %v1390 = vadd.f32 %v1326, 1e-05
  %v1391 = vadd.f32 %v1327, 1e-05
  %v1392 = vadd.f32 %v1328, 1e-05
  %v1393 = vadd.f32 %v1329, 1e-05
  %v1394 = vadd.f32 %v1330, 1e-05
  %v1395 = vadd.f32 %v1331, 1e-05
  %v1396 = vadd.f32 %v1332, 1e-05
  %v1397 = vadd.f32 %v1333, 1e-05
  %v1398 = vadd.f32 %v1334, 1e-05
  %v1399 = vadd.f32 %v1335, 1e-05
  %v1400 = vadd.f32 %v1336, 1e-05
  %v1401 = vadd.f32 %v1337, 1e-05
  %v1402 = vadd.f32 %v1338, 1e-05
  %v1403 = vadd.f32 %v1339, 1e-05
  %v1404 = vadd.f32 %v1340, 1e-05
  %v1405 = vadd.f32 %v1341, 1e-05
  %v1406 = vadd.f32 %v1342, 1e-05
  %v1407 = vadd.f32 %v1343, 1e-05
  %v1408 = vadd.f32 %v1344, 1e-05
  %v1409 = vadd.f32 %v1345, 1e-05
  %v1410 = vadd.f32 %v1346, 1e-05
  %v1411 = vadd.f32 %v1347, 1e-05
  %v1412 = vadd.f32 %v1348, 1e-05
  %v1413 = vadd.f32 %v1349, 1e-05
  %v1414 = vadd.f32 %v1350, 1e-05
  %v1415 = vadd.f32 %v1351, 1e-05
  %v1416 = vadd.f32 %v1352, 1e-05
  %v1417 = vadd.f32 %v1353, 1e-05
  %v1418 = vadd.f32 %v1354, 1e-05
  %v1419 = vadd.f32 %v1355, 1e-05
  %v1420 = vadd.f32 %v1356, 1e-05
  %v1421 = vadd.f32 %v1357, 1e-05
  %v1422 = vadd.f32 %v1358, 1e-05
  %v1423 = vadd.f32 %v1359, 1e-05
  %v1424 = vadd.f32 %v1360, 1e-05
  %v1425 = vadd.f32 %v1361, 1e-05
  %v1426 = vadd.f32 %v1362, 1e-05
  %v1427 = vadd.f32 %v1363, 1e-05
  %v1428 = vadd.f32 %v1364, 1e-05
  %v1429 = vadd.f32 %v1365, 1e-05
  %v1430 = vadd.f32 %v1366, 1e-05
  %v1431 = vadd.f32 %v1367, 1e-05
  %v1432 = vadd.f32 %v1368, 1e-05
  %v1433 = vrsqrt.pop %v1369
  %v1434 = vrsqrt.pop %v1370
  %v1435 = vrsqrt.pop %v1371
  %v1436 = vrsqrt.pop %v1372
  %v1437 = vrsqrt.pop %v1373
  %v1438 = vrsqrt.pop %v1374
  %v1439 = vrsqrt.pop %v1375
  %v1440 = vrsqrt.pop %v1376
  %v1441 = vrsqrt.pop %v1377
  %v1442 = vrsqrt.pop %v1378
  %v1443 = vrsqrt.pop %v1379
  %v1444 = vrsqrt.pop %v1380
  %v1445 = vrsqrt.pop %v1381
  %v1446 = vrsqrt.pop %v1382
  %v1447 = vrsqrt.pop %v1383
  %v1448 = vrsqrt.pop %v1384
  %v1449 = vrsqrt.pop %v1385
  %v1450 = vrsqrt.pop %v1386
  %v1451 = vrsqrt.pop %v1387
  %v1452 = vrsqrt.pop %v1388
  %v1453 = vrsqrt.pop %v1389
  %v1454 = vrsqrt.pop %v1390
  %v1455 = vrsqrt.pop %v1391
  %v1456 = vrsqrt.pop %v1392
  %v1457 = vrsqrt.pop %v1393
  %v1458 = vrsqrt.pop %v1394
  %v1459 = vrsqrt.pop %v1395
  %v1460 = vrsqrt.pop %v1396
  %v1461 = vrsqrt.pop %v1397
  %v1462 = vrsqrt.pop %v1398
  %v1463 = vrsqrt.pop %v1399
  %v1464 = vrsqrt.pop %v1400
  %v1465 = vrsqrt.pop %v1401
  %v1466 = vrsqrt.pop %v1402
  %v1467 = vrsqrt.pop %v1403
  %v1468 = vrsqrt.pop %v1404
  %v1469 = vrsqrt.pop %v1405
  %v1470 = vrsqrt.pop %v1406
  %v1471 = vrsqrt.pop %v1407
  %v1472 = vrsqrt.pop %v1408
  %v1473 = vrsqrt.pop %v1409
  %v1474 = vrsqrt.pop %v1410
  %v1475 = vrsqrt.pop %v1411
  %v1476 = vrsqrt.pop %v1412
  %v1477 = vrsqrt.pop %v1413
  %v1478 = vrsqrt.pop %v1414
  %v1479 = vrsqrt.pop %v1415
  %v1480 = vrsqrt.pop %v1416
  %v1481 = vrsqrt.pop %v1417
  %v1482 = vrsqrt.pop %v1418
  %v1483 = vrsqrt.pop %v1419
  %v1484 = vrsqrt.pop %v1420
  %v1485 = vrsqrt.pop %v1421
  %v1486 = vrsqrt.pop %v1422
  %v1487 = vrsqrt.pop %v1423
  %v1488 = vrsqrt.pop %v1424
  %v1489 = vrsqrt.pop %v1425
  %v1490 = vrsqrt.pop %v1426
  %v1491 = vrsqrt.pop %v1427
  %v1492 = vrsqrt.pop %v1428
  %v1493 = vrsqrt.pop %v1429
  %v1494 = vrsqrt.pop %v1430
  %v1495 = vrsqrt.pop %v1431
  %v1496 = vrsqrt.pop %v1432
  %v1497 = vmul.f32 %v409, %v1433
  %v1498 = vmul.f32 %v414, %v1434
  %v1499 = vmul.f32 %v419, %v1435
  %v1500 = vmul.f32 %v424, %v1436
  %v1501 = vmul.f32 %v429, %v1437
  %v1502 = vmul.f32 %v434, %v1438
  %v1503 = vmul.f32 %v439, %v1439
  %v1504 = vmul.f32 %v444, %v1440
  %v1505 = vmul.f32 %v449, %v1441
  %v1506 = vmul.f32 %v454, %v1442
  %v1507 = vmul.f32 %v459, %v1443
  %v1508 = vmul.f32 %v464, %v1444
  %v1509 = vmul.f32 %v469, %v1445
  %v1510 = vmul.f32 %v474, %v1446
  %v1511 = vmul.f32 %v479, %v1447
  %v1512 = vmul.f32 %v484, %v1448
  %v1513 = vmul.f32 %v489, %v1449
  %v1514 = vmul.f32 %v494, %v1450
  %v1515 = vmul.f32 %v499, %v1451
  %v1516 = vmul.f32 %v504, %v1452
  %v1517 = vmul.f32 %v509, %v1453
  %v1518 = vmul.f32 %v514, %v1454
  %v1519 = vmul.f32 %v519, %v1455
  %v1520 = vmul.f32 %v524, %v1456
  %v1521 = vmul.f32 %v529, %v1457
  %v1522 = vmul.f32 %v534, %v1458
  %v1523 = vmul.f32 %v539, %v1459
  %v1524 = vmul.f32 %v544, %v1460
  %v1525 = vmul.f32 %v549, %v1461
  %v1526 = vmul.f32 %v554, %v1462
  %v1527 = vmul.f32 %v559, %v1463
  %v1528 = vmul.f32 %v564, %v1464
  %v1529 = vmul.f32 %v569, %v1465
  %v1530 = vmul.f32 %v574, %v1466
  %v1531 = vmul.f32 %v579, %v1467
  %v1532 = vmul.f32 %v584, %v1468
  %v1533 = vmul.f32 %v589, %v1469
  %v1534 = vmul.f32 %v594, %v1470
  %v1535 = vmul.f32 %v599, %v1471
  %v1536 = vmul.f32 %v604, %v1472
  %v1537 = vmul.f32 %v609, %v1473
  %v1538 = vmul.f32 %v614, %v1474
  %v1539 = vmul.f32 %v619, %v1475
  %v1540 = vmul.f32 %v624, %v1476
  %v1541 = vmul.f32 %v629, %v1477
  %v1542 = vmul.f32 %v634, %v1478
  %v1543 = vmul.f32 %v639, %v1479
  %v1544 = vmul.f32 %v644, %v1480
  %v1545 = vmul.f32 %v649, %v1481
  %v1546 = vmul.f32 %v654, %v1482
  %v1547 = vmul.f32 %v659, %v1483
  %v1548 = vmul.f32 %v664, %v1484
  %v1549 = vmul.f32 %v669, %v1485
  %v1550 = vmul.f32 %v674, %v1486
  %v1551 = vmul.f32 %v679, %v1487
  %v1552 = vmul.f32 %v684, %v1488
  %v1553 = vmul.f32 %v689, %v1489
  %v1554 = vmul.f32 %v694, %v1490
  %v1555 = vmul.f32 %v699, %v1491
  %v1556 = vmul.f32 %v704, %v1492
  %v1557 = vmul.f32 %v709, %v1493
  %v1558 = vmul.f32 %v714, %v1494
  %v1559 = vmul.f32 %v719, %v1495
  %v1560 = vmul.f32 %v724, %v1496
  %v1561 = vld [vmem:[%s2] sm:$0x1]
  %v1563 = vlaneseq
  %v1564 = vshrl.u32 %v1563, 7
  %v1565 = vsub.s32 0, %v1564
  %v1566 = vrot.slane %v1561, %v1565
  %v1568 = vmul.f32 %v1497, %v1566
  %v1569 = vmul.f32 %v1498, %v1566
  %v1570 = vmul.f32 %v1499, %v1566
  %v1571 = vmul.f32 %v1500, %v1566
  %v1572 = vmul.f32 %v1501, %v1566
  %v1573 = vmul.f32 %v1502, %v1566
  %v1574 = vmul.f32 %v1503, %v1566
  %v1575 = vmul.f32 %v1504, %v1566
  %v1576 = vmul.f32 %v1505, %v1566
  %v1577 = vmul.f32 %v1506, %v1566
  %v1578 = vmul.f32 %v1507, %v1566
  %v1579 = vmul.f32 %v1508, %v1566
  %v1580 = vmul.f32 %v1509, %v1566
  %v1581 = vmul.f32 %v1510, %v1566
  %v1582 = vmul.f32 %v1511, %v1566
  %v1583 = vmul.f32 %v1512, %v1566
  %v1584 = vmul.f32 %v1513, %v1566
  %v1585 = vmul.f32 %v1514, %v1566
  %v1586 = vmul.f32 %v1515, %v1566
  %v1587 = vmul.f32 %v1516, %v1566
  %v1588 = vmul.f32 %v1517, %v1566
  %v1589 = vmul.f32 %v1518, %v1566
  %v1590 = vmul.f32 %v1519, %v1566
  %v1591 = vmul.f32 %v1520, %v1566
  %v1592 = vmul.f32 %v1521, %v1566
  %v1593 = vmul.f32 %v1522, %v1566
  %v1594 = vmul.f32 %v1523, %v1566
  %v1595 = vmul.f32 %v1524, %v1566
  %v1596 = vmul.f32 %v1525, %v1566
  %v1597 = vmul.f32 %v1526, %v1566
  %v1598 = vmul.f32 %v1527, %v1566
  %v1599 = vmul.f32 %v1528, %v1566
  %v1600 = vmul.f32 %v1529, %v1566
  %v1601 = vmul.f32 %v1530, %v1566
  %v1602 = vmul.f32 %v1531, %v1566
  %v1603 = vmul.f32 %v1532, %v1566
  %v1604 = vmul.f32 %v1533, %v1566
  %v1605 = vmul.f32 %v1534, %v1566
  %v1606 = vmul.f32 %v1535, %v1566
  %v1607 = vmul.f32 %v1536, %v1566
  %v1608 = vmul.f32 %v1537, %v1566
  %v1609 = vmul.f32 %v1538, %v1566
  %v1610 = vmul.f32 %v1539, %v1566
  %v1611 = vmul.f32 %v1540, %v1566
  %v1612 = vmul.f32 %v1541, %v1566
  %v1613 = vmul.f32 %v1542, %v1566
  %v1614 = vmul.f32 %v1543, %v1566
  %v1615 = vmul.f32 %v1544, %v1566
  %v1616 = vmul.f32 %v1545, %v1566
  %v1617 = vmul.f32 %v1546, %v1566
  %v1618 = vmul.f32 %v1547, %v1566
  %v1619 = vmul.f32 %v1548, %v1566
  %v1620 = vmul.f32 %v1549, %v1566
  %v1621 = vmul.f32 %v1550, %v1566
  %v1622 = vmul.f32 %v1551, %v1566
  %v1623 = vmul.f32 %v1552, %v1566
  %v1624 = vmul.f32 %v1553, %v1566
  %v1625 = vmul.f32 %v1554, %v1566
  %v1626 = vmul.f32 %v1555, %v1566
  %v1627 = vmul.f32 %v1556, %v1566
  %v1628 = vmul.f32 %v1557, %v1566
  %v1629 = vmul.f32 %v1558, %v1566
  %v1630 = vmul.f32 %v1559, %v1566
  %v1631 = vmul.f32 %v1560, %v1566
  %v1632 = vld [vmem:[%s4] sm:$0xf]
  %v1634 = vsel %vm727, %v1568, 0
  %v1637 = vsel %vm727, %v1569, 0
  %v1640 = vsel %vm727, %v1570, 0
  %v1643 = vsel %vm727, %v1571, 0
  %v1646 = vsel %vm727, %v1572, 0
  %v1649 = vsel %vm727, %v1573, 0
  %v1652 = vsel %vm727, %v1574, 0
  %v1655 = vsel %vm727, %v1575, 0
  %v1658 = vsel %vm727, %v1576, 0
  %v1661 = vsel %vm727, %v1577, 0
  %v1664 = vsel %vm727, %v1578, 0
  %v1667 = vsel %vm727, %v1579, 0
  %v1670 = vsel %vm727, %v1580, 0
  %v1673 = vsel %vm727, %v1581, 0
  %v1676 = vsel %vm727, %v1582, 0
  %v1679 = vsel %vm727, %v1583, 0
  %v1682 = vsel %vm727, %v1584, 0
  %v1685 = vsel %vm727, %v1585, 0
  %v1688 = vsel %vm727, %v1586, 0
  %v1691 = vsel %vm727, %v1587, 0
  %v1694 = vsel %vm727, %v1588, 0
  %v1697 = vsel %vm727, %v1589, 0
  %v1700 = vsel %vm727, %v1590, 0
  %v1703 = vsel %vm727, %v1591, 0
  %v1706 = vsel %vm727, %v1592, 0
  %v1709 = vsel %vm727, %v1593, 0
  %v1712 = vsel %vm727, %v1594, 0
  %v1715 = vsel %vm727, %v1595, 0
  %v1718 = vsel %vm727, %v1596, 0
  %v1721 = vsel %vm727, %v1597, 0
  %v1724 = vsel %vm727, %v1598, 0
  %v1727 = vsel %vm727, %v1599, 0
  %v1730 = vsel %vm727, %v1600, 0
  %v1733 = vsel %vm727, %v1601, 0
  %v1736 = vsel %vm727, %v1602, 0
  %v1739 = vsel %vm727, %v1603, 0
  %v1742 = vsel %vm727, %v1604, 0
  %v1745 = vsel %vm727, %v1605, 0
  %v1748 = vsel %vm727, %v1606, 0
  %v1751 = vsel %vm727, %v1607, 0
  %v1754 = vsel %vm727, %v1608, 0
  %v1757 = vsel %vm727, %v1609, 0
  %v1760 = vsel %vm727, %v1610, 0
  %v1763 = vsel %vm727, %v1611, 0
  %v1766 = vsel %vm727, %v1612, 0
  %v1769 = vsel %vm727, %v1613, 0
  %v1772 = vsel %vm727, %v1614, 0
  %v1775 = vsel %vm727, %v1615, 0
  %v1778 = vsel %vm727, %v1616, 0
  %v1781 = vsel %vm727, %v1617, 0
  %v1784 = vsel %vm727, %v1618, 0
  %v1787 = vsel %vm727, %v1619, 0
  %v1790 = vsel %vm727, %v1620, 0
  %v1793 = vsel %vm727, %v1621, 0
  %v1796 = vsel %vm727, %v1622, 0
  %v1799 = vsel %vm727, %v1623, 0
  %v1802 = vsel %vm727, %v1624, 0
  %v1805 = vsel %vm727, %v1625, 0
  %v1808 = vsel %vm727, %v1626, 0
  %v1811 = vsel %vm727, %v1627, 0
  %v1814 = vsel %vm727, %v1628, 0
  %v1817 = vsel %vm727, %v1629, 0
  %v1820 = vsel %vm727, %v1630, 0
  %v1823 = vsel %vm727, %v1631, 0
  %vm1825 = vcmask 1043456
  %v1827 = vsel %vm1825, %v1632, 0
  %1829 = vmatprep.subr.mxu0 0.0
  %1830 = vmatpush1.msra.mxu0 %v1827
  %1831 = vmatprep.subr.mxu0 0.0
  %1832 = vmatpush1.msra.mxu0 0.0
  %1833 = vmatprep.subr.mxu0 0.0
  %1834 = vmatpush1.msra.mxu0 0.0
  %1835 = vmatprep.subr.mxu0 0.0
  %1836 = vmatpush1.msra.mxu0 0.0
  %1837 = vmatprep.subr.mxu0 0.0
  %1838 = vmatpush1.msra.mxu0 0.0
  %1839 = vmatprep.subr.mxu0 0.0
  %1840 = vmatpush1.msra.mxu0 0.0
  %1841 = vmatprep.subr.mxu0 0.0
  %1842 = vmatpush1.msra.mxu0 0.0
  %1843 = vmatprep.subr.mxu0 0.0
  %1844 = vmatpush1.msra.mxu0 0.0
  %1845 = vmatprep.subr.mxu0 0.0
  %1846 = vmatpush1.msra.mxu0 0.0
  %1847 = vmatprep.subr.mxu0 0.0
  %1848 = vmatpush1.msra.mxu0 0.0
  %1849 = vmatprep.subr.mxu0 0.0
  %1850 = vmatpush1.msra.mxu0 0.0
  %1851 = vmatprep.subr.mxu0 0.0
  %1852 = vmatpush1.msra.mxu0 0.0
  %1853 = vmatprep.subr.mxu0 0.0
  %1854 = vmatpush1.msra.mxu0 0.0
  %1855 = vmatprep.subr.mxu0 0.0
  %1856 = vmatpush1.msra.mxu0 0.0
  %1857 = vmatprep.subr.mxu0 0.0
  %1858 = vmatpush1.msra.mxu0 0.0
  %1859 = vmatprep.subr.mxu0 0.0
  %1860 = vmatpush1.msra.mxu0 0.0
  %1861 = vmatprep.subr.mxu0 0.0
  %1862 = vmatpush1.msra.mxu0 0.0
  %1863 = vmatprep.subr.mxu0 0.0
  %1864 = vmatpush1.msra.mxu0 0.0
  %1865 = vmatprep.subr.mxu0 0.0
  %1866 = vmatpush1.msra.mxu0 0.0
  %1867 = vmatprep.subr.mxu0 0.0
  %1868 = vmatpush1.msra.mxu0 0.0
  %1869 = vmatprep.subr.mxu0 0.0
  %1870 = vmatpush1.msra.mxu0 0.0
  %1871 = vmatprep.subr.mxu0 0.0
  %1872 = vmatpush1.msra.mxu0 0.0
  %1873 = vmatprep.subr.mxu0 0.0
  %1874 = vmatpush1.msra.mxu0 0.0
  %1875 = vmatprep.subr.mxu0 0.0
  %1876 = vmatpush1.msra.mxu0 0.0
  %1877 = vmatprep.subr.mxu0 0.0
  %1878 = vmatpush1.msra.mxu0 0.0
  %1879 = vmatprep.subr.mxu0 0.0
  %1880 = vmatpush1.msra.mxu0 0.0
  %1881 = vmatprep.subr.mxu0 0.0
  %1882 = vmatpush1.msra.mxu0 0.0
  %1883 = vmatprep.subr.mxu0 0.0
  %1884 = vmatpush1.msra.mxu0 0.0
  %1885 = vmatprep.subr.mxu0 0.0
  %1886 = vmatpush1.msra.mxu0 0.0
  %1887 = vmatprep.subr.mxu0 0.0
  %1888 = vmatpush1.msra.mxu0 0.0
  %1889 = vmatprep.subr.mxu0 0.0
  %1890 = vmatpush1.msra.mxu0 0.0
  %1891 = vmatprep.subr.mxu0 0.0
  %1892 = vmatpush1.msra.mxu0 0.0
  %1893 = vmatprep.mubr.f32.mxu0 0.0
  %1894 = vmatmul.mubr.f32.gmra.mrb[0].mxu0 %v1634
  %v1895 = vpop.f32.mrb[0].mxu0
  %v1896 = vadd.f32 0.0, %v1895
  %v1897 = vpop.f32.mrb[0].mxu0
  %1898 = vmatprep.mubr.f32.mxu0 0.0
  %1899 = vmatmul.mubr.f32.gmra.mrb[0].mxu0 %v1637
  %v1900 = vpop.f32.mrb[0].mxu0
  %v1901 = vadd.f32 0.0, %v1900
  %v1902 = vpop.f32.mrb[0].mxu0
  %1903 = vmatprep.mubr.f32.mxu0 0.0
  %1904 = vmatmul.mubr.f32.gmra.mrb[0].mxu0 %v1640
  %v1905 = vpop.f32.mrb[0].mxu0
  %v1906 = vadd.f32 0.0, %v1905
  %v1907 = vpop.f32.mrb[0].mxu0
  %1908 = vmatprep.mubr.f32.mxu0 0.0
  %1909 = vmatmul.mubr.f32.gmra.mrb[0].mxu0 %v1643
  %v1910 = vpop.f32.mrb[0].mxu0
  %v1911 = vadd.f32 0.0, %v1910
  %v1912 = vpop.f32.mrb[0].mxu0
  %1913 = vmatprep.mubr.f32.mxu0 0.0
  %1914 = vmatmul.mubr.f32.gmra.mrb[0].mxu0 %v1646
  %v1915 = vpop.f32.mrb[0].mxu0
  %v1916 = vadd.f32 0.0, %v1915
  %v1917 = vpop.f32.mrb[0].mxu0
  %1918 = vmatprep.mubr.f32.mxu0 0.0
  %1919 = vmatmul.mubr.f32.gmra.mrb[0].mxu0 %v1649
  %v1920 = vpop.f32.mrb[0].mxu0
  %v1921 = vadd.f32 0.0, %v1920
  %v1922 = vpop.f32.mrb[0].mxu0
  %1923 = vmatprep.mubr.f32.mxu0 0.0
  %1924 = vmatmul.mubr.f32.gmra.mrb[0].mxu0 %v1652
  %v1925 = vpop.f32.mrb[0].mxu0
  %v1926 = vadd.f32 0.0, %v1925
  %v1927 = vpop.f32.mrb[0].mxu0
  %1928 = vmatprep.mubr.f32.mxu0 0.0
  %1929 = vmatmul.mubr.f32.gmra.mrb[0].mxu0 %v1655
  %v1930 = vpop.f32.mrb[0].mxu0
  %v1931 = vadd.f32 0.0, %v1930
  %v1932 = vpop.f32.mrb[0].mxu0
  %1933 = vmatprep.mubr.f32.mxu0 0.0
  %1934 = vmatmul.mubr.f32.gmra.mrb[0].mxu0 %v1658
  %v1935 = vpop.f32.mrb[0].mxu0
  %v1936 = vadd.f32 0.0, %v1935
  %v1937 = vpop.f32.mrb[0].mxu0
  %1938 = vmatprep.mubr.f32.mxu0 0.0
  %1939 = vmatmul.mubr.f32.gmra.mrb[0].mxu0 %v1661
  %v1940 = vpop.f32.mrb[0].mxu0
  %v1941 = vadd.f32 0.0, %v1940
  %v1942 = vpop.f32.mrb[0].mxu0
  %1943 = vmatprep.mubr.f32.mxu0 0.0
  %1944 = vmatmul.mubr.f32.gmra.mrb[0].mxu0 %v1664
  %v1945 = vpop.f32.mrb[0].mxu0
  %v1946 = vadd.f32 0.0, %v1945
  %v1947 = vpop.f32.mrb[0].mxu0
  %1948 = vmatprep.mubr.f32.mxu0 0.0
  %1949 = vmatmul.mubr.f32.gmra.mrb[0].mxu0 %v1667
  %v1950 = vpop.f32.mrb[0].mxu0
  %v1951 = vadd.f32 0.0, %v1950
  %v1952 = vpop.f32.mrb[0].mxu0
  %1953 = vmatprep.mubr.f32.mxu0 0.0
  %1954 = vmatmul.mubr.f32.gmra.mrb[0].mxu0 %v1670
  %v1955 = vpop.f32.mrb[0].mxu0
  %v1956 = vadd.f32 0.0, %v1955
  %v1957 = vpop.f32.mrb[0].mxu0
  %1958 = vmatprep.mubr.f32.mxu0 0.0
  %1959 = vmatmul.mubr.f32.gmra.mrb[0].mxu0 %v1673
  %v1960 = vpop.f32.mrb[0].mxu0
  %v1961 = vadd.f32 0.0, %v1960
  %v1962 = vpop.f32.mrb[0].mxu0
  %1963 = vmatprep.mubr.f32.mxu0 0.0
  %1964 = vmatmul.mubr.f32.gmra.mrb[0].mxu0 %v1676
  %v1965 = vpop.f32.mrb[0].mxu0
  %v1966 = vadd.f32 0.0, %v1965
  %v1967 = vpop.f32.mrb[0].mxu0
  %1968 = vmatprep.mubr.f32.mxu0 0.0
  %1969 = vmatmul.mubr.f32.gmra.mrb[0].mxu0 %v1679
  %v1970 = vpop.f32.mrb[0].mxu0
  %v1971 = vadd.f32 0.0, %v1970
  %v1972 = vpop.f32.mrb[0].mxu0
  %1973 = vmatprep.mubr.f32.mxu0 0.0
  %1974 = vmatmul.mubr.f32.gmra.mrb[0].mxu0 %v1682
  %v1975 = vpop.f32.mrb[0].mxu0
  %v1976 = vadd.f32 0.0, %v1975
  %v1977 = vpop.f32.mrb[0].mxu0
  %1978 = vmatprep.mubr.f32.mxu0 0.0
  %1979 = vmatmul.mubr.f32.gmra.mrb[0].mxu0 %v1685
  %v1980 = vpop.f32.mrb[0].mxu0
  %v1981 = vadd.f32 0.0, %v1980
  %v1982 = vpop.f32.mrb[0].mxu0
  %1983 = vmatprep.mubr.f32.mxu0 0.0
  %1984 = vmatmul.mubr.f32.gmra.mrb[0].mxu0 %v1688
  %v1985 = vpop.f32.mrb[0].mxu0
  %v1986 = vadd.f32 0.0, %v1985
  %v1987 = vpop.f32.mrb[0].mxu0
  %1988 = vmatprep.mubr.f32.mxu0 0.0
  %1989 = vmatmul.mubr.f32.gmra.mrb[0].mxu0 %v1691
  %v1990 = vpop.f32.mrb[0].mxu0
  %v1991 = vadd.f32 0.0, %v1990
  %v1992 = vpop.f32.mrb[0].mxu0
  %1993 = vmatprep.mubr.f32.mxu0 0.0
  %1994 = vmatmul.mubr.f32.gmra.mrb[0].mxu0 %v1694
  %v1995 = vpop.f32.mrb[0].mxu0
  %v1996 = vadd.f32 0.0, %v1995
  %v1997 = vpop.f32.mrb[0].mxu0
  %1998 = vmatprep.mubr.f32.mxu0 0.0
  %1999 = vmatmul.mubr.f32.gmra.mrb[0].mxu0 %v1697
  %v2000 = vpop.f32.mrb[0].mxu0
  %v2001 = vadd.f32 0.0, %v2000
  %v2002 = vpop.f32.mrb[0].mxu0
  %2003 = vmatprep.mubr.f32.mxu0 0.0
  %2004 = vmatmul.mubr.f32.gmra.mrb[0].mxu0 %v1700
  %v2005 = vpop.f32.mrb[0].mxu0
  %v2006 = vadd.f32 0.0, %v2005
  %v2007 = vpop.f32.mrb[0].mxu0
  %2008 = vmatprep.mubr.f32.mxu0 0.0
  %2009 = vmatmul.mubr.f32.gmra.mrb[0].mxu0 %v1703
  %v2010 = vpop.f32.mrb[0].mxu0
  %v2011 = vadd.f32 0.0, %v2010
  %v2012 = vpop.f32.mrb[0].mxu0
  %2013 = vmatprep.mubr.f32.mxu0 0.0
  %2014 = vmatmul.mubr.f32.gmra.mrb[0].mxu0 %v1706
  %v2015 = vpop.f32.mrb[0].mxu0
  %v2016 = vadd.f32 0.0, %v2015
  %v2017 = vpop.f32.mrb[0].mxu0
  %2018 = vmatprep.mubr.f32.mxu0 0.0
  %2019 = vmatmul.mubr.f32.gmra.mrb[0].mxu0 %v1709
  %v2020 = vpop.f32.mrb[0].mxu0
  %v2021 = vadd.f32 0.0, %v2020
  %v2022 = vpop.f32.mrb[0].mxu0
  %2023 = vmatprep.mubr.f32.mxu0 0.0
  %2024 = vmatmul.mubr.f32.gmra.mrb[0].mxu0 %v1712
  %v2025 = vpop.f32.mrb[0].mxu0
  %v2026 = vadd.f32 0.0, %v2025
  %v2027 = vpop.f32.mrb[0].mxu0
  %2028 = vmatprep.mubr.f32.mxu0 0.0
  %2029 = vmatmul.mubr.f32.gmra.mrb[0].mxu0 %v1715
  %v2030 = vpop.f32.mrb[0].mxu0
  %v2031 = vadd.f32 0.0, %v2030
  %v2032 = vpop.f32.mrb[0].mxu0
  %2033 = vmatprep.mubr.f32.mxu0 0.0
  %2034 = vmatmul.mubr.f32.gmra.mrb[0].mxu0 %v1718
  %v2035 = vpop.f32.mrb[0].mxu0
  %v2036 = vadd.f32 0.0, %v2035
  %v2037 = vpop.f32.mrb[0].mxu0
  %2038 = vmatprep.mubr.f32.mxu0 0.0
  %2039 = vmatmul.mubr.f32.gmra.mrb[0].mxu0 %v1721
  %v2040 = vpop.f32.mrb[0].mxu0
  %v2041 = vadd.f32 0.0, %v2040
  %v2042 = vpop.f32.mrb[0].mxu0
  %2043 = vmatprep.mubr.f32.mxu0 0.0
  %2044 = vmatmul.mubr.f32.gmra.mrb[0].mxu0 %v1724
  %v2045 = vpop.f32.mrb[0].mxu0
  %v2046 = vadd.f32 0.0, %v2045
  %v2047 = vpop.f32.mrb[0].mxu0
  %2048 = vmatprep.mubr.f32.mxu0 0.0
  %2049 = vmatmul.mubr.f32.gmra.mrb[0].mxu0 %v1727
  %v2050 = vpop.f32.mrb[0].mxu0
  %v2051 = vadd.f32 0.0, %v2050
  %v2052 = vpop.f32.mrb[0].mxu0
  %2053 = vmatprep.mubr.f32.mxu0 0.0
  %2054 = vmatmul.mubr.f32.gmra.mrb[0].mxu0 %v1730
  %v2055 = vpop.f32.mrb[0].mxu0
  %v2056 = vadd.f32 0.0, %v2055
  %v2057 = vpop.f32.mrb[0].mxu0
  %2058 = vmatprep.mubr.f32.mxu0 0.0
  %2059 = vmatmul.mubr.f32.gmra.mrb[0].mxu0 %v1733
  %v2060 = vpop.f32.mrb[0].mxu0
  %v2061 = vadd.f32 0.0, %v2060
  %v2062 = vpop.f32.mrb[0].mxu0
  %2063 = vmatprep.mubr.f32.mxu0 0.0
  %2064 = vmatmul.mubr.f32.gmra.mrb[0].mxu0 %v1736
  %v2065 = vpop.f32.mrb[0].mxu0
  %v2066 = vadd.f32 0.0, %v2065
  %v2067 = vpop.f32.mrb[0].mxu0
  %2068 = vmatprep.mubr.f32.mxu0 0.0
  %2069 = vmatmul.mubr.f32.gmra.mrb[0].mxu0 %v1739
  %v2070 = vpop.f32.mrb[0].mxu0
  %v2071 = vadd.f32 0.0, %v2070
  %v2072 = vpop.f32.mrb[0].mxu0
  %2073 = vmatprep.mubr.f32.mxu0 0.0
  %2074 = vmatmul.mubr.f32.gmra.mrb[0].mxu0 %v1742
  %v2075 = vpop.f32.mrb[0].mxu0
  %v2076 = vadd.f32 0.0, %v2075
  %v2077 = vpop.f32.mrb[0].mxu0
  %2078 = vmatprep.mubr.f32.mxu0 0.0
  %2079 = vmatmul.mubr.f32.gmra.mrb[0].mxu0 %v1745
  %v2080 = vpop.f32.mrb[0].mxu0
  %v2081 = vadd.f32 0.0, %v2080
  %v2082 = vpop.f32.mrb[0].mxu0
  %2083 = vmatprep.mubr.f32.mxu0 0.0
  %2084 = vmatmul.mubr.f32.gmra.mrb[0].mxu0 %v1748
  %v2085 = vpop.f32.mrb[0].mxu0
  %v2086 = vadd.f32 0.0, %v2085
  %v2087 = vpop.f32.mrb[0].mxu0
  %2088 = vmatprep.mubr.f32.mxu0 0.0
  %2089 = vmatmul.mubr.f32.gmra.mrb[0].mxu0 %v1751
  %v2090 = vpop.f32.mrb[0].mxu0
  %v2091 = vadd.f32 0.0, %v2090
  %v2092 = vpop.f32.mrb[0].mxu0
  %2093 = vmatprep.mubr.f32.mxu0 0.0
  %2094 = vmatmul.mubr.f32.gmra.mrb[0].mxu0 %v1754
  %v2095 = vpop.f32.mrb[0].mxu0
  %v2096 = vadd.f32 0.0, %v2095
  %v2097 = vpop.f32.mrb[0].mxu0
  %2098 = vmatprep.mubr.f32.mxu0 0.0
  %2099 = vmatmul.mubr.f32.gmra.mrb[0].mxu0 %v1757
  %v2100 = vpop.f32.mrb[0].mxu0
  %v2101 = vadd.f32 0.0, %v2100
  %v2102 = vpop.f32.mrb[0].mxu0
  %2103 = vmatprep.mubr.f32.mxu0 0.0
  %2104 = vmatmul.mubr.f32.gmra.mrb[0].mxu0 %v1760
  %v2105 = vpop.f32.mrb[0].mxu0
  %v2106 = vadd.f32 0.0, %v2105
  %v2107 = vpop.f32.mrb[0].mxu0
  %2108 = vmatprep.mubr.f32.mxu0 0.0
  %2109 = vmatmul.mubr.f32.gmra.mrb[0].mxu0 %v1763
  %v2110 = vpop.f32.mrb[0].mxu0
  %v2111 = vadd.f32 0.0, %v2110
  %v2112 = vpop.f32.mrb[0].mxu0
  %2113 = vmatprep.mubr.f32.mxu0 0.0
  %2114 = vmatmul.mubr.f32.gmra.mrb[0].mxu0 %v1766
  %v2115 = vpop.f32.mrb[0].mxu0
  %v2116 = vadd.f32 0.0, %v2115
  %v2117 = vpop.f32.mrb[0].mxu0
  %2118 = vmatprep.mubr.f32.mxu0 0.0
  %2119 = vmatmul.mubr.f32.gmra.mrb[0].mxu0 %v1769
  %v2120 = vpop.f32.mrb[0].mxu0
  %v2121 = vadd.f32 0.0, %v2120
  %v2122 = vpop.f32.mrb[0].mxu0
  %2123 = vmatprep.mubr.f32.mxu0 0.0
  %2124 = vmatmul.mubr.f32.gmra.mrb[0].mxu0 %v1772
  %v2125 = vpop.f32.mrb[0].mxu0
  %v2126 = vadd.f32 0.0, %v2125
  %v2127 = vpop.f32.mrb[0].mxu0
  %2128 = vmatprep.mubr.f32.mxu0 0.0
  %2129 = vmatmul.mubr.f32.gmra.mrb[0].mxu0 %v1775
  %v2130 = vpop.f32.mrb[0].mxu0
  %v2131 = vadd.f32 0.0, %v2130
  %v2132 = vpop.f32.mrb[0].mxu0
  %2133 = vmatprep.mubr.f32.mxu0 0.0
  %2134 = vmatmul.mubr.f32.gmra.mrb[0].mxu0 %v1778
  %v2135 = vpop.f32.mrb[0].mxu0
  %v2136 = vadd.f32 0.0, %v2135
  %v2137 = vpop.f32.mrb[0].mxu0
  %2138 = vmatprep.mubr.f32.mxu0 0.0
  %2139 = vmatmul.mubr.f32.gmra.mrb[0].mxu0 %v1781
  %v2140 = vpop.f32.mrb[0].mxu0
  %v2141 = vadd.f32 0.0, %v2140
  %v2142 = vpop.f32.mrb[0].mxu0
  %2143 = vmatprep.mubr.f32.mxu0 0.0
  %2144 = vmatmul.mubr.f32.gmra.mrb[0].mxu0 %v1784
  %v2145 = vpop.f32.mrb[0].mxu0
  %v2146 = vadd.f32 0.0, %v2145
  %v2147 = vpop.f32.mrb[0].mxu0
  %2148 = vmatprep.mubr.f32.mxu0 0.0
  %2149 = vmatmul.mubr.f32.gmra.mrb[0].mxu0 %v1787
  %v2150 = vpop.f32.mrb[0].mxu0
  %v2151 = vadd.f32 0.0, %v2150
  %v2152 = vpop.f32.mrb[0].mxu0
  %2153 = vmatprep.mubr.f32.mxu0 0.0
  %2154 = vmatmul.mubr.f32.gmra.mrb[0].mxu0 %v1790
  %v2155 = vpop.f32.mrb[0].mxu0
  %v2156 = vadd.f32 0.0, %v2155
  %v2157 = vpop.f32.mrb[0].mxu0
  %2158 = vmatprep.mubr.f32.mxu0 0.0
  %2159 = vmatmul.mubr.f32.gmra.mrb[0].mxu0 %v1793
  %v2160 = vpop.f32.mrb[0].mxu0
  %v2161 = vadd.f32 0.0, %v2160
  %v2162 = vpop.f32.mrb[0].mxu0
  %2163 = vmatprep.mubr.f32.mxu0 0.0
  %2164 = vmatmul.mubr.f32.gmra.mrb[0].mxu0 %v1796
  %v2165 = vpop.f32.mrb[0].mxu0
  %v2166 = vadd.f32 0.0, %v2165
  %v2167 = vpop.f32.mrb[0].mxu0
  %2168 = vmatprep.mubr.f32.mxu0 0.0
  %2169 = vmatmul.mubr.f32.gmra.mrb[0].mxu0 %v1799
  %v2170 = vpop.f32.mrb[0].mxu0
  %v2171 = vadd.f32 0.0, %v2170
  %v2172 = vpop.f32.mrb[0].mxu0
  %2173 = vmatprep.mubr.f32.mxu0 0.0
  %2174 = vmatmul.mubr.f32.gmra.mrb[0].mxu0 %v1802
  %v2175 = vpop.f32.mrb[0].mxu0
  %v2176 = vadd.f32 0.0, %v2175
  %v2177 = vpop.f32.mrb[0].mxu0
  %2178 = vmatprep.mubr.f32.mxu0 0.0
  %2179 = vmatmul.mubr.f32.gmra.mrb[0].mxu0 %v1805
  %v2180 = vpop.f32.mrb[0].mxu0
  %v2181 = vadd.f32 0.0, %v2180
  %v2182 = vpop.f32.mrb[0].mxu0
  %2183 = vmatprep.mubr.f32.mxu0 0.0
  %2184 = vmatmul.mubr.f32.gmra.mrb[0].mxu0 %v1808
  %v2185 = vpop.f32.mrb[0].mxu0
  %v2186 = vadd.f32 0.0, %v2185
  %v2187 = vpop.f32.mrb[0].mxu0
  %2188 = vmatprep.mubr.f32.mxu0 0.0
  %2189 = vmatmul.mubr.f32.gmra.mrb[0].mxu0 %v1811
  %v2190 = vpop.f32.mrb[0].mxu0
  %v2191 = vadd.f32 0.0, %v2190
  %v2192 = vpop.f32.mrb[0].mxu0
  %2193 = vmatprep.mubr.f32.mxu0 0.0
  %2194 = vmatmul.mubr.f32.gmra.mrb[0].mxu0 %v1814
  %v2195 = vpop.f32.mrb[0].mxu0
  %v2196 = vadd.f32 0.0, %v2195
  %v2197 = vpop.f32.mrb[0].mxu0
  %2198 = vmatprep.mubr.f32.mxu0 0.0
  %2199 = vmatmul.mubr.f32.gmra.mrb[0].mxu0 %v1817
  %v2200 = vpop.f32.mrb[0].mxu0
  %v2201 = vadd.f32 0.0, %v2200
  %v2202 = vpop.f32.mrb[0].mxu0
  %2203 = vmatprep.mubr.f32.mxu0 0.0
  %2204 = vmatmul.mubr.f32.gmra.mrb[0].mxu0 %v1820
  %v2205 = vpop.f32.mrb[0].mxu0
  %v2206 = vadd.f32 0.0, %v2205
  %v2207 = vpop.f32.mrb[0].mxu0
  %2208 = vmatprep.mubr.f32.mxu0 0.0
  %2209 = vmatmul.mubr.f32.gmra.mrb[0].mxu0 %v1823
  %v2210 = vpop.f32.mrb[0].mxu0
  %v2211 = vadd.f32 0.0, %v2210
  %v2212 = vpop.f32.mrb[0].mxu0
  %2213 = vdwg.mxu0
  %vm2214 = vcmask 162816
  %2215 = vst.msk [vmem:[%s5] sm:$0xff] %vm2214, %v1896
  %2216 = vst.msk [vmem:[%s5 + $0x8] sm:$0xff] %vm2214, %v1901
  %2217 = vst.msk [vmem:[%s5 + $0x10] sm:$0xff] %vm2214, %v1906
  %2218 = vst.msk [vmem:[%s5 + $0x18] sm:$0xff] %vm2214, %v1911
  %2219 = vst.msk [vmem:[%s5 + $0x20] sm:$0xff] %vm2214, %v1916
  %2220 = vst.msk [vmem:[%s5 + $0x28] sm:$0xff] %vm2214, %v1921
  %2221 = vst.msk [vmem:[%s5 + $0x30] sm:$0xff] %vm2214, %v1926
  %2222 = vst.msk [vmem:[%s5 + $0x38] sm:$0xff] %vm2214, %v1931
  %2223 = vst.msk [vmem:[%s5 + $0x40] sm:$0xff] %vm2214, %v1936
  %2224 = vst.msk [vmem:[%s5 + $0x48] sm:$0xff] %vm2214, %v1941
  %2225 = vst.msk [vmem:[%s5 + $0x50] sm:$0xff] %vm2214, %v1946
  %2226 = vst.msk [vmem:[%s5 + $0x58] sm:$0xff] %vm2214, %v1951
  %2227 = vst.msk [vmem:[%s5 + $0x60] sm:$0xff] %vm2214, %v1956
  %2228 = vst.msk [vmem:[%s5 + $0x68] sm:$0xff] %vm2214, %v1961
  %2229 = vst.msk [vmem:[%s5 + $0x70] sm:$0xff] %vm2214, %v1966
  %2230 = vst.msk [vmem:[%s5 + $0x78] sm:$0xff] %vm2214, %v1971
  %2231 = vst.msk [vmem:[%s5 + $0x80] sm:$0xff] %vm2214, %v1976
  %2232 = vst.msk [vmem:[%s5 + $0x88] sm:$0xff] %vm2214, %v1981
  %2233 = vst.msk [vmem:[%s5 + $0x90] sm:$0xff] %vm2214, %v1986
  %2234 = vst.msk [vmem:[%s5 + $0x98] sm:$0xff] %vm2214, %v1991
  %2235 = vst.msk [vmem:[%s5 + $0xa0] sm:$0xff] %vm2214, %v1996
  %2236 = vst.msk [vmem:[%s5 + $0xa8] sm:$0xff] %vm2214, %v2001
  %2237 = vst.msk [vmem:[%s5 + $0xb0] sm:$0xff] %vm2214, %v2006
  %2238 = vst.msk [vmem:[%s5 + $0xb8] sm:$0xff] %vm2214, %v2011
  %2239 = vst.msk [vmem:[%s5 + $0xc0] sm:$0xff] %vm2214, %v2016
  %2240 = vst.msk [vmem:[%s5 + $0xc8] sm:$0xff] %vm2214, %v2021
  %2241 = vst.msk [vmem:[%s5 + $0xd0] sm:$0xff] %vm2214, %v2026
  %2242 = vst.msk [vmem:[%s5 + $0xd8] sm:$0xff] %vm2214, %v2031
  %2243 = vst.msk [vmem:[%s5 + $0xe0] sm:$0xff] %vm2214, %v2036
  %2244 = vst.msk [vmem:[%s5 + $0xe8] sm:$0xff] %vm2214, %v2041
  %2245 = vst.msk [vmem:[%s5 + $0xf0] sm:$0xff] %vm2214, %v2046
  %2246 = vst.msk [vmem:[%s5 + $0xf8] sm:$0xff] %vm2214, %v2051
  %2247 = vst.msk [vmem:[%s5 + $0x100] sm:$0xff] %vm2214, %v2056
  %2248 = vst.msk [vmem:[%s5 + $0x108] sm:$0xff] %vm2214, %v2061
  %2249 = vst.msk [vmem:[%s5 + $0x110] sm:$0xff] %vm2214, %v2066
  %2250 = vst.msk [vmem:[%s5 + $0x118] sm:$0xff] %vm2214, %v2071
  %2251 = vst.msk [vmem:[%s5 + $0x120] sm:$0xff] %vm2214, %v2076
  %2252 = vst.msk [vmem:[%s5 + $0x128] sm:$0xff] %vm2214, %v2081
  %2253 = vst.msk [vmem:[%s5 + $0x130] sm:$0xff] %vm2214, %v2086
  %2254 = vst.msk [vmem:[%s5 + $0x138] sm:$0xff] %vm2214, %v2091
  %2255 = vst.msk [vmem:[%s5 + $0x140] sm:$0xff] %vm2214, %v2096
  %2256 = vst.msk [vmem:[%s5 + $0x148] sm:$0xff] %vm2214, %v2101
  %2257 = vst.msk [vmem:[%s5 + $0x150] sm:$0xff] %vm2214, %v2106
  %2258 = vst.msk [vmem:[%s5 + $0x158] sm:$0xff] %vm2214, %v2111
  %2259 = vst.msk [vmem:[%s5 + $0x160] sm:$0xff] %vm2214, %v2116
  %2260 = vst.msk [vmem:[%s5 + $0x168] sm:$0xff] %vm2214, %v2121
  %2261 = vst.msk [vmem:[%s5 + $0x170] sm:$0xff] %vm2214, %v2126
  %2262 = vst.msk [vmem:[%s5 + $0x178] sm:$0xff] %vm2214, %v2131
  %2263 = vst.msk [vmem:[%s5 + $0x180] sm:$0xff] %vm2214, %v2136
  %2264 = vst.msk [vmem:[%s5 + $0x188] sm:$0xff] %vm2214, %v2141
  %2265 = vst.msk [vmem:[%s5 + $0x190] sm:$0xff] %vm2214, %v2146
  %2266 = vst.msk [vmem:[%s5 + $0x198] sm:$0xff] %vm2214, %v2151
  %2267 = vst.msk [vmem:[%s5 + $0x1a0] sm:$0xff] %vm2214, %v2156
  %2268 = vst.msk [vmem:[%s5 + $0x1a8] sm:$0xff] %vm2214, %v2161
  %2269 = vst.msk [vmem:[%s5 + $0x1b0] sm:$0xff] %vm2214, %v2166
  %2270 = vst.msk [vmem:[%s5 + $0x1b8] sm:$0xff] %vm2214, %v2171
  %2271 = vst.msk [vmem:[%s5 + $0x1c0] sm:$0xff] %vm2214, %v2176
  %2272 = vst.msk [vmem:[%s5 + $0x1c8] sm:$0xff] %vm2214, %v2181
  %2273 = vst.msk [vmem:[%s5 + $0x1d0] sm:$0xff] %vm2214, %v2186
  %2274 = vst.msk [vmem:[%s5 + $0x1d8] sm:$0xff] %vm2214, %v2191
  %2275 = vst.msk [vmem:[%s5 + $0x1e0] sm:$0xff] %vm2214, %v2196
  %2276 = vst.msk [vmem:[%s5 + $0x1e8] sm:$0xff] %vm2214, %v2201
  %2277 = vst.msk [vmem:[%s5 + $0x1f0] sm:$0xff] %vm2214, %v2206
  %2278 = vst.msk [vmem:[%s5 + $0x1f8] sm:$0xff] %vm2214, %v2211
  // Predicated region
  $region22: #{hv_lca_with_mamba.7} parent=0 // pred_check
    _
  $region23: #{hv_lca_with_mamba.7} parent=0 // pred_check_branch
    %2280 = sbr.rel (0) target = $region25
  $region24: #{hv_lca_with_mamba.7} parent=0 // pred_region
    _
  $region25: #{hv_lca_with_mamba.7} parent=0 // pred_fallthru
    _
  // Predicated region
  $region26: #{hv_lca_with_mamba.7} parent=0 // pred_check
    _
  $region27: #{hv_lca_with_mamba.7} parent=0 // pred_check_branch
    %2282 = sbr.rel (0) target = $region29
  $region28: #{hv_lca_with_mamba.7} parent=0 // pred_region
    _
  $region29: #{hv_lca_with_mamba.7} parent=0 // pred_fallthru
    _

// kernel: hv_lca_with_mamba.5
$region0: #{hv_lca_with_mamba.5}
  #allocation0 [shape = 'u32[]', space=smem, size = 0x4, offset = 0x4, fixed_abs, tag = 'smem constant byte address 0x4 - core index']
  #allocation1 [shape = 'u32[144,128]{1,0:T(1,128)}', space=vmem, size = 0x12000, scoped, tag = 'internal scratch']
  %s0 = inlined_call_operand.vmem [shape: f32[512,4], index: 0, kind: input, shape index: {}]
  %s1 = inlined_call_operand.vmem [shape: f32[512,4], index: 1, kind: input, shape index: {}]
  %s2 = inlined_call_operand.vmem [shape: f32[1,4], index: 2, kind: input, shape index: {}]
  %s3 = inlined_call_operand.vmem [shape: f32[4,8], index: 3, kind: input, shape index: {}]
  %s4 = inlined_call_operand.vmem [shape: f32[4,8], index: 4, kind: input, shape index: {}]
  %s5 = inlined_call_operand.vmem [shape: f32[512,8], index: 5, kind: output, shape index: {0}]
  %s6 = inlined_call_operand.vmem [shape: f32[512,8], index: 6, kind: output, shape index: {1}]
  %7 = xla_tuple %s5, %s6
  %s8 = sld [smem:[#allocation0]]
  $region38: #{hv_lca_with_mamba.5} parent=0
    _
  %s10 = ssub.s32 1, %s8
  %s11 = scalar_select 0, %s10, %s8
  // Predicated region
  $region2: #{hv_lca_with_mamba.5} parent=0 // pred_check
    _
  $region3: #{hv_lca_with_mamba.5} parent=0 // pred_check_branch
    %13 = sbr.rel (0) target = $region5
  $region4: #{hv_lca_with_mamba.5} parent=0 // pred_region
    _
  $region5: #{hv_lca_with_mamba.5} parent=0 // pred_fallthru
    _
  // Predicated region
  $region6: #{hv_lca_with_mamba.5} parent=0 // pred_check
    _
  $region7: #{hv_lca_with_mamba.5} parent=0 // pred_check_branch
    %15 = sbr.rel (0) target = $region9
  $region8: #{hv_lca_with_mamba.5} parent=0 // pred_region
    _
  $region9: #{hv_lca_with_mamba.5} parent=0 // pred_fallthru
    _
  // Predicated region
  $region10: #{hv_lca_with_mamba.5} parent=0 // pred_check
    _
  $region11: #{hv_lca_with_mamba.5} parent=0 // pred_check_branch
    %17 = sbr.rel (0) target = $region13
  $region12: #{hv_lca_with_mamba.5} parent=0 // pred_region
    _
  $region13: #{hv_lca_with_mamba.5} parent=0 // pred_fallthru
    _
  // Predicated region
  $region14: #{hv_lca_with_mamba.5} parent=0 // pred_check
    _
  $region15: #{hv_lca_with_mamba.5} parent=0 // pred_check_branch
    %19 = sbr.rel (0) target = $region17
  $region16: #{hv_lca_with_mamba.5} parent=0 // pred_region
    _
  $region17: #{hv_lca_with_mamba.5} parent=0 // pred_fallthru
    _
  // Predicated region
  $region18: #{hv_lca_with_mamba.5} parent=0 // pred_check
    _
  $region19: #{hv_lca_with_mamba.5} parent=0 // pred_check_branch
    %21 = sbr.rel (0) target = $region21
  $region20: #{hv_lca_with_mamba.5} parent=0 // pred_region
    _
  $region21: #{hv_lca_with_mamba.5} parent=0 // pred_fallthru
    _
  %v22 = vld [vmem:[%s2] sm:$0x1]
  %v23 = vld [vmem:[%s0] sm:$0xff]
  %v24 = vld [vmem:[%s0 + $0x8] sm:$0xff]
  %v25 = vld [vmem:[%s0 + $0x10] sm:$0xff]
  %v26 = vld [vmem:[%s0 + $0x18] sm:$0xff]
  %v27 = vld [vmem:[%s0 + $0x20] sm:$0xff]
  %v28 = vld [vmem:[%s0 + $0x28] sm:$0xff]
  %v29 = vld [vmem:[%s0 + $0x30] sm:$0xff]
  %v30 = vld [vmem:[%s0 + $0x38] sm:$0xff]
  %v31 = vld [vmem:[%s0 + $0x40] sm:$0xff]
  %v32 = vld [vmem:[%s0 + $0x48] sm:$0xff]
  %v33 = vld [vmem:[%s0 + $0x50] sm:$0xff]
  %v34 = vld [vmem:[%s0 + $0x58] sm:$0xff]
  %v35 = vld [vmem:[%s0 + $0x60] sm:$0xff]
  %v36 = vld [vmem:[%s0 + $0x68] sm:$0xff]
  %v37 = vld [vmem:[%s0 + $0x70] sm:$0xff]
  %v38 = vld [vmem:[%s0 + $0x78] sm:$0xff]
  %v39 = vld [vmem:[%s0 + $0x80] sm:$0xff]
  %v40 = vld [vmem:[%s0 + $0x88] sm:$0xff]
  %v41 = vld [vmem:[%s0 + $0x90] sm:$0xff]
  %v42 = vld [vmem:[%s0 + $0x98] sm:$0xff]
  %v43 = vld [vmem:[%s0 + $0xa0] sm:$0xff]
  %v44 = vld [vmem:[%s0 + $0xa8] sm:$0xff]
  %v45 = vld [vmem:[%s0 + $0xb0] sm:$0xff]
  %v46 = vld [vmem:[%s0 + $0xb8] sm:$0xff]
  %v47 = vld [vmem:[%s0 + $0xc0] sm:$0xff]
  %v48 = vld [vmem:[%s0 + $0xc8] sm:$0xff]
  %v49 = vld [vmem:[%s0 + $0xd0] sm:$0xff]
  %v50 = vld [vmem:[%s0 + $0xd8] sm:$0xff]
  %v51 = vld [vmem:[%s0 + $0xe0] sm:$0xff]
  %v52 = vld [vmem:[%s0 + $0xe8] sm:$0xff]
  %v53 = vld [vmem:[%s0 + $0xf0] sm:$0xff]
  %v54 = vld [vmem:[%s0 + $0xf8] sm:$0xff]
  %v55 = vld [vmem:[%s0 + $0x100] sm:$0xff]
  %v56 = vld [vmem:[%s0 + $0x108] sm:$0xff]
  %v57 = vld [vmem:[%s0 + $0x110] sm:$0xff]
  %v58 = vld [vmem:[%s0 + $0x118] sm:$0xff]
  %v59 = vld [vmem:[%s0 + $0x120] sm:$0xff]
  %v60 = vld [vmem:[%s0 + $0x128] sm:$0xff]
  %v61 = vld [vmem:[%s0 + $0x130] sm:$0xff]
  %v62 = vld [vmem:[%s0 + $0x138] sm:$0xff]
  %v63 = vld [vmem:[%s0 + $0x140] sm:$0xff]
  %v64 = vld [vmem:[%s0 + $0x148] sm:$0xff]
  %v65 = vld [vmem:[%s0 + $0x150] sm:$0xff]
  %v66 = vld [vmem:[%s0 + $0x158] sm:$0xff]
  %v67 = vld [vmem:[%s0 + $0x160] sm:$0xff]
  %v68 = vld [vmem:[%s0 + $0x168] sm:$0xff]
  %v69 = vld [vmem:[%s0 + $0x170] sm:$0xff]
  %v70 = vld [vmem:[%s0 + $0x178] sm:$0xff]
  %v71 = vld [vmem:[%s0 + $0x180] sm:$0xff]
  %v72 = vld [vmem:[%s0 + $0x188] sm:$0xff]
  %v73 = vld [vmem:[%s0 + $0x190] sm:$0xff]
  %v74 = vld [vmem:[%s0 + $0x198] sm:$0xff]
  %v75 = vld [vmem:[%s0 + $0x1a0] sm:$0xff]
  %v76 = vld [vmem:[%s0 + $0x1a8] sm:$0xff]
  %v77 = vld [vmem:[%s0 + $0x1b0] sm:$0xff]
  %v78 = vld [vmem:[%s0 + $0x1b8] sm:$0xff]
  %v79 = vld [vmem:[%s0 + $0x1c0] sm:$0xff]
  %v80 = vld [vmem:[%s0 + $0x1c8] sm:$0xff]
  %v81 = vld [vmem:[%s0 + $0x1d0] sm:$0xff]
  %v82 = vld [vmem:[%s0 + $0x1d8] sm:$0xff]
  %v83 = vld [vmem:[%s0 + $0x1e0] sm:$0xff]
  %v84 = vld [vmem:[%s0 + $0x1e8] sm:$0xff]
  %v85 = vld [vmem:[%s0 + $0x1f0] sm:$0xff]
  %v86 = vld [vmem:[%s0 + $0x1f8] sm:$0xff]
  %vm87 = vcmask 31744
  %v88 = vsel %vm87, %v23, 0.0
  %89 = vadd.xlane.f32.xlu0 %v88
  %v90 = vpop.xlane.xlu0 %89
  %v91 = vsel %vm87, %v24, 0.0
  %92 = vadd.xlane.f32.xlu0 %v91
  %v93 = vpop.xlane.xlu0 %92
  %v94 = vsel %vm87, %v25, 0.0
  %95 = vadd.xlane.f32.xlu0 %v94
  %v96 = vpop.xlane.xlu0 %95
  %v97 = vsel %vm87, %v26, 0.0
  %98 = vadd.xlane.f32.xlu0 %v97
  %v99 = vpop.xlane.xlu0 %98
  %v100 = vsel %vm87, %v27, 0.0
  %101 = vadd.xlane.f32.xlu0 %v100
  %v102 = vpop.xlane.xlu0 %101
  %v103 = vsel %vm87, %v28, 0.0
  %104 = vadd.xlane.f32.xlu0 %v103
  %v105 = vpop.xlane.xlu0 %104
  %v106 = vsel %vm87, %v29, 0.0
  %107 = vadd.xlane.f32.xlu0 %v106
  %v108 = vpop.xlane.xlu0 %107
  %v109 = vsel %vm87, %v30, 0.0
  %110 = vadd.xlane.f32.xlu0 %v109
  %v111 = vpop.xlane.xlu0 %110
  %v112 = vsel %vm87, %v31, 0.0
  %113 = vadd.xlane.f32.xlu0 %v112
  %v114 = vpop.xlane.xlu0 %113
  %v115 = vsel %vm87, %v32, 0.0
  %116 = vadd.xlane.f32.xlu0 %v115
  %v117 = vpop.xlane.xlu0 %116
  %v118 = vsel %vm87, %v33, 0.0
  %119 = vadd.xlane.f32.xlu0 %v118
  %v120 = vpop.xlane.xlu0 %119
  %v121 = vsel %vm87, %v34, 0.0
  %122 = vadd.xlane.f32.xlu0 %v121
  %v123 = vpop.xlane.xlu0 %122
  %v124 = vsel %vm87, %v35, 0.0
  %125 = vadd.xlane.f32.xlu0 %v124
  %v126 = vpop.xlane.xlu0 %125
  %v127 = vsel %vm87, %v36, 0.0
  %128 = vadd.xlane.f32.xlu0 %v127
  %v129 = vpop.xlane.xlu0 %128
  %v130 = vsel %vm87, %v37, 0.0
  %131 = vadd.xlane.f32.xlu0 %v130
  %v132 = vpop.xlane.xlu0 %131
  %v133 = vsel %vm87, %v38, 0.0
  %134 = vadd.xlane.f32.xlu0 %v133
  %v135 = vpop.xlane.xlu0 %134
  %v136 = vsel %vm87, %v39, 0.0
  %137 = vadd.xlane.f32.xlu0 %v136
  %v138 = vpop.xlane.xlu0 %137
  %v139 = vsel %vm87, %v40, 0.0
  %140 = vadd.xlane.f32.xlu0 %v139
  %v141 = vpop.xlane.xlu0 %140
  %v142 = vsel %vm87, %v41, 0.0
  %143 = vadd.xlane.f32.xlu0 %v142
  %v144 = vpop.xlane.xlu0 %143
  %v145 = vsel %vm87, %v42, 0.0
  %146 = vadd.xlane.f32.xlu0 %v145
  %v147 = vpop.xlane.xlu0 %146
  %v148 = vsel %vm87, %v43, 0.0
  %149 = vadd.xlane.f32.xlu0 %v148
  %v150 = vpop.xlane.xlu0 %149
  %v151 = vsel %vm87, %v44, 0.0
  %152 = vadd.xlane.f32.xlu0 %v151
  %v153 = vpop.xlane.xlu0 %152
  %v154 = vsel %vm87, %v45, 0.0
  %155 = vadd.xlane.f32.xlu0 %v154
  %v156 = vpop.xlane.xlu0 %155
  %v157 = vsel %vm87, %v46, 0.0
  %158 = vadd.xlane.f32.xlu0 %v157
  %v159 = vpop.xlane.xlu0 %158
  %v160 = vsel %vm87, %v47, 0.0
  %161 = vadd.xlane.f32.xlu0 %v160
  %v162 = vpop.xlane.xlu0 %161
  %v163 = vsel %vm87, %v48, 0.0
  %164 = vadd.xlane.f32.xlu0 %v163
  %v165 = vpop.xlane.xlu0 %164
  %v166 = vsel %vm87, %v49, 0.0
  %167 = vadd.xlane.f32.xlu0 %v166
  %v168 = vpop.xlane.xlu0 %167
  %v169 = vsel %vm87, %v50, 0.0
  %170 = vadd.xlane.f32.xlu0 %v169
  %v171 = vpop.xlane.xlu0 %170
  %v172 = vsel %vm87, %v51, 0.0
  %173 = vadd.xlane.f32.xlu0 %v172
  %v174 = vpop.xlane.xlu0 %173
  %v175 = vsel %vm87, %v52, 0.0
  %176 = vadd.xlane.f32.xlu0 %v175
  %v177 = vpop.xlane.xlu0 %176
  %v178 = vsel %vm87, %v53, 0.0
  %179 = vadd.xlane.f32.xlu0 %v178
  %v180 = vpop.xlane.xlu0 %179
  %v181 = vsel %vm87, %v54, 0.0
  %182 = vadd.xlane.f32.xlu0 %v181
  %v183 = vpop.xlane.xlu0 %182
  %v184 = vsel %vm87, %v55, 0.0
  %185 = vadd.xlane.f32.xlu0 %v184
  %v186 = vpop.xlane.xlu0 %185
  %v187 = vsel %vm87, %v56, 0.0
  %188 = vadd.xlane.f32.xlu0 %v187
  %v189 = vpop.xlane.xlu0 %188
  %v190 = vsel %vm87, %v57, 0.0
  %191 = vadd.xlane.f32.xlu0 %v190
  %v192 = vpop.xlane.xlu0 %191
  %v193 = vsel %vm87, %v58, 0.0
  %194 = vadd.xlane.f32.xlu0 %v193
  %v195 = vpop.xlane.xlu0 %194
  %v196 = vsel %vm87, %v59, 0.0
  %197 = vadd.xlane.f32.xlu0 %v196
  %v198 = vpop.xlane.xlu0 %197
  %v199 = vsel %vm87, %v60, 0.0
  %200 = vadd.xlane.f32.xlu0 %v199
  %v201 = vpop.xlane.xlu0 %200
  %v202 = vsel %vm87, %v61, 0.0
  %203 = vadd.xlane.f32.xlu0 %v202
  %v204 = vpop.xlane.xlu0 %203
  %v205 = vsel %vm87, %v62, 0.0
  %206 = vadd.xlane.f32.xlu0 %v205
  %v207 = vpop.xlane.xlu0 %206
  %v208 = vsel %vm87, %v63, 0.0
  %209 = vadd.xlane.f32.xlu0 %v208
  %v210 = vpop.xlane.xlu0 %209
  %v211 = vsel %vm87, %v64, 0.0
  %212 = vadd.xlane.f32.xlu0 %v211
  %v213 = vpop.xlane.xlu0 %212
  %v214 = vsel %vm87, %v65, 0.0
  %215 = vadd.xlane.f32.xlu0 %v214
  %v216 = vpop.xlane.xlu0 %215
  %v217 = vsel %vm87, %v66, 0.0
  %218 = vadd.xlane.f32.xlu0 %v217
  %v219 = vpop.xlane.xlu0 %218
  %v220 = vsel %vm87, %v67, 0.0
  %221 = vadd.xlane.f32.xlu0 %v220
  %v222 = vpop.xlane.xlu0 %221
  %v223 = vsel %vm87, %v68, 0.0
  %224 = vadd.xlane.f32.xlu0 %v223
  %v225 = vpop.xlane.xlu0 %224
  %v226 = vsel %vm87, %v69, 0.0
  %227 = vadd.xlane.f32.xlu0 %v226
  %v228 = vpop.xlane.xlu0 %227
  %v229 = vsel %vm87, %v70, 0.0
  %230 = vadd.xlane.f32.xlu0 %v229
  %v231 = vpop.xlane.xlu0 %230
  %v232 = vsel %vm87, %v71, 0.0
  %233 = vadd.xlane.f32.xlu0 %v232
  %v234 = vpop.xlane.xlu0 %233
  %v235 = vsel %vm87, %v72, 0.0
  %236 = vadd.xlane.f32.xlu0 %v235
  %v237 = vpop.xlane.xlu0 %236
  %v238 = vsel %vm87, %v73, 0.0
  %239 = vadd.xlane.f32.xlu0 %v238
  %v240 = vpop.xlane.xlu0 %239
  %v241 = vsel %vm87, %v74, 0.0
  %242 = vadd.xlane.f32.xlu0 %v241
  %v243 = vpop.xlane.xlu0 %242
  %v244 = vsel %vm87, %v75, 0.0
  %245 = vadd.xlane.f32.xlu0 %v244
  %v246 = vpop.xlane.xlu0 %245
  %v247 = vsel %vm87, %v76, 0.0
  %248 = vadd.xlane.f32.xlu0 %v247
  %v249 = vpop.xlane.xlu0 %248
  %v250 = vsel %vm87, %v77, 0.0
  %251 = vadd.xlane.f32.xlu0 %v250
  %v252 = vpop.xlane.xlu0 %251
  %v253 = vsel %vm87, %v78, 0.0
  %254 = vadd.xlane.f32.xlu0 %v253
  %v255 = vpop.xlane.xlu0 %254
  %v256 = vsel %vm87, %v79, 0.0
  %257 = vadd.xlane.f32.xlu0 %v256
  %v258 = vpop.xlane.xlu0 %257
  %v259 = vsel %vm87, %v80, 0.0
  %260 = vadd.xlane.f32.xlu0 %v259
  %v261 = vpop.xlane.xlu0 %260
  %v262 = vsel %vm87, %v81, 0.0
  %263 = vadd.xlane.f32.xlu0 %v262
  %v264 = vpop.xlane.xlu0 %263
  %v265 = vsel %vm87, %v82, 0.0
  %266 = vadd.xlane.f32.xlu0 %v265
  %v267 = vpop.xlane.xlu0 %266
  %v268 = vsel %vm87, %v83, 0.0
  %269 = vadd.xlane.f32.xlu0 %v268
  %v270 = vpop.xlane.xlu0 %269
  %v271 = vsel %vm87, %v84, 0.0
  %272 = vadd.xlane.f32.xlu0 %v271
  %v273 = vpop.xlane.xlu0 %272
  %v274 = vsel %vm87, %v85, 0.0
  %275 = vadd.xlane.f32.xlu0 %v274
  %v276 = vpop.xlane.xlu0 %275
  %v277 = vsel %vm87, %v86, 0.0
  %278 = vadd.xlane.f32.xlu0 %v277
  %v279 = vpop.xlane.xlu0 %278
  %v280 = vrcp.pop 4.0
  %v281 = vmul.f32 %v90, %v280
  %v282 = vmul.f32 %v93, %v280
  %v283 = vmul.f32 %v96, %v280
  %v284 = vmul.f32 %v99, %v280
  %v285 = vmul.f32 %v102, %v280
  %v286 = vmul.f32 %v105, %v280
  %v287 = vmul.f32 %v108, %v280
  %v288 = vmul.f32 %v111, %v280
  %v289 = vmul.f32 %v114, %v280
  %v290 = vmul.f32 %v117, %v280
  %v291 = vmul.f32 %v120, %v280
  %v292 = vmul.f32 %v123, %v280
  %v293 = vmul.f32 %v126, %v280
  %v294 = vmul.f32 %v129, %v280
  %v295 = vmul.f32 %v132, %v280
  %v296 = vmul.f32 %v135, %v280
  %v297 = vmul.f32 %v138, %v280
  %v298 = vmul.f32 %v141, %v280
  %v299 = vmul.f32 %v144, %v280
  %v300 = vmul.f32 %v147, %v280
  %v301 = vmul.f32 %v150, %v280
  %v302 = vmul.f32 %v153, %v280
  %v303 = vmul.f32 %v156, %v280
  %v304 = vmul.f32 %v159, %v280
  %v305 = vmul.f32 %v162, %v280
  %v306 = vmul.f32 %v165, %v280
  %v307 = vmul.f32 %v168, %v280
  %v308 = vmul.f32 %v171, %v280
  %v309 = vmul.f32 %v174, %v280
  %v310 = vmul.f32 %v177, %v280
  %v311 = vmul.f32 %v180, %v280
  %v312 = vmul.f32 %v183, %v280
  %v313 = vmul.f32 %v186, %v280
  %v314 = vmul.f32 %v189, %v280
  %v315 = vmul.f32 %v192, %v280
  %v316 = vmul.f32 %v195, %v280
  %v317 = vmul.f32 %v198, %v280
  %v318 = vmul.f32 %v201, %v280
  %v319 = vmul.f32 %v204, %v280
  %v320 = vmul.f32 %v207, %v280
  %v321 = vmul.f32 %v210, %v280
  %v322 = vmul.f32 %v213, %v280
  %v323 = vmul.f32 %v216, %v280
  %v324 = vmul.f32 %v219, %v280
  %v325 = vmul.f32 %v222, %v280
  %v326 = vmul.f32 %v225, %v280
  %v327 = vmul.f32 %v228, %v280
  %v328 = vmul.f32 %v231, %v280
  %v329 = vmul.f32 %v234, %v280
  %v330 = vmul.f32 %v237, %v280
  %v331 = vmul.f32 %v240, %v280
  %v332 = vmul.f32 %v243, %v280
  %v333 = vmul.f32 %v246, %v280
  %v334 = vmul.f32 %v249, %v280
  %v335 = vmul.f32 %v252, %v280
  %v336 = vmul.f32 %v255, %v280
  %v337 = vmul.f32 %v258, %v280
  %v338 = vmul.f32 %v261, %v280
  %v339 = vmul.f32 %v264, %v280
  %v340 = vmul.f32 %v267, %v280
  %v341 = vmul.f32 %v270, %v280
  %v342 = vmul.f32 %v273, %v280
  %v343 = vmul.f32 %v276, %v280
  %v344 = vmul.f32 %v279, %v280
  %v345 = vsub.f32 %v23, %v281
  %v346 = vsub.f32 %v24, %v282
  %v347 = vsub.f32 %v25, %v283
  %v348 = vsub.f32 %v26, %v284
  %v349 = vsub.f32 %v27, %v285
  %v350 = vsub.f32 %v28, %v286
  %v351 = vsub.f32 %v29, %v287
  %v352 = vsub.f32 %v30, %v288
  %v353 = vsub.f32 %v31, %v289
  %v354 = vsub.f32 %v32, %v290
  %v355 = vsub.f32 %v33, %v291
  %v356 = vsub.f32 %v34, %v292
  %v357 = vsub.f32 %v35, %v293
  %v358 = vsub.f32 %v36, %v294
  %v359 = vsub.f32 %v37, %v295
  %v360 = vsub.f32 %v38, %v296
  %v361 = vsub.f32 %v39, %v297
  %v362 = vsub.f32 %v40, %v298
  %v363 = vsub.f32 %v41, %v299
  %v364 = vsub.f32 %v42, %v300
  %v365 = vsub.f32 %v43, %v301
  %v366 = vsub.f32 %v44, %v302
  %v367 = vsub.f32 %v45, %v303
  %v368 = vsub.f32 %v46, %v304
  %v369 = vsub.f32 %v47, %v305
  %v370 = vsub.f32 %v48, %v306
  %v371 = vsub.f32 %v49, %v307
  %v372 = vsub.f32 %v50, %v308
  %v373 = vsub.f32 %v51, %v309
  %v374 = vsub.f32 %v52, %v310
  %v375 = vsub.f32 %v53, %v311
  %v376 = vsub.f32 %v54, %v312
  %v377 = vsub.f32 %v55, %v313
  %v378 = vsub.f32 %v56, %v314
  %v379 = vsub.f32 %v57, %v315
  %v380 = vsub.f32 %v58, %v316
  %v381 = vsub.f32 %v59, %v317
  %v382 = vsub.f32 %v60, %v318
  %v383 = vsub.f32 %v61, %v319
  %v384 = vsub.f32 %v62, %v320
  %v385 = vsub.f32 %v63, %v321
  %v386 = vsub.f32 %v64, %v322
  %v387 = vsub.f32 %v65, %v323
  %v388 = vsub.f32 %v66, %v324
  %v389 = vsub.f32 %v67, %v325
  %v390 = vsub.f32 %v68, %v326
  %v391 = vsub.f32 %v69, %v327
  %v392 = vsub.f32 %v70, %v328
  %v393 = vsub.f32 %v71, %v329
  %v394 = vsub.f32 %v72, %v330
  %v395 = vsub.f32 %v73, %v331
  %v396 = vsub.f32 %v74, %v332
  %v397 = vsub.f32 %v75, %v333
  %v398 = vsub.f32 %v76, %v334
  %v399 = vsub.f32 %v77, %v335
  %v400 = vsub.f32 %v78, %v336
  %v401 = vsub.f32 %v79, %v337
  %v402 = vsub.f32 %v80, %v338
  %v403 = vsub.f32 %v81, %v339
  %v404 = vsub.f32 %v82, %v340
  %v405 = vsub.f32 %v83, %v341
  %v406 = vsub.f32 %v84, %v342
  %v407 = vsub.f32 %v85, %v343
  %v408 = vsub.f32 %v86, %v344
  %v409 = vmul.f32 %v345, %v345
  %v410 = vmul.f32 %v346, %v346
  %v411 = vmul.f32 %v347, %v347
  %v412 = vmul.f32 %v348, %v348
  %v413 = vmul.f32 %v349, %v349
  %v414 = vmul.f32 %v350, %v350
  %v415 = vmul.f32 %v351, %v351
  %v416 = vmul.f32 %v352, %v352
  %v417 = vmul.f32 %v353, %v353
  %v418 = vmul.f32 %v354, %v354
  %v419 = vmul.f32 %v355, %v355
  %v420 = vmul.f32 %v356, %v356
  %v421 = vmul.f32 %v357, %v357
  %v422 = vmul.f32 %v358, %v358
  %v423 = vmul.f32 %v359, %v359
  %v424 = vmul.f32 %v360, %v360
  %v425 = vmul.f32 %v361, %v361
  %v426 = vmul.f32 %v362, %v362
  %v427 = vmul.f32 %v363, %v363
  %v428 = vmul.f32 %v364, %v364
  %v429 = vmul.f32 %v365, %v365
  %v430 = vmul.f32 %v366, %v366
  %v431 = vmul.f32 %v367, %v367
  %v432 = vmul.f32 %v368, %v368
  %v433 = vmul.f32 %v369, %v369
  %v434 = vmul.f32 %v370, %v370
  %v435 = vmul.f32 %v371, %v371
  %v436 = vmul.f32 %v372, %v372
  %v437 = vmul.f32 %v373, %v373
  %v438 = vmul.f32 %v374, %v374
  %v439 = vmul.f32 %v375, %v375
  %v440 = vmul.f32 %v376, %v376
  %v441 = vmul.f32 %v377, %v377
  %v442 = vmul.f32 %v378, %v378
  %v443 = vmul.f32 %v379, %v379
  %v444 = vmul.f32 %v380, %v380
  %v445 = vmul.f32 %v381, %v381
  %v446 = vmul.f32 %v382, %v382
  %v447 = vmul.f32 %v383, %v383
  %v448 = vmul.f32 %v384, %v384
  %v449 = vmul.f32 %v385, %v385
  %v450 = vmul.f32 %v386, %v386
  %v451 = vmul.f32 %v387, %v387
  %v452 = vmul.f32 %v388, %v388
  %v453 = vmul.f32 %v389, %v389
  %v454 = vmul.f32 %v390, %v390
  %v455 = vmul.f32 %v391, %v391
  %v456 = vmul.f32 %v392, %v392
  %v457 = vmul.f32 %v393, %v393
  %v458 = vmul.f32 %v394, %v394
  %v459 = vmul.f32 %v395, %v395
  %v460 = vmul.f32 %v396, %v396
  %v461 = vmul.f32 %v397, %v397
  %v462 = vmul.f32 %v398, %v398
  %v463 = vmul.f32 %v399, %v399
  %v464 = vmul.f32 %v400, %v400
  %v465 = vmul.f32 %v401, %v401
  %v466 = vmul.f32 %v402, %v402
  %v467 = vmul.f32 %v403, %v403
  %v468 = vmul.f32 %v404, %v404
  %v469 = vmul.f32 %v405, %v405
  %v470 = vmul.f32 %v406, %v406
  %v471 = vmul.f32 %v407, %v407
  %v472 = vmul.f32 %v408, %v408
  %v473 = vsel %vm87, %v409, 0.0
  %474 = vadd.xlane.f32.xlu0 %v473
  %v475 = vpop.xlane.xlu0 %474
  %v476 = vsel %vm87, %v410, 0.0
  %477 = vadd.xlane.f32.xlu0 %v476
  %v478 = vpop.xlane.xlu0 %477
  %v479 = vsel %vm87, %v411, 0.0
  %480 = vadd.xlane.f32.xlu0 %v479
  %v481 = vpop.xlane.xlu0 %480
  %v482 = vsel %vm87, %v412, 0.0
  %483 = vadd.xlane.f32.xlu0 %v482
  %v484 = vpop.xlane.xlu0 %483
  %v485 = vsel %vm87, %v413, 0.0
  %486 = vadd.xlane.f32.xlu0 %v485
  %v487 = vpop.xlane.xlu0 %486
  %v488 = vsel %vm87, %v414, 0.0
  %489 = vadd.xlane.f32.xlu0 %v488
  %v490 = vpop.xlane.xlu0 %489
  %v491 = vsel %vm87, %v415, 0.0
  %492 = vadd.xlane.f32.xlu0 %v491
  %v493 = vpop.xlane.xlu0 %492
  %v494 = vsel %vm87, %v416, 0.0
  %495 = vadd.xlane.f32.xlu0 %v494
  %v496 = vpop.xlane.xlu0 %495
  %v497 = vsel %vm87, %v417, 0.0
  %498 = vadd.xlane.f32.xlu0 %v497
  %v499 = vpop.xlane.xlu0 %498
  %v500 = vsel %vm87, %v418, 0.0
  %501 = vadd.xlane.f32.xlu0 %v500
  %v502 = vpop.xlane.xlu0 %501
  %v503 = vsel %vm87, %v419, 0.0
  %504 = vadd.xlane.f32.xlu0 %v503
  %v505 = vpop.xlane.xlu0 %504
  %v506 = vsel %vm87, %v420, 0.0
  %507 = vadd.xlane.f32.xlu0 %v506
  %v508 = vpop.xlane.xlu0 %507
  %v509 = vsel %vm87, %v421, 0.0
  %510 = vadd.xlane.f32.xlu0 %v509
  %v511 = vpop.xlane.xlu0 %510
  %v512 = vsel %vm87, %v422, 0.0
  %513 = vadd.xlane.f32.xlu0 %v512
  %v514 = vpop.xlane.xlu0 %513
  %v515 = vsel %vm87, %v423, 0.0
  %516 = vadd.xlane.f32.xlu0 %v515
  %v517 = vpop.xlane.xlu0 %516
  %v518 = vsel %vm87, %v424, 0.0
  %519 = vadd.xlane.f32.xlu0 %v518
  %v520 = vpop.xlane.xlu0 %519
  %v521 = vsel %vm87, %v425, 0.0
  %522 = vadd.xlane.f32.xlu0 %v521
  %v523 = vpop.xlane.xlu0 %522
  %v524 = vsel %vm87, %v426, 0.0
  %525 = vadd.xlane.f32.xlu0 %v524
  %v526 = vpop.xlane.xlu0 %525
  %v527 = vsel %vm87, %v427, 0.0
  %528 = vadd.xlane.f32.xlu0 %v527
  %v529 = vpop.xlane.xlu0 %528
  %v530 = vsel %vm87, %v428, 0.0
  %531 = vadd.xlane.f32.xlu0 %v530
  %v532 = vpop.xlane.xlu0 %531
  %v533 = vsel %vm87, %v429, 0.0
  %534 = vadd.xlane.f32.xlu0 %v533
  %v535 = vpop.xlane.xlu0 %534
  %v536 = vsel %vm87, %v430, 0.0
  %537 = vadd.xlane.f32.xlu0 %v536
  %v538 = vpop.xlane.xlu0 %537
  %v539 = vsel %vm87, %v431, 0.0
  %540 = vadd.xlane.f32.xlu0 %v539
  %v541 = vpop.xlane.xlu0 %540
  %v542 = vsel %vm87, %v432, 0.0
  %543 = vadd.xlane.f32.xlu0 %v542
  %v544 = vpop.xlane.xlu0 %543
  %v545 = vsel %vm87, %v433, 0.0
  %546 = vadd.xlane.f32.xlu0 %v545
  %v547 = vpop.xlane.xlu0 %546
  %v548 = vsel %vm87, %v434, 0.0
  %549 = vadd.xlane.f32.xlu0 %v548
  %v550 = vpop.xlane.xlu0 %549
  %v551 = vsel %vm87, %v435, 0.0
  %552 = vadd.xlane.f32.xlu0 %v551
  %v553 = vpop.xlane.xlu0 %552
  %v554 = vsel %vm87, %v436, 0.0
  %555 = vadd.xlane.f32.xlu0 %v554
  %v556 = vpop.xlane.xlu0 %555
  %v557 = vsel %vm87, %v437, 0.0
  %558 = vadd.xlane.f32.xlu0 %v557
  %v559 = vpop.xlane.xlu0 %558
  %v560 = vsel %vm87, %v438, 0.0
  %561 = vadd.xlane.f32.xlu0 %v560
  %v562 = vpop.xlane.xlu0 %561
  %v563 = vsel %vm87, %v439, 0.0
  %564 = vadd.xlane.f32.xlu0 %v563
  %v565 = vpop.xlane.xlu0 %564
  %v566 = vsel %vm87, %v440, 0.0
  %567 = vadd.xlane.f32.xlu0 %v566
  %v568 = vpop.xlane.xlu0 %567
  %v569 = vsel %vm87, %v441, 0.0
  %570 = vadd.xlane.f32.xlu0 %v569
  %v571 = vpop.xlane.xlu0 %570
  %v572 = vsel %vm87, %v442, 0.0
  %573 = vadd.xlane.f32.xlu0 %v572
  %v574 = vpop.xlane.xlu0 %573
  %v575 = vsel %vm87, %v443, 0.0
  %576 = vadd.xlane.f32.xlu0 %v575
  %v577 = vpop.xlane.xlu0 %576
  %v578 = vsel %vm87, %v444, 0.0
  %579 = vadd.xlane.f32.xlu0 %v578
  %v580 = vpop.xlane.xlu0 %579
  %v581 = vsel %vm87, %v445, 0.0
  %582 = vadd.xlane.f32.xlu0 %v581
  %v583 = vpop.xlane.xlu0 %582
  %v584 = vsel %vm87, %v446, 0.0
  %585 = vadd.xlane.f32.xlu0 %v584
  %v586 = vpop.xlane.xlu0 %585
  %v587 = vsel %vm87, %v447, 0.0
  %588 = vadd.xlane.f32.xlu0 %v587
  %v589 = vpop.xlane.xlu0 %588
  %v590 = vsel %vm87, %v448, 0.0
  %591 = vadd.xlane.f32.xlu0 %v590
  %v592 = vpop.xlane.xlu0 %591
  %v593 = vsel %vm87, %v449, 0.0
  %594 = vadd.xlane.f32.xlu0 %v593
  %v595 = vpop.xlane.xlu0 %594
  %v596 = vsel %vm87, %v450, 0.0
  %597 = vadd.xlane.f32.xlu0 %v596
  %v598 = vpop.xlane.xlu0 %597
  %v599 = vsel %vm87, %v451, 0.0
  %600 = vadd.xlane.f32.xlu0 %v599
  %v601 = vpop.xlane.xlu0 %600
  %v602 = vsel %vm87, %v452, 0.0
  %603 = vadd.xlane.f32.xlu0 %v602
  %v604 = vpop.xlane.xlu0 %603
  %v605 = vsel %vm87, %v453, 0.0
  %606 = vadd.xlane.f32.xlu0 %v605
  %v607 = vpop.xlane.xlu0 %606
  %v608 = vsel %vm87, %v454, 0.0
  %609 = vadd.xlane.f32.xlu0 %v608
  %v610 = vpop.xlane.xlu0 %609
  %v611 = vsel %vm87, %v455, 0.0
  %612 = vadd.xlane.f32.xlu0 %v611
  %v613 = vpop.xlane.xlu0 %612
  %v614 = vsel %vm87, %v456, 0.0
  %615 = vadd.xlane.f32.xlu0 %v614
  %v616 = vpop.xlane.xlu0 %615
  %v617 = vsel %vm87, %v457, 0.0
  %618 = vadd.xlane.f32.xlu0 %v617
  %v619 = vpop.xlane.xlu0 %618
  %v620 = vsel %vm87, %v458, 0.0
  %621 = vadd.xlane.f32.xlu0 %v620
  %v622 = vpop.xlane.xlu0 %621
  %v623 = vsel %vm87, %v459, 0.0
  %624 = vadd.xlane.f32.xlu0 %v623
  %v625 = vpop.xlane.xlu0 %624
  %v626 = vsel %vm87, %v460, 0.0
  %627 = vadd.xlane.f32.xlu0 %v626
  %v628 = vpop.xlane.xlu0 %627
  %v629 = vsel %vm87, %v461, 0.0
  %630 = vadd.xlane.f32.xlu0 %v629
  %v631 = vpop.xlane.xlu0 %630
  %v632 = vsel %vm87, %v462, 0.0
  %633 = vadd.xlane.f32.xlu0 %v632
  %v634 = vpop.xlane.xlu0 %633
  %v635 = vsel %vm87, %v463, 0.0
  %636 = vadd.xlane.f32.xlu0 %v635
  %v637 = vpop.xlane.xlu0 %636
  %v638 = vsel %vm87, %v464, 0.0
  %639 = vadd.xlane.f32.xlu0 %v638
  %v640 = vpop.xlane.xlu0 %639
  %v641 = vsel %vm87, %v465, 0.0
  %642 = vadd.xlane.f32.xlu0 %v641
  %v643 = vpop.xlane.xlu0 %642
  %v644 = vsel %vm87, %v466, 0.0
  %645 = vadd.xlane.f32.xlu0 %v644
  %v646 = vpop.xlane.xlu0 %645
  %v647 = vsel %vm87, %v467, 0.0
  %648 = vadd.xlane.f32.xlu0 %v647
  %v649 = vpop.xlane.xlu0 %648
  %v650 = vsel %vm87, %v468, 0.0
  %651 = vadd.xlane.f32.xlu0 %v650
  %v652 = vpop.xlane.xlu0 %651
  %v653 = vsel %vm87, %v469, 0.0
  %654 = vadd.xlane.f32.xlu0 %v653
  %v655 = vpop.xlane.xlu0 %654
  %v656 = vsel %vm87, %v470, 0.0
  %657 = vadd.xlane.f32.xlu0 %v656
  %v658 = vpop.xlane.xlu0 %657
  %v659 = vsel %vm87, %v471, 0.0
  %660 = vadd.xlane.f32.xlu0 %v659
  %v661 = vpop.xlane.xlu0 %660
  %v662 = vsel %vm87, %v472, 0.0
  %663 = vadd.xlane.f32.xlu0 %v662
  %v664 = vpop.xlane.xlu0 %663
  %v665 = vmul.f32 %v475, %v280
  %v666 = vmul.f32 %v478, %v280
  %v667 = vmul.f32 %v481, %v280
  %v668 = vmul.f32 %v484, %v280
  %v669 = vmul.f32 %v487, %v280
  %v670 = vmul.f32 %v490, %v280
  %v671 = vmul.f32 %v493, %v280
  %v672 = vmul.f32 %v496, %v280
  %v673 = vmul.f32 %v499, %v280
  %v674 = vmul.f32 %v502, %v280
  %v675 = vmul.f32 %v505, %v280
  %v676 = vmul.f32 %v508, %v280
  %v677 = vmul.f32 %v511, %v280
  %v678 = vmul.f32 %v514, %v280
  %v679 = vmul.f32 %v517, %v280
  %v680 = vmul.f32 %v520, %v280
  %v681 = vmul.f32 %v523, %v280
  %v682 = vmul.f32 %v526, %v280
  %v683 = vmul.f32 %v529, %v280
  %v684 = vmul.f32 %v532, %v280
  %v685 = vmul.f32 %v535, %v280
  %v686 = vmul.f32 %v538, %v280
  %v687 = vmul.f32 %v541, %v280
  %v688 = vmul.f32 %v544, %v280
  %v689 = vmul.f32 %v547, %v280
  %v690 = vmul.f32 %v550, %v280
  %v691 = vmul.f32 %v553, %v280
  %v692 = vmul.f32 %v556, %v280
  %v693 = vmul.f32 %v559, %v280
  %v694 = vmul.f32 %v562, %v280
  %v695 = vmul.f32 %v565, %v280
  %v696 = vmul.f32 %v568, %v280
  %v697 = vmul.f32 %v571, %v280
  %v698 = vmul.f32 %v574, %v280
  %v699 = vmul.f32 %v577, %v280
  %v700 = vmul.f32 %v580, %v280
  %v701 = vmul.f32 %v583, %v280
  %v702 = vmul.f32 %v586, %v280
  %v703 = vmul.f32 %v589, %v280
  %v704 = vmul.f32 %v592, %v280
  %v705 = vmul.f32 %v595, %v280
  %v706 = vmul.f32 %v598, %v280
  %v707 = vmul.f32 %v601, %v280
  %v708 = vmul.f32 %v604, %v280
  %v709 = vmul.f32 %v607, %v280
  %v710 = vmul.f32 %v610, %v280
  %v711 = vmul.f32 %v613, %v280
  %v712 = vmul.f32 %v616, %v280
  %v713 = vmul.f32 %v619, %v280
  %v714 = vmul.f32 %v622, %v280
  %v715 = vmul.f32 %v625, %v280
  %v716 = vmul.f32 %v628, %v280
  %v717 = vmul.f32 %v631, %v280
  %v718 = vmul.f32 %v634, %v280
  %v719 = vmul.f32 %v637, %v280
  %v720 = vmul.f32 %v640, %v280
  %v721 = vmul.f32 %v643, %v280
  %v722 = vmul.f32 %v646, %v280
  %v723 = vmul.f32 %v649, %v280
  %v724 = vmul.f32 %v652, %v280
  %v725 = vmul.f32 %v655, %v280
  %v726 = vmul.f32 %v658, %v280
  %v727 = vmul.f32 %v661, %v280
  %v728 = vmul.f32 %v664, %v280
  %v729 = vadd.f32 %v665, 1e-05
  %v730 = vadd.f32 %v666, 1e-05
  %v731 = vadd.f32 %v667, 1e-05
  %v732 = vadd.f32 %v668, 1e-05
  %v733 = vadd.f32 %v669, 1e-05
  %v734 = vadd.f32 %v670, 1e-05
  %v735 = vadd.f32 %v671, 1e-05
  %v736 = vadd.f32 %v672, 1e-05
  %v737 = vadd.f32 %v673, 1e-05
  %v738 = vadd.f32 %v674, 1e-05
  %v739 = vadd.f32 %v675, 1e-05
  %v740 = vadd.f32 %v676, 1e-05
  %v741 = vadd.f32 %v677, 1e-05
  %v742 = vadd.f32 %v678, 1e-05
  %v743 = vadd.f32 %v679, 1e-05
  %v744 = vadd.f32 %v680, 1e-05
  %v745 = vadd.f32 %v681, 1e-05
  %v746 = vadd.f32 %v682, 1e-05
  %v747 = vadd.f32 %v683, 1e-05
  %v748 = vadd.f32 %v684, 1e-05
  %v749 = vadd.f32 %v685, 1e-05
  %v750 = vadd.f32 %v686, 1e-05
  %v751 = vadd.f32 %v687, 1e-05
  %v752 = vadd.f32 %v688, 1e-05
  %v753 = vadd.f32 %v689, 1e-05
  %v754 = vadd.f32 %v690, 1e-05
  %v755 = vadd.f32 %v691, 1e-05
  %v756 = vadd.f32 %v692, 1e-05
  %v757 = vadd.f32 %v693, 1e-05
  %v758 = vadd.f32 %v694, 1e-05
  %v759 = vadd.f32 %v695, 1e-05
  %v760 = vadd.f32 %v696, 1e-05
  %v761 = vadd.f32 %v697, 1e-05
  %v762 = vadd.f32 %v698, 1e-05
  %v763 = vadd.f32 %v699, 1e-05
  %v764 = vadd.f32 %v700, 1e-05
  %v765 = vadd.f32 %v701, 1e-05
  %v766 = vadd.f32 %v702, 1e-05
  %v767 = vadd.f32 %v703, 1e-05
  %v768 = vadd.f32 %v704, 1e-05
  %v769 = vadd.f32 %v705, 1e-05
  %v770 = vadd.f32 %v706, 1e-05
  %v771 = vadd.f32 %v707, 1e-05
  %v772 = vadd.f32 %v708, 1e-05
  %v773 = vadd.f32 %v709, 1e-05
  %v774 = vadd.f32 %v710, 1e-05
  %v775 = vadd.f32 %v711, 1e-05
  %v776 = vadd.f32 %v712, 1e-05
  %v777 = vadd.f32 %v713, 1e-05
  %v778 = vadd.f32 %v714, 1e-05
  %v779 = vadd.f32 %v715, 1e-05
  %v780 = vadd.f32 %v716, 1e-05
  %v781 = vadd.f32 %v717, 1e-05
  %v782 = vadd.f32 %v718, 1e-05
  %v783 = vadd.f32 %v719, 1e-05
  %v784 = vadd.f32 %v720, 1e-05
  %v785 = vadd.f32 %v721, 1e-05
  %v786 = vadd.f32 %v722, 1e-05
  %v787 = vadd.f32 %v723, 1e-05
  %v788 = vadd.f32 %v724, 1e-05
  %v789 = vadd.f32 %v725, 1e-05
  %v790 = vadd.f32 %v726, 1e-05
  %v791 = vadd.f32 %v727, 1e-05
  %v792 = vadd.f32 %v728, 1e-05
  %v793 = vrsqrt.pop %v729
  %v794 = vrsqrt.pop %v730
  %v795 = vrsqrt.pop %v731
  %v796 = vrsqrt.pop %v732
  %v797 = vrsqrt.pop %v733
  %v798 = vrsqrt.pop %v734
  %v799 = vrsqrt.pop %v735
  %v800 = vrsqrt.pop %v736
  %v801 = vrsqrt.pop %v737
  %v802 = vrsqrt.pop %v738
  %v803 = vrsqrt.pop %v739
  %v804 = vrsqrt.pop %v740
  %v805 = vrsqrt.pop %v741
  %v806 = vrsqrt.pop %v742
  %v807 = vrsqrt.pop %v743
  %v808 = vrsqrt.pop %v744
  %v809 = vrsqrt.pop %v745
  %v810 = vrsqrt.pop %v746
  %v811 = vrsqrt.pop %v747
  %v812 = vrsqrt.pop %v748
  %v813 = vrsqrt.pop %v749
  %v814 = vrsqrt.pop %v750
  %v815 = vrsqrt.pop %v751
  %v816 = vrsqrt.pop %v752
  %v817 = vrsqrt.pop %v753
  %v818 = vrsqrt.pop %v754
  %v819 = vrsqrt.pop %v755
  %v820 = vrsqrt.pop %v756
  %v821 = vrsqrt.pop %v757
  %v822 = vrsqrt.pop %v758
  %v823 = vrsqrt.pop %v759
  %v824 = vrsqrt.pop %v760
  %v825 = vrsqrt.pop %v761
  %v826 = vrsqrt.pop %v762
  %v827 = vrsqrt.pop %v763
  %v828 = vrsqrt.pop %v764
  %v829 = vrsqrt.pop %v765
  %v830 = vrsqrt.pop %v766
  %v831 = vrsqrt.pop %v767
  %v832 = vrsqrt.pop %v768
  %v833 = vrsqrt.pop %v769
  %v834 = vrsqrt.pop %v770
  %v835 = vrsqrt.pop %v771
  %v836 = vrsqrt.pop %v772
  %v837 = vrsqrt.pop %v773
  %v838 = vrsqrt.pop %v774
  %v839 = vrsqrt.pop %v775
  %v840 = vrsqrt.pop %v776
  %v841 = vrsqrt.pop %v777
  %v842 = vrsqrt.pop %v778
  %v843 = vrsqrt.pop %v779
  %v844 = vrsqrt.pop %v780
  %v845 = vrsqrt.pop %v781
  %v846 = vrsqrt.pop %v782
  %v847 = vrsqrt.pop %v783
  %v848 = vrsqrt.pop %v784
  %v849 = vrsqrt.pop %v785
  %v850 = vrsqrt.pop %v786
  %v851 = vrsqrt.pop %v787
  %v852 = vrsqrt.pop %v788
  %v853 = vrsqrt.pop %v789
  %v854 = vrsqrt.pop %v790
  %v855 = vrsqrt.pop %v791
  %v856 = vrsqrt.pop %v792
  %v857 = vmul.f32 %v23, %v793
  %v858 = vmul.f32 %v24, %v794
  %v859 = vmul.f32 %v25, %v795
  %v860 = vmul.f32 %v26, %v796
  %v861 = vmul.f32 %v27, %v797
  %v862 = vmul.f32 %v28, %v798
  %v863 = vmul.f32 %v29, %v799
  %v864 = vmul.f32 %v30, %v800
  %v865 = vmul.f32 %v31, %v801
  %v866 = vmul.f32 %v32, %v802
  %v867 = vmul.f32 %v33, %v803
  %v868 = vmul.f32 %v34, %v804
  %v869 = vmul.f32 %v35, %v805
  %v870 = vmul.f32 %v36, %v806
  %v871 = vmul.f32 %v37, %v807
  %v872 = vmul.f32 %v38, %v808
  %v873 = vmul.f32 %v39, %v809
  %v874 = vmul.f32 %v40, %v810
  %v875 = vmul.f32 %v41, %v811
  %v876 = vmul.f32 %v42, %v812
  %v877 = vmul.f32 %v43, %v813
  %v878 = vmul.f32 %v44, %v814
  %v879 = vmul.f32 %v45, %v815
  %v880 = vmul.f32 %v46, %v816
  %v881 = vmul.f32 %v47, %v817
  %v882 = vmul.f32 %v48, %v818
  %v883 = vmul.f32 %v49, %v819
  %v884 = vmul.f32 %v50, %v820
  %v885 = vmul.f32 %v51, %v821
  %v886 = vmul.f32 %v52, %v822
  %v887 = vmul.f32 %v53, %v823
  %v888 = vmul.f32 %v54, %v824
  %v889 = vmul.f32 %v55, %v825
  %v890 = vmul.f32 %v56, %v826
  %v891 = vmul.f32 %v57, %v827
  %v892 = vmul.f32 %v58, %v828
  %v893 = vmul.f32 %v59, %v829
  %v894 = vmul.f32 %v60, %v830
  %v895 = vmul.f32 %v61, %v831
  %v896 = vmul.f32 %v62, %v832
  %v897 = vmul.f32 %v63, %v833
  %v898 = vmul.f32 %v64, %v834
  %v899 = vmul.f32 %v65, %v835
  %v900 = vmul.f32 %v66, %v836
  %v901 = vmul.f32 %v67, %v837
  %v902 = vmul.f32 %v68, %v838
  %v903 = vmul.f32 %v69, %v839
  %v904 = vmul.f32 %v70, %v840
  %v905 = vmul.f32 %v71, %v841
  %v906 = vmul.f32 %v72, %v842
  %v907 = vmul.f32 %v73, %v843
  %v908 = vmul.f32 %v74, %v844
  %v909 = vmul.f32 %v75, %v845
  %v910 = vmul.f32 %v76, %v846
  %v911 = vmul.f32 %v77, %v847
  %v912 = vmul.f32 %v78, %v848
  %v913 = vmul.f32 %v79, %v849
  %v914 = vmul.f32 %v80, %v850
  %v915 = vmul.f32 %v81, %v851
  %v916 = vmul.f32 %v82, %v852
  %v917 = vmul.f32 %v83, %v853
  %v918 = vmul.f32 %v84, %v854
  %v919 = vmul.f32 %v85, %v855
  %v920 = vmul.f32 %v86, %v856
  %v922 = vlaneseq
  %v923 = vshrl.u32 %v922, 7
  %v924 = vsub.s32 0, %v923
  %v925 = vrot.slane %v22, %v924
  %v927 = vmul.f32 %v857, %v925
  %v928 = vmul.f32 %v858, %v925
  %v929 = vmul.f32 %v859, %v925
  %v930 = vmul.f32 %v860, %v925
  %v931 = vmul.f32 %v861, %v925
  %v932 = vmul.f32 %v862, %v925
  %v933 = vmul.f32 %v863, %v925
  %v934 = vmul.f32 %v864, %v925
  %v935 = vmul.f32 %v865, %v925
  %v936 = vmul.f32 %v866, %v925
  %v937 = vmul.f32 %v867, %v925
  %v938 = vmul.f32 %v868, %v925
  %v939 = vmul.f32 %v869, %v925
  %v940 = vmul.f32 %v870, %v925
  %v941 = vmul.f32 %v871, %v925
  %v942 = vmul.f32 %v872, %v925
  %v943 = vmul.f32 %v873, %v925
  %v944 = vmul.f32 %v874, %v925
  %v945 = vmul.f32 %v875, %v925
  %v946 = vmul.f32 %v876, %v925
  %v947 = vmul.f32 %v877, %v925
  %v948 = vmul.f32 %v878, %v925
  %v949 = vmul.f32 %v879, %v925
  %v950 = vmul.f32 %v880, %v925
  %v951 = vmul.f32 %v881, %v925
  %v952 = vmul.f32 %v882, %v925
  %v953 = vmul.f32 %v883, %v925
  %v954 = vmul.f32 %v884, %v925
  %v955 = vmul.f32 %v885, %v925
  %v956 = vmul.f32 %v886, %v925
  %v957 = vmul.f32 %v887, %v925
  %v958 = vmul.f32 %v888, %v925
  %v959 = vmul.f32 %v889, %v925
  %v960 = vmul.f32 %v890, %v925
  %v961 = vmul.f32 %v891, %v925
  %v962 = vmul.f32 %v892, %v925
  %v963 = vmul.f32 %v893, %v925
  %v964 = vmul.f32 %v894, %v925
  %v965 = vmul.f32 %v895, %v925
  %v966 = vmul.f32 %v896, %v925
  %v967 = vmul.f32 %v897, %v925
  %v968 = vmul.f32 %v898, %v925
  %v969 = vmul.f32 %v899, %v925
  %v970 = vmul.f32 %v900, %v925
  %v971 = vmul.f32 %v901, %v925
  %v972 = vmul.f32 %v902, %v925
  %v973 = vmul.f32 %v903, %v925
  %v974 = vmul.f32 %v904, %v925
  %v975 = vmul.f32 %v905, %v925
  %v976 = vmul.f32 %v906, %v925
  %v977 = vmul.f32 %v907, %v925
  %v978 = vmul.f32 %v908, %v925
  %v979 = vmul.f32 %v909, %v925
  %v980 = vmul.f32 %v910, %v925
  %v981 = vmul.f32 %v911, %v925
  %v982 = vmul.f32 %v912, %v925
  %v983 = vmul.f32 %v913, %v925
  %v984 = vmul.f32 %v914, %v925
  %v985 = vmul.f32 %v915, %v925
  %v986 = vmul.f32 %v916, %v925
  %v987 = vmul.f32 %v917, %v925
  %v988 = vmul.f32 %v918, %v925
  %v989 = vmul.f32 %v919, %v925
  %v990 = vmul.f32 %v920, %v925
  %v991 = vld [vmem:[%s3] sm:$0xf]
  %v993 = vsel %vm87, %v927, 0
  %v996 = vsel %vm87, %v928, 0
  %v999 = vsel %vm87, %v929, 0
  %v1002 = vsel %vm87, %v930, 0
  %v1005 = vsel %vm87, %v931, 0
  %v1008 = vsel %vm87, %v932, 0
  %v1011 = vsel %vm87, %v933, 0
  %v1014 = vsel %vm87, %v934, 0
  %v1017 = vsel %vm87, %v935, 0
  %v1020 = vsel %vm87, %v936, 0
  %v1023 = vsel %vm87, %v937, 0
  %v1026 = vsel %vm87, %v938, 0
  %v1029 = vsel %vm87, %v939, 0
  %v1032 = vsel %vm87, %v940, 0
  %v1035 = vsel %vm87, %v941, 0
  %v1038 = vsel %vm87, %v942, 0
  %v1041 = vsel %vm87, %v943, 0
  %v1044 = vsel %vm87, %v944, 0
  %v1047 = vsel %vm87, %v945, 0
  %v1050 = vsel %vm87, %v946, 0
  %v1053 = vsel %vm87, %v947, 0
  %v1056 = vsel %vm87, %v948, 0
  %v1059 = vsel %vm87, %v949, 0
  %v1062 = vsel %vm87, %v950, 0
  %v1065 = vsel %vm87, %v951, 0
  %v1068 = vsel %vm87, %v952, 0
  %v1071 = vsel %vm87, %v953, 0
  %v1074 = vsel %vm87, %v954, 0
  %v1077 = vsel %vm87, %v955, 0
  %v1080 = vsel %vm87, %v956, 0
  %v1083 = vsel %vm87, %v957, 0
  %v1086 = vsel %vm87, %v958, 0
  %v1089 = vsel %vm87, %v959, 0
  %v1092 = vsel %vm87, %v960, 0
  %v1095 = vsel %vm87, %v961, 0
  %v1098 = vsel %vm87, %v962, 0
  %v1101 = vsel %vm87, %v963, 0
  %v1104 = vsel %vm87, %v964, 0
  %v1107 = vsel %vm87, %v965, 0
  %v1110 = vsel %vm87, %v966, 0
  %v1113 = vsel %vm87, %v967, 0
  %v1116 = vsel %vm87, %v968, 0
  %v1119 = vsel %vm87, %v969, 0
  %v1122 = vsel %vm87, %v970, 0
  %v1125 = vsel %vm87, %v971, 0
  %v1128 = vsel %vm87, %v972, 0
  %v1131 = vsel %vm87, %v973, 0
  %v1134 = vsel %vm87, %v974, 0
  %v1137 = vsel %vm87, %v975, 0
  %v1140 = vsel %vm87, %v976, 0
  %v1143 = vsel %vm87, %v977, 0
  %v1146 = vsel %vm87, %v978, 0
  %v1149 = vsel %vm87, %v979, 0
  %v1152 = vsel %vm87, %v980, 0
  %v1155 = vsel %vm87, %v981, 0
  %v1158 = vsel %vm87, %v982, 0
  %v1161 = vsel %vm87, %v983, 0
  %v1164 = vsel %vm87, %v984, 0
  %v1167 = vsel %vm87, %v985, 0
  %v1170 = vsel %vm87, %v986, 0
  %v1173 = vsel %vm87, %v987, 0
  %v1176 = vsel %vm87, %v988, 0
  %v1179 = vsel %vm87, %v989, 0
  %v1182 = vsel %vm87, %v990, 0
  %vm1184 = vcmask 1043456
  %v1186 = vsel %vm1184, %v991, 0
  %1188 = vmatprep.subr.mxu0 0.0
  %1189 = vmatpush1.msra.mxu0 %v1186
  %1190 = vmatprep.subr.mxu0 0.0
  %1191 = vmatpush1.msra.mxu0 0.0
  %1192 = vmatprep.subr.mxu0 0.0
  %1193 = vmatpush1.msra.mxu0 0.0
  %1194 = vmatprep.subr.mxu0 0.0
  %1195 = vmatpush1.msra.mxu0 0.0
  %1196 = vmatprep.subr.mxu0 0.0
  %1197 = vmatpush1.msra.mxu0 0.0
  %1198 = vmatprep.subr.mxu0 0.0
  %1199 = vmatpush1.msra.mxu0 0.0
  %1200 = vmatprep.subr.mxu0 0.0
  %1201 = vmatpush1.msra.mxu0 0.0
  %1202 = vmatprep.subr.mxu0 0.0
  %1203 = vmatpush1.msra.mxu0 0.0
  %1204 = vmatprep.subr.mxu0 0.0
  %1205 = vmatpush1.msra.mxu0 0.0
  %1206 = vmatprep.subr.mxu0 0.0
  %1207 = vmatpush1.msra.mxu0 0.0
  %1208 = vmatprep.subr.mxu0 0.0
  %1209 = vmatpush1.msra.mxu0 0.0
  %1210 = vmatprep.subr.mxu0 0.0
  %1211 = vmatpush1.msra.mxu0 0.0
  %1212 = vmatprep.subr.mxu0 0.0
  %1213 = vmatpush1.msra.mxu0 0.0
  %1214 = vmatprep.subr.mxu0 0.0
  %1215 = vmatpush1.msra.mxu0 0.0
  %1216 = vmatprep.subr.mxu0 0.0
  %1217 = vmatpush1.msra.mxu0 0.0
  %1218 = vmatprep.subr.mxu0 0.0
  %1219 = vmatpush1.msra.mxu0 0.0
  %1220 = vmatprep.subr.mxu0 0.0
  %1221 = vmatpush1.msra.mxu0 0.0
  %1222 = vmatprep.subr.mxu0 0.0
  %1223 = vmatpush1.msra.mxu0 0.0
  %1224 = vmatprep.subr.mxu0 0.0
  %1225 = vmatpush1.msra.mxu0 0.0
  %1226 = vmatprep.subr.mxu0 0.0
  %1227 = vmatpush1.msra.mxu0 0.0
  %1228 = vmatprep.subr.mxu0 0.0
  %1229 = vmatpush1.msra.mxu0 0.0
  %1230 = vmatprep.subr.mxu0 0.0
  %1231 = vmatpush1.msra.mxu0 0.0
  %1232 = vmatprep.subr.mxu0 0.0
  %1233 = vmatpush1.msra.mxu0 0.0
  %1234 = vmatprep.subr.mxu0 0.0
  %1235 = vmatpush1.msra.mxu0 0.0
  %1236 = vmatprep.subr.mxu0 0.0
  %1237 = vmatpush1.msra.mxu0 0.0
  %1238 = vmatprep.subr.mxu0 0.0
  %1239 = vmatpush1.msra.mxu0 0.0
  %1240 = vmatprep.subr.mxu0 0.0
  %1241 = vmatpush1.msra.mxu0 0.0
  %1242 = vmatprep.subr.mxu0 0.0
  %1243 = vmatpush1.msra.mxu0 0.0
  %1244 = vmatprep.subr.mxu0 0.0
  %1245 = vmatpush1.msra.mxu0 0.0
  %1246 = vmatprep.subr.mxu0 0.0
  %1247 = vmatpush1.msra.mxu0 0.0
  %1248 = vmatprep.subr.mxu0 0.0
  %1249 = vmatpush1.msra.mxu0 0.0
  %1250 = vmatprep.subr.mxu0 0.0
  %1251 = vmatpush1.msra.mxu0 0.0
  %1252 = vmatprep.mubr.f32.mxu0 0.0
  %1253 = vmatmul.mubr.f32.gmra.mrb[0].mxu0 %v993
  %v1254 = vpop.f32.mrb[0].mxu0
  %v1255 = vadd.f32 0.0, %v1254
  %v1256 = vpop.f32.mrb[0].mxu0
  %1257 = vmatprep.mubr.f32.mxu0 0.0
  %1258 = vmatmul.mubr.f32.gmra.mrb[0].mxu0 %v996
  %v1259 = vpop.f32.mrb[0].mxu0
  %v1260 = vadd.f32 0.0, %v1259
  %v1261 = vpop.f32.mrb[0].mxu0
  %1262 = vmatprep.mubr.f32.mxu0 0.0
  %1263 = vmatmul.mubr.f32.gmra.mrb[0].mxu0 %v999
  %v1264 = vpop.f32.mrb[0].mxu0
  %v1265 = vadd.f32 0.0, %v1264
  %v1266 = vpop.f32.mrb[0].mxu0
  %1267 = vmatprep.mubr.f32.mxu0 0.0
  %1268 = vmatmul.mubr.f32.gmra.mrb[0].mxu0 %v1002
  %v1269 = vpop.f32.mrb[0].mxu0
  %v1270 = vadd.f32 0.0, %v1269
  %v1271 = vpop.f32.mrb[0].mxu0
  %1272 = vmatprep.mubr.f32.mxu0 0.0
  %1273 = vmatmul.mubr.f32.gmra.mrb[0].mxu0 %v1005
  %v1274 = vpop.f32.mrb[0].mxu0
  %v1275 = vadd.f32 0.0, %v1274
  %v1276 = vpop.f32.mrb[0].mxu0
  %1277 = vmatprep.mubr.f32.mxu0 0.0
  %1278 = vmatmul.mubr.f32.gmra.mrb[0].mxu0 %v1008
  %v1279 = vpop.f32.mrb[0].mxu0
  %v1280 = vadd.f32 0.0, %v1279
  %v1281 = vpop.f32.mrb[0].mxu0
  %1282 = vmatprep.mubr.f32.mxu0 0.0
  %1283 = vmatmul.mubr.f32.gmra.mrb[0].mxu0 %v1011
  %v1284 = vpop.f32.mrb[0].mxu0
  %v1285 = vadd.f32 0.0, %v1284
  %v1286 = vpop.f32.mrb[0].mxu0
  %1287 = vmatprep.mubr.f32.mxu0 0.0
  %1288 = vmatmul.mubr.f32.gmra.mrb[0].mxu0 %v1014
  %v1289 = vpop.f32.mrb[0].mxu0
  %v1290 = vadd.f32 0.0, %v1289
  %v1291 = vpop.f32.mrb[0].mxu0
  %1292 = vmatprep.mubr.f32.mxu0 0.0
  %1293 = vmatmul.mubr.f32.gmra.mrb[0].mxu0 %v1017
  %v1294 = vpop.f32.mrb[0].mxu0
  %v1295 = vadd.f32 0.0, %v1294
  %v1296 = vpop.f32.mrb[0].mxu0
  %1297 = vmatprep.mubr.f32.mxu0 0.0
  %1298 = vmatmul.mubr.f32.gmra.mrb[0].mxu0 %v1020
  %v1299 = vpop.f32.mrb[0].mxu0
  %v1300 = vadd.f32 0.0, %v1299
  %v1301 = vpop.f32.mrb[0].mxu0
  %1302 = vmatprep.mubr.f32.mxu0 0.0
  %1303 = vmatmul.mubr.f32.gmra.mrb[0].mxu0 %v1023
  %v1304 = vpop.f32.mrb[0].mxu0
  %v1305 = vadd.f32 0.0, %v1304
  %v1306 = vpop.f32.mrb[0].mxu0
  %1307 = vmatprep.mubr.f32.mxu0 0.0
  %1308 = vmatmul.mubr.f32.gmra.mrb[0].mxu0 %v1026
  %v1309 = vpop.f32.mrb[0].mxu0
  %v1310 = vadd.f32 0.0, %v1309
  %v1311 = vpop.f32.mrb[0].mxu0
  %1312 = vmatprep.mubr.f32.mxu0 0.0
  %1313 = vmatmul.mubr.f32.gmra.mrb[0].mxu0 %v1029
  %v1314 = vpop.f32.mrb[0].mxu0
  %v1315 = vadd.f32 0.0, %v1314
  %v1316 = vpop.f32.mrb[0].mxu0
  %1317 = vmatprep.mubr.f32.mxu0 0.0
  %1318 = vmatmul.mubr.f32.gmra.mrb[0].mxu0 %v1032
  %v1319 = vpop.f32.mrb[0].mxu0
  %v1320 = vadd.f32 0.0, %v1319
  %v1321 = vpop.f32.mrb[0].mxu0
  %1322 = vmatprep.mubr.f32.mxu0 0.0
  %1323 = vmatmul.mubr.f32.gmra.mrb[0].mxu0 %v1035
  %v1324 = vpop.f32.mrb[0].mxu0
  %v1325 = vadd.f32 0.0, %v1324
  %v1326 = vpop.f32.mrb[0].mxu0
  %1327 = vmatprep.mubr.f32.mxu0 0.0
  %1328 = vmatmul.mubr.f32.gmra.mrb[0].mxu0 %v1038
  %v1329 = vpop.f32.mrb[0].mxu0
  %v1330 = vadd.f32 0.0, %v1329
  %v1331 = vpop.f32.mrb[0].mxu0
  %1332 = vmatprep.mubr.f32.mxu0 0.0
  %1333 = vmatmul.mubr.f32.gmra.mrb[0].mxu0 %v1041
  %v1334 = vpop.f32.mrb[0].mxu0
  %v1335 = vadd.f32 0.0, %v1334
  %v1336 = vpop.f32.mrb[0].mxu0
  %1337 = vmatprep.mubr.f32.mxu0 0.0
  %1338 = vmatmul.mubr.f32.gmra.mrb[0].mxu0 %v1044
  %v1339 = vpop.f32.mrb[0].mxu0
  %v1340 = vadd.f32 0.0, %v1339
  %v1341 = vpop.f32.mrb[0].mxu0
  %1342 = vmatprep.mubr.f32.mxu0 0.0
  %1343 = vmatmul.mubr.f32.gmra.mrb[0].mxu0 %v1047
  %v1344 = vpop.f32.mrb[0].mxu0
  %v1345 = vadd.f32 0.0, %v1344
  %v1346 = vpop.f32.mrb[0].mxu0
  %1347 = vmatprep.mubr.f32.mxu0 0.0
  %1348 = vmatmul.mubr.f32.gmra.mrb[0].mxu0 %v1050
  %v1349 = vpop.f32.mrb[0].mxu0
  %v1350 = vadd.f32 0.0, %v1349
  %v1351 = vpop.f32.mrb[0].mxu0
  %1352 = vmatprep.mubr.f32.mxu0 0.0
  %1353 = vmatmul.mubr.f32.gmra.mrb[0].mxu0 %v1053
  %v1354 = vpop.f32.mrb[0].mxu0
  %v1355 = vadd.f32 0.0, %v1354
  %v1356 = vpop.f32.mrb[0].mxu0
  %1357 = vmatprep.mubr.f32.mxu0 0.0
  %1358 = vmatmul.mubr.f32.gmra.mrb[0].mxu0 %v1056
  %v1359 = vpop.f32.mrb[0].mxu0
  %v1360 = vadd.f32 0.0, %v1359
  %v1361 = vpop.f32.mrb[0].mxu0
  %1362 = vmatprep.mubr.f32.mxu0 0.0
  %1363 = vmatmul.mubr.f32.gmra.mrb[0].mxu0 %v1059
  %v1364 = vpop.f32.mrb[0].mxu0
  %v1365 = vadd.f32 0.0, %v1364
  %v1366 = vpop.f32.mrb[0].mxu0
  %1367 = vmatprep.mubr.f32.mxu0 0.0
  %1368 = vmatmul.mubr.f32.gmra.mrb[0].mxu0 %v1062
  %v1369 = vpop.f32.mrb[0].mxu0
  %v1370 = vadd.f32 0.0, %v1369
  %v1371 = vpop.f32.mrb[0].mxu0
  %1372 = vmatprep.mubr.f32.mxu0 0.0
  %1373 = vmatmul.mubr.f32.gmra.mrb[0].mxu0 %v1065
  %v1374 = vpop.f32.mrb[0].mxu0
  %v1375 = vadd.f32 0.0, %v1374
  %v1376 = vpop.f32.mrb[0].mxu0
  %1377 = vmatprep.mubr.f32.mxu0 0.0
  %1378 = vmatmul.mubr.f32.gmra.mrb[0].mxu0 %v1068
  %v1379 = vpop.f32.mrb[0].mxu0
  %v1380 = vadd.f32 0.0, %v1379
  %v1381 = vpop.f32.mrb[0].mxu0
  %1382 = vmatprep.mubr.f32.mxu0 0.0
  %1383 = vmatmul.mubr.f32.gmra.mrb[0].mxu0 %v1071
  %v1384 = vpop.f32.mrb[0].mxu0
  %v1385 = vadd.f32 0.0, %v1384
  %v1386 = vpop.f32.mrb[0].mxu0
  %1387 = vmatprep.mubr.f32.mxu0 0.0
  %1388 = vmatmul.mubr.f32.gmra.mrb[0].mxu0 %v1074
  %v1389 = vpop.f32.mrb[0].mxu0
  %v1390 = vadd.f32 0.0, %v1389
  %v1391 = vpop.f32.mrb[0].mxu0
  %1392 = vmatprep.mubr.f32.mxu0 0.0
  %1393 = vmatmul.mubr.f32.gmra.mrb[0].mxu0 %v1077
  %v1394 = vpop.f32.mrb[0].mxu0
  %v1395 = vadd.f32 0.0, %v1394
  %v1396 = vpop.f32.mrb[0].mxu0
  %1397 = vmatprep.mubr.f32.mxu0 0.0
  %1398 = vmatmul.mubr.f32.gmra.mrb[0].mxu0 %v1080
  %v1399 = vpop.f32.mrb[0].mxu0
  %v1400 = vadd.f32 0.0, %v1399
  %v1401 = vpop.f32.mrb[0].mxu0
  %1402 = vmatprep.mubr.f32.mxu0 0.0
  %1403 = vmatmul.mubr.f32.gmra.mrb[0].mxu0 %v1083
  %v1404 = vpop.f32.mrb[0].mxu0
  %v1405 = vadd.f32 0.0, %v1404
  %v1406 = vpop.f32.mrb[0].mxu0
  %1407 = vmatprep.mubr.f32.mxu0 0.0
  %1408 = vmatmul.mubr.f32.gmra.mrb[0].mxu0 %v1086
  %v1409 = vpop.f32.mrb[0].mxu0
  %v1410 = vadd.f32 0.0, %v1409
  %v1411 = vpop.f32.mrb[0].mxu0
  %1412 = vmatprep.mubr.f32.mxu0 0.0
  %1413 = vmatmul.mubr.f32.gmra.mrb[0].mxu0 %v1089
  %v1414 = vpop.f32.mrb[0].mxu0
  %v1415 = vadd.f32 0.0, %v1414
  %v1416 = vpop.f32.mrb[0].mxu0
  %1417 = vmatprep.mubr.f32.mxu0 0.0
  %1418 = vmatmul.mubr.f32.gmra.mrb[0].mxu0 %v1092
  %v1419 = vpop.f32.mrb[0].mxu0
  %v1420 = vadd.f32 0.0, %v1419
  %v1421 = vpop.f32.mrb[0].mxu0
  %1422 = vmatprep.mubr.f32.mxu0 0.0
  %1423 = vmatmul.mubr.f32.gmra.mrb[0].mxu0 %v1095
  %v1424 = vpop.f32.mrb[0].mxu0
  %v1425 = vadd.f32 0.0, %v1424
  %v1426 = vpop.f32.mrb[0].mxu0
  %1427 = vmatprep.mubr.f32.mxu0 0.0
  %1428 = vmatmul.mubr.f32.gmra.mrb[0].mxu0 %v1098
  %v1429 = vpop.f32.mrb[0].mxu0
  %v1430 = vadd.f32 0.0, %v1429
  %v1431 = vpop.f32.mrb[0].mxu0
  %1432 = vmatprep.mubr.f32.mxu0 0.0
  %1433 = vmatmul.mubr.f32.gmra.mrb[0].mxu0 %v1101
  %v1434 = vpop.f32.mrb[0].mxu0
  %v1435 = vadd.f32 0.0, %v1434
  %v1436 = vpop.f32.mrb[0].mxu0
  %1437 = vmatprep.mubr.f32.mxu0 0.0
  %1438 = vmatmul.mubr.f32.gmra.mrb[0].mxu0 %v1104
  %v1439 = vpop.f32.mrb[0].mxu0
  %v1440 = vadd.f32 0.0, %v1439
  %v1441 = vpop.f32.mrb[0].mxu0
  %1442 = vmatprep.mubr.f32.mxu0 0.0
  %1443 = vmatmul.mubr.f32.gmra.mrb[0].mxu0 %v1107
  %v1444 = vpop.f32.mrb[0].mxu0
  %v1445 = vadd.f32 0.0, %v1444
  %v1446 = vpop.f32.mrb[0].mxu0
  %1447 = vmatprep.mubr.f32.mxu0 0.0
  %1448 = vmatmul.mubr.f32.gmra.mrb[0].mxu0 %v1110
  %v1449 = vpop.f32.mrb[0].mxu0
  %v1450 = vadd.f32 0.0, %v1449
  %v1451 = vpop.f32.mrb[0].mxu0
  %1452 = vmatprep.mubr.f32.mxu0 0.0
  %1453 = vmatmul.mubr.f32.gmra.mrb[0].mxu0 %v1113
  %v1454 = vpop.f32.mrb[0].mxu0
  %v1455 = vadd.f32 0.0, %v1454
  %v1456 = vpop.f32.mrb[0].mxu0
  %1457 = vmatprep.mubr.f32.mxu0 0.0
  %1458 = vmatmul.mubr.f32.gmra.mrb[0].mxu0 %v1116
  %v1459 = vpop.f32.mrb[0].mxu0
  %v1460 = vadd.f32 0.0, %v1459
  %v1461 = vpop.f32.mrb[0].mxu0
  %1462 = vmatprep.mubr.f32.mxu0 0.0
  %1463 = vmatmul.mubr.f32.gmra.mrb[0].mxu0 %v1119
  %v1464 = vpop.f32.mrb[0].mxu0
  %v1465 = vadd.f32 0.0, %v1464
  %v1466 = vpop.f32.mrb[0].mxu0
  %1467 = vmatprep.mubr.f32.mxu0 0.0
  %1468 = vmatmul.mubr.f32.gmra.mrb[0].mxu0 %v1122
  %v1469 = vpop.f32.mrb[0].mxu0
  %v1470 = vadd.f32 0.0, %v1469
  %v1471 = vpop.f32.mrb[0].mxu0
  %1472 = vmatprep.mubr.f32.mxu0 0.0
  %1473 = vmatmul.mubr.f32.gmra.mrb[0].mxu0 %v1125
  %v1474 = vpop.f32.mrb[0].mxu0
  %v1475 = vadd.f32 0.0, %v1474
  %v1476 = vpop.f32.mrb[0].mxu0
  %1477 = vmatprep.mubr.f32.mxu0 0.0
  %1478 = vmatmul.mubr.f32.gmra.mrb[0].mxu0 %v1128
  %v1479 = vpop.f32.mrb[0].mxu0
  %v1480 = vadd.f32 0.0, %v1479
  %v1481 = vpop.f32.mrb[0].mxu0
  %1482 = vmatprep.mubr.f32.mxu0 0.0
  %1483 = vmatmul.mubr.f32.gmra.mrb[0].mxu0 %v1131
  %v1484 = vpop.f32.mrb[0].mxu0
  %v1485 = vadd.f32 0.0, %v1484
  %v1486 = vpop.f32.mrb[0].mxu0
  %1487 = vmatprep.mubr.f32.mxu0 0.0
  %1488 = vmatmul.mubr.f32.gmra.mrb[0].mxu0 %v1134
  %v1489 = vpop.f32.mrb[0].mxu0
  %v1490 = vadd.f32 0.0, %v1489
  %v1491 = vpop.f32.mrb[0].mxu0
  %1492 = vmatprep.mubr.f32.mxu0 0.0
  %1493 = vmatmul.mubr.f32.gmra.mrb[0].mxu0 %v1137
  %v1494 = vpop.f32.mrb[0].mxu0
  %v1495 = vadd.f32 0.0, %v1494
  %v1496 = vpop.f32.mrb[0].mxu0
  %1497 = vmatprep.mubr.f32.mxu0 0.0
  %1498 = vmatmul.mubr.f32.gmra.mrb[0].mxu0 %v1140
  %v1499 = vpop.f32.mrb[0].mxu0
  %v1500 = vadd.f32 0.0, %v1499
  %v1501 = vpop.f32.mrb[0].mxu0
  %1502 = vmatprep.mubr.f32.mxu0 0.0
  %1503 = vmatmul.mubr.f32.gmra.mrb[0].mxu0 %v1143
  %v1504 = vpop.f32.mrb[0].mxu0
  %v1505 = vadd.f32 0.0, %v1504
  %v1506 = vpop.f32.mrb[0].mxu0
  %1507 = vmatprep.mubr.f32.mxu0 0.0
  %1508 = vmatmul.mubr.f32.gmra.mrb[0].mxu0 %v1146
  %v1509 = vpop.f32.mrb[0].mxu0
  %v1510 = vadd.f32 0.0, %v1509
  %v1511 = vpop.f32.mrb[0].mxu0
  %1512 = vmatprep.mubr.f32.mxu0 0.0
  %1513 = vmatmul.mubr.f32.gmra.mrb[0].mxu0 %v1149
  %v1514 = vpop.f32.mrb[0].mxu0
  %v1515 = vadd.f32 0.0, %v1514
  %v1516 = vpop.f32.mrb[0].mxu0
  %1517 = vmatprep.mubr.f32.mxu0 0.0
  %1518 = vmatmul.mubr.f32.gmra.mrb[0].mxu0 %v1152
  %v1519 = vpop.f32.mrb[0].mxu0
  %v1520 = vadd.f32 0.0, %v1519
  %v1521 = vpop.f32.mrb[0].mxu0
  %1522 = vmatprep.mubr.f32.mxu0 0.0
  %1523 = vmatmul.mubr.f32.gmra.mrb[0].mxu0 %v1155
  %v1524 = vpop.f32.mrb[0].mxu0
  %v1525 = vadd.f32 0.0, %v1524
  %v1526 = vpop.f32.mrb[0].mxu0
  %1527 = vmatprep.mubr.f32.mxu0 0.0
  %1528 = vmatmul.mubr.f32.gmra.mrb[0].mxu0 %v1158
  %v1529 = vpop.f32.mrb[0].mxu0
  %v1530 = vadd.f32 0.0, %v1529
  %v1531 = vpop.f32.mrb[0].mxu0
  %1532 = vmatprep.mubr.f32.mxu0 0.0
  %1533 = vmatmul.mubr.f32.gmra.mrb[0].mxu0 %v1161
  %v1534 = vpop.f32.mrb[0].mxu0
  %v1535 = vadd.f32 0.0, %v1534
  %v1536 = vpop.f32.mrb[0].mxu0
  %1537 = vmatprep.mubr.f32.mxu0 0.0
  %1538 = vmatmul.mubr.f32.gmra.mrb[0].mxu0 %v1164
  %v1539 = vpop.f32.mrb[0].mxu0
  %v1540 = vadd.f32 0.0, %v1539
  %v1541 = vpop.f32.mrb[0].mxu0
  %1542 = vmatprep.mubr.f32.mxu0 0.0
  %1543 = vmatmul.mubr.f32.gmra.mrb[0].mxu0 %v1167
  %v1544 = vpop.f32.mrb[0].mxu0
  %v1545 = vadd.f32 0.0, %v1544
  %v1546 = vpop.f32.mrb[0].mxu0
  %1547 = vmatprep.mubr.f32.mxu0 0.0
  %1548 = vmatmul.mubr.f32.gmra.mrb[0].mxu0 %v1170
  %v1549 = vpop.f32.mrb[0].mxu0
  %v1550 = vadd.f32 0.0, %v1549
  %v1551 = vpop.f32.mrb[0].mxu0
  %1552 = vmatprep.mubr.f32.mxu0 0.0
  %1553 = vmatmul.mubr.f32.gmra.mrb[0].mxu0 %v1173
  %v1554 = vpop.f32.mrb[0].mxu0
  %v1555 = vadd.f32 0.0, %v1554
  %v1556 = vpop.f32.mrb[0].mxu0
  %1557 = vmatprep.mubr.f32.mxu0 0.0
  %1558 = vmatmul.mubr.f32.gmra.mrb[0].mxu0 %v1176
  %v1559 = vpop.f32.mrb[0].mxu0
  %v1560 = vadd.f32 0.0, %v1559
  %v1561 = vpop.f32.mrb[0].mxu0
  %1562 = vmatprep.mubr.f32.mxu0 0.0
  %1563 = vmatmul.mubr.f32.gmra.mrb[0].mxu0 %v1179
  %v1564 = vpop.f32.mrb[0].mxu0
  %v1565 = vadd.f32 0.0, %v1564
  %v1566 = vpop.f32.mrb[0].mxu0
  %1567 = vmatprep.mubr.f32.mxu0 0.0
  %1568 = vmatmul.mubr.f32.gmra.mrb[0].mxu0 %v1182
  %v1569 = vpop.f32.mrb[0].mxu0
  %v1570 = vadd.f32 0.0, %v1569
  %v1571 = vpop.f32.mrb[0].mxu0
  %1572 = vdwg.mxu0
  %vm1573 = vcmask 64512
  %1574 = vst.msk [vmem:[%s5] sm:$0xff] %vm1573, %v1255
  %1575 = vst.msk [vmem:[%s5 + $0x8] sm:$0xff] %vm1573, %v1260
  %1576 = vst.msk [vmem:[%s5 + $0x10] sm:$0xff] %vm1573, %v1265
  %1577 = vst.msk [vmem:[%s5 + $0x18] sm:$0xff] %vm1573, %v1270
  %1578 = vst.msk [vmem:[%s5 + $0x20] sm:$0xff] %vm1573, %v1275
  %1579 = vst.msk [vmem:[%s5 + $0x28] sm:$0xff] %vm1573, %v1280
  %1580 = vst.msk [vmem:[%s5 + $0x30] sm:$0xff] %vm1573, %v1285
  %1581 = vst.msk [vmem:[%s5 + $0x38] sm:$0xff] %vm1573, %v1290
  %1582 = vst.msk [vmem:[%s5 + $0x40] sm:$0xff] %vm1573, %v1295
  %1583 = vst.msk [vmem:[%s5 + $0x48] sm:$0xff] %vm1573, %v1300
  %1584 = vst.msk [vmem:[%s5 + $0x50] sm:$0xff] %vm1573, %v1305
  %1585 = vst.msk [vmem:[%s5 + $0x58] sm:$0xff] %vm1573, %v1310
  %1586 = vst.msk [vmem:[%s5 + $0x60] sm:$0xff] %vm1573, %v1315
  %1587 = vst.msk [vmem:[%s5 + $0x68] sm:$0xff] %vm1573, %v1320
  %1588 = vst.msk [vmem:[%s5 + $0x70] sm:$0xff] %vm1573, %v1325
  %1589 = vst.msk [vmem:[%s5 + $0x78] sm:$0xff] %vm1573, %v1330
  %1590 = vst.msk [vmem:[%s5 + $0x80] sm:$0xff] %vm1573, %v1335
  %1591 = vst.msk [vmem:[%s5 + $0x88] sm:$0xff] %vm1573, %v1340
  %1592 = vst.msk [vmem:[%s5 + $0x90] sm:$0xff] %vm1573, %v1345
  %1593 = vst.msk [vmem:[%s5 + $0x98] sm:$0xff] %vm1573, %v1350
  %1594 = vst.msk [vmem:[%s5 + $0xa0] sm:$0xff] %vm1573, %v1355
  %1595 = vst.msk [vmem:[%s5 + $0xa8] sm:$0xff] %vm1573, %v1360
  %1596 = vst.msk [vmem:[%s5 + $0xb0] sm:$0xff] %vm1573, %v1365
  %1597 = vst.msk [vmem:[%s5 + $0xb8] sm:$0xff] %vm1573, %v1370
  %1598 = vst.msk [vmem:[%s5 + $0xc0] sm:$0xff] %vm1573, %v1375
  %1599 = vst.msk [vmem:[%s5 + $0xc8] sm:$0xff] %vm1573, %v1380
  %1600 = vst.msk [vmem:[%s5 + $0xd0] sm:$0xff] %vm1573, %v1385
  %1601 = vst.msk [vmem:[%s5 + $0xd8] sm:$0xff] %vm1573, %v1390
  %1602 = vst.msk [vmem:[%s5 + $0xe0] sm:$0xff] %vm1573, %v1395
  %1603 = vst.msk [vmem:[%s5 + $0xe8] sm:$0xff] %vm1573, %v1400
  %1604 = vst.msk [vmem:[%s5 + $0xf0] sm:$0xff] %vm1573, %v1405
  %1605 = vst.msk [vmem:[%s5 + $0xf8] sm:$0xff] %vm1573, %v1410
  %1606 = vst.msk [vmem:[%s5 + $0x100] sm:$0xff] %vm1573, %v1415
  %1607 = vst.msk [vmem:[%s5 + $0x108] sm:$0xff] %vm1573, %v1420
  %1608 = vst.msk [vmem:[%s5 + $0x110] sm:$0xff] %vm1573, %v1425
  %1609 = vst.msk [vmem:[%s5 + $0x118] sm:$0xff] %vm1573, %v1430
  %1610 = vst.msk [vmem:[%s5 + $0x120] sm:$0xff] %vm1573, %v1435
  %1611 = vst.msk [vmem:[%s5 + $0x128] sm:$0xff] %vm1573, %v1440
  %1612 = vst.msk [vmem:[%s5 + $0x130] sm:$0xff] %vm1573, %v1445
  %1613 = vst.msk [vmem:[%s5 + $0x138] sm:$0xff] %vm1573, %v1450
  %1614 = vst.msk [vmem:[%s5 + $0x140] sm:$0xff] %vm1573, %v1455
  %1615 = vst.msk [vmem:[%s5 + $0x148] sm:$0xff] %vm1573, %v1460
  %1616 = vst.msk [vmem:[%s5 + $0x150] sm:$0xff] %vm1573, %v1465
  %1617 = vst.msk [vmem:[%s5 + $0x158] sm:$0xff] %vm1573, %v1470
  %1618 = vst.msk [vmem:[%s5 + $0x160] sm:$0xff] %vm1573, %v1475
  %1619 = vst.msk [vmem:[%s5 + $0x168] sm:$0xff] %vm1573, %v1480
  %1620 = vst.msk [vmem:[%s5 + $0x170] sm:$0xff] %vm1573, %v1485
  %1621 = vst.msk [vmem:[%s5 + $0x178] sm:$0xff] %vm1573, %v1490
  %1622 = vst.msk [vmem:[%s5 + $0x180] sm:$0xff] %vm1573, %v1495
  %1623 = vst.msk [vmem:[%s5 + $0x188] sm:$0xff] %vm1573, %v1500
  %1624 = vst.msk [vmem:[%s5 + $0x190] sm:$0xff] %vm1573, %v1505
  %1625 = vst.msk [vmem:[%s5 + $0x198] sm:$0xff] %vm1573, %v1510
  %1626 = vst.msk [vmem:[%s5 + $0x1a0] sm:$0xff] %vm1573, %v1515
  %1627 = vst.msk [vmem:[%s5 + $0x1a8] sm:$0xff] %vm1573, %v1520
  %1628 = vst.msk [vmem:[%s5 + $0x1b0] sm:$0xff] %vm1573, %v1525
  %1629 = vst.msk [vmem:[%s5 + $0x1b8] sm:$0xff] %vm1573, %v1530
  %1630 = vst.msk [vmem:[%s5 + $0x1c0] sm:$0xff] %vm1573, %v1535
  %1631 = vst.msk [vmem:[%s5 + $0x1c8] sm:$0xff] %vm1573, %v1540
  %1632 = vst.msk [vmem:[%s5 + $0x1d0] sm:$0xff] %vm1573, %v1545
  %1633 = vst.msk [vmem:[%s5 + $0x1d8] sm:$0xff] %vm1573, %v1550
  %1634 = vst.msk [vmem:[%s5 + $0x1e0] sm:$0xff] %vm1573, %v1555
  %1635 = vst.msk [vmem:[%s5 + $0x1e8] sm:$0xff] %vm1573, %v1560
  %1636 = vst.msk [vmem:[%s5 + $0x1f0] sm:$0xff] %vm1573, %v1565
  %1637 = vst.msk [vmem:[%s5 + $0x1f8] sm:$0xff] %vm1573, %v1570
  %v1638 = vld [vmem:[%s1] sm:$0xff]
  %v1639 = vld [vmem:[%s1 + $0x8] sm:$0xff]
  %v1640 = vld [vmem:[%s1 + $0x10] sm:$0xff]
  %v1641 = vld [vmem:[%s1 + $0x18] sm:$0xff]
  %v1642 = vld [vmem:[%s1 + $0x20] sm:$0xff]
  %v1643 = vld [vmem:[%s1 + $0x28] sm:$0xff]
  %v1644 = vld [vmem:[%s1 + $0x30] sm:$0xff]
  %v1645 = vld [vmem:[%s1 + $0x38] sm:$0xff]
  %v1646 = vld [vmem:[%s1 + $0x40] sm:$0xff]
  %v1647 = vld [vmem:[%s1 + $0x48] sm:$0xff]
  %v1648 = vld [vmem:[%s1 + $0x50] sm:$0xff]
  %v1649 = vld [vmem:[%s1 + $0x58] sm:$0xff]
  %v1650 = vld [vmem:[%s1 + $0x60] sm:$0xff]
  %v1651 = vld [vmem:[%s1 + $0x68] sm:$0xff]
  %v1652 = vld [vmem:[%s1 + $0x70] sm:$0xff]
  %v1653 = vld [vmem:[%s1 + $0x78] sm:$0xff]
  %v1654 = vld [vmem:[%s1 + $0x80] sm:$0xff]
  %v1655 = vld [vmem:[%s1 + $0x88] sm:$0xff]
  %v1656 = vld [vmem:[%s1 + $0x90] sm:$0xff]
  %v1657 = vld [vmem:[%s1 + $0x98] sm:$0xff]
  %v1658 = vld [vmem:[%s1 + $0xa0] sm:$0xff]
  %v1659 = vld [vmem:[%s1 + $0xa8] sm:$0xff]
  %v1660 = vld [vmem:[%s1 + $0xb0] sm:$0xff]
  %v1661 = vld [vmem:[%s1 + $0xb8] sm:$0xff]
  %v1662 = vld [vmem:[%s1 + $0xc0] sm:$0xff]
  %v1663 = vld [vmem:[%s1 + $0xc8] sm:$0xff]
  %v1664 = vld [vmem:[%s1 + $0xd0] sm:$0xff]
  %v1665 = vld [vmem:[%s1 + $0xd8] sm:$0xff]
  %v1666 = vld [vmem:[%s1 + $0xe0] sm:$0xff]
  %v1667 = vld [vmem:[%s1 + $0xe8] sm:$0xff]
  %v1668 = vld [vmem:[%s1 + $0xf0] sm:$0xff]
  %v1669 = vld [vmem:[%s1 + $0xf8] sm:$0xff]
  %v1670 = vld [vmem:[%s1 + $0x100] sm:$0xff]
  %v1671 = vld [vmem:[%s1 + $0x108] sm:$0xff]
  %v1672 = vld [vmem:[%s1 + $0x110] sm:$0xff]
  %v1673 = vld [vmem:[%s1 + $0x118] sm:$0xff]
  %v1674 = vld [vmem:[%s1 + $0x120] sm:$0xff]
  %v1675 = vld [vmem:[%s1 + $0x128] sm:$0xff]
  %v1676 = vld [vmem:[%s1 + $0x130] sm:$0xff]
  %v1677 = vld [vmem:[%s1 + $0x138] sm:$0xff]
  %v1678 = vld [vmem:[%s1 + $0x140] sm:$0xff]
  %v1679 = vld [vmem:[%s1 + $0x148] sm:$0xff]
  %v1680 = vld [vmem:[%s1 + $0x150] sm:$0xff]
  %v1681 = vld [vmem:[%s1 + $0x158] sm:$0xff]
  %v1682 = vld [vmem:[%s1 + $0x160] sm:$0xff]
  %v1683 = vld [vmem:[%s1 + $0x168] sm:$0xff]
  %v1684 = vld [vmem:[%s1 + $0x170] sm:$0xff]
  %v1685 = vld [vmem:[%s1 + $0x178] sm:$0xff]
  %v1686 = vld [vmem:[%s1 + $0x180] sm:$0xff]
  %v1687 = vld [vmem:[%s1 + $0x188] sm:$0xff]
  %v1688 = vld [vmem:[%s1 + $0x190] sm:$0xff]
  %v1689 = vld [vmem:[%s1 + $0x198] sm:$0xff]
  %v1690 = vld [vmem:[%s1 + $0x1a0] sm:$0xff]
  %v1691 = vld [vmem:[%s1 + $0x1a8] sm:$0xff]
  %v1692 = vld [vmem:[%s1 + $0x1b0] sm:$0xff]
  %v1693 = vld [vmem:[%s1 + $0x1b8] sm:$0xff]
  %v1694 = vld [vmem:[%s1 + $0x1c0] sm:$0xff]
  %v1695 = vld [vmem:[%s1 + $0x1c8] sm:$0xff]
  %v1696 = vld [vmem:[%s1 + $0x1d0] sm:$0xff]
  %v1697 = vld [vmem:[%s1 + $0x1d8] sm:$0xff]
  %v1698 = vld [vmem:[%s1 + $0x1e0] sm:$0xff]
  %v1699 = vld [vmem:[%s1 + $0x1e8] sm:$0xff]
  %v1700 = vld [vmem:[%s1 + $0x1f0] sm:$0xff]
  %v1701 = vld [vmem:[%s1 + $0x1f8] sm:$0xff]
  %v1702 = vsel %vm87, %v1638, 0.0
  %1703 = vadd.xlane.f32.xlu0 %v1702
  %v1704 = vpop.xlane.xlu0 %1703
  %v1705 = vsel %vm87, %v1639, 0.0
  %1706 = vadd.xlane.f32.xlu0 %v1705
  %v1707 = vpop.xlane.xlu0 %1706
  %v1708 = vsel %vm87, %v1640, 0.0
  %1709 = vadd.xlane.f32.xlu0 %v1708
  %v1710 = vpop.xlane.xlu0 %1709
  %v1711 = vsel %vm87, %v1641, 0.0
  %1712 = vadd.xlane.f32.xlu0 %v1711
  %v1713 = vpop.xlane.xlu0 %1712
  %v1714 = vsel %vm87, %v1642, 0.0
  %1715 = vadd.xlane.f32.xlu0 %v1714
  %v1716 = vpop.xlane.xlu0 %1715
  %v1717 = vsel %vm87, %v1643, 0.0
  %1718 = vadd.xlane.f32.xlu0 %v1717
  %v1719 = vpop.xlane.xlu0 %1718
  %v1720 = vsel %vm87, %v1644, 0.0
  %1721 = vadd.xlane.f32.xlu0 %v1720
  %v1722 = vpop.xlane.xlu0 %1721
  %v1723 = vsel %vm87, %v1645, 0.0
  %1724 = vadd.xlane.f32.xlu0 %v1723
  %v1725 = vpop.xlane.xlu0 %1724
  %v1726 = vsel %vm87, %v1646, 0.0
  %1727 = vadd.xlane.f32.xlu0 %v1726
  %v1728 = vpop.xlane.xlu0 %1727
  %v1729 = vsel %vm87, %v1647, 0.0
  %1730 = vadd.xlane.f32.xlu0 %v1729
  %v1731 = vpop.xlane.xlu0 %1730
  %v1732 = vsel %vm87, %v1648, 0.0
  %1733 = vadd.xlane.f32.xlu0 %v1732
  %v1734 = vpop.xlane.xlu0 %1733
  %v1735 = vsel %vm87, %v1649, 0.0
  %1736 = vadd.xlane.f32.xlu0 %v1735
  %v1737 = vpop.xlane.xlu0 %1736
  %v1738 = vsel %vm87, %v1650, 0.0
  %1739 = vadd.xlane.f32.xlu0 %v1738
  %v1740 = vpop.xlane.xlu0 %1739
  %v1741 = vsel %vm87, %v1651, 0.0
  %1742 = vadd.xlane.f32.xlu0 %v1741
  %v1743 = vpop.xlane.xlu0 %1742
  %v1744 = vsel %vm87, %v1652, 0.0
  %1745 = vadd.xlane.f32.xlu0 %v1744
  %v1746 = vpop.xlane.xlu0 %1745
  %v1747 = vsel %vm87, %v1653, 0.0
  %1748 = vadd.xlane.f32.xlu0 %v1747
  %v1749 = vpop.xlane.xlu0 %1748
  %v1750 = vsel %vm87, %v1654, 0.0
  %1751 = vadd.xlane.f32.xlu0 %v1750
  %v1752 = vpop.xlane.xlu0 %1751
  %v1753 = vsel %vm87, %v1655, 0.0
  %1754 = vadd.xlane.f32.xlu0 %v1753
  %v1755 = vpop.xlane.xlu0 %1754
  %v1756 = vsel %vm87, %v1656, 0.0
  %1757 = vadd.xlane.f32.xlu0 %v1756
  %v1758 = vpop.xlane.xlu0 %1757
  %v1759 = vsel %vm87, %v1657, 0.0
  %1760 = vadd.xlane.f32.xlu0 %v1759
  %v1761 = vpop.xlane.xlu0 %1760
  %v1762 = vsel %vm87, %v1658, 0.0
  %1763 = vadd.xlane.f32.xlu0 %v1762
  %v1764 = vpop.xlane.xlu0 %1763
  %v1765 = vsel %vm87, %v1659, 0.0
  %1766 = vadd.xlane.f32.xlu0 %v1765
  %v1767 = vpop.xlane.xlu0 %1766
  %v1768 = vsel %vm87, %v1660, 0.0
  %1769 = vadd.xlane.f32.xlu0 %v1768
  %v1770 = vpop.xlane.xlu0 %1769
  %v1771 = vsel %vm87, %v1661, 0.0
  %1772 = vadd.xlane.f32.xlu0 %v1771
  %v1773 = vpop.xlane.xlu0 %1772
  %v1774 = vsel %vm87, %v1662, 0.0
  %1775 = vadd.xlane.f32.xlu0 %v1774
  %v1776 = vpop.xlane.xlu0 %1775
  %v1777 = vsel %vm87, %v1663, 0.0
  %1778 = vadd.xlane.f32.xlu0 %v1777
  %v1779 = vpop.xlane.xlu0 %1778
  %v1780 = vsel %vm87, %v1664, 0.0
  %1781 = vadd.xlane.f32.xlu0 %v1780
  %v1782 = vpop.xlane.xlu0 %1781
  %v1783 = vsel %vm87, %v1665, 0.0
  %1784 = vadd.xlane.f32.xlu0 %v1783
  %v1785 = vpop.xlane.xlu0 %1784
  %v1786 = vsel %vm87, %v1666, 0.0
  %1787 = vadd.xlane.f32.xlu0 %v1786
  %v1788 = vpop.xlane.xlu0 %1787
  %v1789 = vsel %vm87, %v1667, 0.0
  %1790 = vadd.xlane.f32.xlu0 %v1789
  %v1791 = vpop.xlane.xlu0 %1790
  %v1792 = vsel %vm87, %v1668, 0.0
  %1793 = vadd.xlane.f32.xlu0 %v1792
  %v1794 = vpop.xlane.xlu0 %1793
  %v1795 = vsel %vm87, %v1669, 0.0
  %1796 = vadd.xlane.f32.xlu0 %v1795
  %v1797 = vpop.xlane.xlu0 %1796
  %v1798 = vsel %vm87, %v1670, 0.0
  %1799 = vadd.xlane.f32.xlu0 %v1798
  %v1800 = vpop.xlane.xlu0 %1799
  %v1801 = vsel %vm87, %v1671, 0.0
  %1802 = vadd.xlane.f32.xlu0 %v1801
  %v1803 = vpop.xlane.xlu0 %1802
  %v1804 = vsel %vm87, %v1672, 0.0
  %1805 = vadd.xlane.f32.xlu0 %v1804
  %v1806 = vpop.xlane.xlu0 %1805
  %v1807 = vsel %vm87, %v1673, 0.0
  %1808 = vadd.xlane.f32.xlu0 %v1807
  %v1809 = vpop.xlane.xlu0 %1808
  %v1810 = vsel %vm87, %v1674, 0.0
  %1811 = vadd.xlane.f32.xlu0 %v1810
  %v1812 = vpop.xlane.xlu0 %1811
  %v1813 = vsel %vm87, %v1675, 0.0
  %1814 = vadd.xlane.f32.xlu0 %v1813
  %v1815 = vpop.xlane.xlu0 %1814
  %v1816 = vsel %vm87, %v1676, 0.0
  %1817 = vadd.xlane.f32.xlu0 %v1816
  %v1818 = vpop.xlane.xlu0 %1817
  %v1819 = vsel %vm87, %v1677, 0.0
  %1820 = vadd.xlane.f32.xlu0 %v1819
  %v1821 = vpop.xlane.xlu0 %1820
  %v1822 = vsel %vm87, %v1678, 0.0
  %1823 = vadd.xlane.f32.xlu0 %v1822
  %v1824 = vpop.xlane.xlu0 %1823
  %v1825 = vsel %vm87, %v1679, 0.0
  %1826 = vadd.xlane.f32.xlu0 %v1825
  %v1827 = vpop.xlane.xlu0 %1826
  %v1828 = vsel %vm87, %v1680, 0.0
  %1829 = vadd.xlane.f32.xlu0 %v1828
  %v1830 = vpop.xlane.xlu0 %1829
  %v1831 = vsel %vm87, %v1681, 0.0
  %1832 = vadd.xlane.f32.xlu0 %v1831
  %v1833 = vpop.xlane.xlu0 %1832
  %v1834 = vsel %vm87, %v1682, 0.0
  %1835 = vadd.xlane.f32.xlu0 %v1834
  %v1836 = vpop.xlane.xlu0 %1835
  %v1837 = vsel %vm87, %v1683, 0.0
  %1838 = vadd.xlane.f32.xlu0 %v1837
  %v1839 = vpop.xlane.xlu0 %1838
  %v1840 = vsel %vm87, %v1684, 0.0
  %1841 = vadd.xlane.f32.xlu0 %v1840
  %v1842 = vpop.xlane.xlu0 %1841
  %v1843 = vsel %vm87, %v1685, 0.0
  %1844 = vadd.xlane.f32.xlu0 %v1843
  %v1845 = vpop.xlane.xlu0 %1844
  %v1846 = vsel %vm87, %v1686, 0.0
  %1847 = vadd.xlane.f32.xlu0 %v1846
  %v1848 = vpop.xlane.xlu0 %1847
  %v1849 = vsel %vm87, %v1687, 0.0
  %1850 = vadd.xlane.f32.xlu0 %v1849
  %v1851 = vpop.xlane.xlu0 %1850
  %v1852 = vsel %vm87, %v1688, 0.0
  %1853 = vadd.xlane.f32.xlu0 %v1852
  %v1854 = vpop.xlane.xlu0 %1853
  %v1855 = vsel %vm87, %v1689, 0.0
  %1856 = vadd.xlane.f32.xlu0 %v1855
  %v1857 = vpop.xlane.xlu0 %1856
  %v1858 = vsel %vm87, %v1690, 0.0
  %1859 = vadd.xlane.f32.xlu0 %v1858
  %v1860 = vpop.xlane.xlu0 %1859
  %v1861 = vsel %vm87, %v1691, 0.0
  %1862 = vadd.xlane.f32.xlu0 %v1861
  %v1863 = vpop.xlane.xlu0 %1862
  %v1864 = vsel %vm87, %v1692, 0.0
  %1865 = vadd.xlane.f32.xlu0 %v1864
  %v1866 = vpop.xlane.xlu0 %1865
  %v1867 = vsel %vm87, %v1693, 0.0
  %1868 = vadd.xlane.f32.xlu0 %v1867
  %v1869 = vpop.xlane.xlu0 %1868
  %v1870 = vsel %vm87, %v1694, 0.0
  %1871 = vadd.xlane.f32.xlu0 %v1870
  %v1872 = vpop.xlane.xlu0 %1871
  %v1873 = vsel %vm87, %v1695, 0.0
  %1874 = vadd.xlane.f32.xlu0 %v1873
  %v1875 = vpop.xlane.xlu0 %1874
  %v1876 = vsel %vm87, %v1696, 0.0
  %1877 = vadd.xlane.f32.xlu0 %v1876
  %v1878 = vpop.xlane.xlu0 %1877
  %v1879 = vsel %vm87, %v1697, 0.0
  %1880 = vadd.xlane.f32.xlu0 %v1879
  %v1881 = vpop.xlane.xlu0 %1880
  %v1882 = vsel %vm87, %v1698, 0.0
  %1883 = vadd.xlane.f32.xlu0 %v1882
  %v1884 = vpop.xlane.xlu0 %1883
  %v1885 = vsel %vm87, %v1699, 0.0
  %1886 = vadd.xlane.f32.xlu0 %v1885
  %v1887 = vpop.xlane.xlu0 %1886
  %v1888 = vsel %vm87, %v1700, 0.0
  %1889 = vadd.xlane.f32.xlu0 %v1888
  %v1890 = vpop.xlane.xlu0 %1889
  %v1891 = vsel %vm87, %v1701, 0.0
  %1892 = vadd.xlane.f32.xlu0 %v1891
  %v1893 = vpop.xlane.xlu0 %1892
  %v1894 = vmul.f32 %v1704, %v280
  %v1895 = vmul.f32 %v1707, %v280
  %v1896 = vmul.f32 %v1710, %v280
  %v1897 = vmul.f32 %v1713, %v280
  %v1898 = vmul.f32 %v1716, %v280
  %v1899 = vmul.f32 %v1719, %v280
  %v1900 = vmul.f32 %v1722, %v280
  %v1901 = vmul.f32 %v1725, %v280
  %v1902 = vmul.f32 %v1728, %v280
  %v1903 = vmul.f32 %v1731, %v280
  %v1904 = vmul.f32 %v1734, %v280
  %v1905 = vmul.f32 %v1737, %v280
  %v1906 = vmul.f32 %v1740, %v280
  %v1907 = vmul.f32 %v1743, %v280
  %v1908 = vmul.f32 %v1746, %v280
  %v1909 = vmul.f32 %v1749, %v280
  %v1910 = vmul.f32 %v1752, %v280
  %v1911 = vmul.f32 %v1755, %v280
  %v1912 = vmul.f32 %v1758, %v280
  %v1913 = vmul.f32 %v1761, %v280
  %v1914 = vmul.f32 %v1764, %v280
  %v1915 = vmul.f32 %v1767, %v280
  %v1916 = vmul.f32 %v1770, %v280
  %v1917 = vmul.f32 %v1773, %v280
  %v1918 = vmul.f32 %v1776, %v280
  %v1919 = vmul.f32 %v1779, %v280
  %v1920 = vmul.f32 %v1782, %v280
  %v1921 = vmul.f32 %v1785, %v280
  %v1922 = vmul.f32 %v1788, %v280
  %v1923 = vmul.f32 %v1791, %v280
  %v1924 = vmul.f32 %v1794, %v280
  %v1925 = vmul.f32 %v1797, %v280
  %v1926 = vmul.f32 %v1800, %v280
  %v1927 = vmul.f32 %v1803, %v280
  %v1928 = vmul.f32 %v1806, %v280
  %v1929 = vmul.f32 %v1809, %v280
  %v1930 = vmul.f32 %v1812, %v280
  %v1931 = vmul.f32 %v1815, %v280
  %v1932 = vmul.f32 %v1818, %v280
  %v1933 = vmul.f32 %v1821, %v280
  %v1934 = vmul.f32 %v1824, %v280
  %v1935 = vmul.f32 %v1827, %v280
  %v1936 = vmul.f32 %v1830, %v280
  %v1937 = vmul.f32 %v1833, %v280
  %v1938 = vmul.f32 %v1836, %v280
  %v1939 = vmul.f32 %v1839, %v280
  %v1940 = vmul.f32 %v1842, %v280
  %v1941 = vmul.f32 %v1845, %v280
  %v1942 = vmul.f32 %v1848, %v280
  %v1943 = vmul.f32 %v1851, %v280
  %v1944 = vmul.f32 %v1854, %v280
  %v1945 = vmul.f32 %v1857, %v280
  %v1946 = vmul.f32 %v1860, %v280
  %v1947 = vmul.f32 %v1863, %v280
  %v1948 = vmul.f32 %v1866, %v280
  %v1949 = vmul.f32 %v1869, %v280
  %v1950 = vmul.f32 %v1872, %v280
  %v1951 = vmul.f32 %v1875, %v280
  %v1952 = vmul.f32 %v1878, %v280
  %v1953 = vmul.f32 %v1881, %v280
  %v1954 = vmul.f32 %v1884, %v280
  %v1955 = vmul.f32 %v1887, %v280
  %v1956 = vmul.f32 %v1890, %v280
  %v1957 = vmul.f32 %v1893, %v280
  %v1958 = vsub.f32 %v1638, %v1894
  %v1959 = vsub.f32 %v1639, %v1895
  %v1960 = vsub.f32 %v1640, %v1896
  %v1961 = vsub.f32 %v1641, %v1897
  %v1962 = vsub.f32 %v1642, %v1898
  %v1963 = vsub.f32 %v1643, %v1899
  %v1964 = vsub.f32 %v1644, %v1900
  %v1965 = vsub.f32 %v1645, %v1901
  %v1966 = vsub.f32 %v1646, %v1902
  %v1967 = vsub.f32 %v1647, %v1903
  %v1968 = vsub.f32 %v1648, %v1904
  %v1969 = vsub.f32 %v1649, %v1905
  %v1970 = vsub.f32 %v1650, %v1906
  %v1971 = vsub.f32 %v1651, %v1907
  %v1972 = vsub.f32 %v1652, %v1908
  %v1973 = vsub.f32 %v1653, %v1909
  %v1974 = vsub.f32 %v1654, %v1910
  %v1975 = vsub.f32 %v1655, %v1911
  %v1976 = vsub.f32 %v1656, %v1912
  %v1977 = vsub.f32 %v1657, %v1913
  %v1978 = vsub.f32 %v1658, %v1914
  %v1979 = vsub.f32 %v1659, %v1915
  %v1980 = vsub.f32 %v1660, %v1916
  %v1981 = vsub.f32 %v1661, %v1917
  %v1982 = vsub.f32 %v1662, %v1918
  %v1983 = vsub.f32 %v1663, %v1919
  %v1984 = vsub.f32 %v1664, %v1920
  %v1985 = vsub.f32 %v1665, %v1921
  %v1986 = vsub.f32 %v1666, %v1922
  %v1987 = vsub.f32 %v1667, %v1923
  %v1988 = vsub.f32 %v1668, %v1924
  %v1989 = vsub.f32 %v1669, %v1925
  %v1990 = vsub.f32 %v1670, %v1926
  %v1991 = vsub.f32 %v1671, %v1927
  %v1992 = vsub.f32 %v1672, %v1928
  %v1993 = vsub.f32 %v1673, %v1929
  %v1994 = vsub.f32 %v1674, %v1930
  %v1995 = vsub.f32 %v1675, %v1931
  %v1996 = vsub.f32 %v1676, %v1932
  %v1997 = vsub.f32 %v1677, %v1933
  %v1998 = vsub.f32 %v1678, %v1934
  %v1999 = vsub.f32 %v1679, %v1935
  %v2000 = vsub.f32 %v1680, %v1936
  %v2001 = vsub.f32 %v1681, %v1937
  %v2002 = vsub.f32 %v1682, %v1938
  %v2003 = vsub.f32 %v1683, %v1939
  %v2004 = vsub.f32 %v1684, %v1940
  %v2005 = vsub.f32 %v1685, %v1941
  %v2006 = vsub.f32 %v1686, %v1942
  %v2007 = vsub.f32 %v1687, %v1943
  %v2008 = vsub.f32 %v1688, %v1944
  %v2009 = vsub.f32 %v1689, %v1945
  %v2010 = vsub.f32 %v1690, %v1946
  %v2011 = vsub.f32 %v1691, %v1947
  %v2012 = vsub.f32 %v1692, %v1948
  %v2013 = vsub.f32 %v1693, %v1949
  %v2014 = vsub.f32 %v1694, %v1950
  %v2015 = vsub.f32 %v1695, %v1951
  %v2016 = vsub.f32 %v1696, %v1952
  %v2017 = vsub.f32 %v1697, %v1953
  %v2018 = vsub.f32 %v1698, %v1954
  %v2019 = vsub.f32 %v1699, %v1955
  %v2020 = vsub.f32 %v1700, %v1956
  %v2021 = vsub.f32 %v1701, %v1957
  %v2022 = vmul.f32 %v1958, %v1958
  %v2023 = vmul.f32 %v1959, %v1959
  %v2024 = vmul.f32 %v1960, %v1960
  %v2025 = vmul.f32 %v1961, %v1961
  %v2026 = vmul.f32 %v1962, %v1962
  %v2027 = vmul.f32 %v1963, %v1963
  %v2028 = vmul.f32 %v1964, %v1964
  %v2029 = vmul.f32 %v1965, %v1965
  %v2030 = vmul.f32 %v1966, %v1966
  %v2031 = vmul.f32 %v1967, %v1967
  %v2032 = vmul.f32 %v1968, %v1968
  %v2033 = vmul.f32 %v1969, %v1969
  %v2034 = vmul.f32 %v1970, %v1970
  %v2035 = vmul.f32 %v1971, %v1971
  %v2036 = vmul.f32 %v1972, %v1972
  %v2037 = vmul.f32 %v1973, %v1973
  %v2038 = vmul.f32 %v1974, %v1974
  %v2039 = vmul.f32 %v1975, %v1975
  %v2040 = vmul.f32 %v1976, %v1976
  %v2041 = vmul.f32 %v1977, %v1977
  %v2042 = vmul.f32 %v1978, %v1978
  %v2043 = vmul.f32 %v1979, %v1979
  %v2044 = vmul.f32 %v1980, %v1980
  %v2045 = vmul.f32 %v1981, %v1981
  %v2046 = vmul.f32 %v1982, %v1982
  %v2047 = vmul.f32 %v1983, %v1983
  %v2048 = vmul.f32 %v1984, %v1984
  %v2049 = vmul.f32 %v1985, %v1985
  %v2050 = vmul.f32 %v1986, %v1986
  %v2051 = vmul.f32 %v1987, %v1987
  %v2052 = vmul.f32 %v1988, %v1988
  %v2053 = vmul.f32 %v1989, %v1989
  %v2054 = vmul.f32 %v1990, %v1990
  %v2055 = vmul.f32 %v1991, %v1991
  %v2056 = vmul.f32 %v1992, %v1992
  %v2057 = vmul.f32 %v1993, %v1993
  %v2058 = vmul.f32 %v1994, %v1994
  %v2059 = vmul.f32 %v1995, %v1995
  %v2060 = vmul.f32 %v1996, %v1996
  %v2061 = vmul.f32 %v1997, %v1997
  %v2062 = vmul.f32 %v1998, %v1998
  %v2063 = vmul.f32 %v1999, %v1999
  %v2064 = vmul.f32 %v2000, %v2000
  %v2065 = vmul.f32 %v2001, %v2001
  %v2066 = vmul.f32 %v2002, %v2002
  %v2067 = vmul.f32 %v2003, %v2003
  %v2068 = vmul.f32 %v2004, %v2004
  %v2069 = vmul.f32 %v2005, %v2005
  %v2070 = vmul.f32 %v2006, %v2006
  %v2071 = vmul.f32 %v2007, %v2007
  %v2072 = vmul.f32 %v2008, %v2008
  %v2073 = vmul.f32 %v2009, %v2009
  %v2074 = vmul.f32 %v2010, %v2010
  %v2075 = vmul.f32 %v2011, %v2011
  %v2076 = vmul.f32 %v2012, %v2012
  %v2077 = vmul.f32 %v2013, %v2013
  %v2078 = vmul.f32 %v2014, %v2014
  %v2079 = vmul.f32 %v2015, %v2015
  %v2080 = vmul.f32 %v2016, %v2016
  %v2081 = vmul.f32 %v2017, %v2017
  %v2082 = vmul.f32 %v2018, %v2018
  %v2083 = vmul.f32 %v2019, %v2019
  %v2084 = vmul.f32 %v2020, %v2020
  %v2085 = vmul.f32 %v2021, %v2021
  %v2086 = vsel %vm87, %v2022, 0.0
  %2087 = vadd.xlane.f32.xlu0 %v2086
  %v2088 = vpop.xlane.xlu0 %2087
  %v2089 = vsel %vm87, %v2023, 0.0
  %2090 = vadd.xlane.f32.xlu0 %v2089
  %v2091 = vpop.xlane.xlu0 %2090
  %v2092 = vsel %vm87, %v2024, 0.0
  %2093 = vadd.xlane.f32.xlu0 %v2092
  %v2094 = vpop.xlane.xlu0 %2093
  %v2095 = vsel %vm87, %v2025, 0.0
  %2096 = vadd.xlane.f32.xlu0 %v2095
  %v2097 = vpop.xlane.xlu0 %2096
  %v2098 = vsel %vm87, %v2026, 0.0
  %2099 = vadd.xlane.f32.xlu0 %v2098
  %v2100 = vpop.xlane.xlu0 %2099
  %v2101 = vsel %vm87, %v2027, 0.0
  %2102 = vadd.xlane.f32.xlu0 %v2101
  %v2103 = vpop.xlane.xlu0 %2102
  %v2104 = vsel %vm87, %v2028, 0.0
  %2105 = vadd.xlane.f32.xlu0 %v2104
  %v2106 = vpop.xlane.xlu0 %2105
  %v2107 = vsel %vm87, %v2029, 0.0
  %2108 = vadd.xlane.f32.xlu0 %v2107
  %v2109 = vpop.xlane.xlu0 %2108
  %v2110 = vsel %vm87, %v2030, 0.0
  %2111 = vadd.xlane.f32.xlu0 %v2110
  %v2112 = vpop.xlane.xlu0 %2111
  %v2113 = vsel %vm87, %v2031, 0.0
  %2114 = vadd.xlane.f32.xlu0 %v2113
  %v2115 = vpop.xlane.xlu0 %2114
  %v2116 = vsel %vm87, %v2032, 0.0
  %2117 = vadd.xlane.f32.xlu0 %v2116
  %v2118 = vpop.xlane.xlu0 %2117
  %v2119 = vsel %vm87, %v2033, 0.0
  %2120 = vadd.xlane.f32.xlu0 %v2119
  %v2121 = vpop.xlane.xlu0 %2120
  %v2122 = vsel %vm87, %v2034, 0.0
  %2123 = vadd.xlane.f32.xlu0 %v2122
  %v2124 = vpop.xlane.xlu0 %2123
  %v2125 = vsel %vm87, %v2035, 0.0
  %2126 = vadd.xlane.f32.xlu0 %v2125
  %v2127 = vpop.xlane.xlu0 %2126
  %v2128 = vsel %vm87, %v2036, 0.0
  %2129 = vadd.xlane.f32.xlu0 %v2128
  %v2130 = vpop.xlane.xlu0 %2129
  %v2131 = vsel %vm87, %v2037, 0.0
  %2132 = vadd.xlane.f32.xlu0 %v2131
  %v2133 = vpop.xlane.xlu0 %2132
  %v2134 = vsel %vm87, %v2038, 0.0
  %2135 = vadd.xlane.f32.xlu0 %v2134
  %v2136 = vpop.xlane.xlu0 %2135
  %v2137 = vsel %vm87, %v2039, 0.0
  %2138 = vadd.xlane.f32.xlu0 %v2137
  %v2139 = vpop.xlane.xlu0 %2138
  %v2140 = vsel %vm87, %v2040, 0.0
  %2141 = vadd.xlane.f32.xlu0 %v2140
  %v2142 = vpop.xlane.xlu0 %2141
  %v2143 = vsel %vm87, %v2041, 0.0
  %2144 = vadd.xlane.f32.xlu0 %v2143
  %v2145 = vpop.xlane.xlu0 %2144
  %v2146 = vsel %vm87, %v2042, 0.0
  %2147 = vadd.xlane.f32.xlu0 %v2146
  %v2148 = vpop.xlane.xlu0 %2147
  %v2149 = vsel %vm87, %v2043, 0.0
  %2150 = vadd.xlane.f32.xlu0 %v2149
  %v2151 = vpop.xlane.xlu0 %2150
  %v2152 = vsel %vm87, %v2044, 0.0
  %2153 = vadd.xlane.f32.xlu0 %v2152
  %v2154 = vpop.xlane.xlu0 %2153
  %v2155 = vsel %vm87, %v2045, 0.0
  %2156 = vadd.xlane.f32.xlu0 %v2155
  %v2157 = vpop.xlane.xlu0 %2156
  %v2158 = vsel %vm87, %v2046, 0.0
  %2159 = vadd.xlane.f32.xlu0 %v2158
  %v2160 = vpop.xlane.xlu0 %2159
  %v2161 = vsel %vm87, %v2047, 0.0
  %2162 = vadd.xlane.f32.xlu0 %v2161
  %v2163 = vpop.xlane.xlu0 %2162
  %v2164 = vsel %vm87, %v2048, 0.0
  %2165 = vadd.xlane.f32.xlu0 %v2164
  %v2166 = vpop.xlane.xlu0 %2165
  %v2167 = vsel %vm87, %v2049, 0.0
  %2168 = vadd.xlane.f32.xlu0 %v2167
  %v2169 = vpop.xlane.xlu0 %2168
  %v2170 = vsel %vm87, %v2050, 0.0
  %2171 = vadd.xlane.f32.xlu0 %v2170
  %v2172 = vpop.xlane.xlu0 %2171
  %v2173 = vsel %vm87, %v2051, 0.0
  %2174 = vadd.xlane.f32.xlu0 %v2173
  %v2175 = vpop.xlane.xlu0 %2174
  %v2176 = vsel %vm87, %v2052, 0.0
  %2177 = vadd.xlane.f32.xlu0 %v2176
  %v2178 = vpop.xlane.xlu0 %2177
  %v2179 = vsel %vm87, %v2053, 0.0
  %2180 = vadd.xlane.f32.xlu0 %v2179
  %v2181 = vpop.xlane.xlu0 %2180
  %v2182 = vsel %vm87, %v2054, 0.0
  %2183 = vadd.xlane.f32.xlu0 %v2182
  %v2184 = vpop.xlane.xlu0 %2183
  %v2185 = vsel %vm87, %v2055, 0.0
  %2186 = vadd.xlane.f32.xlu0 %v2185
  %v2187 = vpop.xlane.xlu0 %2186
  %v2188 = vsel %vm87, %v2056, 0.0
  %2189 = vadd.xlane.f32.xlu0 %v2188
  %v2190 = vpop.xlane.xlu0 %2189
  %v2191 = vsel %vm87, %v2057, 0.0
  %2192 = vadd.xlane.f32.xlu0 %v2191
  %v2193 = vpop.xlane.xlu0 %2192
  %v2194 = vsel %vm87, %v2058, 0.0
  %2195 = vadd.xlane.f32.xlu0 %v2194
  %v2196 = vpop.xlane.xlu0 %2195
  %v2197 = vsel %vm87, %v2059, 0.0
  %2198 = vadd.xlane.f32.xlu0 %v2197
  %v2199 = vpop.xlane.xlu0 %2198
  %v2200 = vsel %vm87, %v2060, 0.0
  %2201 = vadd.xlane.f32.xlu0 %v2200
  %v2202 = vpop.xlane.xlu0 %2201
  %v2203 = vsel %vm87, %v2061, 0.0
  %2204 = vadd.xlane.f32.xlu0 %v2203
  %v2205 = vpop.xlane.xlu0 %2204
  %v2206 = vsel %vm87, %v2062, 0.0
  %2207 = vadd.xlane.f32.xlu0 %v2206
  %v2208 = vpop.xlane.xlu0 %2207
  %v2209 = vsel %vm87, %v2063, 0.0
  %2210 = vadd.xlane.f32.xlu0 %v2209
  %v2211 = vpop.xlane.xlu0 %2210
  %v2212 = vsel %vm87, %v2064, 0.0
  %2213 = vadd.xlane.f32.xlu0 %v2212
  %v2214 = vpop.xlane.xlu0 %2213
  %v2215 = vsel %vm87, %v2065, 0.0
  %2216 = vadd.xlane.f32.xlu0 %v2215
  %v2217 = vpop.xlane.xlu0 %2216
  %v2218 = vsel %vm87, %v2066, 0.0
  %2219 = vadd.xlane.f32.xlu0 %v2218
  %v2220 = vpop.xlane.xlu0 %2219
  %v2221 = vsel %vm87, %v2067, 0.0
  %2222 = vadd.xlane.f32.xlu0 %v2221
  %v2223 = vpop.xlane.xlu0 %2222
  %v2224 = vsel %vm87, %v2068, 0.0
  %2225 = vadd.xlane.f32.xlu0 %v2224
  %v2226 = vpop.xlane.xlu0 %2225
  %v2227 = vsel %vm87, %v2069, 0.0
  %2228 = vadd.xlane.f32.xlu0 %v2227
  %v2229 = vpop.xlane.xlu0 %2228
  %v2230 = vsel %vm87, %v2070, 0.0
  %2231 = vadd.xlane.f32.xlu0 %v2230
  %v2232 = vpop.xlane.xlu0 %2231
  %v2233 = vsel %vm87, %v2071, 0.0
  %2234 = vadd.xlane.f32.xlu0 %v2233
  %v2235 = vpop.xlane.xlu0 %2234
  %v2236 = vsel %vm87, %v2072, 0.0
  %2237 = vadd.xlane.f32.xlu0 %v2236
  %v2238 = vpop.xlane.xlu0 %2237
  %v2239 = vsel %vm87, %v2073, 0.0
  %2240 = vadd.xlane.f32.xlu0 %v2239
  %v2241 = vpop.xlane.xlu0 %2240
  %v2242 = vsel %vm87, %v2074, 0.0
  %2243 = vadd.xlane.f32.xlu0 %v2242
  %v2244 = vpop.xlane.xlu0 %2243
  %v2245 = vsel %vm87, %v2075, 0.0
  %2246 = vadd.xlane.f32.xlu0 %v2245
  %v2247 = vpop.xlane.xlu0 %2246
  %v2248 = vsel %vm87, %v2076, 0.0
  %2249 = vadd.xlane.f32.xlu0 %v2248
  %v2250 = vpop.xlane.xlu0 %2249
  %v2251 = vsel %vm87, %v2077, 0.0
  %2252 = vadd.xlane.f32.xlu0 %v2251
  %v2253 = vpop.xlane.xlu0 %2252
  %v2254 = vsel %vm87, %v2078, 0.0
  %2255 = vadd.xlane.f32.xlu0 %v2254
  %v2256 = vpop.xlane.xlu0 %2255
  %v2257 = vsel %vm87, %v2079, 0.0
  %2258 = vadd.xlane.f32.xlu0 %v2257
  %v2259 = vpop.xlane.xlu0 %2258
  %v2260 = vsel %vm87, %v2080, 0.0
  %2261 = vadd.xlane.f32.xlu0 %v2260
  %v2262 = vpop.xlane.xlu0 %2261
  %v2263 = vsel %vm87, %v2081, 0.0
  %2264 = vadd.xlane.f32.xlu0 %v2263
  %v2265 = vpop.xlane.xlu0 %2264
  %v2266 = vsel %vm87, %v2082, 0.0
  %2267 = vadd.xlane.f32.xlu0 %v2266
  %v2268 = vpop.xlane.xlu0 %2267
  %v2269 = vsel %vm87, %v2083, 0.0
  %2270 = vadd.xlane.f32.xlu0 %v2269
  %v2271 = vpop.xlane.xlu0 %2270
  %v2272 = vsel %vm87, %v2084, 0.0
  %2273 = vadd.xlane.f32.xlu0 %v2272
  %v2274 = vpop.xlane.xlu0 %2273
  %v2275 = vsel %vm87, %v2085, 0.0
  %2276 = vadd.xlane.f32.xlu0 %v2275
  %v2277 = vpop.xlane.xlu0 %2276
  %v2278 = vmul.f32 %v2088, %v280
  %v2279 = vmul.f32 %v2091, %v280
  %v2280 = vmul.f32 %v2094, %v280
  %v2281 = vmul.f32 %v2097, %v280
  %v2282 = vmul.f32 %v2100, %v280
  %v2283 = vmul.f32 %v2103, %v280
  %v2284 = vmul.f32 %v2106, %v280
  %v2285 = vmul.f32 %v2109, %v280
  %v2286 = vmul.f32 %v2112, %v280
  %v2287 = vmul.f32 %v2115, %v280
  %v2288 = vmul.f32 %v2118, %v280
  %v2289 = vmul.f32 %v2121, %v280
  %v2290 = vmul.f32 %v2124, %v280
  %v2291 = vmul.f32 %v2127, %v280
  %v2292 = vmul.f32 %v2130, %v280
  %v2293 = vmul.f32 %v2133, %v280
  %v2294 = vmul.f32 %v2136, %v280
  %v2295 = vmul.f32 %v2139, %v280
  %v2296 = vmul.f32 %v2142, %v280
  %v2297 = vmul.f32 %v2145, %v280
  %v2298 = vmul.f32 %v2148, %v280
  %v2299 = vmul.f32 %v2151, %v280
  %v2300 = vmul.f32 %v2154, %v280
  %v2301 = vmul.f32 %v2157, %v280
  %v2302 = vmul.f32 %v2160, %v280
  %v2303 = vmul.f32 %v2163, %v280
  %v2304 = vmul.f32 %v2166, %v280
  %v2305 = vmul.f32 %v2169, %v280
  %v2306 = vmul.f32 %v2172, %v280
  %v2307 = vmul.f32 %v2175, %v280
  %v2308 = vmul.f32 %v2178, %v280
  %v2309 = vmul.f32 %v2181, %v280
  %v2310 = vmul.f32 %v2184, %v280
  %v2311 = vmul.f32 %v2187, %v280
  %v2312 = vmul.f32 %v2190, %v280
  %v2313 = vmul.f32 %v2193, %v280
  %v2314 = vmul.f32 %v2196, %v280
  %v2315 = vmul.f32 %v2199, %v280
  %v2316 = vmul.f32 %v2202, %v280
  %v2317 = vmul.f32 %v2205, %v280
  %v2318 = vmul.f32 %v2208, %v280
  %v2319 = vmul.f32 %v2211, %v280
  %v2320 = vmul.f32 %v2214, %v280
  %v2321 = vmul.f32 %v2217, %v280
  %v2322 = vmul.f32 %v2220, %v280
  %v2323 = vmul.f32 %v2223, %v280
  %v2324 = vmul.f32 %v2226, %v280
  %v2325 = vmul.f32 %v2229, %v280
  %v2326 = vmul.f32 %v2232, %v280
  %v2327 = vmul.f32 %v2235, %v280
  %v2328 = vmul.f32 %v2238, %v280
  %v2329 = vmul.f32 %v2241, %v280
  %v2330 = vmul.f32 %v2244, %v280
  %v2331 = vmul.f32 %v2247, %v280
  %v2332 = vmul.f32 %v2250, %v280
  %v2333 = vmul.f32 %v2253, %v280
  %v2334 = vmul.f32 %v2256, %v280
  %v2335 = vmul.f32 %v2259, %v280
  %v2336 = vmul.f32 %v2262, %v280
  %v2337 = vmul.f32 %v2265, %v280
  %v2338 = vmul.f32 %v2268, %v280
  %v2339 = vmul.f32 %v2271, %v280
  %v2340 = vmul.f32 %v2274, %v280
  %v2341 = vmul.f32 %v2277, %v280
  %v2342 = vadd.f32 %v2278, 1e-05
  %v2343 = vadd.f32 %v2279, 1e-05
  %v2344 = vadd.f32 %v2280, 1e-05
  %v2345 = vadd.f32 %v2281, 1e-05
  %v2346 = vadd.f32 %v2282, 1e-05
  %v2347 = vadd.f32 %v2283, 1e-05
  %v2348 = vadd.f32 %v2284, 1e-05
  %v2349 = vadd.f32 %v2285, 1e-05
  %v2350 = vadd.f32 %v2286, 1e-05
  %v2351 = vadd.f32 %v2287, 1e-05
  %v2352 = vadd.f32 %v2288, 1e-05
  %v2353 = vadd.f32 %v2289, 1e-05
  %v2354 = vadd.f32 %v2290, 1e-05
  %v2355 = vadd.f32 %v2291, 1e-05
  %v2356 = vadd.f32 %v2292, 1e-05
  %v2357 = vadd.f32 %v2293, 1e-05
  %v2358 = vadd.f32 %v2294, 1e-05
  %v2359 = vadd.f32 %v2295, 1e-05
  %v2360 = vadd.f32 %v2296, 1e-05
  %v2361 = vadd.f32 %v2297, 1e-05
  %v2362 = vadd.f32 %v2298, 1e-05
  %v2363 = vadd.f32 %v2299, 1e-05
  %v2364 = vadd.f32 %v2300, 1e-05
  %v2365 = vadd.f32 %v2301, 1e-05
  %v2366 = vadd.f32 %v2302, 1e-05
  %v2367 = vadd.f32 %v2303, 1e-05
  %v2368 = vadd.f32 %v2304, 1e-05
  %v2369 = vadd.f32 %v2305, 1e-05
  %v2370 = vadd.f32 %v2306, 1e-05
  %v2371 = vadd.f32 %v2307, 1e-05
  %v2372 = vadd.f32 %v2308, 1e-05
  %v2373 = vadd.f32 %v2309, 1e-05
  %v2374 = vadd.f32 %v2310, 1e-05
  %v2375 = vadd.f32 %v2311, 1e-05
  %v2376 = vadd.f32 %v2312, 1e-05
  %v2377 = vadd.f32 %v2313, 1e-05
  %v2378 = vadd.f32 %v2314, 1e-05
  %v2379 = vadd.f32 %v2315, 1e-05
  %v2380 = vadd.f32 %v2316, 1e-05
  %v2381 = vadd.f32 %v2317, 1e-05
  %v2382 = vadd.f32 %v2318, 1e-05
  %v2383 = vadd.f32 %v2319, 1e-05
  %v2384 = vadd.f32 %v2320, 1e-05
  %v2385 = vadd.f32 %v2321, 1e-05
  %v2386 = vadd.f32 %v2322, 1e-05
  %v2387 = vadd.f32 %v2323, 1e-05
  %v2388 = vadd.f32 %v2324, 1e-05
  %v2389 = vadd.f32 %v2325, 1e-05
  %v2390 = vadd.f32 %v2326, 1e-05
  %v2391 = vadd.f32 %v2327, 1e-05
  %v2392 = vadd.f32 %v2328, 1e-05
  %v2393 = vadd.f32 %v2329, 1e-05
  %v2394 = vadd.f32 %v2330, 1e-05
  %v2395 = vadd.f32 %v2331, 1e-05
  %v2396 = vadd.f32 %v2332, 1e-05
  %v2397 = vadd.f32 %v2333, 1e-05
  %v2398 = vadd.f32 %v2334, 1e-05
  %v2399 = vadd.f32 %v2335, 1e-05
  %v2400 = vadd.f32 %v2336, 1e-05
  %v2401 = vadd.f32 %v2337, 1e-05
  %v2402 = vadd.f32 %v2338, 1e-05
  %v2403 = vadd.f32 %v2339, 1e-05
  %v2404 = vadd.f32 %v2340, 1e-05
  %v2405 = vadd.f32 %v2341, 1e-05
  %v2406 = vrsqrt.pop %v2342
  %v2407 = vrsqrt.pop %v2343
  %v2408 = vrsqrt.pop %v2344
  %v2409 = vrsqrt.pop %v2345
  %v2410 = vrsqrt.pop %v2346
  %v2411 = vrsqrt.pop %v2347
  %v2412 = vrsqrt.pop %v2348
  %v2413 = vrsqrt.pop %v2349
  %v2414 = vrsqrt.pop %v2350
  %v2415 = vrsqrt.pop %v2351
  %v2416 = vrsqrt.pop %v2352
  %v2417 = vrsqrt.pop %v2353
  %v2418 = vrsqrt.pop %v2354
  %v2419 = vrsqrt.pop %v2355
  %v2420 = vrsqrt.pop %v2356
  %v2421 = vrsqrt.pop %v2357
  %v2422 = vrsqrt.pop %v2358
  %v2423 = vrsqrt.pop %v2359
  %v2424 = vrsqrt.pop %v2360
  %v2425 = vrsqrt.pop %v2361
  %v2426 = vrsqrt.pop %v2362
  %v2427 = vrsqrt.pop %v2363
  %v2428 = vrsqrt.pop %v2364
  %v2429 = vrsqrt.pop %v2365
  %v2430 = vrsqrt.pop %v2366
  %v2431 = vrsqrt.pop %v2367
  %v2432 = vrsqrt.pop %v2368
  %v2433 = vrsqrt.pop %v2369
  %v2434 = vrsqrt.pop %v2370
  %v2435 = vrsqrt.pop %v2371
  %v2436 = vrsqrt.pop %v2372
  %v2437 = vrsqrt.pop %v2373
  %v2438 = vrsqrt.pop %v2374
  %v2439 = vrsqrt.pop %v2375
  %v2440 = vrsqrt.pop %v2376
  %v2441 = vrsqrt.pop %v2377
  %v2442 = vrsqrt.pop %v2378
  %v2443 = vrsqrt.pop %v2379
  %v2444 = vrsqrt.pop %v2380
  %v2445 = vrsqrt.pop %v2381
  %v2446 = vrsqrt.pop %v2382
  %v2447 = vrsqrt.pop %v2383
  %v2448 = vrsqrt.pop %v2384
  %v2449 = vrsqrt.pop %v2385
  %v2450 = vrsqrt.pop %v2386
  %v2451 = vrsqrt.pop %v2387
  %v2452 = vrsqrt.pop %v2388
  %v2453 = vrsqrt.pop %v2389
  %v2454 = vrsqrt.pop %v2390
  %v2455 = vrsqrt.pop %v2391
  %v2456 = vrsqrt.pop %v2392
  %v2457 = vrsqrt.pop %v2393
  %v2458 = vrsqrt.pop %v2394
  %v2459 = vrsqrt.pop %v2395
  %v2460 = vrsqrt.pop %v2396
  %v2461 = vrsqrt.pop %v2397
  %v2462 = vrsqrt.pop %v2398
  %v2463 = vrsqrt.pop %v2399
  %v2464 = vrsqrt.pop %v2400
  %v2465 = vrsqrt.pop %v2401
  %v2466 = vrsqrt.pop %v2402
  %v2467 = vrsqrt.pop %v2403
  %v2468 = vrsqrt.pop %v2404
  %v2469 = vrsqrt.pop %v2405
  %v2470 = vmul.f32 %v1638, %v2406
  %v2471 = vmul.f32 %v1639, %v2407
  %v2472 = vmul.f32 %v1640, %v2408
  %v2473 = vmul.f32 %v1641, %v2409
  %v2474 = vmul.f32 %v1642, %v2410
  %v2475 = vmul.f32 %v1643, %v2411
  %v2476 = vmul.f32 %v1644, %v2412
  %v2477 = vmul.f32 %v1645, %v2413
  %v2478 = vmul.f32 %v1646, %v2414
  %v2479 = vmul.f32 %v1647, %v2415
  %v2480 = vmul.f32 %v1648, %v2416
  %v2481 = vmul.f32 %v1649, %v2417
  %v2482 = vmul.f32 %v1650, %v2418
  %v2483 = vmul.f32 %v1651, %v2419
  %v2484 = vmul.f32 %v1652, %v2420
  %v2485 = vmul.f32 %v1653, %v2421
  %v2486 = vmul.f32 %v1654, %v2422
  %v2487 = vmul.f32 %v1655, %v2423
  %v2488 = vmul.f32 %v1656, %v2424
  %v2489 = vmul.f32 %v1657, %v2425
  %v2490 = vmul.f32 %v1658, %v2426
  %v2491 = vmul.f32 %v1659, %v2427
  %v2492 = vmul.f32 %v1660, %v2428
  %v2493 = vmul.f32 %v1661, %v2429
  %v2494 = vmul.f32 %v1662, %v2430
  %v2495 = vmul.f32 %v1663, %v2431
  %v2496 = vmul.f32 %v1664, %v2432
  %v2497 = vmul.f32 %v1665, %v2433
  %v2498 = vmul.f32 %v1666, %v2434
  %v2499 = vmul.f32 %v1667, %v2435
  %v2500 = vmul.f32 %v1668, %v2436
  %v2501 = vmul.f32 %v1669, %v2437
  %v2502 = vmul.f32 %v1670, %v2438
  %v2503 = vmul.f32 %v1671, %v2439
  %v2504 = vmul.f32 %v1672, %v2440
  %v2505 = vmul.f32 %v1673, %v2441
  %v2506 = vmul.f32 %v1674, %v2442
  %v2507 = vmul.f32 %v1675, %v2443
  %v2508 = vmul.f32 %v1676, %v2444
  %v2509 = vmul.f32 %v1677, %v2445
  %v2510 = vmul.f32 %v1678, %v2446
  %v2511 = vmul.f32 %v1679, %v2447
  %v2512 = vmul.f32 %v1680, %v2448
  %v2513 = vmul.f32 %v1681, %v2449
  %v2514 = vmul.f32 %v1682, %v2450
  %v2515 = vmul.f32 %v1683, %v2451
  %v2516 = vmul.f32 %v1684, %v2452
  %v2517 = vmul.f32 %v1685, %v2453
  %v2518 = vmul.f32 %v1686, %v2454
  %v2519 = vmul.f32 %v1687, %v2455
  %v2520 = vmul.f32 %v1688, %v2456
  %v2521 = vmul.f32 %v1689, %v2457
  %v2522 = vmul.f32 %v1690, %v2458
  %v2523 = vmul.f32 %v1691, %v2459
  %v2524 = vmul.f32 %v1692, %v2460
  %v2525 = vmul.f32 %v1693, %v2461
  %v2526 = vmul.f32 %v1694, %v2462
  %v2527 = vmul.f32 %v1695, %v2463
  %v2528 = vmul.f32 %v1696, %v2464
  %v2529 = vmul.f32 %v1697, %v2465
  %v2530 = vmul.f32 %v1698, %v2466
  %v2531 = vmul.f32 %v1699, %v2467
  %v2532 = vmul.f32 %v1700, %v2468
  %v2533 = vmul.f32 %v1701, %v2469
  %v2534 = vmul.f32 %v2470, %v925
  %v2535 = vmul.f32 %v2471, %v925
  %v2536 = vmul.f32 %v2472, %v925
  %v2537 = vmul.f32 %v2473, %v925
  %v2538 = vmul.f32 %v2474, %v925
  %v2539 = vmul.f32 %v2475, %v925
  %v2540 = vmul.f32 %v2476, %v925
  %v2541 = vmul.f32 %v2477, %v925
  %v2542 = vmul.f32 %v2478, %v925
  %v2543 = vmul.f32 %v2479, %v925
  %v2544 = vmul.f32 %v2480, %v925
  %v2545 = vmul.f32 %v2481, %v925
  %v2546 = vmul.f32 %v2482, %v925
  %v2547 = vmul.f32 %v2483, %v925
  %v2548 = vmul.f32 %v2484, %v925
  %v2549 = vmul.f32 %v2485, %v925
  %v2550 = vmul.f32 %v2486, %v925
  %v2551 = vmul.f32 %v2487, %v925
  %v2552 = vmul.f32 %v2488, %v925
  %v2553 = vmul.f32 %v2489, %v925
  %v2554 = vmul.f32 %v2490, %v925
  %v2555 = vmul.f32 %v2491, %v925
  %v2556 = vmul.f32 %v2492, %v925
  %v2557 = vmul.f32 %v2493, %v925
  %v2558 = vmul.f32 %v2494, %v925
  %v2559 = vmul.f32 %v2495, %v925
  %v2560 = vmul.f32 %v2496, %v925
  %v2561 = vmul.f32 %v2497, %v925
  %v2562 = vmul.f32 %v2498, %v925
  %v2563 = vmul.f32 %v2499, %v925
  %v2564 = vmul.f32 %v2500, %v925
  %v2565 = vmul.f32 %v2501, %v925
  %v2566 = vmul.f32 %v2502, %v925
  %v2567 = vmul.f32 %v2503, %v925
  %v2568 = vmul.f32 %v2504, %v925
  %v2569 = vmul.f32 %v2505, %v925
  %v2570 = vmul.f32 %v2506, %v925
  %v2571 = vmul.f32 %v2507, %v925
  %v2572 = vmul.f32 %v2508, %v925
  %v2573 = vmul.f32 %v2509, %v925
  %v2574 = vmul.f32 %v2510, %v925
  %v2575 = vmul.f32 %v2511, %v925
  %v2576 = vmul.f32 %v2512, %v925
  %v2577 = vmul.f32 %v2513, %v925
  %v2578 = vmul.f32 %v2514, %v925
  %v2579 = vmul.f32 %v2515, %v925
  %v2580 = vmul.f32 %v2516, %v925
  %v2581 = vmul.f32 %v2517, %v925
  %v2582 = vmul.f32 %v2518, %v925
  %v2583 = vmul.f32 %v2519, %v925
  %v2584 = vmul.f32 %v2520, %v925
  %v2585 = vmul.f32 %v2521, %v925
  %v2586 = vmul.f32 %v2522, %v925
  %v2587 = vmul.f32 %v2523, %v925
  %v2588 = vmul.f32 %v2524, %v925
  %v2589 = vmul.f32 %v2525, %v925
  %v2590 = vmul.f32 %v2526, %v925
  %v2591 = vmul.f32 %v2527, %v925
  %v2592 = vmul.f32 %v2528, %v925
  %v2593 = vmul.f32 %v2529, %v925
  %v2594 = vmul.f32 %v2530, %v925
  %v2595 = vmul.f32 %v2531, %v925
  %v2596 = vmul.f32 %v2532, %v925
  %v2597 = vmul.f32 %v2533, %v925
  %v2598 = vld [vmem:[%s4] sm:$0xf]
  %v2600 = vsel %vm87, %v2534, 0
  %v2603 = vsel %vm87, %v2535, 0
  %v2606 = vsel %vm87, %v2536, 0
  %v2609 = vsel %vm87, %v2537, 0
  %v2612 = vsel %vm87, %v2538, 0
  %v2615 = vsel %vm87, %v2539, 0
  %v2618 = vsel %vm87, %v2540, 0
  %v2621 = vsel %vm87, %v2541, 0
  %v2624 = vsel %vm87, %v2542, 0
  %v2627 = vsel %vm87, %v2543, 0
  %v2630 = vsel %vm87, %v2544, 0
  %v2633 = vsel %vm87, %v2545, 0
  %v2636 = vsel %vm87, %v2546, 0
  %v2639 = vsel %vm87, %v2547, 0
  %v2642 = vsel %vm87, %v2548, 0
  %v2645 = vsel %vm87, %v2549, 0
  %v2648 = vsel %vm87, %v2550, 0
  %v2651 = vsel %vm87, %v2551, 0
  %v2654 = vsel %vm87, %v2552, 0
  %v2657 = vsel %vm87, %v2553, 0
  %v2660 = vsel %vm87, %v2554, 0
  %v2663 = vsel %vm87, %v2555, 0
  %v2666 = vsel %vm87, %v2556, 0
  %v2669 = vsel %vm87, %v2557, 0
  %v2672 = vsel %vm87, %v2558, 0
  %v2675 = vsel %vm87, %v2559, 0
  %v2678 = vsel %vm87, %v2560, 0
  %v2681 = vsel %vm87, %v2561, 0
  %v2684 = vsel %vm87, %v2562, 0
  %v2687 = vsel %vm87, %v2563, 0
  %v2690 = vsel %vm87, %v2564, 0
  %v2693 = vsel %vm87, %v2565, 0
  %v2696 = vsel %vm87, %v2566, 0
  %v2699 = vsel %vm87, %v2567, 0
  %v2702 = vsel %vm87, %v2568, 0
  %v2705 = vsel %vm87, %v2569, 0
  %v2708 = vsel %vm87, %v2570, 0
  %v2711 = vsel %vm87, %v2571, 0
  %v2714 = vsel %vm87, %v2572, 0
  %v2717 = vsel %vm87, %v2573, 0
  %v2720 = vsel %vm87, %v2574, 0
  %v2723 = vsel %vm87, %v2575, 0
  %v2726 = vsel %vm87, %v2576, 0
  %v2729 = vsel %vm87, %v2577, 0
  %v2732 = vsel %vm87, %v2578, 0
  %v2735 = vsel %vm87, %v2579, 0
  %v2738 = vsel %vm87, %v2580, 0
  %v2741 = vsel %vm87, %v2581, 0
  %v2744 = vsel %vm87, %v2582, 0
  %v2747 = vsel %vm87, %v2583, 0
  %v2750 = vsel %vm87, %v2584, 0
  %v2753 = vsel %vm87, %v2585, 0
  %v2756 = vsel %vm87, %v2586, 0
  %v2759 = vsel %vm87, %v2587, 0
  %v2762 = vsel %vm87, %v2588, 0
  %v2765 = vsel %vm87, %v2589, 0
  %v2768 = vsel %vm87, %v2590, 0
  %v2771 = vsel %vm87, %v2591, 0
  %v2774 = vsel %vm87, %v2592, 0
  %v2777 = vsel %vm87, %v2593, 0
  %v2780 = vsel %vm87, %v2594, 0
  %v2783 = vsel %vm87, %v2595, 0
  %v2786 = vsel %vm87, %v2596, 0
  %v2789 = vsel %vm87, %v2597, 0
  %v2792 = vsel %vm1184, %v2598, 0
  %2794 = vmatprep.subr.mxu0 0.0
  %2795 = vmatpush1.msra.mxu0 %v2792
  %2796 = vmatprep.subr.mxu0 0.0
  %2797 = vmatpush1.msra.mxu0 0.0
  %2798 = vmatprep.subr.mxu0 0.0
  %2799 = vmatpush1.msra.mxu0 0.0
  %2800 = vmatprep.subr.mxu0 0.0
  %2801 = vmatpush1.msra.mxu0 0.0
  %2802 = vmatprep.subr.mxu0 0.0
  %2803 = vmatpush1.msra.mxu0 0.0
  %2804 = vmatprep.subr.mxu0 0.0
  %2805 = vmatpush1.msra.mxu0 0.0
  %2806 = vmatprep.subr.mxu0 0.0
  %2807 = vmatpush1.msra.mxu0 0.0
  %2808 = vmatprep.subr.mxu0 0.0
  %2809 = vmatpush1.msra.mxu0 0.0
  %2810 = vmatprep.subr.mxu0 0.0
  %2811 = vmatpush1.msra.mxu0 0.0
  %2812 = vmatprep.subr.mxu0 0.0
  %2813 = vmatpush1.msra.mxu0 0.0
  %2814 = vmatprep.subr.mxu0 0.0
  %2815 = vmatpush1.msra.mxu0 0.0
  %2816 = vmatprep.subr.mxu0 0.0
  %2817 = vmatpush1.msra.mxu0 0.0
  %2818 = vmatprep.subr.mxu0 0.0
  %2819 = vmatpush1.msra.mxu0 0.0
  %2820 = vmatprep.subr.mxu0 0.0
  %2821 = vmatpush1.msra.mxu0 0.0
  %2822 = vmatprep.subr.mxu0 0.0
  %2823 = vmatpush1.msra.mxu0 0.0
  %2824 = vmatprep.subr.mxu0 0.0
  %2825 = vmatpush1.msra.mxu0 0.0
  %2826 = vmatprep.subr.mxu0 0.0
  %2827 = vmatpush1.msra.mxu0 0.0
  %2828 = vmatprep.subr.mxu0 0.0
  %2829 = vmatpush1.msra.mxu0 0.0
  %2830 = vmatprep.subr.mxu0 0.0
  %2831 = vmatpush1.msra.mxu0 0.0
  %2832 = vmatprep.subr.mxu0 0.0
  %2833 = vmatpush1.msra.mxu0 0.0
  %2834 = vmatprep.subr.mxu0 0.0
  %2835 = vmatpush1.msra.mxu0 0.0
  %2836 = vmatprep.subr.mxu0 0.0
  %2837 = vmatpush1.msra.mxu0 0.0
  %2838 = vmatprep.subr.mxu0 0.0
  %2839 = vmatpush1.msra.mxu0 0.0
  %2840 = vmatprep.subr.mxu0 0.0
  %2841 = vmatpush1.msra.mxu0 0.0
  %2842 = vmatprep.subr.mxu0 0.0
  %2843 = vmatpush1.msra.mxu0 0.0
  %2844 = vmatprep.subr.mxu0 0.0
  %2845 = vmatpush1.msra.mxu0 0.0
  %2846 = vmatprep.subr.mxu0 0.0
  %2847 = vmatpush1.msra.mxu0 0.0
  %2848 = vmatprep.subr.mxu0 0.0
  %2849 = vmatpush1.msra.mxu0 0.0
  %2850 = vmatprep.subr.mxu0 0.0
  %2851 = vmatpush1.msra.mxu0 0.0
  %2852 = vmatprep.subr.mxu0 0.0
  %2853 = vmatpush1.msra.mxu0 0.0
  %2854 = vmatprep.subr.mxu0 0.0
  %2855 = vmatpush1.msra.mxu0 0.0
  %2856 = vmatprep.subr.mxu0 0.0
  %2857 = vmatpush1.msra.mxu0 0.0
  %2858 = vmatprep.mubr.f32.mxu0 0.0
  %2859 = vmatmul.mubr.f32.gmra.mrb[0].mxu0 %v2600
  %v2860 = vpop.f32.mrb[0].mxu0
  %v2861 = vadd.f32 0.0, %v2860
  %v2862 = vpop.f32.mrb[0].mxu0
  %2863 = vmatprep.mubr.f32.mxu0 0.0
  %2864 = vmatmul.mubr.f32.gmra.mrb[0].mxu0 %v2603
  %v2865 = vpop.f32.mrb[0].mxu0
  %v2866 = vadd.f32 0.0, %v2865
  %v2867 = vpop.f32.mrb[0].mxu0
  %2868 = vmatprep.mubr.f32.mxu0 0.0
  %2869 = vmatmul.mubr.f32.gmra.mrb[0].mxu0 %v2606
  %v2870 = vpop.f32.mrb[0].mxu0
  %v2871 = vadd.f32 0.0, %v2870
  %v2872 = vpop.f32.mrb[0].mxu0
  %2873 = vmatprep.mubr.f32.mxu0 0.0
  %2874 = vmatmul.mubr.f32.gmra.mrb[0].mxu0 %v2609
  %v2875 = vpop.f32.mrb[0].mxu0
  %v2876 = vadd.f32 0.0, %v2875
  %v2877 = vpop.f32.mrb[0].mxu0
  %2878 = vmatprep.mubr.f32.mxu0 0.0
  %2879 = vmatmul.mubr.f32.gmra.mrb[0].mxu0 %v2612
  %v2880 = vpop.f32.mrb[0].mxu0
  %v2881 = vadd.f32 0.0, %v2880
  %v2882 = vpop.f32.mrb[0].mxu0
  %2883 = vmatprep.mubr.f32.mxu0 0.0
  %2884 = vmatmul.mubr.f32.gmra.mrb[0].mxu0 %v2615
  %v2885 = vpop.f32.mrb[0].mxu0
  %v2886 = vadd.f32 0.0, %v2885
  %v2887 = vpop.f32.mrb[0].mxu0
  %2888 = vmatprep.mubr.f32.mxu0 0.0
  %2889 = vmatmul.mubr.f32.gmra.mrb[0].mxu0 %v2618
  %v2890 = vpop.f32.mrb[0].mxu0
  %v2891 = vadd.f32 0.0, %v2890
  %v2892 = vpop.f32.mrb[0].mxu0
  %2893 = vmatprep.mubr.f32.mxu0 0.0
  %2894 = vmatmul.mubr.f32.gmra.mrb[0].mxu0 %v2621
  %v2895 = vpop.f32.mrb[0].mxu0
  %v2896 = vadd.f32 0.0, %v2895
  %v2897 = vpop.f32.mrb[0].mxu0
  %2898 = vmatprep.mubr.f32.mxu0 0.0
  %2899 = vmatmul.mubr.f32.gmra.mrb[0].mxu0 %v2624
  %v2900 = vpop.f32.mrb[0].mxu0
  %v2901 = vadd.f32 0.0, %v2900
  %v2902 = vpop.f32.mrb[0].mxu0
  %2903 = vmatprep.mubr.f32.mxu0 0.0
  %2904 = vmatmul.mubr.f32.gmra.mrb[0].mxu0 %v2627
  %v2905 = vpop.f32.mrb[0].mxu0
  %v2906 = vadd.f32 0.0, %v2905
  %v2907 = vpop.f32.mrb[0].mxu0
  %2908 = vmatprep.mubr.f32.mxu0 0.0
  %2909 = vmatmul.mubr.f32.gmra.mrb[0].mxu0 %v2630
  %v2910 = vpop.f32.mrb[0].mxu0
  %v2911 = vadd.f32 0.0, %v2910
  %v2912 = vpop.f32.mrb[0].mxu0
  %2913 = vmatprep.mubr.f32.mxu0 0.0
  %2914 = vmatmul.mubr.f32.gmra.mrb[0].mxu0 %v2633
  %v2915 = vpop.f32.mrb[0].mxu0
  %v2916 = vadd.f32 0.0, %v2915
  %v2917 = vpop.f32.mrb[0].mxu0
  %2918 = vmatprep.mubr.f32.mxu0 0.0
  %2919 = vmatmul.mubr.f32.gmra.mrb[0].mxu0 %v2636
  %v2920 = vpop.f32.mrb[0].mxu0
  %v2921 = vadd.f32 0.0, %v2920
  %v2922 = vpop.f32.mrb[0].mxu0
  %2923 = vmatprep.mubr.f32.mxu0 0.0
  %2924 = vmatmul.mubr.f32.gmra.mrb[0].mxu0 %v2639
  %v2925 = vpop.f32.mrb[0].mxu0
  %v2926 = vadd.f32 0.0, %v2925
  %v2927 = vpop.f32.mrb[0].mxu0
  %2928 = vmatprep.mubr.f32.mxu0 0.0
  %2929 = vmatmul.mubr.f32.gmra.mrb[0].mxu0 %v2642
  %v2930 = vpop.f32.mrb[0].mxu0
  %v2931 = vadd.f32 0.0, %v2930
  %v2932 = vpop.f32.mrb[0].mxu0
  %2933 = vmatprep.mubr.f32.mxu0 0.0
  %2934 = vmatmul.mubr.f32.gmra.mrb[0].mxu0 %v2645
  %v2935 = vpop.f32.mrb[0].mxu0
  %v2936 = vadd.f32 0.0, %v2935
  %v2937 = vpop.f32.mrb[0].mxu0
  %2938 = vmatprep.mubr.f32.mxu0 0.0
  %2939 = vmatmul.mubr.f32.gmra.mrb[0].mxu0 %v2648
  %v2940 = vpop.f32.mrb[0].mxu0
  %v2941 = vadd.f32 0.0, %v2940
  %v2942 = vpop.f32.mrb[0].mxu0
  %2943 = vmatprep.mubr.f32.mxu0 0.0
  %2944 = vmatmul.mubr.f32.gmra.mrb[0].mxu0 %v2651
  %v2945 = vpop.f32.mrb[0].mxu0
  %v2946 = vadd.f32 0.0, %v2945
  %v2947 = vpop.f32.mrb[0].mxu0
  %2948 = vmatprep.mubr.f32.mxu0 0.0
  %2949 = vmatmul.mubr.f32.gmra.mrb[0].mxu0 %v2654
  %v2950 = vpop.f32.mrb[0].mxu0
  %v2951 = vadd.f32 0.0, %v2950
  %v2952 = vpop.f32.mrb[0].mxu0
  %2953 = vmatprep.mubr.f32.mxu0 0.0
  %2954 = vmatmul.mubr.f32.gmra.mrb[0].mxu0 %v2657
  %v2955 = vpop.f32.mrb[0].mxu0
  %v2956 = vadd.f32 0.0, %v2955
  %v2957 = vpop.f32.mrb[0].mxu0
  %2958 = vmatprep.mubr.f32.mxu0 0.0
  %2959 = vmatmul.mubr.f32.gmra.mrb[0].mxu0 %v2660
  %v2960 = vpop.f32.mrb[0].mxu0
  %v2961 = vadd.f32 0.0, %v2960
  %v2962 = vpop.f32.mrb[0].mxu0
  %2963 = vmatprep.mubr.f32.mxu0 0.0
  %2964 = vmatmul.mubr.f32.gmra.mrb[0].mxu0 %v2663
  %v2965 = vpop.f32.mrb[0].mxu0
  %v2966 = vadd.f32 0.0, %v2965
  %v2967 = vpop.f32.mrb[0].mxu0
  %2968 = vmatprep.mubr.f32.mxu0 0.0
  %2969 = vmatmul.mubr.f32.gmra.mrb[0].mxu0 %v2666
  %v2970 = vpop.f32.mrb[0].mxu0
  %v2971 = vadd.f32 0.0, %v2970
  %v2972 = vpop.f32.mrb[0].mxu0
  %2973 = vmatprep.mubr.f32.mxu0 0.0
  %2974 = vmatmul.mubr.f32.gmra.mrb[0].mxu0 %v2669
  %v2975 = vpop.f32.mrb[0].mxu0
  %v2976 = vadd.f32 0.0, %v2975
  %v2977 = vpop.f32.mrb[0].mxu0
  %2978 = vmatprep.mubr.f32.mxu0 0.0
  %2979 = vmatmul.mubr.f32.gmra.mrb[0].mxu0 %v2672
  %v2980 = vpop.f32.mrb[0].mxu0
  %v2981 = vadd.f32 0.0, %v2980
  %v2982 = vpop.f32.mrb[0].mxu0
  %2983 = vmatprep.mubr.f32.mxu0 0.0
  %2984 = vmatmul.mubr.f32.gmra.mrb[0].mxu0 %v2675
  %v2985 = vpop.f32.mrb[0].mxu0
  %v2986 = vadd.f32 0.0, %v2985
  %v2987 = vpop.f32.mrb[0].mxu0
  %2988 = vmatprep.mubr.f32.mxu0 0.0
  %2989 = vmatmul.mubr.f32.gmra.mrb[0].mxu0 %v2678
  %v2990 = vpop.f32.mrb[0].mxu0
  %v2991 = vadd.f32 0.0, %v2990
  %v2992 = vpop.f32.mrb[0].mxu0
  %2993 = vmatprep.mubr.f32.mxu0 0.0
  %2994 = vmatmul.mubr.f32.gmra.mrb[0].mxu0 %v2681
  %v2995 = vpop.f32.mrb[0].mxu0
  %v2996 = vadd.f32 0.0, %v2995
  %v2997 = vpop.f32.mrb[0].mxu0
  %2998 = vmatprep.mubr.f32.mxu0 0.0
  %2999 = vmatmul.mubr.f32.gmra.mrb[0].mxu0 %v2684
  %v3000 = vpop.f32.mrb[0].mxu0
  %v3001 = vadd.f32 0.0, %v3000
  %v3002 = vpop.f32.mrb[0].mxu0
  %3003 = vmatprep.mubr.f32.mxu0 0.0
  %3004 = vmatmul.mubr.f32.gmra.mrb[0].mxu0 %v2687
  %v3005 = vpop.f32.mrb[0].mxu0
  %v3006 = vadd.f32 0.0, %v3005
  %v3007 = vpop.f32.mrb[0].mxu0
  %3008 = vmatprep.mubr.f32.mxu0 0.0
  %3009 = vmatmul.mubr.f32.gmra.mrb[0].mxu0 %v2690
  %v3010 = vpop.f32.mrb[0].mxu0
  %v3011 = vadd.f32 0.0, %v3010
  %v3012 = vpop.f32.mrb[0].mxu0
  %3013 = vmatprep.mubr.f32.mxu0 0.0
  %3014 = vmatmul.mubr.f32.gmra.mrb[0].mxu0 %v2693
  %v3015 = vpop.f32.mrb[0].mxu0
  %v3016 = vadd.f32 0.0, %v3015
  %v3017 = vpop.f32.mrb[0].mxu0
  %3018 = vmatprep.mubr.f32.mxu0 0.0
  %3019 = vmatmul.mubr.f32.gmra.mrb[0].mxu0 %v2696
  %v3020 = vpop.f32.mrb[0].mxu0
  %v3021 = vadd.f32 0.0, %v3020
  %v3022 = vpop.f32.mrb[0].mxu0
  %3023 = vmatprep.mubr.f32.mxu0 0.0
  %3024 = vmatmul.mubr.f32.gmra.mrb[0].mxu0 %v2699
  %v3025 = vpop.f32.mrb[0].mxu0
  %v3026 = vadd.f32 0.0, %v3025
  %v3027 = vpop.f32.mrb[0].mxu0
  %3028 = vmatprep.mubr.f32.mxu0 0.0
  %3029 = vmatmul.mubr.f32.gmra.mrb[0].mxu0 %v2702
  %v3030 = vpop.f32.mrb[0].mxu0
  %v3031 = vadd.f32 0.0, %v3030
  %v3032 = vpop.f32.mrb[0].mxu0
  %3033 = vmatprep.mubr.f32.mxu0 0.0
  %3034 = vmatmul.mubr.f32.gmra.mrb[0].mxu0 %v2705
  %v3035 = vpop.f32.mrb[0].mxu0
  %v3036 = vadd.f32 0.0, %v3035
  %v3037 = vpop.f32.mrb[0].mxu0
  %3038 = vmatprep.mubr.f32.mxu0 0.0
  %3039 = vmatmul.mubr.f32.gmra.mrb[0].mxu0 %v2708
  %v3040 = vpop.f32.mrb[0].mxu0
  %v3041 = vadd.f32 0.0, %v3040
  %v3042 = vpop.f32.mrb[0].mxu0
  %3043 = vmatprep.mubr.f32.mxu0 0.0
  %3044 = vmatmul.mubr.f32.gmra.mrb[0].mxu0 %v2711
  %v3045 = vpop.f32.mrb[0].mxu0
  %v3046 = vadd.f32 0.0, %v3045
  %v3047 = vpop.f32.mrb[0].mxu0
  %3048 = vmatprep.mubr.f32.mxu0 0.0
  %3049 = vmatmul.mubr.f32.gmra.mrb[0].mxu0 %v2714
  %v3050 = vpop.f32.mrb[0].mxu0
  %v3051 = vadd.f32 0.0, %v3050
  %v3052 = vpop.f32.mrb[0].mxu0
  %3053 = vmatprep.mubr.f32.mxu0 0.0
  %3054 = vmatmul.mubr.f32.gmra.mrb[0].mxu0 %v2717
  %v3055 = vpop.f32.mrb[0].mxu0
  %v3056 = vadd.f32 0.0, %v3055
  %v3057 = vpop.f32.mrb[0].mxu0
  %3058 = vmatprep.mubr.f32.mxu0 0.0
  %3059 = vmatmul.mubr.f32.gmra.mrb[0].mxu0 %v2720
  %v3060 = vpop.f32.mrb[0].mxu0
  %v3061 = vadd.f32 0.0, %v3060
  %v3062 = vpop.f32.mrb[0].mxu0
  %3063 = vmatprep.mubr.f32.mxu0 0.0
  %3064 = vmatmul.mubr.f32.gmra.mrb[0].mxu0 %v2723
  %v3065 = vpop.f32.mrb[0].mxu0
  %v3066 = vadd.f32 0.0, %v3065
  %v3067 = vpop.f32.mrb[0].mxu0
  %3068 = vmatprep.mubr.f32.mxu0 0.0
  %3069 = vmatmul.mubr.f32.gmra.mrb[0].mxu0 %v2726
  %v3070 = vpop.f32.mrb[0].mxu0
  %v3071 = vadd.f32 0.0, %v3070
  %v3072 = vpop.f32.mrb[0].mxu0
  %3073 = vmatprep.mubr.f32.mxu0 0.0
  %3074 = vmatmul.mubr.f32.gmra.mrb[0].mxu0 %v2729
  %v3075 = vpop.f32.mrb[0].mxu0
  %v3076 = vadd.f32 0.0, %v3075
  %v3077 = vpop.f32.mrb[0].mxu0
  %3078 = vmatprep.mubr.f32.mxu0 0.0
  %3079 = vmatmul.mubr.f32.gmra.mrb[0].mxu0 %v2732
  %v3080 = vpop.f32.mrb[0].mxu0
  %v3081 = vadd.f32 0.0, %v3080
  %v3082 = vpop.f32.mrb[0].mxu0
  %3083 = vmatprep.mubr.f32.mxu0 0.0
  %3084 = vmatmul.mubr.f32.gmra.mrb[0].mxu0 %v2735
  %v3085 = vpop.f32.mrb[0].mxu0
  %v3086 = vadd.f32 0.0, %v3085
  %v3087 = vpop.f32.mrb[0].mxu0
  %3088 = vmatprep.mubr.f32.mxu0 0.0
  %3089 = vmatmul.mubr.f32.gmra.mrb[0].mxu0 %v2738
  %v3090 = vpop.f32.mrb[0].mxu0
  %v3091 = vadd.f32 0.0, %v3090
  %v3092 = vpop.f32.mrb[0].mxu0
  %3093 = vmatprep.mubr.f32.mxu0 0.0
  %3094 = vmatmul.mubr.f32.gmra.mrb[0].mxu0 %v2741
  %v3095 = vpop.f32.mrb[0].mxu0
  %v3096 = vadd.f32 0.0, %v3095
  %v3097 = vpop.f32.mrb[0].mxu0
  %3098 = vmatprep.mubr.f32.mxu0 0.0
  %3099 = vmatmul.mubr.f32.gmra.mrb[0].mxu0 %v2744
  %v3100 = vpop.f32.mrb[0].mxu0
  %v3101 = vadd.f32 0.0, %v3100
  %v3102 = vpop.f32.mrb[0].mxu0
  %3103 = vmatprep.mubr.f32.mxu0 0.0
  %3104 = vmatmul.mubr.f32.gmra.mrb[0].mxu0 %v2747
  %v3105 = vpop.f32.mrb[0].mxu0
  %v3106 = vadd.f32 0.0, %v3105
  %v3107 = vpop.f32.mrb[0].mxu0
  %3108 = vmatprep.mubr.f32.mxu0 0.0
  %3109 = vmatmul.mubr.f32.gmra.mrb[0].mxu0 %v2750
  %v3110 = vpop.f32.mrb[0].mxu0
  %v3111 = vadd.f32 0.0, %v3110
  %v3112 = vpop.f32.mrb[0].mxu0
  %3113 = vmatprep.mubr.f32.mxu0 0.0
  %3114 = vmatmul.mubr.f32.gmra.mrb[0].mxu0 %v2753
  %v3115 = vpop.f32.mrb[0].mxu0
  %v3116 = vadd.f32 0.0, %v3115
  %v3117 = vpop.f32.mrb[0].mxu0
  %3118 = vmatprep.mubr.f32.mxu0 0.0
  %3119 = vmatmul.mubr.f32.gmra.mrb[0].mxu0 %v2756
  %v3120 = vpop.f32.mrb[0].mxu0
  %v3121 = vadd.f32 0.0, %v3120
  %v3122 = vpop.f32.mrb[0].mxu0
  %3123 = vmatprep.mubr.f32.mxu0 0.0
  %3124 = vmatmul.mubr.f32.gmra.mrb[0].mxu0 %v2759
  %v3125 = vpop.f32.mrb[0].mxu0
  %v3126 = vadd.f32 0.0, %v3125
  %v3127 = vpop.f32.mrb[0].mxu0
  %3128 = vmatprep.mubr.f32.mxu0 0.0
  %3129 = vmatmul.mubr.f32.gmra.mrb[0].mxu0 %v2762
  %v3130 = vpop.f32.mrb[0].mxu0
  %v3131 = vadd.f32 0.0, %v3130
  %v3132 = vpop.f32.mrb[0].mxu0
  %3133 = vmatprep.mubr.f32.mxu0 0.0
  %3134 = vmatmul.mubr.f32.gmra.mrb[0].mxu0 %v2765
  %v3135 = vpop.f32.mrb[0].mxu0
  %v3136 = vadd.f32 0.0, %v3135
  %v3137 = vpop.f32.mrb[0].mxu0
  %3138 = vmatprep.mubr.f32.mxu0 0.0
  %3139 = vmatmul.mubr.f32.gmra.mrb[0].mxu0 %v2768
  %v3140 = vpop.f32.mrb[0].mxu0
  %v3141 = vadd.f32 0.0, %v3140
  %v3142 = vpop.f32.mrb[0].mxu0
  %3143 = vmatprep.mubr.f32.mxu0 0.0
  %3144 = vmatmul.mubr.f32.gmra.mrb[0].mxu0 %v2771
  %v3145 = vpop.f32.mrb[0].mxu0
  %v3146 = vadd.f32 0.0, %v3145
  %v3147 = vpop.f32.mrb[0].mxu0
  %3148 = vmatprep.mubr.f32.mxu0 0.0
  %3149 = vmatmul.mubr.f32.gmra.mrb[0].mxu0 %v2774
  %v3150 = vpop.f32.mrb[0].mxu0
  %v3151 = vadd.f32 0.0, %v3150
  %v3152 = vpop.f32.mrb[0].mxu0
  %3153 = vmatprep.mubr.f32.mxu0 0.0
  %3154 = vmatmul.mubr.f32.gmra.mrb[0].mxu0 %v2777
  %v3155 = vpop.f32.mrb[0].mxu0
  %v3156 = vadd.f32 0.0, %v3155
  %v3157 = vpop.f32.mrb[0].mxu0
  %3158 = vmatprep.mubr.f32.mxu0 0.0
  %3159 = vmatmul.mubr.f32.gmra.mrb[0].mxu0 %v2780
  %v3160 = vpop.f32.mrb[0].mxu0
  %v3161 = vadd.f32 0.0, %v3160
  %v3162 = vpop.f32.mrb[0].mxu0
  %3163 = vmatprep.mubr.f32.mxu0 0.0
  %3164 = vmatmul.mubr.f32.gmra.mrb[0].mxu0 %v2783
  %v3165 = vpop.f32.mrb[0].mxu0
  %v3166 = vadd.f32 0.0, %v3165
  %v3167 = vpop.f32.mrb[0].mxu0
  %3168 = vmatprep.mubr.f32.mxu0 0.0
  %3169 = vmatmul.mubr.f32.gmra.mrb[0].mxu0 %v2786
  %v3170 = vpop.f32.mrb[0].mxu0
  %v3171 = vadd.f32 0.0, %v3170
  %v3172 = vpop.f32.mrb[0].mxu0
  %3173 = vmatprep.mubr.f32.mxu0 0.0
  %3174 = vmatmul.mubr.f32.gmra.mrb[0].mxu0 %v2789
  %v3175 = vpop.f32.mrb[0].mxu0
  %v3176 = vadd.f32 0.0, %v3175
  %v3177 = vpop.f32.mrb[0].mxu0
  %3178 = vdwg.mxu0
  %3179 = vst.msk [vmem:[%s6] sm:$0xff] %vm1573, %v2861
  %3180 = vst.msk [vmem:[%s6 + $0x8] sm:$0xff] %vm1573, %v2866
  %3181 = vst.msk [vmem:[%s6 + $0x10] sm:$0xff] %vm1573, %v2871
  %3182 = vst.msk [vmem:[%s6 + $0x18] sm:$0xff] %vm1573, %v2876
  %3183 = vst.msk [vmem:[%s6 + $0x20] sm:$0xff] %vm1573, %v2881
  %3184 = vst.msk [vmem:[%s6 + $0x28] sm:$0xff] %vm1573, %v2886
  %3185 = vst.msk [vmem:[%s6 + $0x30] sm:$0xff] %vm1573, %v2891
  %3186 = vst.msk [vmem:[%s6 + $0x38] sm:$0xff] %vm1573, %v2896
  %3187 = vst.msk [vmem:[%s6 + $0x40] sm:$0xff] %vm1573, %v2901
  %3188 = vst.msk [vmem:[%s6 + $0x48] sm:$0xff] %vm1573, %v2906
  %3189 = vst.msk [vmem:[%s6 + $0x50] sm:$0xff] %vm1573, %v2911
  %3190 = vst.msk [vmem:[%s6 + $0x58] sm:$0xff] %vm1573, %v2916
  %3191 = vst.msk [vmem:[%s6 + $0x60] sm:$0xff] %vm1573, %v2921
  %3192 = vst.msk [vmem:[%s6 + $0x68] sm:$0xff] %vm1573, %v2926
  %3193 = vst.msk [vmem:[%s6 + $0x70] sm:$0xff] %vm1573, %v2931
  %3194 = vst.msk [vmem:[%s6 + $0x78] sm:$0xff] %vm1573, %v2936
  %3195 = vst.msk [vmem:[%s6 + $0x80] sm:$0xff] %vm1573, %v2941
  %3196 = vst.msk [vmem:[%s6 + $0x88] sm:$0xff] %vm1573, %v2946
  %3197 = vst.msk [vmem:[%s6 + $0x90] sm:$0xff] %vm1573, %v2951
  %3198 = vst.msk [vmem:[%s6 + $0x98] sm:$0xff] %vm1573, %v2956
  %3199 = vst.msk [vmem:[%s6 + $0xa0] sm:$0xff] %vm1573, %v2961
  %3200 = vst.msk [vmem:[%s6 + $0xa8] sm:$0xff] %vm1573, %v2966
  %3201 = vst.msk [vmem:[%s6 + $0xb0] sm:$0xff] %vm1573, %v2971
  %3202 = vst.msk [vmem:[%s6 + $0xb8] sm:$0xff] %vm1573, %v2976
  %3203 = vst.msk [vmem:[%s6 + $0xc0] sm:$0xff] %vm1573, %v2981
  %3204 = vst.msk [vmem:[%s6 + $0xc8] sm:$0xff] %vm1573, %v2986
  %3205 = vst.msk [vmem:[%s6 + $0xd0] sm:$0xff] %vm1573, %v2991
  %3206 = vst.msk [vmem:[%s6 + $0xd8] sm:$0xff] %vm1573, %v2996
  %3207 = vst.msk [vmem:[%s6 + $0xe0] sm:$0xff] %vm1573, %v3001
  %3208 = vst.msk [vmem:[%s6 + $0xe8] sm:$0xff] %vm1573, %v3006
  %3209 = vst.msk [vmem:[%s6 + $0xf0] sm:$0xff] %vm1573, %v3011
  %3210 = vst.msk [vmem:[%s6 + $0xf8] sm:$0xff] %vm1573, %v3016
  %3211 = vst.msk [vmem:[%s6 + $0x100] sm:$0xff] %vm1573, %v3021
  %3212 = vst.msk [vmem:[%s6 + $0x108] sm:$0xff] %vm1573, %v3026
  %3213 = vst.msk [vmem:[%s6 + $0x110] sm:$0xff] %vm1573, %v3031
  %3214 = vst.msk [vmem:[%s6 + $0x118] sm:$0xff] %vm1573, %v3036
  %3215 = vst.msk [vmem:[%s6 + $0x120] sm:$0xff] %vm1573, %v3041
  %3216 = vst.msk [vmem:[%s6 + $0x128] sm:$0xff] %vm1573, %v3046
  %3217 = vst.msk [vmem:[%s6 + $0x130] sm:$0xff] %vm1573, %v3051
  %3218 = vst.msk [vmem:[%s6 + $0x138] sm:$0xff] %vm1573, %v3056
  %3219 = vst.msk [vmem:[%s6 + $0x140] sm:$0xff] %vm1573, %v3061
  %3220 = vst.msk [vmem:[%s6 + $0x148] sm:$0xff] %vm1573, %v3066
  %3221 = vst.msk [vmem:[%s6 + $0x150] sm:$0xff] %vm1573, %v3071
  %3222 = vst.msk [vmem:[%s6 + $0x158] sm:$0xff] %vm1573, %v3076
  %3223 = vst.msk [vmem:[%s6 + $0x160] sm:$0xff] %vm1573, %v3081
  %3224 = vst.msk [vmem:[%s6 + $0x168] sm:$0xff] %vm1573, %v3086
  %3225 = vst.msk [vmem:[%s6 + $0x170] sm:$0xff] %vm1573, %v3091
  %3226 = vst.msk [vmem:[%s6 + $0x178] sm:$0xff] %vm1573, %v3096
  %3227 = vst.msk [vmem:[%s6 + $0x180] sm:$0xff] %vm1573, %v3101
  %3228 = vst.msk [vmem:[%s6 + $0x188] sm:$0xff] %vm1573, %v3106
  %3229 = vst.msk [vmem:[%s6 + $0x190] sm:$0xff] %vm1573, %v3111
  %3230 = vst.msk [vmem:[%s6 + $0x198] sm:$0xff] %vm1573, %v3116
  %3231 = vst.msk [vmem:[%s6 + $0x1a0] sm:$0xff] %vm1573, %v3121
  %3232 = vst.msk [vmem:[%s6 + $0x1a8] sm:$0xff] %vm1573, %v3126
  %3233 = vst.msk [vmem:[%s6 + $0x1b0] sm:$0xff] %vm1573, %v3131
  %3234 = vst.msk [vmem:[%s6 + $0x1b8] sm:$0xff] %vm1573, %v3136
  %3235 = vst.msk [vmem:[%s6 + $0x1c0] sm:$0xff] %vm1573, %v3141
  %3236 = vst.msk [vmem:[%s6 + $0x1c8] sm:$0xff] %vm1573, %v3146
  %3237 = vst.msk [vmem:[%s6 + $0x1d0] sm:$0xff] %vm1573, %v3151
  %3238 = vst.msk [vmem:[%s6 + $0x1d8] sm:$0xff] %vm1573, %v3156
  %3239 = vst.msk [vmem:[%s6 + $0x1e0] sm:$0xff] %vm1573, %v3161
  %3240 = vst.msk [vmem:[%s6 + $0x1e8] sm:$0xff] %vm1573, %v3166
  %3241 = vst.msk [vmem:[%s6 + $0x1f0] sm:$0xff] %vm1573, %v3171
  %3242 = vst.msk [vmem:[%s6 + $0x1f8] sm:$0xff] %vm1573, %v3176
  // Predicated region
  $region22: #{hv_lca_with_mamba.5} parent=0 // pred_check
    _
  $region23: #{hv_lca_with_mamba.5} parent=0 // pred_check_branch
    %3244 = sbr.rel (0) target = $region25
  $region24: #{hv_lca_with_mamba.5} parent=0 // pred_region
    _
  $region25: #{hv_lca_with_mamba.5} parent=0 // pred_fallthru
    _
  // Predicated region
  $region26: #{hv_lca_with_mamba.5} parent=0 // pred_check
    _
  $region27: #{hv_lca_with_mamba.5} parent=0 // pred_check_branch
    %3246 = sbr.rel (0) target = $region29
  $region28: #{hv_lca_with_mamba.5} parent=0 // pred_region
    _
  $region29: #{hv_lca_with_mamba.5} parent=0 // pred_fallthru
    _
  // Predicated region
  $region30: #{hv_lca_with_mamba.5} parent=0 // pred_check
    _
  $region31: #{hv_lca_with_mamba.5} parent=0 // pred_check_branch
    %3248 = sbr.rel (0) target = $region33
  $region32: #{hv_lca_with_mamba.5} parent=0 // pred_region
    _
  $region33: #{hv_lca_with_mamba.5} parent=0 // pred_fallthru
    _
  // Predicated region
  $region34: #{hv_lca_with_mamba.5} parent=0 // pred_check
    _
  $region35: #{hv_lca_with_mamba.5} parent=0 // pred_check_branch
    %3250 = sbr.rel (0) target = $region37
  $region36: #{hv_lca_with_mamba.5} parent=0 // pred_region
    _
  $region37: #{hv_lca_with_mamba.5} parent=0 // pred_fallthru
    _

// kernel: hv_lca_with_mamba.9
$region0: #{hv_lca_with_mamba.9}
  #allocation0 [shape = 'u32[]', space=smem, size = 0x4, offset = 0x4, fixed_abs, tag = 'smem constant byte address 0x4 - core index']
  #allocation1 [shape = 'u32[144,128]{1,0:T(1,128)}', space=vmem, size = 0x12000, scoped, tag = 'internal scratch']
  %s0 = inlined_call_operand.vmem [shape: f32[512,10], index: 0, kind: input, shape index: {}]
  %s1 = inlined_call_operand.vmem [shape: f32[10,4], index: 1, kind: input, shape index: {}]
  %s2 = inlined_call_operand.vmem [shape: f32[512,4], index: 2, kind: output, shape index: {}]
  %s3 = sld [smem:[#allocation0]]
  $region18: #{hv_lca_with_mamba.9} parent=0
    _
  %s5 = ssub.s32 1, %s3
  %s6 = scalar_select 0, %s5, %s3
  // Predicated region
  $region2: #{hv_lca_with_mamba.9} parent=0 // pred_check
    _
  $region3: #{hv_lca_with_mamba.9} parent=0 // pred_check_branch
    %8 = sbr.rel (0) target = $region5
  $region4: #{hv_lca_with_mamba.9} parent=0 // pred_region
    _
  $region5: #{hv_lca_with_mamba.9} parent=0 // pred_fallthru
    _
  // Predicated region
  $region6: #{hv_lca_with_mamba.9} parent=0 // pred_check
    _
  $region7: #{hv_lca_with_mamba.9} parent=0 // pred_check_branch
    %10 = sbr.rel (0) target = $region9
  $region8: #{hv_lca_with_mamba.9} parent=0 // pred_region
    _
  $region9: #{hv_lca_with_mamba.9} parent=0 // pred_fallthru
    _
  %v11 = vld [vmem:[%s0] sm:$0xff]
  %v12 = vld [vmem:[%s0 + $0x8] sm:$0xff]
  %v13 = vld [vmem:[%s0 + $0x10] sm:$0xff]
  %v14 = vld [vmem:[%s0 + $0x18] sm:$0xff]
  %v15 = vld [vmem:[%s0 + $0x20] sm:$0xff]
  %v16 = vld [vmem:[%s0 + $0x28] sm:$0xff]
  %v17 = vld [vmem:[%s0 + $0x30] sm:$0xff]
  %v18 = vld [vmem:[%s0 + $0x38] sm:$0xff]
  %v19 = vld [vmem:[%s0 + $0x40] sm:$0xff]
  %v20 = vld [vmem:[%s0 + $0x48] sm:$0xff]
  %v21 = vld [vmem:[%s0 + $0x50] sm:$0xff]
  %v22 = vld [vmem:[%s0 + $0x58] sm:$0xff]
  %v23 = vld [vmem:[%s0 + $0x60] sm:$0xff]
  %v24 = vld [vmem:[%s0 + $0x68] sm:$0xff]
  %v25 = vld [vmem:[%s0 + $0x70] sm:$0xff]
  %v26 = vld [vmem:[%s0 + $0x78] sm:$0xff]
  %v27 = vld [vmem:[%s0 + $0x80] sm:$0xff]
  %v28 = vld [vmem:[%s0 + $0x88] sm:$0xff]
  %v29 = vld [vmem:[%s0 + $0x90] sm:$0xff]
  %v30 = vld [vmem:[%s0 + $0x98] sm:$0xff]
  %v31 = vld [vmem:[%s0 + $0xa0] sm:$0xff]
  %v32 = vld [vmem:[%s0 + $0xa8] sm:$0xff]
  %v33 = vld [vmem:[%s0 + $0xb0] sm:$0xff]
  %v34 = vld [vmem:[%s0 + $0xb8] sm:$0xff]
  %v35 = vld [vmem:[%s0 + $0xc0] sm:$0xff]
  %v36 = vld [vmem:[%s0 + $0xc8] sm:$0xff]
  %v37 = vld [vmem:[%s0 + $0xd0] sm:$0xff]
  %v38 = vld [vmem:[%s0 + $0xd8] sm:$0xff]
  %v39 = vld [vmem:[%s0 + $0xe0] sm:$0xff]
  %v40 = vld [vmem:[%s0 + $0xe8] sm:$0xff]
  %v41 = vld [vmem:[%s0 + $0xf0] sm:$0xff]
  %v42 = vld [vmem:[%s0 + $0xf8] sm:$0xff]
  %v43 = vld [vmem:[%s0 + $0x100] sm:$0xff]
  %v44 = vld [vmem:[%s0 + $0x108] sm:$0xff]
  %v45 = vld [vmem:[%s0 + $0x110] sm:$0xff]
  %v46 = vld [vmem:[%s0 + $0x118] sm:$0xff]
  %v47 = vld [vmem:[%s0 + $0x120] sm:$0xff]
  %v48 = vld [vmem:[%s0 + $0x128] sm:$0xff]
  %v49 = vld [vmem:[%s0 + $0x130] sm:$0xff]
  %v50 = vld [vmem:[%s0 + $0x138] sm:$0xff]
  %v51 = vld [vmem:[%s0 + $0x140] sm:$0xff]
  %v52 = vld [vmem:[%s0 + $0x148] sm:$0xff]
  %v53 = vld [vmem:[%s0 + $0x150] sm:$0xff]
  %v54 = vld [vmem:[%s0 + $0x158] sm:$0xff]
  %v55 = vld [vmem:[%s0 + $0x160] sm:$0xff]
  %v56 = vld [vmem:[%s0 + $0x168] sm:$0xff]
  %v57 = vld [vmem:[%s0 + $0x170] sm:$0xff]
  %v58 = vld [vmem:[%s0 + $0x178] sm:$0xff]
  %v59 = vld [vmem:[%s0 + $0x180] sm:$0xff]
  %v60 = vld [vmem:[%s0 + $0x188] sm:$0xff]
  %v61 = vld [vmem:[%s0 + $0x190] sm:$0xff]
  %v62 = vld [vmem:[%s0 + $0x198] sm:$0xff]
  %v63 = vld [vmem:[%s0 + $0x1a0] sm:$0xff]
  %v64 = vld [vmem:[%s0 + $0x1a8] sm:$0xff]
  %v65 = vld [vmem:[%s0 + $0x1b0] sm:$0xff]
  %v66 = vld [vmem:[%s0 + $0x1b8] sm:$0xff]
  %v67 = vld [vmem:[%s0 + $0x1c0] sm:$0xff]
  %v68 = vld [vmem:[%s0 + $0x1c8] sm:$0xff]
  %v69 = vld [vmem:[%s0 + $0x1d0] sm:$0xff]
  %v70 = vld [vmem:[%s0 + $0x1d8] sm:$0xff]
  %v71 = vld [vmem:[%s0 + $0x1e0] sm:$0xff]
  %v72 = vld [vmem:[%s0 + $0x1e8] sm:$0xff]
  %v73 = vld [vmem:[%s0 + $0x1f0] sm:$0xff]
  %v74 = vld [vmem:[%s0 + $0x1f8] sm:$0xff]
  %v75 = vld [vmem:[%s1] sm:$0xff]
  %v76 = vld [vmem:[%s1 + $0x8] sm:$0x3]
  %vm77 = vcmask 80896
  %v79 = vsel %vm77, %v11, 0
  %v82 = vsel %vm77, %v12, 0
  %v85 = vsel %vm77, %v13, 0
  %v88 = vsel %vm77, %v14, 0
  %v91 = vsel %vm77, %v15, 0
  %v94 = vsel %vm77, %v16, 0
  %v97 = vsel %vm77, %v17, 0
  %v100 = vsel %vm77, %v18, 0
  %v103 = vsel %vm77, %v19, 0
  %v106 = vsel %vm77, %v20, 0
  %v109 = vsel %vm77, %v21, 0
  %v112 = vsel %vm77, %v22, 0
  %v115 = vsel %vm77, %v23, 0
  %v118 = vsel %vm77, %v24, 0
  %v121 = vsel %vm77, %v25, 0
  %v124 = vsel %vm77, %v26, 0
  %v127 = vsel %vm77, %v27, 0
  %v130 = vsel %vm77, %v28, 0
  %v133 = vsel %vm77, %v29, 0
  %v136 = vsel %vm77, %v30, 0
  %v139 = vsel %vm77, %v31, 0
  %v142 = vsel %vm77, %v32, 0
  %v145 = vsel %vm77, %v33, 0
  %v148 = vsel %vm77, %v34, 0
  %v151 = vsel %vm77, %v35, 0
  %v154 = vsel %vm77, %v36, 0
  %v157 = vsel %vm77, %v37, 0
  %v160 = vsel %vm77, %v38, 0
  %v163 = vsel %vm77, %v39, 0
  %v166 = vsel %vm77, %v40, 0
  %v169 = vsel %vm77, %v41, 0
  %v172 = vsel %vm77, %v42, 0
  %v175 = vsel %vm77, %v43, 0
  %v178 = vsel %vm77, %v44, 0
  %v181 = vsel %vm77, %v45, 0
  %v184 = vsel %vm77, %v46, 0
  %v187 = vsel %vm77, %v47, 0
  %v190 = vsel %vm77, %v48, 0
  %v193 = vsel %vm77, %v49, 0
  %v196 = vsel %vm77, %v50, 0
  %v199 = vsel %vm77, %v51, 0
  %v202 = vsel %vm77, %v52, 0
  %v205 = vsel %vm77, %v53, 0
  %v208 = vsel %vm77, %v54, 0
  %v211 = vsel %vm77, %v55, 0
  %v214 = vsel %vm77, %v56, 0
  %v217 = vsel %vm77, %v57, 0
  %v220 = vsel %vm77, %v58, 0
  %v223 = vsel %vm77, %v59, 0
  %v226 = vsel %vm77, %v60, 0
  %v229 = vsel %vm77, %v61, 0
  %v232 = vsel %vm77, %v62, 0
  %v235 = vsel %vm77, %v63, 0
  %v238 = vsel %vm77, %v64, 0
  %v241 = vsel %vm77, %v65, 0
  %v244 = vsel %vm77, %v66, 0
  %v247 = vsel %vm77, %v67, 0
  %v250 = vsel %vm77, %v68, 0
  %v253 = vsel %vm77, %v69, 0
  %v256 = vsel %vm77, %v70, 0
  %v259 = vsel %vm77, %v71, 0
  %v262 = vsel %vm77, %v72, 0
  %v265 = vsel %vm77, %v73, 0
  %v268 = vsel %vm77, %v74, 0
  %vm270 = vcmask 1041408
  %v272 = vsel %vm270, %v76, 0
  %274 = vmatprep.subr.mxu0 0.0
  %275 = vmatpush1.msra.mxu0 %v75
  %276 = vmatprep.subr.mxu0 0.0
  %277 = vmatpush1.msra.mxu0 %v272
  %278 = vmatprep.subr.mxu0 0.0
  %279 = vmatpush1.msra.mxu0 0.0
  %280 = vmatprep.subr.mxu0 0.0
  %281 = vmatpush1.msra.mxu0 0.0
  %282 = vmatprep.subr.mxu0 0.0
  %283 = vmatpush1.msra.mxu0 0.0
  %284 = vmatprep.subr.mxu0 0.0
  %285 = vmatpush1.msra.mxu0 0.0
  %286 = vmatprep.subr.mxu0 0.0
  %287 = vmatpush1.msra.mxu0 0.0
  %288 = vmatprep.subr.mxu0 0.0
  %289 = vmatpush1.msra.mxu0 0.0
  %290 = vmatprep.subr.mxu0 0.0
  %291 = vmatpush1.msra.mxu0 0.0
  %292 = vmatprep.subr.mxu0 0.0
  %293 = vmatpush1.msra.mxu0 0.0
  %294 = vmatprep.subr.mxu0 0.0
  %295 = vmatpush1.msra.mxu0 0.0
  %296 = vmatprep.subr.mxu0 0.0
  %297 = vmatpush1.msra.mxu0 0.0
  %298 = vmatprep.subr.mxu0 0.0
  %299 = vmatpush1.msra.mxu0 0.0
  %300 = vmatprep.subr.mxu0 0.0
  %301 = vmatpush1.msra.mxu0 0.0
  %302 = vmatprep.subr.mxu0 0.0
  %303 = vmatpush1.msra.mxu0 0.0
  %304 = vmatprep.subr.mxu0 0.0
  %305 = vmatpush1.msra.mxu0 0.0
  %306 = vmatprep.subr.mxu0 0.0
  %307 = vmatpush1.msra.mxu0 0.0
  %308 = vmatprep.subr.mxu0 0.0
  %309 = vmatpush1.msra.mxu0 0.0
  %310 = vmatprep.subr.mxu0 0.0
  %311 = vmatpush1.msra.mxu0 0.0
  %312 = vmatprep.subr.mxu0 0.0
  %313 = vmatpush1.msra.mxu0 0.0
  %314 = vmatprep.subr.mxu0 0.0
  %315 = vmatpush1.msra.mxu0 0.0
  %316 = vmatprep.subr.mxu0 0.0
  %317 = vmatpush1.msra.mxu0 0.0
  %318 = vmatprep.subr.mxu0 0.0
  %319 = vmatpush1.msra.mxu0 0.0
  %320 = vmatprep.subr.mxu0 0.0
  %321 = vmatpush1.msra.mxu0 0.0
  %322 = vmatprep.subr.mxu0 0.0
  %323 = vmatpush1.msra.mxu0 0.0
  %324 = vmatprep.subr.mxu0 0.0
  %325 = vmatpush1.msra.mxu0 0.0
  %326 = vmatprep.subr.mxu0 0.0
  %327 = vmatpush1.msra.mxu0 0.0
  %328 = vmatprep.subr.mxu0 0.0
  %329 = vmatpush1.msra.mxu0 0.0
  %330 = vmatprep.subr.mxu0 0.0
  %331 = vmatpush1.msra.mxu0 0.0
  %332 = vmatprep.subr.mxu0 0.0
  %333 = vmatpush1.msra.mxu0 0.0
  %334 = vmatprep.subr.mxu0 0.0
  %335 = vmatpush1.msra.mxu0 0.0
  %336 = vmatprep.subr.mxu0 0.0
  %337 = vmatpush1.msra.mxu0 0.0
  %338 = vmatprep.mubr.f32.mxu0 0.0
  %339 = vmatmul.mubr.f32.gmra.mrb[0].mxu0 %v79
  %v340 = vpop.f32.mrb[0].mxu0
  %v341 = vadd.f32 0.0, %v340
  %v342 = vpop.f32.mrb[0].mxu0
  %343 = vmatprep.mubr.f32.mxu0 0.0
  %344 = vmatmul.mubr.f32.gmra.mrb[0].mxu0 %v82
  %v345 = vpop.f32.mrb[0].mxu0
  %v346 = vadd.f32 0.0, %v345
  %v347 = vpop.f32.mrb[0].mxu0
  %348 = vmatprep.mubr.f32.mxu0 0.0
  %349 = vmatmul.mubr.f32.gmra.mrb[0].mxu0 %v85
  %v350 = vpop.f32.mrb[0].mxu0
  %v351 = vadd.f32 0.0, %v350
  %v352 = vpop.f32.mrb[0].mxu0
  %353 = vmatprep.mubr.f32.mxu0 0.0
  %354 = vmatmul.mubr.f32.gmra.mrb[0].mxu0 %v88
  %v355 = vpop.f32.mrb[0].mxu0
  %v356 = vadd.f32 0.0, %v355
  %v357 = vpop.f32.mrb[0].mxu0
  %358 = vmatprep.mubr.f32.mxu0 0.0
  %359 = vmatmul.mubr.f32.gmra.mrb[0].mxu0 %v91
  %v360 = vpop.f32.mrb[0].mxu0
  %v361 = vadd.f32 0.0, %v360
  %v362 = vpop.f32.mrb[0].mxu0
  %363 = vmatprep.mubr.f32.mxu0 0.0
  %364 = vmatmul.mubr.f32.gmra.mrb[0].mxu0 %v94
  %v365 = vpop.f32.mrb[0].mxu0
  %v366 = vadd.f32 0.0, %v365
  %v367 = vpop.f32.mrb[0].mxu0
  %368 = vmatprep.mubr.f32.mxu0 0.0
  %369 = vmatmul.mubr.f32.gmra.mrb[0].mxu0 %v97
  %v370 = vpop.f32.mrb[0].mxu0
  %v371 = vadd.f32 0.0, %v370
  %v372 = vpop.f32.mrb[0].mxu0
  %373 = vmatprep.mubr.f32.mxu0 0.0
  %374 = vmatmul.mubr.f32.gmra.mrb[0].mxu0 %v100
  %v375 = vpop.f32.mrb[0].mxu0
  %v376 = vadd.f32 0.0, %v375
  %v377 = vpop.f32.mrb[0].mxu0
  %378 = vmatprep.mubr.f32.mxu0 0.0
  %379 = vmatmul.mubr.f32.gmra.mrb[0].mxu0 %v103
  %v380 = vpop.f32.mrb[0].mxu0
  %v381 = vadd.f32 0.0, %v380
  %v382 = vpop.f32.mrb[0].mxu0
  %383 = vmatprep.mubr.f32.mxu0 0.0
  %384 = vmatmul.mubr.f32.gmra.mrb[0].mxu0 %v106
  %v385 = vpop.f32.mrb[0].mxu0
  %v386 = vadd.f32 0.0, %v385
  %v387 = vpop.f32.mrb[0].mxu0
  %388 = vmatprep.mubr.f32.mxu0 0.0
  %389 = vmatmul.mubr.f32.gmra.mrb[0].mxu0 %v109
  %v390 = vpop.f32.mrb[0].mxu0
  %v391 = vadd.f32 0.0, %v390
  %v392 = vpop.f32.mrb[0].mxu0
  %393 = vmatprep.mubr.f32.mxu0 0.0
  %394 = vmatmul.mubr.f32.gmra.mrb[0].mxu0 %v112
  %v395 = vpop.f32.mrb[0].mxu0
  %v396 = vadd.f32 0.0, %v395
  %v397 = vpop.f32.mrb[0].mxu0
  %398 = vmatprep.mubr.f32.mxu0 0.0
  %399 = vmatmul.mubr.f32.gmra.mrb[0].mxu0 %v115
  %v400 = vpop.f32.mrb[0].mxu0
  %v401 = vadd.f32 0.0, %v400
  %v402 = vpop.f32.mrb[0].mxu0
  %403 = vmatprep.mubr.f32.mxu0 0.0
  %404 = vmatmul.mubr.f32.gmra.mrb[0].mxu0 %v118
  %v405 = vpop.f32.mrb[0].mxu0
  %v406 = vadd.f32 0.0, %v405
  %v407 = vpop.f32.mrb[0].mxu0
  %408 = vmatprep.mubr.f32.mxu0 0.0
  %409 = vmatmul.mubr.f32.gmra.mrb[0].mxu0 %v121
  %v410 = vpop.f32.mrb[0].mxu0
  %v411 = vadd.f32 0.0, %v410
  %v412 = vpop.f32.mrb[0].mxu0
  %413 = vmatprep.mubr.f32.mxu0 0.0
  %414 = vmatmul.mubr.f32.gmra.mrb[0].mxu0 %v124
  %v415 = vpop.f32.mrb[0].mxu0
  %v416 = vadd.f32 0.0, %v415
  %v417 = vpop.f32.mrb[0].mxu0
  %418 = vmatprep.mubr.f32.mxu0 0.0
  %419 = vmatmul.mubr.f32.gmra.mrb[0].mxu0 %v127
  %v420 = vpop.f32.mrb[0].mxu0
  %v421 = vadd.f32 0.0, %v420
  %v422 = vpop.f32.mrb[0].mxu0
  %423 = vmatprep.mubr.f32.mxu0 0.0
  %424 = vmatmul.mubr.f32.gmra.mrb[0].mxu0 %v130
  %v425 = vpop.f32.mrb[0].mxu0
  %v426 = vadd.f32 0.0, %v425
  %v427 = vpop.f32.mrb[0].mxu0
  %428 = vmatprep.mubr.f32.mxu0 0.0
  %429 = vmatmul.mubr.f32.gmra.mrb[0].mxu0 %v133
  %v430 = vpop.f32.mrb[0].mxu0
  %v431 = vadd.f32 0.0, %v430
  %v432 = vpop.f32.mrb[0].mxu0
  %433 = vmatprep.mubr.f32.mxu0 0.0
  %434 = vmatmul.mubr.f32.gmra.mrb[0].mxu0 %v136
  %v435 = vpop.f32.mrb[0].mxu0
  %v436 = vadd.f32 0.0, %v435
  %v437 = vpop.f32.mrb[0].mxu0
  %438 = vmatprep.mubr.f32.mxu0 0.0
  %439 = vmatmul.mubr.f32.gmra.mrb[0].mxu0 %v139
  %v440 = vpop.f32.mrb[0].mxu0
  %v441 = vadd.f32 0.0, %v440
  %v442 = vpop.f32.mrb[0].mxu0
  %443 = vmatprep.mubr.f32.mxu0 0.0
  %444 = vmatmul.mubr.f32.gmra.mrb[0].mxu0 %v142
  %v445 = vpop.f32.mrb[0].mxu0
  %v446 = vadd.f32 0.0, %v445
  %v447 = vpop.f32.mrb[0].mxu0
  %448 = vmatprep.mubr.f32.mxu0 0.0
  %449 = vmatmul.mubr.f32.gmra.mrb[0].mxu0 %v145
  %v450 = vpop.f32.mrb[0].mxu0
  %v451 = vadd.f32 0.0, %v450
  %v452 = vpop.f32.mrb[0].mxu0
  %453 = vmatprep.mubr.f32.mxu0 0.0
  %454 = vmatmul.mubr.f32.gmra.mrb[0].mxu0 %v148
  %v455 = vpop.f32.mrb[0].mxu0
  %v456 = vadd.f32 0.0, %v455
  %v457 = vpop.f32.mrb[0].mxu0
  %458 = vmatprep.mubr.f32.mxu0 0.0
  %459 = vmatmul.mubr.f32.gmra.mrb[0].mxu0 %v151
  %v460 = vpop.f32.mrb[0].mxu0
  %v461 = vadd.f32 0.0, %v460
  %v462 = vpop.f32.mrb[0].mxu0
  %463 = vmatprep.mubr.f32.mxu0 0.0
  %464 = vmatmul.mubr.f32.gmra.mrb[0].mxu0 %v154
  %v465 = vpop.f32.mrb[0].mxu0
  %v466 = vadd.f32 0.0, %v465
  %v467 = vpop.f32.mrb[0].mxu0
  %468 = vmatprep.mubr.f32.mxu0 0.0
  %469 = vmatmul.mubr.f32.gmra.mrb[0].mxu0 %v157
  %v470 = vpop.f32.mrb[0].mxu0
  %v471 = vadd.f32 0.0, %v470
  %v472 = vpop.f32.mrb[0].mxu0
  %473 = vmatprep.mubr.f32.mxu0 0.0
  %474 = vmatmul.mubr.f32.gmra.mrb[0].mxu0 %v160
  %v475 = vpop.f32.mrb[0].mxu0
  %v476 = vadd.f32 0.0, %v475
  %v477 = vpop.f32.mrb[0].mxu0
  %478 = vmatprep.mubr.f32.mxu0 0.0
  %479 = vmatmul.mubr.f32.gmra.mrb[0].mxu0 %v163
  %v480 = vpop.f32.mrb[0].mxu0
  %v481 = vadd.f32 0.0, %v480
  %v482 = vpop.f32.mrb[0].mxu0
  %483 = vmatprep.mubr.f32.mxu0 0.0
  %484 = vmatmul.mubr.f32.gmra.mrb[0].mxu0 %v166
  %v485 = vpop.f32.mrb[0].mxu0
  %v486 = vadd.f32 0.0, %v485
  %v487 = vpop.f32.mrb[0].mxu0
  %488 = vmatprep.mubr.f32.mxu0 0.0
  %489 = vmatmul.mubr.f32.gmra.mrb[0].mxu0 %v169
  %v490 = vpop.f32.mrb[0].mxu0
  %v491 = vadd.f32 0.0, %v490
  %v492 = vpop.f32.mrb[0].mxu0
  %493 = vmatprep.mubr.f32.mxu0 0.0
  %494 = vmatmul.mubr.f32.gmra.mrb[0].mxu0 %v172
  %v495 = vpop.f32.mrb[0].mxu0
  %v496 = vadd.f32 0.0, %v495
  %v497 = vpop.f32.mrb[0].mxu0
  %498 = vmatprep.mubr.f32.mxu0 0.0
  %499 = vmatmul.mubr.f32.gmra.mrb[0].mxu0 %v175
  %v500 = vpop.f32.mrb[0].mxu0
  %v501 = vadd.f32 0.0, %v500
  %v502 = vpop.f32.mrb[0].mxu0
  %503 = vmatprep.mubr.f32.mxu0 0.0
  %504 = vmatmul.mubr.f32.gmra.mrb[0].mxu0 %v178
  %v505 = vpop.f32.mrb[0].mxu0
  %v506 = vadd.f32 0.0, %v505
  %v507 = vpop.f32.mrb[0].mxu0
  %508 = vmatprep.mubr.f32.mxu0 0.0
  %509 = vmatmul.mubr.f32.gmra.mrb[0].mxu0 %v181
  %v510 = vpop.f32.mrb[0].mxu0
  %v511 = vadd.f32 0.0, %v510
  %v512 = vpop.f32.mrb[0].mxu0
  %513 = vmatprep.mubr.f32.mxu0 0.0
  %514 = vmatmul.mubr.f32.gmra.mrb[0].mxu0 %v184
  %v515 = vpop.f32.mrb[0].mxu0
  %v516 = vadd.f32 0.0, %v515
  %v517 = vpop.f32.mrb[0].mxu0
  %518 = vmatprep.mubr.f32.mxu0 0.0
  %519 = vmatmul.mubr.f32.gmra.mrb[0].mxu0 %v187
  %v520 = vpop.f32.mrb[0].mxu0
  %v521 = vadd.f32 0.0, %v520
  %v522 = vpop.f32.mrb[0].mxu0
  %523 = vmatprep.mubr.f32.mxu0 0.0
  %524 = vmatmul.mubr.f32.gmra.mrb[0].mxu0 %v190
  %v525 = vpop.f32.mrb[0].mxu0
  %v526 = vadd.f32 0.0, %v525
  %v527 = vpop.f32.mrb[0].mxu0
  %528 = vmatprep.mubr.f32.mxu0 0.0
  %529 = vmatmul.mubr.f32.gmra.mrb[0].mxu0 %v193
  %v530 = vpop.f32.mrb[0].mxu0
  %v531 = vadd.f32 0.0, %v530
  %v532 = vpop.f32.mrb[0].mxu0
  %533 = vmatprep.mubr.f32.mxu0 0.0
  %534 = vmatmul.mubr.f32.gmra.mrb[0].mxu0 %v196
  %v535 = vpop.f32.mrb[0].mxu0
  %v536 = vadd.f32 0.0, %v535
  %v537 = vpop.f32.mrb[0].mxu0
  %538 = vmatprep.mubr.f32.mxu0 0.0
  %539 = vmatmul.mubr.f32.gmra.mrb[0].mxu0 %v199
  %v540 = vpop.f32.mrb[0].mxu0
  %v541 = vadd.f32 0.0, %v540
  %v542 = vpop.f32.mrb[0].mxu0
  %543 = vmatprep.mubr.f32.mxu0 0.0
  %544 = vmatmul.mubr.f32.gmra.mrb[0].mxu0 %v202
  %v545 = vpop.f32.mrb[0].mxu0
  %v546 = vadd.f32 0.0, %v545
  %v547 = vpop.f32.mrb[0].mxu0
  %548 = vmatprep.mubr.f32.mxu0 0.0
  %549 = vmatmul.mubr.f32.gmra.mrb[0].mxu0 %v205
  %v550 = vpop.f32.mrb[0].mxu0
  %v551 = vadd.f32 0.0, %v550
  %v552 = vpop.f32.mrb[0].mxu0
  %553 = vmatprep.mubr.f32.mxu0 0.0
  %554 = vmatmul.mubr.f32.gmra.mrb[0].mxu0 %v208
  %v555 = vpop.f32.mrb[0].mxu0
  %v556 = vadd.f32 0.0, %v555
  %v557 = vpop.f32.mrb[0].mxu0
  %558 = vmatprep.mubr.f32.mxu0 0.0
  %559 = vmatmul.mubr.f32.gmra.mrb[0].mxu0 %v211
  %v560 = vpop.f32.mrb[0].mxu0
  %v561 = vadd.f32 0.0, %v560
  %v562 = vpop.f32.mrb[0].mxu0
  %563 = vmatprep.mubr.f32.mxu0 0.0
  %564 = vmatmul.mubr.f32.gmra.mrb[0].mxu0 %v214
  %v565 = vpop.f32.mrb[0].mxu0
  %v566 = vadd.f32 0.0, %v565
  %v567 = vpop.f32.mrb[0].mxu0
  %568 = vmatprep.mubr.f32.mxu0 0.0
  %569 = vmatmul.mubr.f32.gmra.mrb[0].mxu0 %v217
  %v570 = vpop.f32.mrb[0].mxu0
  %v571 = vadd.f32 0.0, %v570
  %v572 = vpop.f32.mrb[0].mxu0
  %573 = vmatprep.mubr.f32.mxu0 0.0
  %574 = vmatmul.mubr.f32.gmra.mrb[0].mxu0 %v220
  %v575 = vpop.f32.mrb[0].mxu0
  %v576 = vadd.f32 0.0, %v575
  %v577 = vpop.f32.mrb[0].mxu0
  %578 = vmatprep.mubr.f32.mxu0 0.0
  %579 = vmatmul.mubr.f32.gmra.mrb[0].mxu0 %v223
  %v580 = vpop.f32.mrb[0].mxu0
  %v581 = vadd.f32 0.0, %v580
  %v582 = vpop.f32.mrb[0].mxu0
  %583 = vmatprep.mubr.f32.mxu0 0.0
  %584 = vmatmul.mubr.f32.gmra.mrb[0].mxu0 %v226
  %v585 = vpop.f32.mrb[0].mxu0
  %v586 = vadd.f32 0.0, %v585
  %v587 = vpop.f32.mrb[0].mxu0
  %588 = vmatprep.mubr.f32.mxu0 0.0
  %589 = vmatmul.mubr.f32.gmra.mrb[0].mxu0 %v229
  %v590 = vpop.f32.mrb[0].mxu0
  %v591 = vadd.f32 0.0, %v590
  %v592 = vpop.f32.mrb[0].mxu0
  %593 = vmatprep.mubr.f32.mxu0 0.0
  %594 = vmatmul.mubr.f32.gmra.mrb[0].mxu0 %v232
  %v595 = vpop.f32.mrb[0].mxu0
  %v596 = vadd.f32 0.0, %v595
  %v597 = vpop.f32.mrb[0].mxu0
  %598 = vmatprep.mubr.f32.mxu0 0.0
  %599 = vmatmul.mubr.f32.gmra.mrb[0].mxu0 %v235
  %v600 = vpop.f32.mrb[0].mxu0
  %v601 = vadd.f32 0.0, %v600
  %v602 = vpop.f32.mrb[0].mxu0
  %603 = vmatprep.mubr.f32.mxu0 0.0
  %604 = vmatmul.mubr.f32.gmra.mrb[0].mxu0 %v238
  %v605 = vpop.f32.mrb[0].mxu0
  %v606 = vadd.f32 0.0, %v605
  %v607 = vpop.f32.mrb[0].mxu0
  %608 = vmatprep.mubr.f32.mxu0 0.0
  %609 = vmatmul.mubr.f32.gmra.mrb[0].mxu0 %v241
  %v610 = vpop.f32.mrb[0].mxu0
  %v611 = vadd.f32 0.0, %v610
  %v612 = vpop.f32.mrb[0].mxu0
  %613 = vmatprep.mubr.f32.mxu0 0.0
  %614 = vmatmul.mubr.f32.gmra.mrb[0].mxu0 %v244
  %v615 = vpop.f32.mrb[0].mxu0
  %v616 = vadd.f32 0.0, %v615
  %v617 = vpop.f32.mrb[0].mxu0
  %618 = vmatprep.mubr.f32.mxu0 0.0
  %619 = vmatmul.mubr.f32.gmra.mrb[0].mxu0 %v247
  %v620 = vpop.f32.mrb[0].mxu0
  %v621 = vadd.f32 0.0, %v620
  %v622 = vpop.f32.mrb[0].mxu0
  %623 = vmatprep.mubr.f32.mxu0 0.0
  %624 = vmatmul.mubr.f32.gmra.mrb[0].mxu0 %v250
  %v625 = vpop.f32.mrb[0].mxu0
  %v626 = vadd.f32 0.0, %v625
  %v627 = vpop.f32.mrb[0].mxu0
  %628 = vmatprep.mubr.f32.mxu0 0.0
  %629 = vmatmul.mubr.f32.gmra.mrb[0].mxu0 %v253
  %v630 = vpop.f32.mrb[0].mxu0
  %v631 = vadd.f32 0.0, %v630
  %v632 = vpop.f32.mrb[0].mxu0
  %633 = vmatprep.mubr.f32.mxu0 0.0
  %634 = vmatmul.mubr.f32.gmra.mrb[0].mxu0 %v256
  %v635 = vpop.f32.mrb[0].mxu0
  %v636 = vadd.f32 0.0, %v635
  %v637 = vpop.f32.mrb[0].mxu0
  %638 = vmatprep.mubr.f32.mxu0 0.0
  %639 = vmatmul.mubr.f32.gmra.mrb[0].mxu0 %v259
  %v640 = vpop.f32.mrb[0].mxu0
  %v641 = vadd.f32 0.0, %v640
  %v642 = vpop.f32.mrb[0].mxu0
  %643 = vmatprep.mubr.f32.mxu0 0.0
  %644 = vmatmul.mubr.f32.gmra.mrb[0].mxu0 %v262
  %v645 = vpop.f32.mrb[0].mxu0
  %v646 = vadd.f32 0.0, %v645
  %v647 = vpop.f32.mrb[0].mxu0
  %648 = vmatprep.mubr.f32.mxu0 0.0
  %649 = vmatmul.mubr.f32.gmra.mrb[0].mxu0 %v265
  %v650 = vpop.f32.mrb[0].mxu0
  %v651 = vadd.f32 0.0, %v650
  %v652 = vpop.f32.mrb[0].mxu0
  %653 = vmatprep.mubr.f32.mxu0 0.0
  %654 = vmatmul.mubr.f32.gmra.mrb[0].mxu0 %v268
  %v655 = vpop.f32.mrb[0].mxu0
  %v656 = vadd.f32 0.0, %v655
  %v657 = vpop.f32.mrb[0].mxu0
  %658 = vdwg.mxu0
  %vm659 = vcmask 31744
  %660 = vst.msk [vmem:[%s2] sm:$0xff] %vm659, %v341
  %661 = vst.msk [vmem:[%s2 + $0x8] sm:$0xff] %vm659, %v346
  %662 = vst.msk [vmem:[%s2 + $0x10] sm:$0xff] %vm659, %v351
  %663 = vst.msk [vmem:[%s2 + $0x18] sm:$0xff] %vm659, %v356
  %664 = vst.msk [vmem:[%s2 + $0x20] sm:$0xff] %vm659, %v361
  %665 = vst.msk [vmem:[%s2 + $0x28] sm:$0xff] %vm659, %v366
  %666 = vst.msk [vmem:[%s2 + $0x30] sm:$0xff] %vm659, %v371
  %667 = vst.msk [vmem:[%s2 + $0x38] sm:$0xff] %vm659, %v376
  %668 = vst.msk [vmem:[%s2 + $0x40] sm:$0xff] %vm659, %v381
  %669 = vst.msk [vmem:[%s2 + $0x48] sm:$0xff] %vm659, %v386
  %670 = vst.msk [vmem:[%s2 + $0x50] sm:$0xff] %vm659, %v391
  %671 = vst.msk [vmem:[%s2 + $0x58] sm:$0xff] %vm659, %v396
  %672 = vst.msk [vmem:[%s2 + $0x60] sm:$0xff] %vm659, %v401
  %673 = vst.msk [vmem:[%s2 + $0x68] sm:$0xff] %vm659, %v406
  %674 = vst.msk [vmem:[%s2 + $0x70] sm:$0xff] %vm659, %v411
  %675 = vst.msk [vmem:[%s2 + $0x78] sm:$0xff] %vm659, %v416
  %676 = vst.msk [vmem:[%s2 + $0x80] sm:$0xff] %vm659, %v421
  %677 = vst.msk [vmem:[%s2 + $0x88] sm:$0xff] %vm659, %v426
  %678 = vst.msk [vmem:[%s2 + $0x90] sm:$0xff] %vm659, %v431
  %679 = vst.msk [vmem:[%s2 + $0x98] sm:$0xff] %vm659, %v436
  %680 = vst.msk [vmem:[%s2 + $0xa0] sm:$0xff] %vm659, %v441
  %681 = vst.msk [vmem:[%s2 + $0xa8] sm:$0xff] %vm659, %v446
  %682 = vst.msk [vmem:[%s2 + $0xb0] sm:$0xff] %vm659, %v451
  %683 = vst.msk [vmem:[%s2 + $0xb8] sm:$0xff] %vm659, %v456
  %684 = vst.msk [vmem:[%s2 + $0xc0] sm:$0xff] %vm659, %v461
  %685 = vst.msk [vmem:[%s2 + $0xc8] sm:$0xff] %vm659, %v466
  %686 = vst.msk [vmem:[%s2 + $0xd0] sm:$0xff] %vm659, %v471
  %687 = vst.msk [vmem:[%s2 + $0xd8] sm:$0xff] %vm659, %v476
  %688 = vst.msk [vmem:[%s2 + $0xe0] sm:$0xff] %vm659, %v481
  %689 = vst.msk [vmem:[%s2 + $0xe8] sm:$0xff] %vm659, %v486
  %690 = vst.msk [vmem:[%s2 + $0xf0] sm:$0xff] %vm659, %v491
  %691 = vst.msk [vmem:[%s2 + $0xf8] sm:$0xff] %vm659, %v496
  %692 = vst.msk [vmem:[%s2 + $0x100] sm:$0xff] %vm659, %v501
  %693 = vst.msk [vmem:[%s2 + $0x108] sm:$0xff] %vm659, %v506
  %694 = vst.msk [vmem:[%s2 + $0x110] sm:$0xff] %vm659, %v511
  %695 = vst.msk [vmem:[%s2 + $0x118] sm:$0xff] %vm659, %v516
  %696 = vst.msk [vmem:[%s2 + $0x120] sm:$0xff] %vm659, %v521
  %697 = vst.msk [vmem:[%s2 + $0x128] sm:$0xff] %vm659, %v526
  %698 = vst.msk [vmem:[%s2 + $0x130] sm:$0xff] %vm659, %v531
  %699 = vst.msk [vmem:[%s2 + $0x138] sm:$0xff] %vm659, %v536
  %700 = vst.msk [vmem:[%s2 + $0x140] sm:$0xff] %vm659, %v541
  %701 = vst.msk [vmem:[%s2 + $0x148] sm:$0xff] %vm659, %v546
  %702 = vst.msk [vmem:[%s2 + $0x150] sm:$0xff] %vm659, %v551
  %703 = vst.msk [vmem:[%s2 + $0x158] sm:$0xff] %vm659, %v556
  %704 = vst.msk [vmem:[%s2 + $0x160] sm:$0xff] %vm659, %v561
  %705 = vst.msk [vmem:[%s2 + $0x168] sm:$0xff] %vm659, %v566
  %706 = vst.msk [vmem:[%s2 + $0x170] sm:$0xff] %vm659, %v571
  %707 = vst.msk [vmem:[%s2 + $0x178] sm:$0xff] %vm659, %v576
  %708 = vst.msk [vmem:[%s2 + $0x180] sm:$0xff] %vm659, %v581
  %709 = vst.msk [vmem:[%s2 + $0x188] sm:$0xff] %vm659, %v586
  %710 = vst.msk [vmem:[%s2 + $0x190] sm:$0xff] %vm659, %v591
  %711 = vst.msk [vmem:[%s2 + $0x198] sm:$0xff] %vm659, %v596
  %712 = vst.msk [vmem:[%s2 + $0x1a0] sm:$0xff] %vm659, %v601
  %713 = vst.msk [vmem:[%s2 + $0x1a8] sm:$0xff] %vm659, %v606
  %714 = vst.msk [vmem:[%s2 + $0x1b0] sm:$0xff] %vm659, %v611
  %715 = vst.msk [vmem:[%s2 + $0x1b8] sm:$0xff] %vm659, %v616
  %716 = vst.msk [vmem:[%s2 + $0x1c0] sm:$0xff] %vm659, %v621
  %717 = vst.msk [vmem:[%s2 + $0x1c8] sm:$0xff] %vm659, %v626
  %718 = vst.msk [vmem:[%s2 + $0x1d0] sm:$0xff] %vm659, %v631
  %719 = vst.msk [vmem:[%s2 + $0x1d8] sm:$0xff] %vm659, %v636
  %720 = vst.msk [vmem:[%s2 + $0x1e0] sm:$0xff] %vm659, %v641
  %721 = vst.msk [vmem:[%s2 + $0x1e8] sm:$0xff] %vm659, %v646
  %722 = vst.msk [vmem:[%s2 + $0x1f0] sm:$0xff] %vm659, %v651
  %723 = vst.msk [vmem:[%s2 + $0x1f8] sm:$0xff] %vm659, %v656
  // Predicated region
  $region10: #{hv_lca_with_mamba.9} parent=0 // pred_check
    _
  $region11: #{hv_lca_with_mamba.9} parent=0 // pred_check_branch
    %725 = sbr.rel (0) target = $region13
  $region12: #{hv_lca_with_mamba.9} parent=0 // pred_region
    _
  $region13: #{hv_lca_with_mamba.9} parent=0 // pred_fallthru
    _
  // Predicated region
  $region14: #{hv_lca_with_mamba.9} parent=0 // pred_check
    _
  $region15: #{hv_lca_with_mamba.9} parent=0 // pred_check_branch
    %727 = sbr.rel (0) target = $region17
  $region16: #{hv_lca_with_mamba.9} parent=0 // pred_region
    _
  $region17: #{hv_lca_with_mamba.9} parent=0 // pred_fallthru
    _

// kernel: hv_lca_with_mamba.8
$region0: #{hv_lca_with_mamba.8}
  #allocation0 [shape = 'u32[]', space=smem, size = 0x4, offset = 0x4, fixed_abs, tag = 'smem constant byte address 0x4 - core index']
  #allocation1 [shape = 'u32[144,128]{1,0:T(1,128)}', space=vmem, size = 0x12000, scoped, tag = 'internal scratch']
  #allocation2 [shape = 'f32[18,18,20]{2,1,0:T(8,128)}', space=vmem, size = 0x36000, scoped, tag = 'scratch operand']
  #allocation3 [shape = 'f32[18,18,10]{2,1,0:T(8,128)}', space=vmem, size = 0x36000, scoped, tag = 'scratch operand']
  #allocation4 [shape = 'f32[18,18,10]{2,1,0:T(8,128)}', space=vmem, size = 0x36000, scoped, tag = 'scratch operand']
  %s0 = inlined_call_operand.vmem [shape: f32[2,16,16,20], index: 0, kind: input, shape index: {}]
  %s1 = inlined_call_operand.vmem [shape: f32[3,3,20], index: 1, kind: input, shape index: {}]
  %s2 = inlined_call_operand.vmem [shape: f32[3,3,10], index: 2, kind: input, shape index: {}]
  %s3 = inlined_call_operand.vmem [shape: f32[3,3,10], index: 3, kind: input, shape index: {}]
  %s4 = inlined_call_operand.vmem [shape: f32[2,16,16,10], index: 4, kind: output, shape index: {}]
  %s5 = sld [smem:[#allocation0]]
  $region49: #{hv_lca_with_mamba.8} parent=0
    _
  %s7 = ssub.s32 1, %s5
  %s8 = scalar_select 0, %s7, %s5
  loop: start=0, step=1, limit=4
  $region2: #{hv_lca_with_mamba.8} parent=0 // loop_pre_header
    _
  $region3: #{hv_lca_with_mamba.8} parent=0 // loop_header
    %s10 = sphi 0, %s14
    %p11 = scmp.ge.s32.totalorder %s10, 4
    %s20 = sphi 0, %s22
    %s23 = sphi 0, %s20
    %s24 = sphi 0, %s23
    %s40 = sphi 0, %s24
    %s44 = sphi 0, %s44
    %s46 = sphi 0, %s44
    %s47 = sphi 0, %s46
    %s61 = sphi 0, %s47
    %s65 = sphi 0, %s65
    %s67 = sphi 0, %s65
    %s68 = sphi 0, %s67
    %s82 = sphi 0, %s68
    %s86 = sphi 0, %s86
    %s88 = sphi 0, %s86
    %s89 = sphi 0, %s88
    %s103 = sphi 0, %s89
    %s109 = sphi 0, %s111
    %s112 = sphi 0, %s109
    %s113 = sphi 0, %s112
    %s129 = sphi 0, %s113
  $region4: #{hv_lca_with_mamba.8} parent=0 // loop_header_branch
    %13 = sbr.rel (%p11) target = $region8
  $region5: #{hv_lca_with_mamba.8} parent=0 // loop_body
    %s15 = ssub.s32 %s10, 1
    %s16 = ssub.s32 %s10, 2
    %s17 = sadd.s32 %s10, 1
    %s18 = ssub.s32 %s10, %s17
    %p19 = scmp.eq.s32.totalorder %s18, 0
    %s21 = sadd.s32 %s20, 1
    %s22 = scalar_select %p19, %s20, %s21
    %p25 = pneg %p19
    %p26 = scmp.eq.s32.totalorder %s10, 1
    %p27 = por %p25, %p26
    %p28 = scmp.ne.s32.totalorder %s20, %s23
    %p29 = scmp.eq.s32.totalorder %s10, 0
    %p30 = por %p28, %p29
    %p31 = scmp.ne.s32.totalorder %s20, %s23
    %p32 = scmp.eq.s32.totalorder %s15, 1
    %p33 = por %p31, %p32
    %p34 = scmp.ne.s32.totalorder %s23, %s24
    %p35 = scmp.eq.s32.totalorder %s15, 0
    %p36 = por %p34, %p35
    %p37 = scmp.ne.s32.totalorder %s23, %s24
    %p38 = scmp.eq.s32.totalorder %s16, 1
    %p39 = por %p37, %p38
    %p41 = scmp.ne.s32.totalorder %s24, %s40
    %p42 = scmp.eq.s32.totalorder %s16, 0
    %p43 = por %p41, %p42
    %s45 = sadd.s32 %s44, 1
    %p48 = scmp.eq.s32.totalorder %s10, 1
    %p49 = scmp.ne.s32.totalorder %s44, %s46
    %p50 = scmp.eq.s32.totalorder %s10, 0
    %p51 = por %p49, %p50
    %p52 = scmp.ne.s32.totalorder %s44, %s46
    %p53 = scmp.eq.s32.totalorder %s15, 1
    %p54 = por %p52, %p53
    %p55 = scmp.ne.s32.totalorder %s46, %s47
    %p56 = scmp.eq.s32.totalorder %s15, 0
    %p57 = por %p55, %p56
    %p58 = scmp.ne.s32.totalorder %s46, %s47
    %p59 = scmp.eq.s32.totalorder %s16, 1
    %p60 = por %p58, %p59
    %p62 = scmp.ne.s32.totalorder %s47, %s61
    %p63 = scmp.eq.s32.totalorder %s16, 0
    %p64 = por %p62, %p63
    %s66 = sadd.s32 %s65, 1
    %p69 = scmp.eq.s32.totalorder %s10, 1
    %p70 = scmp.ne.s32.totalorder %s65, %s67
    %p71 = scmp.eq.s32.totalorder %s10, 0
    %p72 = por %p70, %p71
    %p73 = scmp.ne.s32.totalorder %s65, %s67
    %p74 = scmp.eq.s32.totalorder %s15, 1
    %p75 = por %p73, %p74
    %p76 = scmp.ne.s32.totalorder %s67, %s68
    %p77 = scmp.eq.s32.totalorder %s15, 0
    %p78 = por %p76, %p77
    %p79 = scmp.ne.s32.totalorder %s67, %s68
    %p80 = scmp.eq.s32.totalorder %s16, 1
    %p81 = por %p79, %p80
    %p83 = scmp.ne.s32.totalorder %s68, %s82
    %p84 = scmp.eq.s32.totalorder %s16, 0
    %p85 = por %p83, %p84
    %s87 = sadd.s32 %s86, 1
    %p90 = scmp.eq.s32.totalorder %s10, 1
    %p91 = scmp.ne.s32.totalorder %s86, %s88
    %p92 = scmp.eq.s32.totalorder %s10, 0
    %p93 = por %p91, %p92
    %p94 = scmp.ne.s32.totalorder %s86, %s88
    %p95 = scmp.eq.s32.totalorder %s15, 1
    %p96 = por %p94, %p95
    %p97 = scmp.ne.s32.totalorder %s88, %s89
    %p98 = scmp.eq.s32.totalorder %s15, 0
    %p99 = por %p97, %p98
    %p100 = scmp.ne.s32.totalorder %s88, %s89
    %p101 = scmp.eq.s32.totalorder %s16, 1
    %p102 = por %p100, %p101
    %p104 = scmp.ne.s32.totalorder %s89, %s103
    %p105 = scmp.eq.s32.totalorder %s16, 0
    %p106 = por %p104, %p105
    %s107 = ssub.s32 %s10, %s17
    %p108 = scmp.eq.s32.totalorder %s107, 0
    %s110 = sadd.s32 %s109, 1
    %s111 = scalar_select %p108, %s109, %s110
    %p114 = pneg %p108
    %p115 = scmp.eq.s32.totalorder %s10, 1
    %p116 = por %p114, %p115
    %p117 = scmp.ne.s32.totalorder %s109, %s112
    %p118 = scmp.eq.s32.totalorder %s10, 0
    %p119 = por %p117, %p118
    %p120 = scmp.ne.s32.totalorder %s109, %s112
    %p121 = scmp.eq.s32.totalorder %s15, 1
    %p122 = por %p120, %p121
    %p123 = scmp.ne.s32.totalorder %s112, %s113
    %p124 = scmp.eq.s32.totalorder %s15, 0
    %p125 = por %p123, %p124
    %p126 = scmp.ne.s32.totalorder %s112, %s113
    %p127 = scmp.eq.s32.totalorder %s16, 1
    %p128 = por %p126, %p127
    %p130 = scmp.ne.s32.totalorder %s113, %s129
    %p131 = scmp.eq.s32.totalorder %s16, 0
    %p132 = por %p130, %p131
    %p133 = scmp.le.s32.totalorder 1, %s10
    %p134 = scmp.lt.s32.totalorder %s10, 3
    %p135 = pnand %p133, %p134
    %p136 = pneg %p135
    // Predicated region
    $region9: #{hv_lca_with_mamba.8} parent=5 // pred_check
      _
    $region10: #{hv_lca_with_mamba.8} parent=5 // pred_check_branch
      %138 = sbr.rel (%p135) target = $region12
    $region11: #{hv_lca_with_mamba.8} parent=5 // pred_region
      %s139 = ssub.s32 %s10, 1
      // Predicated region
      $region13: #{hv_lca_with_mamba.8} parent=11 // pred_check
        %p140 = pneg %p57
      $region14: #{hv_lca_with_mamba.8} parent=11 // pred_check_branch
        %142 = sbr.rel (%p140) target = $region16
      $region15: #{hv_lca_with_mamba.8} parent=11 // pred_region
        _
      $region16: #{hv_lca_with_mamba.8} parent=11 // pred_fallthru
        _
      // Predicated region
      $region17: #{hv_lca_with_mamba.8} parent=11 // pred_check
        %p143 = pneg %p78
      $region18: #{hv_lca_with_mamba.8} parent=11 // pred_check_branch
        %145 = sbr.rel (%p143) target = $region20
      $region19: #{hv_lca_with_mamba.8} parent=11 // pred_region
        _
      $region20: #{hv_lca_with_mamba.8} parent=11 // pred_fallthru
        _
      // Predicated region
      $region21: #{hv_lca_with_mamba.8} parent=11 // pred_check
        %p146 = pneg %p99
      $region22: #{hv_lca_with_mamba.8} parent=11 // pred_check_branch
        %148 = sbr.rel (%p146) target = $region24
      $region23: #{hv_lca_with_mamba.8} parent=11 // pred_region
        _
      $region24: #{hv_lca_with_mamba.8} parent=11 // pred_fallthru
        _
    $region12: #{hv_lca_with_mamba.8} parent=5 // pred_fallthru
      _
    %p149 = scmp.lt.s32.totalorder %s10, 2
    // Predicated region
    $region25: #{hv_lca_with_mamba.8} parent=5 // pred_check
      %p150 = pneg %p149
    $region26: #{hv_lca_with_mamba.8} parent=5 // pred_check_branch
      %152 = sbr.rel (%p150) target = $region28
    $region27: #{hv_lca_with_mamba.8} parent=5 // pred_region
      // Predicated region
      $region29: #{hv_lca_with_mamba.8} parent=27 // pred_check
        %p153 = pneg %p30
      $region30: #{hv_lca_with_mamba.8} parent=27 // pred_check_branch
        %155 = sbr.rel (%p153) target = $region32
      $region31: #{hv_lca_with_mamba.8} parent=27 // pred_region
        %p156 = scmp.lt.s32.totalorder %s10, 1
        %s157 = scalar_select %p156, %s10, 1
        %s158 = smul.addr %s157, 32
        %s159 = smul.addr %s158, 8
        %s160 = scalar_lea.vmem %s0, %s159
      $region32: #{hv_lca_with_mamba.8} parent=27 // pred_fallthru
        _
    $region28: #{hv_lca_with_mamba.8} parent=5 // pred_fallthru
      _
    %p161 = scmp.le.s32.totalorder 1, %s10
    %p162 = scmp.lt.s32.totalorder %s10, 3
    %p163 = pnand %p161, %p162
    %p164 = pneg %p163
    // Predicated region
    $region33: #{hv_lca_with_mamba.8} parent=5 // pred_check
      _
    $region34: #{hv_lca_with_mamba.8} parent=5 // pred_check_branch
      %166 = sbr.rel (%p163) target = $region36
    $region35: #{hv_lca_with_mamba.8} parent=5 // pred_region
      %s167 = ssub.s32 %s10, 1
      %p168 = scmp.lt.s32.totalorder %s15, 1
      %s169 = scalar_select %p168, %s15, 1
      %s170 = smul.addr %s169, 32
      %s171 = smul.addr %s170, 8
      %s172 = scalar_lea.vmem %s0, %s171
      %p173 = pneg %p36
      %p174 = pneg %p33
      %p175 = pneg %p57
      %p176 = pneg %p54
      %p177 = pneg %p78
      %p178 = pneg %p75
      %p179 = pneg %p99
      %p180 = pneg %p96
      %p181 = pneg %p125
      %p182 = pneg %p122
      %p183 = scmp.lt.s32.totalorder %s15, 1
      %s184 = scalar_select %p183, %s15, 1
      %s185 = smul.addr %s184, 32
      %s186 = smul.addr %s185, 8
      %s187 = scalar_lea.vmem %s4, %s186
      %p188 = scmp.lt.s32.totalorder %s15, 1
      %s189 = scalar_select %p188, %s15, 1
      %s190 = smul.addr %s189, 32
      %s191 = smul.addr %s190, 8
      %s192 = scalar_lea.vmem %s0, %s191
      %p193 = scmp.lt.s32.totalorder %s15, 1
      %s194 = scalar_select %p193, %s15, 1
      %s195 = smul.addr %s194, 32
      %s196 = smul.addr %s195, 8
      %s197 = scalar_lea.vmem %s4, %s196
      %v198 = vld [vmem:[%s192] sm:$0xff]
      %v199 = vld [vmem:[%s192 + $0x8] sm:$0xff]
      %v200 = vld [vmem:[%s192 + $0x10] sm:$0xff]
      %v201 = vld [vmem:[%s192 + $0x18] sm:$0xff]
      %v202 = vld [vmem:[%s192 + $0x20] sm:$0xff]
      %v203 = vld [vmem:[%s192 + $0x28] sm:$0xff]
      %v204 = vld [vmem:[%s192 + $0x30] sm:$0xff]
      %v205 = vld [vmem:[%s192 + $0x38] sm:$0xff]
      %v206 = vld [vmem:[%s192 + $0x40] sm:$0xff]
      %v207 = vld [vmem:[%s192 + $0x48] sm:$0xff]
      %v208 = vld [vmem:[%s192 + $0x50] sm:$0xff]
      %v209 = vld [vmem:[%s192 + $0x58] sm:$0xff]
      %v210 = vld [vmem:[%s192 + $0x60] sm:$0xff]
      %v211 = vld [vmem:[%s192 + $0x68] sm:$0xff]
      %v212 = vld [vmem:[%s192 + $0x70] sm:$0xff]
      %v213 = vld [vmem:[%s192 + $0x78] sm:$0xff]
      %v214 = vld [vmem:[%s192 + $0x80] sm:$0xff]
      %v215 = vld [vmem:[%s192 + $0x88] sm:$0xff]
      %v216 = vld [vmem:[%s192 + $0x90] sm:$0xff]
      %v217 = vld [vmem:[%s192 + $0x98] sm:$0xff]
      %v218 = vld [vmem:[%s192 + $0xa0] sm:$0xff]
      %v219 = vld [vmem:[%s192 + $0xa8] sm:$0xff]
      %v220 = vld [vmem:[%s192 + $0xb0] sm:$0xff]
      %v221 = vld [vmem:[%s192 + $0xb8] sm:$0xff]
      %v222 = vld [vmem:[%s192 + $0xc0] sm:$0xff]
      %v223 = vld [vmem:[%s192 + $0xc8] sm:$0xff]
      %v224 = vld [vmem:[%s192 + $0xd0] sm:$0xff]
      %v225 = vld [vmem:[%s192 + $0xd8] sm:$0xff]
      %v226 = vld [vmem:[%s192 + $0xe0] sm:$0xff]
      %v227 = vld [vmem:[%s192 + $0xe8] sm:$0xff]
      %v228 = vld [vmem:[%s192 + $0xf0] sm:$0xff]
      %v229 = vld [vmem:[%s192 + $0xf8] sm:$0xff]
      %vm230 = vcmask 162816
      %231 = vst.msk [vmem:[#allocation2] sm:$0xff] %vm230, 0.0
      %232 = vst.msk [vmem:[#allocation2 + $0x8] sm:$0xff] %vm230, 0.0
      %vm233 = vcmask 156672
      %234 = vst.msk [vmem:[#allocation2 + $0x10] sm:$0x3] %vm233, 0.0
      %235 = vst.msk [vmem:[#allocation2 + $0x18] sm:$0xff] %vm230, 0.0
      %236 = vst.msk [vmem:[#allocation2 + $0x20] sm:$0xff] %vm230, 0.0
      %237 = vst.msk [vmem:[#allocation2 + $0x28] sm:$0x3] %vm233, 0.0
      %238 = vst.msk [vmem:[#allocation2 + $0x30] sm:$0xff] %vm230, 0.0
      %239 = vst.msk [vmem:[#allocation2 + $0x38] sm:$0xff] %vm230, 0.0
      %240 = vst.msk [vmem:[#allocation2 + $0x40] sm:$0x3] %vm233, 0.0
      %241 = vst.msk [vmem:[#allocation2 + $0x48] sm:$0xff] %vm230, 0.0
      %242 = vst.msk [vmem:[#allocation2 + $0x50] sm:$0xff] %vm230, 0.0
      %243 = vst.msk [vmem:[#allocation2 + $0x58] sm:$0x3] %vm233, 0.0
      %244 = vst.msk [vmem:[#allocation2 + $0x60] sm:$0xff] %vm230, 0.0
      %245 = vst.msk [vmem:[#allocation2 + $0x68] sm:$0xff] %vm230, 0.0
      %246 = vst.msk [vmem:[#allocation2 + $0x70] sm:$0x3] %vm233, 0.0
      %247 = vst.msk [vmem:[#allocation2 + $0x78] sm:$0xff] %vm230, 0.0
      %248 = vst.msk [vmem:[#allocation2 + $0x80] sm:$0xff] %vm230, 0.0
      %249 = vst.msk [vmem:[#allocation2 + $0x88] sm:$0x3] %vm233, 0.0
      %250 = vst.msk [vmem:[#allocation2 + $0x90] sm:$0xff] %vm230, 0.0
      %251 = vst.msk [vmem:[#allocation2 + $0x98] sm:$0xff] %vm230, 0.0
      %252 = vst.msk [vmem:[#allocation2 + $0xa0] sm:$0x3] %vm233, 0.0
      %253 = vst.msk [vmem:[#allocation2 + $0xa8] sm:$0xff] %vm230, 0.0
      %254 = vst.msk [vmem:[#allocation2 + $0xb0] sm:$0xff] %vm230, 0.0
      %255 = vst.msk [vmem:[#allocation2 + $0xb8] sm:$0x3] %vm233, 0.0
      %256 = vst.msk [vmem:[#allocation2 + $0xc0] sm:$0xff] %vm230, 0.0
      %257 = vst.msk [vmem:[#allocation2 + $0xc8] sm:$0xff] %vm230, 0.0
      %258 = vst.msk [vmem:[#allocation2 + $0xd0] sm:$0x3] %vm233, 0.0
      %259 = vst.msk [vmem:[#allocation2 + $0xd8] sm:$0xff] %vm230, 0.0
      %260 = vst.msk [vmem:[#allocation2 + $0xe0] sm:$0xff] %vm230, 0.0
      %261 = vst.msk [vmem:[#allocation2 + $0xe8] sm:$0x3] %vm233, 0.0
      %262 = vst.msk [vmem:[#allocation2 + $0xf0] sm:$0xff] %vm230, 0.0
      %263 = vst.msk [vmem:[#allocation2 + $0xf8] sm:$0xff] %vm230, 0.0
      %264 = vst.msk [vmem:[#allocation2 + $0x100] sm:$0x3] %vm233, 0.0
      %265 = vst.msk [vmem:[#allocation2 + $0x108] sm:$0xff] %vm230, 0.0
      %266 = vst.msk [vmem:[#allocation2 + $0x110] sm:$0xff] %vm230, 0.0
      %267 = vst.msk [vmem:[#allocation2 + $0x118] sm:$0x3] %vm233, 0.0
      %268 = vst.msk [vmem:[#allocation2 + $0x120] sm:$0xff] %vm230, 0.0
      %269 = vst.msk [vmem:[#allocation2 + $0x128] sm:$0xff] %vm230, 0.0
      %270 = vst.msk [vmem:[#allocation2 + $0x130] sm:$0x3] %vm233, 0.0
      %271 = vst.msk [vmem:[#allocation2 + $0x138] sm:$0xff] %vm230, 0.0
      %272 = vst.msk [vmem:[#allocation2 + $0x140] sm:$0xff] %vm230, 0.0
      %273 = vst.msk [vmem:[#allocation2 + $0x148] sm:$0x3] %vm233, 0.0
      %274 = vst.msk [vmem:[#allocation2 + $0x150] sm:$0xff] %vm230, 0.0
      %275 = vst.msk [vmem:[#allocation2 + $0x158] sm:$0xff] %vm230, 0.0
      %276 = vst.msk [vmem:[#allocation2 + $0x160] sm:$0x3] %vm233, 0.0
      %277 = vst.msk [vmem:[#allocation2 + $0x168] sm:$0xff] %vm230, 0.0
      %278 = vst.msk [vmem:[#allocation2 + $0x170] sm:$0xff] %vm230, 0.0
      %279 = vst.msk [vmem:[#allocation2 + $0x178] sm:$0x3] %vm233, 0.0
      %280 = vst.msk [vmem:[#allocation2 + $0x180] sm:$0xff] %vm230, 0.0
      %281 = vst.msk [vmem:[#allocation2 + $0x188] sm:$0xff] %vm230, 0.0
      %282 = vst.msk [vmem:[#allocation2 + $0x190] sm:$0x3] %vm233, 0.0
      %283 = vst.msk [vmem:[#allocation2 + $0x198] sm:$0xff] %vm230, 0.0
      %284 = vst.msk [vmem:[#allocation2 + $0x1a0] sm:$0xff] %vm230, 0.0
      %285 = vst.msk [vmem:[#allocation2 + $0x1a8] sm:$0x3] %vm233, 0.0
      %s286 = scalar_lea.vmem [#allocation2], 24
      %287 = vst.msk [vmem:[%s286 + $0x1] sm:$0xff] %vm230, %v198
      %288 = vst.msk [vmem:[%s286 + $0x9] sm:$0xff] %vm230, %v199
      %289 = vst.msk [vmem:[%s286 + $0x19] sm:$0xff] %vm230, %v200
      %290 = vst.msk [vmem:[%s286 + $0x21] sm:$0xff] %vm230, %v201
      %291 = vst.msk [vmem:[%s286 + $0x31] sm:$0xff] %vm230, %v202
      %292 = vst.msk [vmem:[%s286 + $0x39] sm:$0xff] %vm230, %v203
      %293 = vst.msk [vmem:[%s286 + $0x49] sm:$0xff] %vm230, %v204
      %294 = vst.msk [vmem:[%s286 + $0x51] sm:$0xff] %vm230, %v205
      %295 = vst.msk [vmem:[%s286 + $0x61] sm:$0xff] %vm230, %v206
      %296 = vst.msk [vmem:[%s286 + $0x69] sm:$0xff] %vm230, %v207
      %297 = vst.msk [vmem:[%s286 + $0x79] sm:$0xff] %vm230, %v208
      %298 = vst.msk [vmem:[%s286 + $0x81] sm:$0xff] %vm230, %v209
      %299 = vst.msk [vmem:[%s286 + $0x91] sm:$0xff] %vm230, %v210
      %300 = vst.msk [vmem:[%s286 + $0x99] sm:$0xff] %vm230, %v211
      %301 = vst.msk [vmem:[%s286 + $0xa9] sm:$0xff] %vm230, %v212
      %302 = vst.msk [vmem:[%s286 + $0xb1] sm:$0xff] %vm230, %v213
      %303 = vst.msk [vmem:[%s286 + $0xc1] sm:$0xff] %vm230, %v214
      %304 = vst.msk [vmem:[%s286 + $0xc9] sm:$0xff] %vm230, %v215
      %305 = vst.msk [vmem:[%s286 + $0xd9] sm:$0xff] %vm230, %v216
      %306 = vst.msk [vmem:[%s286 + $0xe1] sm:$0xff] %vm230, %v217
      %307 = vst.msk [vmem:[%s286 + $0xf1] sm:$0xff] %vm230, %v218
      %308 = vst.msk [vmem:[%s286 + $0xf9] sm:$0xff] %vm230, %v219
      %309 = vst.msk [vmem:[%s286 + $0x109] sm:$0xff] %vm230, %v220
      %310 = vst.msk [vmem:[%s286 + $0x111] sm:$0xff] %vm230, %v221
      %311 = vst.msk [vmem:[%s286 + $0x121] sm:$0xff] %vm230, %v222
      %312 = vst.msk [vmem:[%s286 + $0x129] sm:$0xff] %vm230, %v223
      %313 = vst.msk [vmem:[%s286 + $0x139] sm:$0xff] %vm230, %v224
      %314 = vst.msk [vmem:[%s286 + $0x141] sm:$0xff] %vm230, %v225
      %315 = vst.msk [vmem:[%s286 + $0x151] sm:$0xff] %vm230, %v226
      %316 = vst.msk [vmem:[%s286 + $0x159] sm:$0xff] %vm230, %v227
      %317 = vst.msk [vmem:[%s286 + $0x169] sm:$0xff] %vm230, %v228
      %318 = vst.msk [vmem:[%s286 + $0x171] sm:$0xff] %vm230, %v229
      %v319 = vld [vmem:[#allocation2] sm:$0xff]
      %v320 = vld [vmem:[#allocation2 + $0x8] sm:$0xff]
      %v321 = vld [vmem:[#allocation2 + $0x18] sm:$0xff]
      %v322 = vld [vmem:[#allocation2 + $0x20] sm:$0xff]
      %v323 = vld [vmem:[#allocation2 + $0x30] sm:$0xff]
      %v324 = vld [vmem:[#allocation2 + $0x38] sm:$0xff]
      %v325 = vld [vmem:[#allocation2 + $0x48] sm:$0xff]
      %v326 = vld [vmem:[#allocation2 + $0x50] sm:$0xff]
      %v327 = vld [vmem:[#allocation2 + $0x60] sm:$0xff]
      %v328 = vld [vmem:[#allocation2 + $0x68] sm:$0xff]
      %v329 = vld [vmem:[#allocation2 + $0x78] sm:$0xff]
      %v330 = vld [vmem:[#allocation2 + $0x80] sm:$0xff]
      %v331 = vld [vmem:[#allocation2 + $0x90] sm:$0xff]
      %v332 = vld [vmem:[#allocation2 + $0x98] sm:$0xff]
      %v333 = vld [vmem:[#allocation2 + $0xa8] sm:$0xff]
      %v334 = vld [vmem:[#allocation2 + $0xb0] sm:$0xff]
      %v335 = vld [vmem:[#allocation2 + $0xc0] sm:$0xff]
      %v336 = vld [vmem:[#allocation2 + $0xc8] sm:$0xff]
      %v337 = vld [vmem:[#allocation2 + $0xd8] sm:$0xff]
      %v338 = vld [vmem:[#allocation2 + $0xe0] sm:$0xff]
      %v339 = vld [vmem:[#allocation2 + $0xf0] sm:$0xff]
      %v340 = vld [vmem:[#allocation2 + $0xf8] sm:$0xff]
      %v341 = vld [vmem:[#allocation2 + $0x108] sm:$0xff]
      %v342 = vld [vmem:[#allocation2 + $0x110] sm:$0xff]
      %v343 = vld [vmem:[#allocation2 + $0x120] sm:$0xff]
      %v344 = vld [vmem:[#allocation2 + $0x128] sm:$0xff]
      %v345 = vld [vmem:[#allocation2 + $0x138] sm:$0xff]
      %v346 = vld [vmem:[#allocation2 + $0x140] sm:$0xff]
      %v347 = vld [vmem:[#allocation2 + $0x150] sm:$0xff]
      %v348 = vld [vmem:[#allocation2 + $0x158] sm:$0xff]
      %v349 = vld [vmem:[#allocation2 + $0x168] sm:$0xff]
      %v350 = vld [vmem:[#allocation2 + $0x170] sm:$0xff]
      %v351 = vld [vmem:[%s1] sm:$0x1]
      %v352 = vlaneseq
      %v353 = vshrl.u32 %v352, 7
      %v354 = vsub.s32 0, %v353
      %v355 = vrot.slane %v351, %v354
      %v356 = vmul.f32 %v319, %v355
      %v357 = vmul.f32 %v320, %v355
      %v358 = vmul.f32 %v321, %v355
      %v359 = vmul.f32 %v322, %v355
      %v360 = vmul.f32 %v323, %v355
      %v361 = vmul.f32 %v324, %v355
      %v362 = vmul.f32 %v325, %v355
      %v363 = vmul.f32 %v326, %v355
      %v364 = vmul.f32 %v327, %v355
      %v365 = vmul.f32 %v328, %v355
      %v366 = vmul.f32 %v329, %v355
      %v367 = vmul.f32 %v330, %v355
      %v368 = vmul.f32 %v331, %v355
      %v369 = vmul.f32 %v332, %v355
      %v370 = vmul.f32 %v333, %v355
      %v371 = vmul.f32 %v334, %v355
      %v372 = vmul.f32 %v335, %v355
      %v373 = vmul.f32 %v336, %v355
      %v374 = vmul.f32 %v337, %v355
      %v375 = vmul.f32 %v338, %v355
      %v376 = vmul.f32 %v339, %v355
      %v377 = vmul.f32 %v340, %v355
      %v378 = vmul.f32 %v341, %v355
      %v379 = vmul.f32 %v342, %v355
      %v380 = vmul.f32 %v343, %v355
      %v381 = vmul.f32 %v344, %v355
      %v382 = vmul.f32 %v345, %v355
      %v383 = vmul.f32 %v346, %v355
      %v384 = vmul.f32 %v347, %v355
      %v385 = vmul.f32 %v348, %v355
      %v386 = vmul.f32 %v349, %v355
      %v387 = vmul.f32 %v350, %v355
      %v388 = vadd.f32 %v356, 0.0
      %v389 = vadd.f32 %v357, 0.0
      %v390 = vadd.f32 %v358, 0.0
      %v391 = vadd.f32 %v359, 0.0
      %v392 = vadd.f32 %v360, 0.0
      %v393 = vadd.f32 %v361, 0.0
      %v394 = vadd.f32 %v362, 0.0
      %v395 = vadd.f32 %v363, 0.0
      %v396 = vadd.f32 %v364, 0.0
      %v397 = vadd.f32 %v365, 0.0
      %v398 = vadd.f32 %v366, 0.0
      %v399 = vadd.f32 %v367, 0.0
      %v400 = vadd.f32 %v368, 0.0
      %v401 = vadd.f32 %v369, 0.0
      %v402 = vadd.f32 %v370, 0.0
      %v403 = vadd.f32 %v371, 0.0
      %v404 = vadd.f32 %v372, 0.0
      %v405 = vadd.f32 %v373, 0.0
      %v406 = vadd.f32 %v374, 0.0
      %v407 = vadd.f32 %v375, 0.0
      %v408 = vadd.f32 %v376, 0.0
      %v409 = vadd.f32 %v377, 0.0
      %v410 = vadd.f32 %v378, 0.0
      %v411 = vadd.f32 %v379, 0.0
      %v412 = vadd.f32 %v380, 0.0
      %v413 = vadd.f32 %v381, 0.0
      %v414 = vadd.f32 %v382, 0.0
      %v415 = vadd.f32 %v383, 0.0
      %v416 = vadd.f32 %v384, 0.0
      %v417 = vadd.f32 %v385, 0.0
      %v418 = vadd.f32 %v386, 0.0
      %v419 = vadd.f32 %v387, 0.0
      %v420 = vld [vmem:[#allocation2 + $0x1] sm:$0xff]
      %v421 = vld [vmem:[#allocation2 + $0x9] sm:$0xff]
      %v422 = vld [vmem:[#allocation2 + $0x19] sm:$0xff]
      %v423 = vld [vmem:[#allocation2 + $0x21] sm:$0xff]
      %v424 = vld [vmem:[#allocation2 + $0x31] sm:$0xff]
      %v425 = vld [vmem:[#allocation2 + $0x39] sm:$0xff]
      %v426 = vld [vmem:[#allocation2 + $0x49] sm:$0xff]
      %v427 = vld [vmem:[#allocation2 + $0x51] sm:$0xff]
      %v428 = vld [vmem:[#allocation2 + $0x61] sm:$0xff]
      %v429 = vld [vmem:[#allocation2 + $0x69] sm:$0xff]
      %v430 = vld [vmem:[#allocation2 + $0x79] sm:$0xff]
      %v431 = vld [vmem:[#allocation2 + $0x81] sm:$0xff]
      %v432 = vld [vmem:[#allocation2 + $0x91] sm:$0xff]
      %v433 = vld [vmem:[#allocation2 + $0x99] sm:$0xff]
      %v434 = vld [vmem:[#allocation2 + $0xa9] sm:$0xff]
      %v435 = vld [vmem:[#allocation2 + $0xb1] sm:$0xff]
      %v436 = vld [vmem:[#allocation2 + $0xc1] sm:$0xff]
      %v437 = vld [vmem:[#allocation2 + $0xc9] sm:$0xff]
      %v438 = vld [vmem:[#allocation2 + $0xd9] sm:$0xff]
      %v439 = vld [vmem:[#allocation2 + $0xe1] sm:$0xff]
      %v440 = vld [vmem:[#allocation2 + $0xf1] sm:$0xff]
      %v441 = vld [vmem:[#allocation2 + $0xf9] sm:$0xff]
      %v442 = vld [vmem:[#allocation2 + $0x109] sm:$0xff]
      %v443 = vld [vmem:[#allocation2 + $0x111] sm:$0xff]
      %v444 = vld [vmem:[#allocation2 + $0x121] sm:$0xff]
      %v445 = vld [vmem:[#allocation2 + $0x129] sm:$0xff]
      %v446 = vld [vmem:[#allocation2 + $0x139] sm:$0xff]
      %v447 = vld [vmem:[#allocation2 + $0x141] sm:$0xff]
      %v448 = vld [vmem:[#allocation2 + $0x151] sm:$0xff]
      %v449 = vld [vmem:[#allocation2 + $0x159] sm:$0xff]
      %v450 = vld [vmem:[#allocation2 + $0x169] sm:$0xff]
      %v451 = vld [vmem:[#allocation2 + $0x171] sm:$0xff]
      %v452 = vld [vmem:[%s1 + $0x1] sm:$0x1]
      %v453 = vlaneseq
      %v454 = vshrl.u32 %v453, 7
      %v455 = vsub.s32 0, %v454
      %v456 = vrot.slane %v452, %v455
      %v457 = vmul.f32 %v420, %v456
      %v458 = vmul.f32 %v421, %v456
      %v459 = vmul.f32 %v422, %v456
      %v460 = vmul.f32 %v423, %v456
      %v461 = vmul.f32 %v424, %v456
      %v462 = vmul.f32 %v425, %v456
      %v463 = vmul.f32 %v426, %v456
      %v464 = vmul.f32 %v427, %v456
      %v465 = vmul.f32 %v428, %v456
      %v466 = vmul.f32 %v429, %v456
      %v467 = vmul.f32 %v430, %v456
      %v468 = vmul.f32 %v431, %v456
      %v469 = vmul.f32 %v432, %v456
      %v470 = vmul.f32 %v433, %v456
      %v471 = vmul.f32 %v434, %v456
      %v472 = vmul.f32 %v435, %v456
      %v473 = vmul.f32 %v436, %v456
      %v474 = vmul.f32 %v437, %v456
      %v475 = vmul.f32 %v438, %v456
      %v476 = vmul.f32 %v439, %v456
      %v477 = vmul.f32 %v440, %v456
      %v478 = vmul.f32 %v441, %v456
      %v479 = vmul.f32 %v442, %v456
      %v480 = vmul.f32 %v443, %v456
      %v481 = vmul.f32 %v444, %v456
      %v482 = vmul.f32 %v445, %v456
      %v483 = vmul.f32 %v446, %v456
      %v484 = vmul.f32 %v447, %v456
      %v485 = vmul.f32 %v448, %v456
      %v486 = vmul.f32 %v449, %v456
      %v487 = vmul.f32 %v450, %v456
      %v488 = vmul.f32 %v451, %v456
      %v489 = vadd.f32 %v388, %v457
      %v490 = vadd.f32 %v389, %v458
      %v491 = vadd.f32 %v390, %v459
      %v492 = vadd.f32 %v391, %v460
      %v493 = vadd.f32 %v392, %v461
      %v494 = vadd.f32 %v393, %v462
      %v495 = vadd.f32 %v394, %v463
      %v496 = vadd.f32 %v395, %v464
      %v497 = vadd.f32 %v396, %v465
      %v498 = vadd.f32 %v397, %v466
      %v499 = vadd.f32 %v398, %v467
      %v500 = vadd.f32 %v399, %v468
      %v501 = vadd.f32 %v400, %v469
      %v502 = vadd.f32 %v401, %v470
      %v503 = vadd.f32 %v402, %v471
      %v504 = vadd.f32 %v403, %v472
      %v505 = vadd.f32 %v404, %v473
      %v506 = vadd.f32 %v405, %v474
      %v507 = vadd.f32 %v406, %v475
      %v508 = vadd.f32 %v407, %v476
      %v509 = vadd.f32 %v408, %v477
      %v510 = vadd.f32 %v409, %v478
      %v511 = vadd.f32 %v410, %v479
      %v512 = vadd.f32 %v411, %v480
      %v513 = vadd.f32 %v412, %v481
      %v514 = vadd.f32 %v413, %v482
      %v515 = vadd.f32 %v414, %v483
      %v516 = vadd.f32 %v415, %v484
      %v517 = vadd.f32 %v416, %v485
      %v518 = vadd.f32 %v417, %v486
      %v519 = vadd.f32 %v418, %v487
      %v520 = vadd.f32 %v419, %v488
      %v521 = vld [vmem:[#allocation2 + $0x2] sm:$0xff]
      %v522 = vld [vmem:[#allocation2 + $0xa] sm:$0xff]
      %v523 = vld [vmem:[#allocation2 + $0x1a] sm:$0xff]
      %v524 = vld [vmem:[#allocation2 + $0x22] sm:$0xff]
      %v525 = vld [vmem:[#allocation2 + $0x32] sm:$0xff]
      %v526 = vld [vmem:[#allocation2 + $0x3a] sm:$0xff]
      %v527 = vld [vmem:[#allocation2 + $0x4a] sm:$0xff]
      %v528 = vld [vmem:[#allocation2 + $0x52] sm:$0xff]
      %v529 = vld [vmem:[#allocation2 + $0x62] sm:$0xff]
      %v530 = vld [vmem:[#allocation2 + $0x6a] sm:$0xff]
      %v531 = vld [vmem:[#allocation2 + $0x7a] sm:$0xff]
      %v532 = vld [vmem:[#allocation2 + $0x82] sm:$0xff]
      %v533 = vld [vmem:[#allocation2 + $0x92] sm:$0xff]
      %v534 = vld [vmem:[#allocation2 + $0x9a] sm:$0xff]
      %v535 = vld [vmem:[#allocation2 + $0xaa] sm:$0xff]
      %v536 = vld [vmem:[#allocation2 + $0xb2] sm:$0xff]
      %v537 = vld [vmem:[#allocation2 + $0xc2] sm:$0xff]
      %v538 = vld [vmem:[#allocation2 + $0xca] sm:$0xff]
      %v539 = vld [vmem:[#allocation2 + $0xda] sm:$0xff]
      %v540 = vld [vmem:[#allocation2 + $0xe2] sm:$0xff]
      %v541 = vld [vmem:[#allocation2 + $0xf2] sm:$0xff]
      %v542 = vld [vmem:[#allocation2 + $0xfa] sm:$0xff]
      %v543 = vld [vmem:[#allocation2 + $0x10a] sm:$0xff]
      %v544 = vld [vmem:[#allocation2 + $0x112] sm:$0xff]
      %v545 = vld [vmem:[#allocation2 + $0x122] sm:$0xff]
      %v546 = vld [vmem:[#allocation2 + $0x12a] sm:$0xff]
      %v547 = vld [vmem:[#allocation2 + $0x13a] sm:$0xff]
      %v548 = vld [vmem:[#allocation2 + $0x142] sm:$0xff]
      %v549 = vld [vmem:[#allocation2 + $0x152] sm:$0xff]
      %v550 = vld [vmem:[#allocation2 + $0x15a] sm:$0xff]
      %v551 = vld [vmem:[#allocation2 + $0x16a] sm:$0xff]
      %v552 = vld [vmem:[#allocation2 + $0x172] sm:$0xff]
      %v553 = vld [vmem:[%s1 + $0x2] sm:$0x1]
      %v554 = vlaneseq
      %v555 = vshrl.u32 %v554, 7
      %v556 = vsub.s32 0, %v555
      %v557 = vrot.slane %v553, %v556
      %v558 = vmul.f32 %v521, %v557
      %v559 = vmul.f32 %v522, %v557
      %v560 = vmul.f32 %v523, %v557
      %v561 = vmul.f32 %v524, %v557
      %v562 = vmul.f32 %v525, %v557
      %v563 = vmul.f32 %v526, %v557
      %v564 = vmul.f32 %v527, %v557
      %v565 = vmul.f32 %v528, %v557
      %v566 = vmul.f32 %v529, %v557
      %v567 = vmul.f32 %v530, %v557
      %v568 = vmul.f32 %v531, %v557
      %v569 = vmul.f32 %v532, %v557
      %v570 = vmul.f32 %v533, %v557
      %v571 = vmul.f32 %v534, %v557
      %v572 = vmul.f32 %v535, %v557
      %v573 = vmul.f32 %v536, %v557
      %v574 = vmul.f32 %v537, %v557
      %v575 = vmul.f32 %v538, %v557
      %v576 = vmul.f32 %v539, %v557
      %v577 = vmul.f32 %v540, %v557
      %v578 = vmul.f32 %v541, %v557
      %v579 = vmul.f32 %v542, %v557
      %v580 = vmul.f32 %v543, %v557
      %v581 = vmul.f32 %v544, %v557
      %v582 = vmul.f32 %v545, %v557
      %v583 = vmul.f32 %v546, %v557
      %v584 = vmul.f32 %v547, %v557
      %v585 = vmul.f32 %v548, %v557
      %v586 = vmul.f32 %v549, %v557
      %v587 = vmul.f32 %v550, %v557
      %v588 = vmul.f32 %v551, %v557
      %v589 = vmul.f32 %v552, %v557
      %v590 = vadd.f32 %v489, %v558
      %v591 = vadd.f32 %v490, %v559
      %v592 = vadd.f32 %v491, %v560
      %v593 = vadd.f32 %v492, %v561
      %v594 = vadd.f32 %v493, %v562
      %v595 = vadd.f32 %v494, %v563
      %v596 = vadd.f32 %v495, %v564
      %v597 = vadd.f32 %v496, %v565
      %v598 = vadd.f32 %v497, %v566
      %v599 = vadd.f32 %v498, %v567
      %v600 = vadd.f32 %v499, %v568
      %v601 = vadd.f32 %v500, %v569
      %v602 = vadd.f32 %v501, %v570
      %v603 = vadd.f32 %v502, %v571
      %v604 = vadd.f32 %v503, %v572
      %v605 = vadd.f32 %v504, %v573
      %v606 = vadd.f32 %v505, %v574
      %v607 = vadd.f32 %v506, %v575
      %v608 = vadd.f32 %v507, %v576
      %v609 = vadd.f32 %v508, %v577
      %v610 = vadd.f32 %v509, %v578
      %v611 = vadd.f32 %v510, %v579
      %v612 = vadd.f32 %v511, %v580
      %v613 = vadd.f32 %v512, %v581
      %v614 = vadd.f32 %v513, %v582
      %v615 = vadd.f32 %v514, %v583
      %v616 = vadd.f32 %v515, %v584
      %v617 = vadd.f32 %v516, %v585
      %v618 = vadd.f32 %v517, %v586
      %v619 = vadd.f32 %v518, %v587
      %v620 = vadd.f32 %v519, %v588
      %v621 = vadd.f32 %v520, %v589
      %v622 = vld [vmem:[%s286] sm:$0xff]
      %v623 = vld [vmem:[%s286 + $0x8] sm:$0xff]
      %v624 = vld [vmem:[%s286 + $0x18] sm:$0xff]
      %v625 = vld [vmem:[%s286 + $0x20] sm:$0xff]
      %v626 = vld [vmem:[%s286 + $0x30] sm:$0xff]
      %v627 = vld [vmem:[%s286 + $0x38] sm:$0xff]
      %v628 = vld [vmem:[%s286 + $0x48] sm:$0xff]
      %v629 = vld [vmem:[%s286 + $0x50] sm:$0xff]
      %v630 = vld [vmem:[%s286 + $0x60] sm:$0xff]
      %v631 = vld [vmem:[%s286 + $0x68] sm:$0xff]
      %v632 = vld [vmem:[%s286 + $0x78] sm:$0xff]
      %v633 = vld [vmem:[%s286 + $0x80] sm:$0xff]
      %v634 = vld [vmem:[%s286 + $0x90] sm:$0xff]
      %v635 = vld [vmem:[%s286 + $0x98] sm:$0xff]
      %v636 = vld [vmem:[%s286 + $0xa8] sm:$0xff]
      %v637 = vld [vmem:[%s286 + $0xb0] sm:$0xff]
      %v638 = vld [vmem:[%s286 + $0xc0] sm:$0xff]
      %v639 = vld [vmem:[%s286 + $0xc8] sm:$0xff]
      %v640 = vld [vmem:[%s286 + $0xd8] sm:$0xff]
      %v641 = vld [vmem:[%s286 + $0xe0] sm:$0xff]
      %v642 = vld [vmem:[%s286 + $0xf0] sm:$0xff]
      %v643 = vld [vmem:[%s286 + $0xf8] sm:$0xff]
      %v644 = vld [vmem:[%s286 + $0x108] sm:$0xff]
      %v645 = vld [vmem:[%s286 + $0x110] sm:$0xff]
      %v646 = vld [vmem:[%s286 + $0x120] sm:$0xff]
      %v647 = vld [vmem:[%s286 + $0x128] sm:$0xff]
      %v648 = vld [vmem:[%s286 + $0x138] sm:$0xff]
      %v649 = vld [vmem:[%s286 + $0x140] sm:$0xff]
      %v650 = vld [vmem:[%s286 + $0x150] sm:$0xff]
      %v651 = vld [vmem:[%s286 + $0x158] sm:$0xff]
      %v652 = vld [vmem:[%s286 + $0x168] sm:$0xff]
      %v653 = vld [vmem:[%s286 + $0x170] sm:$0xff]
      %s654 = scalar_lea.vmem %s1, 4
      %v655 = vld [vmem:[%s654] sm:$0x1]
      %v656 = vlaneseq
      %v657 = vshrl.u32 %v656, 7
      %v658 = vsub.s32 0, %v657
      %v659 = vrot.slane %v655, %v658
      %v660 = vmul.f32 %v622, %v659
      %v661 = vmul.f32 %v623, %v659
      %v662 = vmul.f32 %v624, %v659
      %v663 = vmul.f32 %v625, %v659
      %v664 = vmul.f32 %v626, %v659
      %v665 = vmul.f32 %v627, %v659
      %v666 = vmul.f32 %v628, %v659
      %v667 = vmul.f32 %v629, %v659
      %v668 = vmul.f32 %v630, %v659
      %v669 = vmul.f32 %v631, %v659
      %v670 = vmul.f32 %v632, %v659
      %v671 = vmul.f32 %v633, %v659
      %v672 = vmul.f32 %v634, %v659
      %v673 = vmul.f32 %v635, %v659
      %v674 = vmul.f32 %v636, %v659
      %v675 = vmul.f32 %v637, %v659
      %v676 = vmul.f32 %v638, %v659
      %v677 = vmul.f32 %v639, %v659
      %v678 = vmul.f32 %v640, %v659
      %v679 = vmul.f32 %v641, %v659
      %v680 = vmul.f32 %v642, %v659
      %v681 = vmul.f32 %v643, %v659
      %v682 = vmul.f32 %v644, %v659
      %v683 = vmul.f32 %v645, %v659
      %v684 = vmul.f32 %v646, %v659
      %v685 = vmul.f32 %v647, %v659
      %v686 = vmul.f32 %v648, %v659
      %v687 = vmul.f32 %v649, %v659
      %v688 = vmul.f32 %v650, %v659
      %v689 = vmul.f32 %v651, %v659
      %v690 = vmul.f32 %v652, %v659
      %v691 = vmul.f32 %v653, %v659
      %v692 = vadd.f32 %v590, %v660
      %v693 = vadd.f32 %v591, %v661
      %v694 = vadd.f32 %v592, %v662
      %v695 = vadd.f32 %v593, %v663
      %v696 = vadd.f32 %v594, %v664
      %v697 = vadd.f32 %v595, %v665
      %v698 = vadd.f32 %v596, %v666
      %v699 = vadd.f32 %v597, %v667
      %v700 = vadd.f32 %v598, %v668
      %v701 = vadd.f32 %v599, %v669
      %v702 = vadd.f32 %v600, %v670
      %v703 = vadd.f32 %v601, %v671
      %v704 = vadd.f32 %v602, %v672
      %v705 = vadd.f32 %v603, %v673
      %v706 = vadd.f32 %v604, %v674
      %v707 = vadd.f32 %v605, %v675
      %v708 = vadd.f32 %v606, %v676
      %v709 = vadd.f32 %v607, %v677
      %v710 = vadd.f32 %v608, %v678
      %v711 = vadd.f32 %v609, %v679
      %v712 = vadd.f32 %v610, %v680
      %v713 = vadd.f32 %v611, %v681
      %v714 = vadd.f32 %v612, %v682
      %v715 = vadd.f32 %v613, %v683
      %v716 = vadd.f32 %v614, %v684
      %v717 = vadd.f32 %v615, %v685
      %v718 = vadd.f32 %v616, %v686
      %v719 = vadd.f32 %v617, %v687
      %v720 = vadd.f32 %v618, %v688
      %v721 = vadd.f32 %v619, %v689
      %v722 = vadd.f32 %v620, %v690
      %v723 = vadd.f32 %v621, %v691
      %v724 = vld [vmem:[%s286 + $0x1] sm:$0xff]
      %v725 = vld [vmem:[%s286 + $0x9] sm:$0xff]
      %v726 = vld [vmem:[%s286 + $0x19] sm:$0xff]
      %v727 = vld [vmem:[%s286 + $0x21] sm:$0xff]
      %v728 = vld [vmem:[%s286 + $0x31] sm:$0xff]
      %v729 = vld [vmem:[%s286 + $0x39] sm:$0xff]
      %v730 = vld [vmem:[%s286 + $0x49] sm:$0xff]
      %v731 = vld [vmem:[%s286 + $0x51] sm:$0xff]
      %v732 = vld [vmem:[%s286 + $0x61] sm:$0xff]
      %v733 = vld [vmem:[%s286 + $0x69] sm:$0xff]
      %v734 = vld [vmem:[%s286 + $0x79] sm:$0xff]
      %v735 = vld [vmem:[%s286 + $0x81] sm:$0xff]
      %v736 = vld [vmem:[%s286 + $0x91] sm:$0xff]
      %v737 = vld [vmem:[%s286 + $0x99] sm:$0xff]
      %v738 = vld [vmem:[%s286 + $0xa9] sm:$0xff]
      %v739 = vld [vmem:[%s286 + $0xb1] sm:$0xff]
      %v740 = vld [vmem:[%s286 + $0xc1] sm:$0xff]
      %v741 = vld [vmem:[%s286 + $0xc9] sm:$0xff]
      %v742 = vld [vmem:[%s286 + $0xd9] sm:$0xff]
      %v743 = vld [vmem:[%s286 + $0xe1] sm:$0xff]
      %v744 = vld [vmem:[%s286 + $0xf1] sm:$0xff]
      %v745 = vld [vmem:[%s286 + $0xf9] sm:$0xff]
      %v746 = vld [vmem:[%s286 + $0x109] sm:$0xff]
      %v747 = vld [vmem:[%s286 + $0x111] sm:$0xff]
      %v748 = vld [vmem:[%s286 + $0x121] sm:$0xff]
      %v749 = vld [vmem:[%s286 + $0x129] sm:$0xff]
      %v750 = vld [vmem:[%s286 + $0x139] sm:$0xff]
      %v751 = vld [vmem:[%s286 + $0x141] sm:$0xff]
      %v752 = vld [vmem:[%s286 + $0x151] sm:$0xff]
      %v753 = vld [vmem:[%s286 + $0x159] sm:$0xff]
      %v754 = vld [vmem:[%s286 + $0x169] sm:$0xff]
      %v755 = vld [vmem:[%s286 + $0x171] sm:$0xff]
      %v756 = vld [vmem:[%s654 + $0x1] sm:$0x1]
      %v757 = vlaneseq
      %v758 = vshrl.u32 %v757, 7
      %v759 = vsub.s32 0, %v758
      %v760 = vrot.slane %v756, %v759
      %v761 = vmul.f32 %v724, %v760
      %v762 = vmul.f32 %v725, %v760
      %v763 = vmul.f32 %v726, %v760
      %v764 = vmul.f32 %v727, %v760
      %v765 = vmul.f32 %v728, %v760
      %v766 = vmul.f32 %v729, %v760
      %v767 = vmul.f32 %v730, %v760
      %v768 = vmul.f32 %v731, %v760
      %v769 = vmul.f32 %v732, %v760
      %v770 = vmul.f32 %v733, %v760
      %v771 = vmul.f32 %v734, %v760
      %v772 = vmul.f32 %v735, %v760
      %v773 = vmul.f32 %v736, %v760
      %v774 = vmul.f32 %v737, %v760
      %v775 = vmul.f32 %v738, %v760
      %v776 = vmul.f32 %v739, %v760
      %v777 = vmul.f32 %v740, %v760
      %v778 = vmul.f32 %v741, %v760
      %v779 = vmul.f32 %v742, %v760
      %v780 = vmul.f32 %v743, %v760
      %v781 = vmul.f32 %v744, %v760
      %v782 = vmul.f32 %v745, %v760
      %v783 = vmul.f32 %v746, %v760
      %v784 = vmul.f32 %v747, %v760
      %v785 = vmul.f32 %v748, %v760
      %v786 = vmul.f32 %v749, %v760
      %v787 = vmul.f32 %v750, %v760
      %v788 = vmul.f32 %v751, %v760
      %v789 = vmul.f32 %v752, %v760
      %v790 = vmul.f32 %v753, %v760
      %v791 = vmul.f32 %v754, %v760
      %v792 = vmul.f32 %v755, %v760
      %v793 = vadd.f32 %v692, %v761
      %v794 = vadd.f32 %v693, %v762
      %v795 = vadd.f32 %v694, %v763
      %v796 = vadd.f32 %v695, %v764
      %v797 = vadd.f32 %v696, %v765
      %v798 = vadd.f32 %v697, %v766
      %v799 = vadd.f32 %v698, %v767
      %v800 = vadd.f32 %v699, %v768
      %v801 = vadd.f32 %v700, %v769
      %v802 = vadd.f32 %v701, %v770
      %v803 = vadd.f32 %v702, %v771
      %v804 = vadd.f32 %v703, %v772
      %v805 = vadd.f32 %v704, %v773
      %v806 = vadd.f32 %v705, %v774
      %v807 = vadd.f32 %v706, %v775
      %v808 = vadd.f32 %v707, %v776
      %v809 = vadd.f32 %v708, %v777
      %v810 = vadd.f32 %v709, %v778
      %v811 = vadd.f32 %v710, %v779
      %v812 = vadd.f32 %v711, %v780
      %v813 = vadd.f32 %v712, %v781
      %v814 = vadd.f32 %v713, %v782
      %v815 = vadd.f32 %v714, %v783
      %v816 = vadd.f32 %v715, %v784
      %v817 = vadd.f32 %v716, %v785
      %v818 = vadd.f32 %v717, %v786
      %v819 = vadd.f32 %v718, %v787
      %v820 = vadd.f32 %v719, %v788
      %v821 = vadd.f32 %v720, %v789
      %v822 = vadd.f32 %v721, %v790
      %v823 = vadd.f32 %v722, %v791
      %v824 = vadd.f32 %v723, %v792
      %v825 = vld [vmem:[%s286 + $0x2] sm:$0xff]
      %v826 = vld [vmem:[%s286 + $0xa] sm:$0xff]
      %v827 = vld [vmem:[%s286 + $0x1a] sm:$0xff]
      %v828 = vld [vmem:[%s286 + $0x22] sm:$0xff]
      %v829 = vld [vmem:[%s286 + $0x32] sm:$0xff]
      %v830 = vld [vmem:[%s286 + $0x3a] sm:$0xff]
      %v831 = vld [vmem:[%s286 + $0x4a] sm:$0xff]
      %v832 = vld [vmem:[%s286 + $0x52] sm:$0xff]
      %v833 = vld [vmem:[%s286 + $0x62] sm:$0xff]
      %v834 = vld [vmem:[%s286 + $0x6a] sm:$0xff]
      %v835 = vld [vmem:[%s286 + $0x7a] sm:$0xff]
      %v836 = vld [vmem:[%s286 + $0x82] sm:$0xff]
      %v837 = vld [vmem:[%s286 + $0x92] sm:$0xff]
      %v838 = vld [vmem:[%s286 + $0x9a] sm:$0xff]
      %v839 = vld [vmem:[%s286 + $0xaa] sm:$0xff]
      %v840 = vld [vmem:[%s286 + $0xb2] sm:$0xff]
      %v841 = vld [vmem:[%s286 + $0xc2] sm:$0xff]
      %v842 = vld [vmem:[%s286 + $0xca] sm:$0xff]
      %v843 = vld [vmem:[%s286 + $0xda] sm:$0xff]
      %v844 = vld [vmem:[%s286 + $0xe2] sm:$0xff]
      %v845 = vld [vmem:[%s286 + $0xf2] sm:$0xff]
      %v846 = vld [vmem:[%s286 + $0xfa] sm:$0xff]
      %v847 = vld [vmem:[%s286 + $0x10a] sm:$0xff]
      %v848 = vld [vmem:[%s286 + $0x112] sm:$0xff]
      %v849 = vld [vmem:[%s286 + $0x122] sm:$0xff]
      %v850 = vld [vmem:[%s286 + $0x12a] sm:$0xff]
      %v851 = vld [vmem:[%s286 + $0x13a] sm:$0xff]
      %v852 = vld [vmem:[%s286 + $0x142] sm:$0xff]
      %v853 = vld [vmem:[%s286 + $0x152] sm:$0xff]
      %v854 = vld [vmem:[%s286 + $0x15a] sm:$0xff]
      %v855 = vld [vmem:[%s286 + $0x16a] sm:$0xff]
      %v856 = vld [vmem:[%s286 + $0x172] sm:$0xff]
      %v857 = vld [vmem:[%s654 + $0x2] sm:$0x1]
      %v858 = vlaneseq
      %v859 = vshrl.u32 %v858, 7
      %v860 = vsub.s32 0, %v859
      %v861 = vrot.slane %v857, %v860
      %v862 = vmul.f32 %v825, %v861
      %v863 = vmul.f32 %v826, %v861
      %v864 = vmul.f32 %v827, %v861
      %v865 = vmul.f32 %v828, %v861
      %v866 = vmul.f32 %v829, %v861
      %v867 = vmul.f32 %v830, %v861
      %v868 = vmul.f32 %v831, %v861
      %v869 = vmul.f32 %v832, %v861
      %v870 = vmul.f32 %v833, %v861
      %v871 = vmul.f32 %v834, %v861
      %v872 = vmul.f32 %v835, %v861
      %v873 = vmul.f32 %v836, %v861
      %v874 = vmul.f32 %v837, %v861
      %v875 = vmul.f32 %v838, %v861
      %v876 = vmul.f32 %v839, %v861
      %v877 = vmul.f32 %v840, %v861
      %v878 = vmul.f32 %v841, %v861
      %v879 = vmul.f32 %v842, %v861
      %v880 = vmul.f32 %v843, %v861
      %v881 = vmul.f32 %v844, %v861
      %v882 = vmul.f32 %v845, %v861
      %v883 = vmul.f32 %v846, %v861
      %v884 = vmul.f32 %v847, %v861
      %v885 = vmul.f32 %v848, %v861
      %v886 = vmul.f32 %v849, %v861
      %v887 = vmul.f32 %v850, %v861
      %v888 = vmul.f32 %v851, %v861
      %v889 = vmul.f32 %v852, %v861
      %v890 = vmul.f32 %v853, %v861
      %v891 = vmul.f32 %v854, %v861
      %v892 = vmul.f32 %v855, %v861
      %v893 = vmul.f32 %v856, %v861
      %v894 = vadd.f32 %v793, %v862
      %v895 = vadd.f32 %v794, %v863
      %v896 = vadd.f32 %v795, %v864
      %v897 = vadd.f32 %v796, %v865
      %v898 = vadd.f32 %v797, %v866
      %v899 = vadd.f32 %v798, %v867
      %v900 = vadd.f32 %v799, %v868
      %v901 = vadd.f32 %v800, %v869
      %v902 = vadd.f32 %v801, %v870
      %v903 = vadd.f32 %v802, %v871
      %v904 = vadd.f32 %v803, %v872
      %v905 = vadd.f32 %v804, %v873
      %v906 = vadd.f32 %v805, %v874
      %v907 = vadd.f32 %v806, %v875
      %v908 = vadd.f32 %v807, %v876
      %v909 = vadd.f32 %v808, %v877
      %v910 = vadd.f32 %v809, %v878
      %v911 = vadd.f32 %v810, %v879
      %v912 = vadd.f32 %v811, %v880
      %v913 = vadd.f32 %v812, %v881
      %v914 = vadd.f32 %v813, %v882
      %v915 = vadd.f32 %v814, %v883
      %v916 = vadd.f32 %v815, %v884
      %v917 = vadd.f32 %v816, %v885
      %v918 = vadd.f32 %v817, %v886
      %v919 = vadd.f32 %v818, %v887
      %v920 = vadd.f32 %v819, %v888
      %v921 = vadd.f32 %v820, %v889
      %v922 = vadd.f32 %v821, %v890
      %v923 = vadd.f32 %v822, %v891
      %v924 = vadd.f32 %v823, %v892
      %v925 = vadd.f32 %v824, %v893
      %s926 = scalar_lea.vmem [#allocation2], 48
      %v927 = vld [vmem:[%s926] sm:$0xff]
      %v928 = vld [vmem:[%s926 + $0x8] sm:$0xff]
      %v929 = vld [vmem:[%s926 + $0x18] sm:$0xff]
      %v930 = vld [vmem:[%s926 + $0x20] sm:$0xff]
      %v931 = vld [vmem:[%s926 + $0x30] sm:$0xff]
      %v932 = vld [vmem:[%s926 + $0x38] sm:$0xff]
      %v933 = vld [vmem:[%s926 + $0x48] sm:$0xff]
      %v934 = vld [vmem:[%s926 + $0x50] sm:$0xff]
      %v935 = vld [vmem:[%s926 + $0x60] sm:$0xff]
      %v936 = vld [vmem:[%s926 + $0x68] sm:$0xff]
      %v937 = vld [vmem:[%s926 + $0x78] sm:$0xff]
      %v938 = vld [vmem:[%s926 + $0x80] sm:$0xff]
      %v939 = vld [vmem:[%s926 + $0x90] sm:$0xff]
      %v940 = vld [vmem:[%s926 + $0x98] sm:$0xff]
      %v941 = vld [vmem:[%s926 + $0xa8] sm:$0xff]
      %v942 = vld [vmem:[%s926 + $0xb0] sm:$0xff]
      %v943 = vld [vmem:[%s926 + $0xc0] sm:$0xff]
      %v944 = vld [vmem:[%s926 + $0xc8] sm:$0xff]
      %v945 = vld [vmem:[%s926 + $0xd8] sm:$0xff]
      %v946 = vld [vmem:[%s926 + $0xe0] sm:$0xff]
      %v947 = vld [vmem:[%s926 + $0xf0] sm:$0xff]
      %v948 = vld [vmem:[%s926 + $0xf8] sm:$0xff]
      %v949 = vld [vmem:[%s926 + $0x108] sm:$0xff]
      %v950 = vld [vmem:[%s926 + $0x110] sm:$0xff]
      %v951 = vld [vmem:[%s926 + $0x120] sm:$0xff]
      %v952 = vld [vmem:[%s926 + $0x128] sm:$0xff]
      %v953 = vld [vmem:[%s926 + $0x138] sm:$0xff]
      %v954 = vld [vmem:[%s926 + $0x140] sm:$0xff]
      %v955 = vld [vmem:[%s926 + $0x150] sm:$0xff]
      %v956 = vld [vmem:[%s926 + $0x158] sm:$0xff]
      %v957 = vld [vmem:[%s926 + $0x168] sm:$0xff]
      %v958 = vld [vmem:[%s926 + $0x170] sm:$0xff]
      %s959 = scalar_lea.vmem %s1, 8
      %v960 = vld [vmem:[%s959] sm:$0x1]
      %v961 = vlaneseq
      %v962 = vshrl.u32 %v961, 7
      %v963 = vsub.s32 0, %v962
      %v964 = vrot.slane %v960, %v963
      %v965 = vmul.f32 %v927, %v964
      %v966 = vmul.f32 %v928, %v964
      %v967 = vmul.f32 %v929, %v964
      %v968 = vmul.f32 %v930, %v964
      %v969 = vmul.f32 %v931, %v964
      %v970 = vmul.f32 %v932, %v964
      %v971 = vmul.f32 %v933, %v964
      %v972 = vmul.f32 %v934, %v964
      %v973 = vmul.f32 %v935, %v964
      %v974 = vmul.f32 %v936, %v964
      %v975 = vmul.f32 %v937, %v964
      %v976 = vmul.f32 %v938, %v964
      %v977 = vmul.f32 %v939, %v964
      %v978 = vmul.f32 %v940, %v964
      %v979 = vmul.f32 %v941, %v964
      %v980 = vmul.f32 %v942, %v964
      %v981 = vmul.f32 %v943, %v964
      %v982 = vmul.f32 %v944, %v964
      %v983 = vmul.f32 %v945, %v964
      %v984 = vmul.f32 %v946, %v964
      %v985 = vmul.f32 %v947, %v964
      %v986 = vmul.f32 %v948, %v964
      %v987 = vmul.f32 %v949, %v964
      %v988 = vmul.f32 %v950, %v964
      %v989 = vmul.f32 %v951, %v964
      %v990 = vmul.f32 %v952, %v964
      %v991 = vmul.f32 %v953, %v964
      %v992 = vmul.f32 %v954, %v964
      %v993 = vmul.f32 %v955, %v964
      %v994 = vmul.f32 %v956, %v964
      %v995 = vmul.f32 %v957, %v964
      %v996 = vmul.f32 %v958, %v964
      %v997 = vadd.f32 %v894, %v965
      %v998 = vadd.f32 %v895, %v966
      %v999 = vadd.f32 %v896, %v967
      %v1000 = vadd.f32 %v897, %v968
      %v1001 = vadd.f32 %v898, %v969
      %v1002 = vadd.f32 %v899, %v970
      %v1003 = vadd.f32 %v900, %v971
      %v1004 = vadd.f32 %v901, %v972
      %v1005 = vadd.f32 %v902, %v973
      %v1006 = vadd.f32 %v903, %v974
      %v1007 = vadd.f32 %v904, %v975
      %v1008 = vadd.f32 %v905, %v976
      %v1009 = vadd.f32 %v906, %v977
      %v1010 = vadd.f32 %v907, %v978
      %v1011 = vadd.f32 %v908, %v979
      %v1012 = vadd.f32 %v909, %v980
      %v1013 = vadd.f32 %v910, %v981
      %v1014 = vadd.f32 %v911, %v982
      %v1015 = vadd.f32 %v912, %v983
      %v1016 = vadd.f32 %v913, %v984
      %v1017 = vadd.f32 %v914, %v985
      %v1018 = vadd.f32 %v915, %v986
      %v1019 = vadd.f32 %v916, %v987
      %v1020 = vadd.f32 %v917, %v988
      %v1021 = vadd.f32 %v918, %v989
      %v1022 = vadd.f32 %v919, %v990
      %v1023 = vadd.f32 %v920, %v991
      %v1024 = vadd.f32 %v921, %v992
      %v1025 = vadd.f32 %v922, %v993
      %v1026 = vadd.f32 %v923, %v994
      %v1027 = vadd.f32 %v924, %v995
      %v1028 = vadd.f32 %v925, %v996
      %v1029 = vld [vmem:[%s926 + $0x1] sm:$0xff]
      %v1030 = vld [vmem:[%s926 + $0x9] sm:$0xff]
      %v1031 = vld [vmem:[%s926 + $0x19] sm:$0xff]
      %v1032 = vld [vmem:[%s926 + $0x21] sm:$0xff]
      %v1033 = vld [vmem:[%s926 + $0x31] sm:$0xff]
      %v1034 = vld [vmem:[%s926 + $0x39] sm:$0xff]
      %v1035 = vld [vmem:[%s926 + $0x49] sm:$0xff]
      %v1036 = vld [vmem:[%s926 + $0x51] sm:$0xff]
      %v1037 = vld [vmem:[%s926 + $0x61] sm:$0xff]
      %v1038 = vld [vmem:[%s926 + $0x69] sm:$0xff]
      %v1039 = vld [vmem:[%s926 + $0x79] sm:$0xff]
      %v1040 = vld [vmem:[%s926 + $0x81] sm:$0xff]
      %v1041 = vld [vmem:[%s926 + $0x91] sm:$0xff]
      %v1042 = vld [vmem:[%s926 + $0x99] sm:$0xff]
      %v1043 = vld [vmem:[%s926 + $0xa9] sm:$0xff]
      %v1044 = vld [vmem:[%s926 + $0xb1] sm:$0xff]
      %v1045 = vld [vmem:[%s926 + $0xc1] sm:$0xff]
      %v1046 = vld [vmem:[%s926 + $0xc9] sm:$0xff]
      %v1047 = vld [vmem:[%s926 + $0xd9] sm:$0xff]
      %v1048 = vld [vmem:[%s926 + $0xe1] sm:$0xff]
      %v1049 = vld [vmem:[%s926 + $0xf1] sm:$0xff]
      %v1050 = vld [vmem:[%s926 + $0xf9] sm:$0xff]
      %v1051 = vld [vmem:[%s926 + $0x109] sm:$0xff]
      %v1052 = vld [vmem:[%s926 + $0x111] sm:$0xff]
      %v1053 = vld [vmem:[%s926 + $0x121] sm:$0xff]
      %v1054 = vld [vmem:[%s926 + $0x129] sm:$0xff]
      %v1055 = vld [vmem:[%s926 + $0x139] sm:$0xff]
      %v1056 = vld [vmem:[%s926 + $0x141] sm:$0xff]
      %v1057 = vld [vmem:[%s926 + $0x151] sm:$0xff]
      %v1058 = vld [vmem:[%s926 + $0x159] sm:$0xff]
      %v1059 = vld [vmem:[%s926 + $0x169] sm:$0xff]
      %v1060 = vld [vmem:[%s926 + $0x171] sm:$0xff]
      %v1061 = vld [vmem:[%s959 + $0x1] sm:$0x1]
      %v1062 = vlaneseq
      %v1063 = vshrl.u32 %v1062, 7
      %v1064 = vsub.s32 0, %v1063
      %v1065 = vrot.slane %v1061, %v1064
      %v1066 = vmul.f32 %v1029, %v1065
      %v1067 = vmul.f32 %v1030, %v1065
      %v1068 = vmul.f32 %v1031, %v1065
      %v1069 = vmul.f32 %v1032, %v1065
      %v1070 = vmul.f32 %v1033, %v1065
      %v1071 = vmul.f32 %v1034, %v1065
      %v1072 = vmul.f32 %v1035, %v1065
      %v1073 = vmul.f32 %v1036, %v1065
      %v1074 = vmul.f32 %v1037, %v1065
      %v1075 = vmul.f32 %v1038, %v1065
      %v1076 = vmul.f32 %v1039, %v1065
      %v1077 = vmul.f32 %v1040, %v1065
      %v1078 = vmul.f32 %v1041, %v1065
      %v1079 = vmul.f32 %v1042, %v1065
      %v1080 = vmul.f32 %v1043, %v1065
      %v1081 = vmul.f32 %v1044, %v1065
      %v1082 = vmul.f32 %v1045, %v1065
      %v1083 = vmul.f32 %v1046, %v1065
      %v1084 = vmul.f32 %v1047, %v1065
      %v1085 = vmul.f32 %v1048, %v1065
      %v1086 = vmul.f32 %v1049, %v1065
      %v1087 = vmul.f32 %v1050, %v1065
      %v1088 = vmul.f32 %v1051, %v1065
      %v1089 = vmul.f32 %v1052, %v1065
      %v1090 = vmul.f32 %v1053, %v1065
      %v1091 = vmul.f32 %v1054, %v1065
      %v1092 = vmul.f32 %v1055, %v1065
      %v1093 = vmul.f32 %v1056, %v1065
      %v1094 = vmul.f32 %v1057, %v1065
      %v1095 = vmul.f32 %v1058, %v1065
      %v1096 = vmul.f32 %v1059, %v1065
      %v1097 = vmul.f32 %v1060, %v1065
      %v1098 = vadd.f32 %v997, %v1066
      %v1099 = vadd.f32 %v998, %v1067
      %v1100 = vadd.f32 %v999, %v1068
      %v1101 = vadd.f32 %v1000, %v1069
      %v1102 = vadd.f32 %v1001, %v1070
      %v1103 = vadd.f32 %v1002, %v1071
      %v1104 = vadd.f32 %v1003, %v1072
      %v1105 = vadd.f32 %v1004, %v1073
      %v1106 = vadd.f32 %v1005, %v1074
      %v1107 = vadd.f32 %v1006, %v1075
      %v1108 = vadd.f32 %v1007, %v1076
      %v1109 = vadd.f32 %v1008, %v1077
      %v1110 = vadd.f32 %v1009, %v1078
      %v1111 = vadd.f32 %v1010, %v1079
      %v1112 = vadd.f32 %v1011, %v1080
      %v1113 = vadd.f32 %v1012, %v1081
      %v1114 = vadd.f32 %v1013, %v1082
      %v1115 = vadd.f32 %v1014, %v1083
      %v1116 = vadd.f32 %v1015, %v1084
      %v1117 = vadd.f32 %v1016, %v1085
      %v1118 = vadd.f32 %v1017, %v1086
      %v1119 = vadd.f32 %v1018, %v1087
      %v1120 = vadd.f32 %v1019, %v1088
      %v1121 = vadd.f32 %v1020, %v1089
      %v1122 = vadd.f32 %v1021, %v1090
      %v1123 = vadd.f32 %v1022, %v1091
      %v1124 = vadd.f32 %v1023, %v1092
      %v1125 = vadd.f32 %v1024, %v1093
      %v1126 = vadd.f32 %v1025, %v1094
      %v1127 = vadd.f32 %v1026, %v1095
      %v1128 = vadd.f32 %v1027, %v1096
      %v1129 = vadd.f32 %v1028, %v1097
      %v1130 = vld [vmem:[%s926 + $0x2] sm:$0xff]
      %v1131 = vld [vmem:[%s926 + $0xa] sm:$0xff]
      %v1132 = vld [vmem:[%s926 + $0x1a] sm:$0xff]
      %v1133 = vld [vmem:[%s926 + $0x22] sm:$0xff]
      %v1134 = vld [vmem:[%s926 + $0x32] sm:$0xff]
      %v1135 = vld [vmem:[%s926 + $0x3a] sm:$0xff]
      %v1136 = vld [vmem:[%s926 + $0x4a] sm:$0xff]
      %v1137 = vld [vmem:[%s926 + $0x52] sm:$0xff]
      %v1138 = vld [vmem:[%s926 + $0x62] sm:$0xff]
      %v1139 = vld [vmem:[%s926 + $0x6a] sm:$0xff]
      %v1140 = vld [vmem:[%s926 + $0x7a] sm:$0xff]
      %v1141 = vld [vmem:[%s926 + $0x82] sm:$0xff]
      %v1142 = vld [vmem:[%s926 + $0x92] sm:$0xff]
      %v1143 = vld [vmem:[%s926 + $0x9a] sm:$0xff]
      %v1144 = vld [vmem:[%s926 + $0xaa] sm:$0xff]
      %v1145 = vld [vmem:[%s926 + $0xb2] sm:$0xff]
      %v1146 = vld [vmem:[%s926 + $0xc2] sm:$0xff]
      %v1147 = vld [vmem:[%s926 + $0xca] sm:$0xff]
      %v1148 = vld [vmem:[%s926 + $0xda] sm:$0xff]
      %v1149 = vld [vmem:[%s926 + $0xe2] sm:$0xff]
      %v1150 = vld [vmem:[%s926 + $0xf2] sm:$0xff]
      %v1151 = vld [vmem:[%s926 + $0xfa] sm:$0xff]
      %v1152 = vld [vmem:[%s926 + $0x10a] sm:$0xff]
      %v1153 = vld [vmem:[%s926 + $0x112] sm:$0xff]
      %v1154 = vld [vmem:[%s926 + $0x122] sm:$0xff]
      %v1155 = vld [vmem:[%s926 + $0x12a] sm:$0xff]
      %v1156 = vld [vmem:[%s926 + $0x13a] sm:$0xff]
      %v1157 = vld [vmem:[%s926 + $0x142] sm:$0xff]
      %v1158 = vld [vmem:[%s926 + $0x152] sm:$0xff]
      %v1159 = vld [vmem:[%s926 + $0x15a] sm:$0xff]
      %v1160 = vld [vmem:[%s926 + $0x16a] sm:$0xff]
      %v1161 = vld [vmem:[%s926 + $0x172] sm:$0xff]
      %v1162 = vld [vmem:[%s959 + $0x2] sm:$0x1]
      %v1163 = vlaneseq
      %v1164 = vshrl.u32 %v1163, 7
      %v1165 = vsub.s32 0, %v1164
      %v1166 = vrot.slane %v1162, %v1165
      %v1167 = vmul.f32 %v1130, %v1166
      %v1168 = vmul.f32 %v1131, %v1166
      %v1169 = vmul.f32 %v1132, %v1166
      %v1170 = vmul.f32 %v1133, %v1166
      %v1171 = vmul.f32 %v1134, %v1166
      %v1172 = vmul.f32 %v1135, %v1166
      %v1173 = vmul.f32 %v1136, %v1166
      %v1174 = vmul.f32 %v1137, %v1166
      %v1175 = vmul.f32 %v1138, %v1166
      %v1176 = vmul.f32 %v1139, %v1166
      %v1177 = vmul.f32 %v1140, %v1166
      %v1178 = vmul.f32 %v1141, %v1166
      %v1179 = vmul.f32 %v1142, %v1166
      %v1180 = vmul.f32 %v1143, %v1166
      %v1181 = vmul.f32 %v1144, %v1166
      %v1182 = vmul.f32 %v1145, %v1166
      %v1183 = vmul.f32 %v1146, %v1166
      %v1184 = vmul.f32 %v1147, %v1166
      %v1185 = vmul.f32 %v1148, %v1166
      %v1186 = vmul.f32 %v1149, %v1166
      %v1187 = vmul.f32 %v1150, %v1166
      %v1188 = vmul.f32 %v1151, %v1166
      %v1189 = vmul.f32 %v1152, %v1166
      %v1190 = vmul.f32 %v1153, %v1166
      %v1191 = vmul.f32 %v1154, %v1166
      %v1192 = vmul.f32 %v1155, %v1166
      %v1193 = vmul.f32 %v1156, %v1166
      %v1194 = vmul.f32 %v1157, %v1166
      %v1195 = vmul.f32 %v1158, %v1166
      %v1196 = vmul.f32 %v1159, %v1166
      %v1197 = vmul.f32 %v1160, %v1166
      %v1198 = vmul.f32 %v1161, %v1166
      %v1199 = vadd.f32 %v1098, %v1167
      %v1200 = vadd.f32 %v1099, %v1168
      %v1201 = vadd.f32 %v1100, %v1169
      %v1202 = vadd.f32 %v1101, %v1170
      %v1203 = vadd.f32 %v1102, %v1171
      %v1204 = vadd.f32 %v1103, %v1172
      %v1205 = vadd.f32 %v1104, %v1173
      %v1206 = vadd.f32 %v1105, %v1174
      %v1207 = vadd.f32 %v1106, %v1175
      %v1208 = vadd.f32 %v1107, %v1176
      %v1209 = vadd.f32 %v1108, %v1177
      %v1210 = vadd.f32 %v1109, %v1178
      %v1211 = vadd.f32 %v1110, %v1179
      %v1212 = vadd.f32 %v1111, %v1180
      %v1213 = vadd.f32 %v1112, %v1181
      %v1214 = vadd.f32 %v1113, %v1182
      %v1215 = vadd.f32 %v1114, %v1183
      %v1216 = vadd.f32 %v1115, %v1184
      %v1217 = vadd.f32 %v1116, %v1185
      %v1218 = vadd.f32 %v1117, %v1186
      %v1219 = vadd.f32 %v1118, %v1187
      %v1220 = vadd.f32 %v1119, %v1188
      %v1221 = vadd.f32 %v1120, %v1189
      %v1222 = vadd.f32 %v1121, %v1190
      %v1223 = vadd.f32 %v1122, %v1191
      %v1224 = vadd.f32 %v1123, %v1192
      %v1225 = vadd.f32 %v1124, %v1193
      %v1226 = vadd.f32 %v1125, %v1194
      %v1227 = vadd.f32 %v1126, %v1195
      %v1228 = vadd.f32 %v1127, %v1196
      %v1229 = vadd.f32 %v1128, %v1197
      %v1230 = vadd.f32 %v1129, %v1198
      %vm1231 = vcmask 80896
      %1232 = vst.msk [vmem:[#allocation3] sm:$0xff] %vm1231, 0.0
      %1233 = vst.msk [vmem:[#allocation3 + $0x8] sm:$0xff] %vm1231, 0.0
      %vm1234 = vcmask 74752
      %1235 = vst.msk [vmem:[#allocation3 + $0x10] sm:$0x3] %vm1234, 0.0
      %1236 = vst.msk [vmem:[#allocation3 + $0x18] sm:$0xff] %vm1231, 0.0
      %1237 = vst.msk [vmem:[#allocation3 + $0x20] sm:$0xff] %vm1231, 0.0
      %1238 = vst.msk [vmem:[#allocation3 + $0x28] sm:$0x3] %vm1234, 0.0
      %1239 = vst.msk [vmem:[#allocation3 + $0x30] sm:$0xff] %vm1231, 0.0
      %1240 = vst.msk [vmem:[#allocation3 + $0x38] sm:$0xff] %vm1231, 0.0
      %1241 = vst.msk [vmem:[#allocation3 + $0x40] sm:$0x3] %vm1234, 0.0
      %1242 = vst.msk [vmem:[#allocation3 + $0x48] sm:$0xff] %vm1231, 0.0
      %1243 = vst.msk [vmem:[#allocation3 + $0x50] sm:$0xff] %vm1231, 0.0
      %1244 = vst.msk [vmem:[#allocation3 + $0x58] sm:$0x3] %vm1234, 0.0
      %1245 = vst.msk [vmem:[#allocation3 + $0x60] sm:$0xff] %vm1231, 0.0
      %1246 = vst.msk [vmem:[#allocation3 + $0x68] sm:$0xff] %vm1231, 0.0
      %1247 = vst.msk [vmem:[#allocation3 + $0x70] sm:$0x3] %vm1234, 0.0
      %1248 = vst.msk [vmem:[#allocation3 + $0x78] sm:$0xff] %vm1231, 0.0
      %1249 = vst.msk [vmem:[#allocation3 + $0x80] sm:$0xff] %vm1231, 0.0
      %1250 = vst.msk [vmem:[#allocation3 + $0x88] sm:$0x3] %vm1234, 0.0
      %1251 = vst.msk [vmem:[#allocation3 + $0x90] sm:$0xff] %vm1231, 0.0
      %1252 = vst.msk [vmem:[#allocation3 + $0x98] sm:$0xff] %vm1231, 0.0
      %1253 = vst.msk [vmem:[#allocation3 + $0xa0] sm:$0x3] %vm1234, 0.0
      %1254 = vst.msk [vmem:[#allocation3 + $0xa8] sm:$0xff] %vm1231, 0.0
      %1255 = vst.msk [vmem:[#allocation3 + $0xb0] sm:$0xff] %vm1231, 0.0
      %1256 = vst.msk [vmem:[#allocation3 + $0xb8] sm:$0x3] %vm1234, 0.0
      %1257 = vst.msk [vmem:[#allocation3 + $0xc0] sm:$0xff] %vm1231, 0.0
      %1258 = vst.msk [vmem:[#allocation3 + $0xc8] sm:$0xff] %vm1231, 0.0
      %1259 = vst.msk [vmem:[#allocation3 + $0xd0] sm:$0x3] %vm1234, 0.0
      %1260 = vst.msk [vmem:[#allocation3 + $0xd8] sm:$0xff] %vm1231, 0.0
      %1261 = vst.msk [vmem:[#allocation3 + $0xe0] sm:$0xff] %vm1231, 0.0
      %1262 = vst.msk [vmem:[#allocation3 + $0xe8] sm:$0x3] %vm1234, 0.0
      %1263 = vst.msk [vmem:[#allocation3 + $0xf0] sm:$0xff] %vm1231, 0.0
      %1264 = vst.msk [vmem:[#allocation3 + $0xf8] sm:$0xff] %vm1231, 0.0
      %1265 = vst.msk [vmem:[#allocation3 + $0x100] sm:$0x3] %vm1234, 0.0
      %1266 = vst.msk [vmem:[#allocation3 + $0x108] sm:$0xff] %vm1231, 0.0
      %1267 = vst.msk [vmem:[#allocation3 + $0x110] sm:$0xff] %vm1231, 0.0
      %1268 = vst.msk [vmem:[#allocation3 + $0x118] sm:$0x3] %vm1234, 0.0
      %1269 = vst.msk [vmem:[#allocation3 + $0x120] sm:$0xff] %vm1231, 0.0
      %1270 = vst.msk [vmem:[#allocation3 + $0x128] sm:$0xff] %vm1231, 0.0
      %1271 = vst.msk [vmem:[#allocation3 + $0x130] sm:$0x3] %vm1234, 0.0
      %1272 = vst.msk [vmem:[#allocation3 + $0x138] sm:$0xff] %vm1231, 0.0
      %1273 = vst.msk [vmem:[#allocation3 + $0x140] sm:$0xff] %vm1231, 0.0
      %1274 = vst.msk [vmem:[#allocation3 + $0x148] sm:$0x3] %vm1234, 0.0
      %1275 = vst.msk [vmem:[#allocation3 + $0x150] sm:$0xff] %vm1231, 0.0
      %1276 = vst.msk [vmem:[#allocation3 + $0x158] sm:$0xff] %vm1231, 0.0
      %1277 = vst.msk [vmem:[#allocation3 + $0x160] sm:$0x3] %vm1234, 0.0
      %1278 = vst.msk [vmem:[#allocation3 + $0x168] sm:$0xff] %vm1231, 0.0
      %1279 = vst.msk [vmem:[#allocation3 + $0x170] sm:$0xff] %vm1231, 0.0
      %1280 = vst.msk [vmem:[#allocation3 + $0x178] sm:$0x3] %vm1234, 0.0
      %1281 = vst.msk [vmem:[#allocation3 + $0x180] sm:$0xff] %vm1231, 0.0
      %1282 = vst.msk [vmem:[#allocation3 + $0x188] sm:$0xff] %vm1231, 0.0
      %1283 = vst.msk [vmem:[#allocation3 + $0x190] sm:$0x3] %vm1234, 0.0
      %1284 = vst.msk [vmem:[#allocation3 + $0x198] sm:$0xff] %vm1231, 0.0
      %1285 = vst.msk [vmem:[#allocation3 + $0x1a0] sm:$0xff] %vm1231, 0.0
      %1286 = vst.msk [vmem:[#allocation3 + $0x1a8] sm:$0x3] %vm1234, 0.0
      %s1287 = scalar_lea.vmem [#allocation3], 24
      %1288 = vst.msk [vmem:[%s1287 + $0x1] sm:$0xff] %vm1231, %v1199
      %1289 = vst.msk [vmem:[%s1287 + $0x9] sm:$0xff] %vm1231, %v1200
      %1290 = vst.msk [vmem:[%s1287 + $0x19] sm:$0xff] %vm1231, %v1201
      %1291 = vst.msk [vmem:[%s1287 + $0x21] sm:$0xff] %vm1231, %v1202
      %1292 = vst.msk [vmem:[%s1287 + $0x31] sm:$0xff] %vm1231, %v1203
      %1293 = vst.msk [vmem:[%s1287 + $0x39] sm:$0xff] %vm1231, %v1204
      %1294 = vst.msk [vmem:[%s1287 + $0x49] sm:$0xff] %vm1231, %v1205
      %1295 = vst.msk [vmem:[%s1287 + $0x51] sm:$0xff] %vm1231, %v1206
      %1296 = vst.msk [vmem:[%s1287 + $0x61] sm:$0xff] %vm1231, %v1207
      %1297 = vst.msk [vmem:[%s1287 + $0x69] sm:$0xff] %vm1231, %v1208
      %1298 = vst.msk [vmem:[%s1287 + $0x79] sm:$0xff] %vm1231, %v1209
      %1299 = vst.msk [vmem:[%s1287 + $0x81] sm:$0xff] %vm1231, %v1210
      %1300 = vst.msk [vmem:[%s1287 + $0x91] sm:$0xff] %vm1231, %v1211
      %1301 = vst.msk [vmem:[%s1287 + $0x99] sm:$0xff] %vm1231, %v1212
      %1302 = vst.msk [vmem:[%s1287 + $0xa9] sm:$0xff] %vm1231, %v1213
      %1303 = vst.msk [vmem:[%s1287 + $0xb1] sm:$0xff] %vm1231, %v1214
      %1304 = vst.msk [vmem:[%s1287 + $0xc1] sm:$0xff] %vm1231, %v1215
      %1305 = vst.msk [vmem:[%s1287 + $0xc9] sm:$0xff] %vm1231, %v1216
      %1306 = vst.msk [vmem:[%s1287 + $0xd9] sm:$0xff] %vm1231, %v1217
      %1307 = vst.msk [vmem:[%s1287 + $0xe1] sm:$0xff] %vm1231, %v1218
      %1308 = vst.msk [vmem:[%s1287 + $0xf1] sm:$0xff] %vm1231, %v1219
      %1309 = vst.msk [vmem:[%s1287 + $0xf9] sm:$0xff] %vm1231, %v1220
      %1310 = vst.msk [vmem:[%s1287 + $0x109] sm:$0xff] %vm1231, %v1221
      %1311 = vst.msk [vmem:[%s1287 + $0x111] sm:$0xff] %vm1231, %v1222
      %1312 = vst.msk [vmem:[%s1287 + $0x121] sm:$0xff] %vm1231, %v1223
      %1313 = vst.msk [vmem:[%s1287 + $0x129] sm:$0xff] %vm1231, %v1224
      %1314 = vst.msk [vmem:[%s1287 + $0x139] sm:$0xff] %vm1231, %v1225
      %1315 = vst.msk [vmem:[%s1287 + $0x141] sm:$0xff] %vm1231, %v1226
      %1316 = vst.msk [vmem:[%s1287 + $0x151] sm:$0xff] %vm1231, %v1227
      %1317 = vst.msk [vmem:[%s1287 + $0x159] sm:$0xff] %vm1231, %v1228
      %1318 = vst.msk [vmem:[%s1287 + $0x169] sm:$0xff] %vm1231, %v1229
      %1319 = vst.msk [vmem:[%s1287 + $0x171] sm:$0xff] %vm1231, %v1230
      %v1320 = vld [vmem:[#allocation3] sm:$0xff]
      %v1321 = vld [vmem:[#allocation3 + $0x8] sm:$0xff]
      %v1322 = vld [vmem:[#allocation3 + $0x18] sm:$0xff]
      %v1323 = vld [vmem:[#allocation3 + $0x20] sm:$0xff]
      %v1324 = vld [vmem:[#allocation3 + $0x30] sm:$0xff]
      %v1325 = vld [vmem:[#allocation3 + $0x38] sm:$0xff]
      %v1326 = vld [vmem:[#allocation3 + $0x48] sm:$0xff]
      %v1327 = vld [vmem:[#allocation3 + $0x50] sm:$0xff]
      %v1328 = vld [vmem:[#allocation3 + $0x60] sm:$0xff]
      %v1329 = vld [vmem:[#allocation3 + $0x68] sm:$0xff]
      %v1330 = vld [vmem:[#allocation3 + $0x78] sm:$0xff]
      %v1331 = vld [vmem:[#allocation3 + $0x80] sm:$0xff]
      %v1332 = vld [vmem:[#allocation3 + $0x90] sm:$0xff]
      %v1333 = vld [vmem:[#allocation3 + $0x98] sm:$0xff]
      %v1334 = vld [vmem:[#allocation3 + $0xa8] sm:$0xff]
      %v1335 = vld [vmem:[#allocation3 + $0xb0] sm:$0xff]
      %v1336 = vld [vmem:[#allocation3 + $0xc0] sm:$0xff]
      %v1337 = vld [vmem:[#allocation3 + $0xc8] sm:$0xff]
      %v1338 = vld [vmem:[#allocation3 + $0xd8] sm:$0xff]
      %v1339 = vld [vmem:[#allocation3 + $0xe0] sm:$0xff]
      %v1340 = vld [vmem:[#allocation3 + $0xf0] sm:$0xff]
      %v1341 = vld [vmem:[#allocation3 + $0xf8] sm:$0xff]
      %v1342 = vld [vmem:[#allocation3 + $0x108] sm:$0xff]
      %v1343 = vld [vmem:[#allocation3 + $0x110] sm:$0xff]
      %v1344 = vld [vmem:[#allocation3 + $0x120] sm:$0xff]
      %v1345 = vld [vmem:[#allocation3 + $0x128] sm:$0xff]
      %v1346 = vld [vmem:[#allocation3 + $0x138] sm:$0xff]
      %v1347 = vld [vmem:[#allocation3 + $0x140] sm:$0xff]
      %v1348 = vld [vmem:[#allocation3 + $0x150] sm:$0xff]
      %v1349 = vld [vmem:[#allocation3 + $0x158] sm:$0xff]
      %v1350 = vld [vmem:[#allocation3 + $0x168] sm:$0xff]
      %v1351 = vld [vmem:[#allocation3 + $0x170] sm:$0xff]
      %v1352 = vld [vmem:[%s2] sm:$0x1]
      %v1353 = vlaneseq
      %v1354 = vshrl.u32 %v1353, 7
      %v1355 = vsub.s32 0, %v1354
      %v1356 = vrot.slane %v1352, %v1355
      %v1357 = vmul.f32 %v1320, %v1356
      %v1358 = vmul.f32 %v1321, %v1356
      %v1359 = vmul.f32 %v1322, %v1356
      %v1360 = vmul.f32 %v1323, %v1356
      %v1361 = vmul.f32 %v1324, %v1356
      %v1362 = vmul.f32 %v1325, %v1356
      %v1363 = vmul.f32 %v1326, %v1356
      %v1364 = vmul.f32 %v1327, %v1356
      %v1365 = vmul.f32 %v1328, %v1356
      %v1366 = vmul.f32 %v1329, %v1356
      %v1367 = vmul.f32 %v1330, %v1356
      %v1368 = vmul.f32 %v1331, %v1356
      %v1369 = vmul.f32 %v1332, %v1356
      %v1370 = vmul.f32 %v1333, %v1356
      %v1371 = vmul.f32 %v1334, %v1356
      %v1372 = vmul.f32 %v1335, %v1356
      %v1373 = vmul.f32 %v1336, %v1356
      %v1374 = vmul.f32 %v1337, %v1356
      %v1375 = vmul.f32 %v1338, %v1356
      %v1376 = vmul.f32 %v1339, %v1356
      %v1377 = vmul.f32 %v1340, %v1356
      %v1378 = vmul.f32 %v1341, %v1356
      %v1379 = vmul.f32 %v1342, %v1356
      %v1380 = vmul.f32 %v1343, %v1356
      %v1381 = vmul.f32 %v1344, %v1356
      %v1382 = vmul.f32 %v1345, %v1356
      %v1383 = vmul.f32 %v1346, %v1356
      %v1384 = vmul.f32 %v1347, %v1356
      %v1385 = vmul.f32 %v1348, %v1356
      %v1386 = vmul.f32 %v1349, %v1356
      %v1387 = vmul.f32 %v1350, %v1356
      %v1388 = vmul.f32 %v1351, %v1356
      %v1389 = vadd.f32 %v1357, 0.0
      %v1390 = vadd.f32 %v1358, 0.0
      %v1391 = vadd.f32 %v1359, 0.0
      %v1392 = vadd.f32 %v1360, 0.0
      %v1393 = vadd.f32 %v1361, 0.0
      %v1394 = vadd.f32 %v1362, 0.0
      %v1395 = vadd.f32 %v1363, 0.0
      %v1396 = vadd.f32 %v1364, 0.0
      %v1397 = vadd.f32 %v1365, 0.0
      %v1398 = vadd.f32 %v1366, 0.0
      %v1399 = vadd.f32 %v1367, 0.0
      %v1400 = vadd.f32 %v1368, 0.0
      %v1401 = vadd.f32 %v1369, 0.0
      %v1402 = vadd.f32 %v1370, 0.0
      %v1403 = vadd.f32 %v1371, 0.0
      %v1404 = vadd.f32 %v1372, 0.0
      %v1405 = vadd.f32 %v1373, 0.0
      %v1406 = vadd.f32 %v1374, 0.0
      %v1407 = vadd.f32 %v1375, 0.0
      %v1408 = vadd.f32 %v1376, 0.0
      %v1409 = vadd.f32 %v1377, 0.0
      %v1410 = vadd.f32 %v1378, 0.0
      %v1411 = vadd.f32 %v1379, 0.0
      %v1412 = vadd.f32 %v1380, 0.0
      %v1413 = vadd.f32 %v1381, 0.0
      %v1414 = vadd.f32 %v1382, 0.0
      %v1415 = vadd.f32 %v1383, 0.0
      %v1416 = vadd.f32 %v1384, 0.0
      %v1417 = vadd.f32 %v1385, 0.0
      %v1418 = vadd.f32 %v1386, 0.0
      %v1419 = vadd.f32 %v1387, 0.0
      %v1420 = vadd.f32 %v1388, 0.0
      %v1421 = vld [vmem:[#allocation3 + $0x1] sm:$0xff]
      %v1422 = vld [vmem:[#allocation3 + $0x9] sm:$0xff]
      %v1423 = vld [vmem:[#allocation3 + $0x19] sm:$0xff]
      %v1424 = vld [vmem:[#allocation3 + $0x21] sm:$0xff]
      %v1425 = vld [vmem:[#allocation3 + $0x31] sm:$0xff]
      %v1426 = vld [vmem:[#allocation3 + $0x39] sm:$0xff]
      %v1427 = vld [vmem:[#allocation3 + $0x49] sm:$0xff]
      %v1428 = vld [vmem:[#allocation3 + $0x51] sm:$0xff]
      %v1429 = vld [vmem:[#allocation3 + $0x61] sm:$0xff]
      %v1430 = vld [vmem:[#allocation3 + $0x69] sm:$0xff]
      %v1431 = vld [vmem:[#allocation3 + $0x79] sm:$0xff]
      %v1432 = vld [vmem:[#allocation3 + $0x81] sm:$0xff]
      %v1433 = vld [vmem:[#allocation3 + $0x91] sm:$0xff]
      %v1434 = vld [vmem:[#allocation3 + $0x99] sm:$0xff]
      %v1435 = vld [vmem:[#allocation3 + $0xa9] sm:$0xff]
      %v1436 = vld [vmem:[#allocation3 + $0xb1] sm:$0xff]
      %v1437 = vld [vmem:[#allocation3 + $0xc1] sm:$0xff]
      %v1438 = vld [vmem:[#allocation3 + $0xc9] sm:$0xff]
      %v1439 = vld [vmem:[#allocation3 + $0xd9] sm:$0xff]
      %v1440 = vld [vmem:[#allocation3 + $0xe1] sm:$0xff]
      %v1441 = vld [vmem:[#allocation3 + $0xf1] sm:$0xff]
      %v1442 = vld [vmem:[#allocation3 + $0xf9] sm:$0xff]
      %v1443 = vld [vmem:[#allocation3 + $0x109] sm:$0xff]
      %v1444 = vld [vmem:[#allocation3 + $0x111] sm:$0xff]
      %v1445 = vld [vmem:[#allocation3 + $0x121] sm:$0xff]
      %v1446 = vld [vmem:[#allocation3 + $0x129] sm:$0xff]
      %v1447 = vld [vmem:[#allocation3 + $0x139] sm:$0xff]
      %v1448 = vld [vmem:[#allocation3 + $0x141] sm:$0xff]
      %v1449 = vld [vmem:[#allocation3 + $0x151] sm:$0xff]
      %v1450 = vld [vmem:[#allocation3 + $0x159] sm:$0xff]
      %v1451 = vld [vmem:[#allocation3 + $0x169] sm:$0xff]
      %v1452 = vld [vmem:[#allocation3 + $0x171] sm:$0xff]
      %v1453 = vld [vmem:[%s2 + $0x1] sm:$0x1]
      %v1454 = vlaneseq
      %v1455 = vshrl.u32 %v1454, 7
      %v1456 = vsub.s32 0, %v1455
      %v1457 = vrot.slane %v1453, %v1456
      %v1458 = vmul.f32 %v1421, %v1457
      %v1459 = vmul.f32 %v1422, %v1457
      %v1460 = vmul.f32 %v1423, %v1457
      %v1461 = vmul.f32 %v1424, %v1457
      %v1462 = vmul.f32 %v1425, %v1457
      %v1463 = vmul.f32 %v1426, %v1457
      %v1464 = vmul.f32 %v1427, %v1457
      %v1465 = vmul.f32 %v1428, %v1457
      %v1466 = vmul.f32 %v1429, %v1457
      %v1467 = vmul.f32 %v1430, %v1457
      %v1468 = vmul.f32 %v1431, %v1457
      %v1469 = vmul.f32 %v1432, %v1457
      %v1470 = vmul.f32 %v1433, %v1457
      %v1471 = vmul.f32 %v1434, %v1457
      %v1472 = vmul.f32 %v1435, %v1457
      %v1473 = vmul.f32 %v1436, %v1457
      %v1474 = vmul.f32 %v1437, %v1457
      %v1475 = vmul.f32 %v1438, %v1457
      %v1476 = vmul.f32 %v1439, %v1457
      %v1477 = vmul.f32 %v1440, %v1457
      %v1478 = vmul.f32 %v1441, %v1457
      %v1479 = vmul.f32 %v1442, %v1457
      %v1480 = vmul.f32 %v1443, %v1457
      %v1481 = vmul.f32 %v1444, %v1457
      %v1482 = vmul.f32 %v1445, %v1457
      %v1483 = vmul.f32 %v1446, %v1457
      %v1484 = vmul.f32 %v1447, %v1457
      %v1485 = vmul.f32 %v1448, %v1457
      %v1486 = vmul.f32 %v1449, %v1457
      %v1487 = vmul.f32 %v1450, %v1457
      %v1488 = vmul.f32 %v1451, %v1457
      %v1489 = vmul.f32 %v1452, %v1457
      %v1490 = vadd.f32 %v1389, %v1458
      %v1491 = vadd.f32 %v1390, %v1459
      %v1492 = vadd.f32 %v1391, %v1460
      %v1493 = vadd.f32 %v1392, %v1461
      %v1494 = vadd.f32 %v1393, %v1462
      %v1495 = vadd.f32 %v1394, %v1463
      %v1496 = vadd.f32 %v1395, %v1464
      %v1497 = vadd.f32 %v1396, %v1465
      %v1498 = vadd.f32 %v1397, %v1466
      %v1499 = vadd.f32 %v1398, %v1467
      %v1500 = vadd.f32 %v1399, %v1468
      %v1501 = vadd.f32 %v1400, %v1469
      %v1502 = vadd.f32 %v1401, %v1470
      %v1503 = vadd.f32 %v1402, %v1471
      %v1504 = vadd.f32 %v1403, %v1472
      %v1505 = vadd.f32 %v1404, %v1473
      %v1506 = vadd.f32 %v1405, %v1474
      %v1507 = vadd.f32 %v1406, %v1475
      %v1508 = vadd.f32 %v1407, %v1476
      %v1509 = vadd.f32 %v1408, %v1477
      %v1510 = vadd.f32 %v1409, %v1478
      %v1511 = vadd.f32 %v1410, %v1479
      %v1512 = vadd.f32 %v1411, %v1480
      %v1513 = vadd.f32 %v1412, %v1481
      %v1514 = vadd.f32 %v1413, %v1482
      %v1515 = vadd.f32 %v1414, %v1483
      %v1516 = vadd.f32 %v1415, %v1484
      %v1517 = vadd.f32 %v1416, %v1485
      %v1518 = vadd.f32 %v1417, %v1486
      %v1519 = vadd.f32 %v1418, %v1487
      %v1520 = vadd.f32 %v1419, %v1488
      %v1521 = vadd.f32 %v1420, %v1489
      %v1522 = vld [vmem:[#allocation3 + $0x2] sm:$0xff]
      %v1523 = vld [vmem:[#allocation3 + $0xa] sm:$0xff]
      %v1524 = vld [vmem:[#allocation3 + $0x1a] sm:$0xff]
      %v1525 = vld [vmem:[#allocation3 + $0x22] sm:$0xff]
      %v1526 = vld [vmem:[#allocation3 + $0x32] sm:$0xff]
      %v1527 = vld [vmem:[#allocation3 + $0x3a] sm:$0xff]
      %v1528 = vld [vmem:[#allocation3 + $0x4a] sm:$0xff]
      %v1529 = vld [vmem:[#allocation3 + $0x52] sm:$0xff]
      %v1530 = vld [vmem:[#allocation3 + $0x62] sm:$0xff]
      %v1531 = vld [vmem:[#allocation3 + $0x6a] sm:$0xff]
      %v1532 = vld [vmem:[#allocation3 + $0x7a] sm:$0xff]
      %v1533 = vld [vmem:[#allocation3 + $0x82] sm:$0xff]
      %v1534 = vld [vmem:[#allocation3 + $0x92] sm:$0xff]
      %v1535 = vld [vmem:[#allocation3 + $0x9a] sm:$0xff]
      %v1536 = vld [vmem:[#allocation3 + $0xaa] sm:$0xff]
      %v1537 = vld [vmem:[#allocation3 + $0xb2] sm:$0xff]
      %v1538 = vld [vmem:[#allocation3 + $0xc2] sm:$0xff]
      %v1539 = vld [vmem:[#allocation3 + $0xca] sm:$0xff]
      %v1540 = vld [vmem:[#allocation3 + $0xda] sm:$0xff]
      %v1541 = vld [vmem:[#allocation3 + $0xe2] sm:$0xff]
      %v1542 = vld [vmem:[#allocation3 + $0xf2] sm:$0xff]
      %v1543 = vld [vmem:[#allocation3 + $0xfa] sm:$0xff]
      %v1544 = vld [vmem:[#allocation3 + $0x10a] sm:$0xff]
      %v1545 = vld [vmem:[#allocation3 + $0x112] sm:$0xff]
      %v1546 = vld [vmem:[#allocation3 + $0x122] sm:$0xff]
      %v1547 = vld [vmem:[#allocation3 + $0x12a] sm:$0xff]
      %v1548 = vld [vmem:[#allocation3 + $0x13a] sm:$0xff]
      %v1549 = vld [vmem:[#allocation3 + $0x142] sm:$0xff]
      %v1550 = vld [vmem:[#allocation3 + $0x152] sm:$0xff]
      %v1551 = vld [vmem:[#allocation3 + $0x15a] sm:$0xff]
      %v1552 = vld [vmem:[#allocation3 + $0x16a] sm:$0xff]
      %v1553 = vld [vmem:[#allocation3 + $0x172] sm:$0xff]
      %v1554 = vld [vmem:[%s2 + $0x2] sm:$0x1]
      %v1555 = vlaneseq
      %v1556 = vshrl.u32 %v1555, 7
      %v1557 = vsub.s32 0, %v1556
      %v1558 = vrot.slane %v1554, %v1557
      %v1559 = vmul.f32 %v1522, %v1558
      %v1560 = vmul.f32 %v1523, %v1558
      %v1561 = vmul.f32 %v1524, %v1558
      %v1562 = vmul.f32 %v1525, %v1558
      %v1563 = vmul.f32 %v1526, %v1558
      %v1564 = vmul.f32 %v1527, %v1558
      %v1565 = vmul.f32 %v1528, %v1558
      %v1566 = vmul.f32 %v1529, %v1558
      %v1567 = vmul.f32 %v1530, %v1558
      %v1568 = vmul.f32 %v1531, %v1558
      %v1569 = vmul.f32 %v1532, %v1558
      %v1570 = vmul.f32 %v1533, %v1558
      %v1571 = vmul.f32 %v1534, %v1558
      %v1572 = vmul.f32 %v1535, %v1558
      %v1573 = vmul.f32 %v1536, %v1558
      %v1574 = vmul.f32 %v1537, %v1558
      %v1575 = vmul.f32 %v1538, %v1558
      %v1576 = vmul.f32 %v1539, %v1558
      %v1577 = vmul.f32 %v1540, %v1558
      %v1578 = vmul.f32 %v1541, %v1558
      %v1579 = vmul.f32 %v1542, %v1558
      %v1580 = vmul.f32 %v1543, %v1558
      %v1581 = vmul.f32 %v1544, %v1558
      %v1582 = vmul.f32 %v1545, %v1558
      %v1583 = vmul.f32 %v1546, %v1558
      %v1584 = vmul.f32 %v1547, %v1558
      %v1585 = vmul.f32 %v1548, %v1558
      %v1586 = vmul.f32 %v1549, %v1558
      %v1587 = vmul.f32 %v1550, %v1558
      %v1588 = vmul.f32 %v1551, %v1558
      %v1589 = vmul.f32 %v1552, %v1558
      %v1590 = vmul.f32 %v1553, %v1558
      %v1591 = vadd.f32 %v1490, %v1559
      %v1592 = vadd.f32 %v1491, %v1560
      %v1593 = vadd.f32 %v1492, %v1561
      %v1594 = vadd.f32 %v1493, %v1562
      %v1595 = vadd.f32 %v1494, %v1563
      %v1596 = vadd.f32 %v1495, %v1564
      %v1597 = vadd.f32 %v1496, %v1565
      %v1598 = vadd.f32 %v1497, %v1566
      %v1599 = vadd.f32 %v1498, %v1567
      %v1600 = vadd.f32 %v1499, %v1568
      %v1601 = vadd.f32 %v1500, %v1569
      %v1602 = vadd.f32 %v1501, %v1570
      %v1603 = vadd.f32 %v1502, %v1571
      %v1604 = vadd.f32 %v1503, %v1572
      %v1605 = vadd.f32 %v1504, %v1573
      %v1606 = vadd.f32 %v1505, %v1574
      %v1607 = vadd.f32 %v1506, %v1575
      %v1608 = vadd.f32 %v1507, %v1576
      %v1609 = vadd.f32 %v1508, %v1577
      %v1610 = vadd.f32 %v1509, %v1578
      %v1611 = vadd.f32 %v1510, %v1579
      %v1612 = vadd.f32 %v1511, %v1580
      %v1613 = vadd.f32 %v1512, %v1581
      %v1614 = vadd.f32 %v1513, %v1582
      %v1615 = vadd.f32 %v1514, %v1583
      %v1616 = vadd.f32 %v1515, %v1584
      %v1617 = vadd.f32 %v1516, %v1585
      %v1618 = vadd.f32 %v1517, %v1586
      %v1619 = vadd.f32 %v1518, %v1587
      %v1620 = vadd.f32 %v1519, %v1588
      %v1621 = vadd.f32 %v1520, %v1589
      %v1622 = vadd.f32 %v1521, %v1590
      %v1623 = vld [vmem:[%s1287] sm:$0xff]
      %v1624 = vld [vmem:[%s1287 + $0x8] sm:$0xff]
      %v1625 = vld [vmem:[%s1287 + $0x18] sm:$0xff]
      %v1626 = vld [vmem:[%s1287 + $0x20] sm:$0xff]
      %v1627 = vld [vmem:[%s1287 + $0x30] sm:$0xff]
      %v1628 = vld [vmem:[%s1287 + $0x38] sm:$0xff]
      %v1629 = vld [vmem:[%s1287 + $0x48] sm:$0xff]
      %v1630 = vld [vmem:[%s1287 + $0x50] sm:$0xff]
      %v1631 = vld [vmem:[%s1287 + $0x60] sm:$0xff]
      %v1632 = vld [vmem:[%s1287 + $0x68] sm:$0xff]
      %v1633 = vld [vmem:[%s1287 + $0x78] sm:$0xff]
      %v1634 = vld [vmem:[%s1287 + $0x80] sm:$0xff]
      %v1635 = vld [vmem:[%s1287 + $0x90] sm:$0xff]
      %v1636 = vld [vmem:[%s1287 + $0x98] sm:$0xff]
      %v1637 = vld [vmem:[%s1287 + $0xa8] sm:$0xff]
      %v1638 = vld [vmem:[%s1287 + $0xb0] sm:$0xff]
      %v1639 = vld [vmem:[%s1287 + $0xc0] sm:$0xff]
      %v1640 = vld [vmem:[%s1287 + $0xc8] sm:$0xff]
      %v1641 = vld [vmem:[%s1287 + $0xd8] sm:$0xff]
      %v1642 = vld [vmem:[%s1287 + $0xe0] sm:$0xff]
      %v1643 = vld [vmem:[%s1287 + $0xf0] sm:$0xff]
      %v1644 = vld [vmem:[%s1287 + $0xf8] sm:$0xff]
      %v1645 = vld [vmem:[%s1287 + $0x108] sm:$0xff]
      %v1646 = vld [vmem:[%s1287 + $0x110] sm:$0xff]
      %v1647 = vld [vmem:[%s1287 + $0x120] sm:$0xff]
      %v1648 = vld [vmem:[%s1287 + $0x128] sm:$0xff]
      %v1649 = vld [vmem:[%s1287 + $0x138] sm:$0xff]
      %v1650 = vld [vmem:[%s1287 + $0x140] sm:$0xff]
      %v1651 = vld [vmem:[%s1287 + $0x150] sm:$0xff]
      %v1652 = vld [vmem:[%s1287 + $0x158] sm:$0xff]
      %v1653 = vld [vmem:[%s1287 + $0x168] sm:$0xff]
      %v1654 = vld [vmem:[%s1287 + $0x170] sm:$0xff]
      %s1655 = scalar_lea.vmem %s2, 4
      %v1656 = vld [vmem:[%s1655] sm:$0x1]
      %v1657 = vlaneseq
      %v1658 = vshrl.u32 %v1657, 7
      %v1659 = vsub.s32 0, %v1658
      %v1660 = vrot.slane %v1656, %v1659
      %v1661 = vmul.f32 %v1623, %v1660
      %v1662 = vmul.f32 %v1624, %v1660
      %v1663 = vmul.f32 %v1625, %v1660
      %v1664 = vmul.f32 %v1626, %v1660
      %v1665 = vmul.f32 %v1627, %v1660
      %v1666 = vmul.f32 %v1628, %v1660
      %v1667 = vmul.f32 %v1629, %v1660
      %v1668 = vmul.f32 %v1630, %v1660
      %v1669 = vmul.f32 %v1631, %v1660
      %v1670 = vmul.f32 %v1632, %v1660
      %v1671 = vmul.f32 %v1633, %v1660
      %v1672 = vmul.f32 %v1634, %v1660
      %v1673 = vmul.f32 %v1635, %v1660
      %v1674 = vmul.f32 %v1636, %v1660
      %v1675 = vmul.f32 %v1637, %v1660
      %v1676 = vmul.f32 %v1638, %v1660
      %v1677 = vmul.f32 %v1639, %v1660
      %v1678 = vmul.f32 %v1640, %v1660
      %v1679 = vmul.f32 %v1641, %v1660
      %v1680 = vmul.f32 %v1642, %v1660
      %v1681 = vmul.f32 %v1643, %v1660
      %v1682 = vmul.f32 %v1644, %v1660
      %v1683 = vmul.f32 %v1645, %v1660
      %v1684 = vmul.f32 %v1646, %v1660
      %v1685 = vmul.f32 %v1647, %v1660
      %v1686 = vmul.f32 %v1648, %v1660
      %v1687 = vmul.f32 %v1649, %v1660
      %v1688 = vmul.f32 %v1650, %v1660
      %v1689 = vmul.f32 %v1651, %v1660
      %v1690 = vmul.f32 %v1652, %v1660
      %v1691 = vmul.f32 %v1653, %v1660
      %v1692 = vmul.f32 %v1654, %v1660
      %v1693 = vadd.f32 %v1591, %v1661
      %v1694 = vadd.f32 %v1592, %v1662
      %v1695 = vadd.f32 %v1593, %v1663
      %v1696 = vadd.f32 %v1594, %v1664
      %v1697 = vadd.f32 %v1595, %v1665
      %v1698 = vadd.f32 %v1596, %v1666
      %v1699 = vadd.f32 %v1597, %v1667
      %v1700 = vadd.f32 %v1598, %v1668
      %v1701 = vadd.f32 %v1599, %v1669
      %v1702 = vadd.f32 %v1600, %v1670
      %v1703 = vadd.f32 %v1601, %v1671
      %v1704 = vadd.f32 %v1602, %v1672
      %v1705 = vadd.f32 %v1603, %v1673
      %v1706 = vadd.f32 %v1604, %v1674
      %v1707 = vadd.f32 %v1605, %v1675
      %v1708 = vadd.f32 %v1606, %v1676
      %v1709 = vadd.f32 %v1607, %v1677
      %v1710 = vadd.f32 %v1608, %v1678
      %v1711 = vadd.f32 %v1609, %v1679
      %v1712 = vadd.f32 %v1610, %v1680
      %v1713 = vadd.f32 %v1611, %v1681
      %v1714 = vadd.f32 %v1612, %v1682
      %v1715 = vadd.f32 %v1613, %v1683
      %v1716 = vadd.f32 %v1614, %v1684
      %v1717 = vadd.f32 %v1615, %v1685
      %v1718 = vadd.f32 %v1616, %v1686
      %v1719 = vadd.f32 %v1617, %v1687
      %v1720 = vadd.f32 %v1618, %v1688
      %v1721 = vadd.f32 %v1619, %v1689
      %v1722 = vadd.f32 %v1620, %v1690
      %v1723 = vadd.f32 %v1621, %v1691
      %v1724 = vadd.f32 %v1622, %v1692
      %v1725 = vld [vmem:[%s1287 + $0x1] sm:$0xff]
      %v1726 = vld [vmem:[%s1287 + $0x9] sm:$0xff]
      %v1727 = vld [vmem:[%s1287 + $0x19] sm:$0xff]
      %v1728 = vld [vmem:[%s1287 + $0x21] sm:$0xff]
      %v1729 = vld [vmem:[%s1287 + $0x31] sm:$0xff]
      %v1730 = vld [vmem:[%s1287 + $0x39] sm:$0xff]
      %v1731 = vld [vmem:[%s1287 + $0x49] sm:$0xff]
      %v1732 = vld [vmem:[%s1287 + $0x51] sm:$0xff]
      %v1733 = vld [vmem:[%s1287 + $0x61] sm:$0xff]
      %v1734 = vld [vmem:[%s1287 + $0x69] sm:$0xff]
      %v1735 = vld [vmem:[%s1287 + $0x79] sm:$0xff]
      %v1736 = vld [vmem:[%s1287 + $0x81] sm:$0xff]
      %v1737 = vld [vmem:[%s1287 + $0x91] sm:$0xff]
      %v1738 = vld [vmem:[%s1287 + $0x99] sm:$0xff]
      %v1739 = vld [vmem:[%s1287 + $0xa9] sm:$0xff]
      %v1740 = vld [vmem:[%s1287 + $0xb1] sm:$0xff]
      %v1741 = vld [vmem:[%s1287 + $0xc1] sm:$0xff]
      %v1742 = vld [vmem:[%s1287 + $0xc9] sm:$0xff]
      %v1743 = vld [vmem:[%s1287 + $0xd9] sm:$0xff]
      %v1744 = vld [vmem:[%s1287 + $0xe1] sm:$0xff]
      %v1745 = vld [vmem:[%s1287 + $0xf1] sm:$0xff]
      %v1746 = vld [vmem:[%s1287 + $0xf9] sm:$0xff]
      %v1747 = vld [vmem:[%s1287 + $0x109] sm:$0xff]
      %v1748 = vld [vmem:[%s1287 + $0x111] sm:$0xff]
      %v1749 = vld [vmem:[%s1287 + $0x121] sm:$0xff]
      %v1750 = vld [vmem:[%s1287 + $0x129] sm:$0xff]
      %v1751 = vld [vmem:[%s1287 + $0x139] sm:$0xff]
      %v1752 = vld [vmem:[%s1287 + $0x141] sm:$0xff]
      %v1753 = vld [vmem:[%s1287 + $0x151] sm:$0xff]
      %v1754 = vld [vmem:[%s1287 + $0x159] sm:$0xff]
      %v1755 = vld [vmem:[%s1287 + $0x169] sm:$0xff]
      %v1756 = vld [vmem:[%s1287 + $0x171] sm:$0xff]
      %v1757 = vld [vmem:[%s1655 + $0x1] sm:$0x1]
      %v1758 = vlaneseq
      %v1759 = vshrl.u32 %v1758, 7
      %v1760 = vsub.s32 0, %v1759
      %v1761 = vrot.slane %v1757, %v1760
      %v1762 = vmul.f32 %v1725, %v1761
      %v1763 = vmul.f32 %v1726, %v1761
      %v1764 = vmul.f32 %v1727, %v1761
      %v1765 = vmul.f32 %v1728, %v1761
      %v1766 = vmul.f32 %v1729, %v1761
      %v1767 = vmul.f32 %v1730, %v1761
      %v1768 = vmul.f32 %v1731, %v1761
      %v1769 = vmul.f32 %v1732, %v1761
      %v1770 = vmul.f32 %v1733, %v1761
      %v1771 = vmul.f32 %v1734, %v1761
      %v1772 = vmul.f32 %v1735, %v1761
      %v1773 = vmul.f32 %v1736, %v1761
      %v1774 = vmul.f32 %v1737, %v1761
      %v1775 = vmul.f32 %v1738, %v1761
      %v1776 = vmul.f32 %v1739, %v1761
      %v1777 = vmul.f32 %v1740, %v1761
      %v1778 = vmul.f32 %v1741, %v1761
      %v1779 = vmul.f32 %v1742, %v1761
      %v1780 = vmul.f32 %v1743, %v1761
      %v1781 = vmul.f32 %v1744, %v1761
      %v1782 = vmul.f32 %v1745, %v1761
      %v1783 = vmul.f32 %v1746, %v1761
      %v1784 = vmul.f32 %v1747, %v1761
      %v1785 = vmul.f32 %v1748, %v1761
      %v1786 = vmul.f32 %v1749, %v1761
      %v1787 = vmul.f32 %v1750, %v1761
      %v1788 = vmul.f32 %v1751, %v1761
      %v1789 = vmul.f32 %v1752, %v1761
      %v1790 = vmul.f32 %v1753, %v1761
      %v1791 = vmul.f32 %v1754, %v1761
      %v1792 = vmul.f32 %v1755, %v1761
      %v1793 = vmul.f32 %v1756, %v1761
      %v1794 = vadd.f32 %v1693, %v1762
      %v1795 = vadd.f32 %v1694, %v1763
      %v1796 = vadd.f32 %v1695, %v1764
      %v1797 = vadd.f32 %v1696, %v1765
      %v1798 = vadd.f32 %v1697, %v1766
      %v1799 = vadd.f32 %v1698, %v1767
      %v1800 = vadd.f32 %v1699, %v1768
      %v1801 = vadd.f32 %v1700, %v1769
      %v1802 = vadd.f32 %v1701, %v1770
      %v1803 = vadd.f32 %v1702, %v1771
      %v1804 = vadd.f32 %v1703, %v1772
      %v1805 = vadd.f32 %v1704, %v1773
      %v1806 = vadd.f32 %v1705, %v1774
      %v1807 = vadd.f32 %v1706, %v1775
      %v1808 = vadd.f32 %v1707, %v1776
      %v1809 = vadd.f32 %v1708, %v1777
      %v1810 = vadd.f32 %v1709, %v1778
      %v1811 = vadd.f32 %v1710, %v1779
      %v1812 = vadd.f32 %v1711, %v1780
      %v1813 = vadd.f32 %v1712, %v1781
      %v1814 = vadd.f32 %v1713, %v1782
      %v1815 = vadd.f32 %v1714, %v1783
      %v1816 = vadd.f32 %v1715, %v1784
      %v1817 = vadd.f32 %v1716, %v1785
      %v1818 = vadd.f32 %v1717, %v1786
      %v1819 = vadd.f32 %v1718, %v1787
      %v1820 = vadd.f32 %v1719, %v1788
      %v1821 = vadd.f32 %v1720, %v1789
      %v1822 = vadd.f32 %v1721, %v1790
      %v1823 = vadd.f32 %v1722, %v1791
      %v1824 = vadd.f32 %v1723, %v1792
      %v1825 = vadd.f32 %v1724, %v1793
      %v1826 = vld [vmem:[%s1287 + $0x2] sm:$0xff]
      %v1827 = vld [vmem:[%s1287 + $0xa] sm:$0xff]
      %v1828 = vld [vmem:[%s1287 + $0x1a] sm:$0xff]
      %v1829 = vld [vmem:[%s1287 + $0x22] sm:$0xff]
      %v1830 = vld [vmem:[%s1287 + $0x32] sm:$0xff]
      %v1831 = vld [vmem:[%s1287 + $0x3a] sm:$0xff]
      %v1832 = vld [vmem:[%s1287 + $0x4a] sm:$0xff]
      %v1833 = vld [vmem:[%s1287 + $0x52] sm:$0xff]
      %v1834 = vld [vmem:[%s1287 + $0x62] sm:$0xff]
      %v1835 = vld [vmem:[%s1287 + $0x6a] sm:$0xff]
      %v1836 = vld [vmem:[%s1287 + $0x7a] sm:$0xff]
      %v1837 = vld [vmem:[%s1287 + $0x82] sm:$0xff]
      %v1838 = vld [vmem:[%s1287 + $0x92] sm:$0xff]
      %v1839 = vld [vmem:[%s1287 + $0x9a] sm:$0xff]
      %v1840 = vld [vmem:[%s1287 + $0xaa] sm:$0xff]
      %v1841 = vld [vmem:[%s1287 + $0xb2] sm:$0xff]
      %v1842 = vld [vmem:[%s1287 + $0xc2] sm:$0xff]
      %v1843 = vld [vmem:[%s1287 + $0xca] sm:$0xff]
      %v1844 = vld [vmem:[%s1287 + $0xda] sm:$0xff]
      %v1845 = vld [vmem:[%s1287 + $0xe2] sm:$0xff]
      %v1846 = vld [vmem:[%s1287 + $0xf2] sm:$0xff]
      %v1847 = vld [vmem:[%s1287 + $0xfa] sm:$0xff]
      %v1848 = vld [vmem:[%s1287 + $0x10a] sm:$0xff]
      %v1849 = vld [vmem:[%s1287 + $0x112] sm:$0xff]
      %v1850 = vld [vmem:[%s1287 + $0x122] sm:$0xff]
      %v1851 = vld [vmem:[%s1287 + $0x12a] sm:$0xff]
      %v1852 = vld [vmem:[%s1287 + $0x13a] sm:$0xff]
      %v1853 = vld [vmem:[%s1287 + $0x142] sm:$0xff]
      %v1854 = vld [vmem:[%s1287 + $0x152] sm:$0xff]
      %v1855 = vld [vmem:[%s1287 + $0x15a] sm:$0xff]
      %v1856 = vld [vmem:[%s1287 + $0x16a] sm:$0xff]
      %v1857 = vld [vmem:[%s1287 + $0x172] sm:$0xff]
      %v1858 = vld [vmem:[%s1655 + $0x2] sm:$0x1]
      %v1859 = vlaneseq
      %v1860 = vshrl.u32 %v1859, 7
      %v1861 = vsub.s32 0, %v1860
      %v1862 = vrot.slane %v1858, %v1861
      %v1863 = vmul.f32 %v1826, %v1862
      %v1864 = vmul.f32 %v1827, %v1862
      %v1865 = vmul.f32 %v1828, %v1862
      %v1866 = vmul.f32 %v1829, %v1862
      %v1867 = vmul.f32 %v1830, %v1862
      %v1868 = vmul.f32 %v1831, %v1862
      %v1869 = vmul.f32 %v1832, %v1862
      %v1870 = vmul.f32 %v1833, %v1862
      %v1871 = vmul.f32 %v1834, %v1862
      %v1872 = vmul.f32 %v1835, %v1862
      %v1873 = vmul.f32 %v1836, %v1862
      %v1874 = vmul.f32 %v1837, %v1862
      %v1875 = vmul.f32 %v1838, %v1862
      %v1876 = vmul.f32 %v1839, %v1862
      %v1877 = vmul.f32 %v1840, %v1862
      %v1878 = vmul.f32 %v1841, %v1862
      %v1879 = vmul.f32 %v1842, %v1862
      %v1880 = vmul.f32 %v1843, %v1862
      %v1881 = vmul.f32 %v1844, %v1862
      %v1882 = vmul.f32 %v1845, %v1862
      %v1883 = vmul.f32 %v1846, %v1862
      %v1884 = vmul.f32 %v1847, %v1862
      %v1885 = vmul.f32 %v1848, %v1862
      %v1886 = vmul.f32 %v1849, %v1862
      %v1887 = vmul.f32 %v1850, %v1862
      %v1888 = vmul.f32 %v1851, %v1862
      %v1889 = vmul.f32 %v1852, %v1862
      %v1890 = vmul.f32 %v1853, %v1862
      %v1891 = vmul.f32 %v1854, %v1862
      %v1892 = vmul.f32 %v1855, %v1862
      %v1893 = vmul.f32 %v1856, %v1862
      %v1894 = vmul.f32 %v1857, %v1862
      %v1895 = vadd.f32 %v1794, %v1863
      %v1896 = vadd.f32 %v1795, %v1864
      %v1897 = vadd.f32 %v1796, %v1865
      %v1898 = vadd.f32 %v1797, %v1866
      %v1899 = vadd.f32 %v1798, %v1867
      %v1900 = vadd.f32 %v1799, %v1868
      %v1901 = vadd.f32 %v1800, %v1869
      %v1902 = vadd.f32 %v1801, %v1870
      %v1903 = vadd.f32 %v1802, %v1871
      %v1904 = vadd.f32 %v1803, %v1872
      %v1905 = vadd.f32 %v1804, %v1873
      %v1906 = vadd.f32 %v1805, %v1874
      %v1907 = vadd.f32 %v1806, %v1875
      %v1908 = vadd.f32 %v1807, %v1876
      %v1909 = vadd.f32 %v1808, %v1877
      %v1910 = vadd.f32 %v1809, %v1878
      %v1911 = vadd.f32 %v1810, %v1879
      %v1912 = vadd.f32 %v1811, %v1880
      %v1913 = vadd.f32 %v1812, %v1881
      %v1914 = vadd.f32 %v1813, %v1882
      %v1915 = vadd.f32 %v1814, %v1883
      %v1916 = vadd.f32 %v1815, %v1884
      %v1917 = vadd.f32 %v1816, %v1885
      %v1918 = vadd.f32 %v1817, %v1886
      %v1919 = vadd.f32 %v1818, %v1887
      %v1920 = vadd.f32 %v1819, %v1888
      %v1921 = vadd.f32 %v1820, %v1889
      %v1922 = vadd.f32 %v1821, %v1890
      %v1923 = vadd.f32 %v1822, %v1891
      %v1924 = vadd.f32 %v1823, %v1892
      %v1925 = vadd.f32 %v1824, %v1893
      %v1926 = vadd.f32 %v1825, %v1894
      %s1927 = scalar_lea.vmem [#allocation3], 48
      %v1928 = vld [vmem:[%s1927] sm:$0xff]
      %v1929 = vld [vmem:[%s1927 + $0x8] sm:$0xff]
      %v1930 = vld [vmem:[%s1927 + $0x18] sm:$0xff]
      %v1931 = vld [vmem:[%s1927 + $0x20] sm:$0xff]
      %v1932 = vld [vmem:[%s1927 + $0x30] sm:$0xff]
      %v1933 = vld [vmem:[%s1927 + $0x38] sm:$0xff]
      %v1934 = vld [vmem:[%s1927 + $0x48] sm:$0xff]
      %v1935 = vld [vmem:[%s1927 + $0x50] sm:$0xff]
      %v1936 = vld [vmem:[%s1927 + $0x60] sm:$0xff]
      %v1937 = vld [vmem:[%s1927 + $0x68] sm:$0xff]
      %v1938 = vld [vmem:[%s1927 + $0x78] sm:$0xff]
      %v1939 = vld [vmem:[%s1927 + $0x80] sm:$0xff]
      %v1940 = vld [vmem:[%s1927 + $0x90] sm:$0xff]
      %v1941 = vld [vmem:[%s1927 + $0x98] sm:$0xff]
      %v1942 = vld [vmem:[%s1927 + $0xa8] sm:$0xff]
      %v1943 = vld [vmem:[%s1927 + $0xb0] sm:$0xff]
      %v1944 = vld [vmem:[%s1927 + $0xc0] sm:$0xff]
      %v1945 = vld [vmem:[%s1927 + $0xc8] sm:$0xff]
      %v1946 = vld [vmem:[%s1927 + $0xd8] sm:$0xff]
      %v1947 = vld [vmem:[%s1927 + $0xe0] sm:$0xff]
      %v1948 = vld [vmem:[%s1927 + $0xf0] sm:$0xff]
      %v1949 = vld [vmem:[%s1927 + $0xf8] sm:$0xff]
      %v1950 = vld [vmem:[%s1927 + $0x108] sm:$0xff]
      %v1951 = vld [vmem:[%s1927 + $0x110] sm:$0xff]
      %v1952 = vld [vmem:[%s1927 + $0x120] sm:$0xff]
      %v1953 = vld [vmem:[%s1927 + $0x128] sm:$0xff]
      %v1954 = vld [vmem:[%s1927 + $0x138] sm:$0xff]
      %v1955 = vld [vmem:[%s1927 + $0x140] sm:$0xff]
      %v1956 = vld [vmem:[%s1927 + $0x150] sm:$0xff]
      %v1957 = vld [vmem:[%s1927 + $0x158] sm:$0xff]
      %v1958 = vld [vmem:[%s1927 + $0x168] sm:$0xff]
      %v1959 = vld [vmem:[%s1927 + $0x170] sm:$0xff]
      %s1960 = scalar_lea.vmem %s2, 8
      %v1961 = vld [vmem:[%s1960] sm:$0x1]
      %v1962 = vlaneseq
      %v1963 = vshrl.u32 %v1962, 7
      %v1964 = vsub.s32 0, %v1963
      %v1965 = vrot.slane %v1961, %v1964
      %v1966 = vmul.f32 %v1928, %v1965
      %v1967 = vmul.f32 %v1929, %v1965
      %v1968 = vmul.f32 %v1930, %v1965
      %v1969 = vmul.f32 %v1931, %v1965
      %v1970 = vmul.f32 %v1932, %v1965
      %v1971 = vmul.f32 %v1933, %v1965
      %v1972 = vmul.f32 %v1934, %v1965
      %v1973 = vmul.f32 %v1935, %v1965
      %v1974 = vmul.f32 %v1936, %v1965
      %v1975 = vmul.f32 %v1937, %v1965
      %v1976 = vmul.f32 %v1938, %v1965
      %v1977 = vmul.f32 %v1939, %v1965
      %v1978 = vmul.f32 %v1940, %v1965
      %v1979 = vmul.f32 %v1941, %v1965
      %v1980 = vmul.f32 %v1942, %v1965
      %v1981 = vmul.f32 %v1943, %v1965
      %v1982 = vmul.f32 %v1944, %v1965
      %v1983 = vmul.f32 %v1945, %v1965
      %v1984 = vmul.f32 %v1946, %v1965
      %v1985 = vmul.f32 %v1947, %v1965
      %v1986 = vmul.f32 %v1948, %v1965
      %v1987 = vmul.f32 %v1949, %v1965
      %v1988 = vmul.f32 %v1950, %v1965
      %v1989 = vmul.f32 %v1951, %v1965
      %v1990 = vmul.f32 %v1952, %v1965
      %v1991 = vmul.f32 %v1953, %v1965
      %v1992 = vmul.f32 %v1954, %v1965
      %v1993 = vmul.f32 %v1955, %v1965
      %v1994 = vmul.f32 %v1956, %v1965
      %v1995 = vmul.f32 %v1957, %v1965
      %v1996 = vmul.f32 %v1958, %v1965
      %v1997 = vmul.f32 %v1959, %v1965
      %v1998 = vadd.f32 %v1895, %v1966
      %v1999 = vadd.f32 %v1896, %v1967
      %v2000 = vadd.f32 %v1897, %v1968
      %v2001 = vadd.f32 %v1898, %v1969
      %v2002 = vadd.f32 %v1899, %v1970
      %v2003 = vadd.f32 %v1900, %v1971
      %v2004 = vadd.f32 %v1901, %v1972
      %v2005 = vadd.f32 %v1902, %v1973
      %v2006 = vadd.f32 %v1903, %v1974
      %v2007 = vadd.f32 %v1904, %v1975
      %v2008 = vadd.f32 %v1905, %v1976
      %v2009 = vadd.f32 %v1906, %v1977
      %v2010 = vadd.f32 %v1907, %v1978
      %v2011 = vadd.f32 %v1908, %v1979
      %v2012 = vadd.f32 %v1909, %v1980
      %v2013 = vadd.f32 %v1910, %v1981
      %v2014 = vadd.f32 %v1911, %v1982
      %v2015 = vadd.f32 %v1912, %v1983
      %v2016 = vadd.f32 %v1913, %v1984
      %v2017 = vadd.f32 %v1914, %v1985
      %v2018 = vadd.f32 %v1915, %v1986
      %v2019 = vadd.f32 %v1916, %v1987
      %v2020 = vadd.f32 %v1917, %v1988
      %v2021 = vadd.f32 %v1918, %v1989
      %v2022 = vadd.f32 %v1919, %v1990
      %v2023 = vadd.f32 %v1920, %v1991
      %v2024 = vadd.f32 %v1921, %v1992
      %v2025 = vadd.f32 %v1922, %v1993
      %v2026 = vadd.f32 %v1923, %v1994
      %v2027 = vadd.f32 %v1924, %v1995
      %v2028 = vadd.f32 %v1925, %v1996
      %v2029 = vadd.f32 %v1926, %v1997
      %v2030 = vld [vmem:[%s1927 + $0x1] sm:$0xff]
      %v2031 = vld [vmem:[%s1927 + $0x9] sm:$0xff]
      %v2032 = vld [vmem:[%s1927 + $0x19] sm:$0xff]
      %v2033 = vld [vmem:[%s1927 + $0x21] sm:$0xff]
      %v2034 = vld [vmem:[%s1927 + $0x31] sm:$0xff]
      %v2035 = vld [vmem:[%s1927 + $0x39] sm:$0xff]
      %v2036 = vld [vmem:[%s1927 + $0x49] sm:$0xff]
      %v2037 = vld [vmem:[%s1927 + $0x51] sm:$0xff]
      %v2038 = vld [vmem:[%s1927 + $0x61] sm:$0xff]
      %v2039 = vld [vmem:[%s1927 + $0x69] sm:$0xff]
      %v2040 = vld [vmem:[%s1927 + $0x79] sm:$0xff]
      %v2041 = vld [vmem:[%s1927 + $0x81] sm:$0xff]
      %v2042 = vld [vmem:[%s1927 + $0x91] sm:$0xff]
      %v2043 = vld [vmem:[%s1927 + $0x99] sm:$0xff]
      %v2044 = vld [vmem:[%s1927 + $0xa9] sm:$0xff]
      %v2045 = vld [vmem:[%s1927 + $0xb1] sm:$0xff]
      %v2046 = vld [vmem:[%s1927 + $0xc1] sm:$0xff]
      %v2047 = vld [vmem:[%s1927 + $0xc9] sm:$0xff]
      %v2048 = vld [vmem:[%s1927 + $0xd9] sm:$0xff]
      %v2049 = vld [vmem:[%s1927 + $0xe1] sm:$0xff]
      %v2050 = vld [vmem:[%s1927 + $0xf1] sm:$0xff]
      %v2051 = vld [vmem:[%s1927 + $0xf9] sm:$0xff]
      %v2052 = vld [vmem:[%s1927 + $0x109] sm:$0xff]
      %v2053 = vld [vmem:[%s1927 + $0x111] sm:$0xff]
      %v2054 = vld [vmem:[%s1927 + $0x121] sm:$0xff]
      %v2055 = vld [vmem:[%s1927 + $0x129] sm:$0xff]
      %v2056 = vld [vmem:[%s1927 + $0x139] sm:$0xff]
      %v2057 = vld [vmem:[%s1927 + $0x141] sm:$0xff]
      %v2058 = vld [vmem:[%s1927 + $0x151] sm:$0xff]
      %v2059 = vld [vmem:[%s1927 + $0x159] sm:$0xff]
      %v2060 = vld [vmem:[%s1927 + $0x169] sm:$0xff]
      %v2061 = vld [vmem:[%s1927 + $0x171] sm:$0xff]
      %v2062 = vld [vmem:[%s1960 + $0x1] sm:$0x1]
      %v2063 = vlaneseq
      %v2064 = vshrl.u32 %v2063, 7
      %v2065 = vsub.s32 0, %v2064
      %v2066 = vrot.slane %v2062, %v2065
      %v2067 = vmul.f32 %v2030, %v2066
      %v2068 = vmul.f32 %v2031, %v2066
      %v2069 = vmul.f32 %v2032, %v2066
      %v2070 = vmul.f32 %v2033, %v2066
      %v2071 = vmul.f32 %v2034, %v2066
      %v2072 = vmul.f32 %v2035, %v2066
      %v2073 = vmul.f32 %v2036, %v2066
      %v2074 = vmul.f32 %v2037, %v2066
      %v2075 = vmul.f32 %v2038, %v2066
      %v2076 = vmul.f32 %v2039, %v2066
      %v2077 = vmul.f32 %v2040, %v2066
      %v2078 = vmul.f32 %v2041, %v2066
      %v2079 = vmul.f32 %v2042, %v2066
      %v2080 = vmul.f32 %v2043, %v2066
      %v2081 = vmul.f32 %v2044, %v2066
      %v2082 = vmul.f32 %v2045, %v2066
      %v2083 = vmul.f32 %v2046, %v2066
      %v2084 = vmul.f32 %v2047, %v2066
      %v2085 = vmul.f32 %v2048, %v2066
      %v2086 = vmul.f32 %v2049, %v2066
      %v2087 = vmul.f32 %v2050, %v2066
      %v2088 = vmul.f32 %v2051, %v2066
      %v2089 = vmul.f32 %v2052, %v2066
      %v2090 = vmul.f32 %v2053, %v2066
      %v2091 = vmul.f32 %v2054, %v2066
      %v2092 = vmul.f32 %v2055, %v2066
      %v2093 = vmul.f32 %v2056, %v2066
      %v2094 = vmul.f32 %v2057, %v2066
      %v2095 = vmul.f32 %v2058, %v2066
      %v2096 = vmul.f32 %v2059, %v2066
      %v2097 = vmul.f32 %v2060, %v2066
      %v2098 = vmul.f32 %v2061, %v2066
      %v2099 = vadd.f32 %v1998, %v2067
      %v2100 = vadd.f32 %v1999, %v2068
      %v2101 = vadd.f32 %v2000, %v2069
      %v2102 = vadd.f32 %v2001, %v2070
      %v2103 = vadd.f32 %v2002, %v2071
      %v2104 = vadd.f32 %v2003, %v2072
      %v2105 = vadd.f32 %v2004, %v2073
      %v2106 = vadd.f32 %v2005, %v2074
      %v2107 = vadd.f32 %v2006, %v2075
      %v2108 = vadd.f32 %v2007, %v2076
      %v2109 = vadd.f32 %v2008, %v2077
      %v2110 = vadd.f32 %v2009, %v2078
      %v2111 = vadd.f32 %v2010, %v2079
      %v2112 = vadd.f32 %v2011, %v2080
      %v2113 = vadd.f32 %v2012, %v2081
      %v2114 = vadd.f32 %v2013, %v2082
      %v2115 = vadd.f32 %v2014, %v2083
      %v2116 = vadd.f32 %v2015, %v2084
      %v2117 = vadd.f32 %v2016, %v2085
      %v2118 = vadd.f32 %v2017, %v2086
      %v2119 = vadd.f32 %v2018, %v2087
      %v2120 = vadd.f32 %v2019, %v2088
      %v2121 = vadd.f32 %v2020, %v2089
      %v2122 = vadd.f32 %v2021, %v2090
      %v2123 = vadd.f32 %v2022, %v2091
      %v2124 = vadd.f32 %v2023, %v2092
      %v2125 = vadd.f32 %v2024, %v2093
      %v2126 = vadd.f32 %v2025, %v2094
      %v2127 = vadd.f32 %v2026, %v2095
      %v2128 = vadd.f32 %v2027, %v2096
      %v2129 = vadd.f32 %v2028, %v2097
      %v2130 = vadd.f32 %v2029, %v2098
      %v2131 = vld [vmem:[%s1927 + $0x2] sm:$0xff]
      %v2132 = vld [vmem:[%s1927 + $0xa] sm:$0xff]
      %v2133 = vld [vmem:[%s1927 + $0x1a] sm:$0xff]
      %v2134 = vld [vmem:[%s1927 + $0x22] sm:$0xff]
      %v2135 = vld [vmem:[%s1927 + $0x32] sm:$0xff]
      %v2136 = vld [vmem:[%s1927 + $0x3a] sm:$0xff]
      %v2137 = vld [vmem:[%s1927 + $0x4a] sm:$0xff]
      %v2138 = vld [vmem:[%s1927 + $0x52] sm:$0xff]
      %v2139 = vld [vmem:[%s1927 + $0x62] sm:$0xff]
      %v2140 = vld [vmem:[%s1927 + $0x6a] sm:$0xff]
      %v2141 = vld [vmem:[%s1927 + $0x7a] sm:$0xff]
      %v2142 = vld [vmem:[%s1927 + $0x82] sm:$0xff]
      %v2143 = vld [vmem:[%s1927 + $0x92] sm:$0xff]
      %v2144 = vld [vmem:[%s1927 + $0x9a] sm:$0xff]
      %v2145 = vld [vmem:[%s1927 + $0xaa] sm:$0xff]
      %v2146 = vld [vmem:[%s1927 + $0xb2] sm:$0xff]
      %v2147 = vld [vmem:[%s1927 + $0xc2] sm:$0xff]
      %v2148 = vld [vmem:[%s1927 + $0xca] sm:$0xff]
      %v2149 = vld [vmem:[%s1927 + $0xda] sm:$0xff]
      %v2150 = vld [vmem:[%s1927 + $0xe2] sm:$0xff]
      %v2151 = vld [vmem:[%s1927 + $0xf2] sm:$0xff]
      %v2152 = vld [vmem:[%s1927 + $0xfa] sm:$0xff]
      %v2153 = vld [vmem:[%s1927 + $0x10a] sm:$0xff]
      %v2154 = vld [vmem:[%s1927 + $0x112] sm:$0xff]
      %v2155 = vld [vmem:[%s1927 + $0x122] sm:$0xff]
      %v2156 = vld [vmem:[%s1927 + $0x12a] sm:$0xff]
      %v2157 = vld [vmem:[%s1927 + $0x13a] sm:$0xff]
      %v2158 = vld [vmem:[%s1927 + $0x142] sm:$0xff]
      %v2159 = vld [vmem:[%s1927 + $0x152] sm:$0xff]
      %v2160 = vld [vmem:[%s1927 + $0x15a] sm:$0xff]
      %v2161 = vld [vmem:[%s1927 + $0x16a] sm:$0xff]
      %v2162 = vld [vmem:[%s1927 + $0x172] sm:$0xff]
      %v2163 = vld [vmem:[%s1960 + $0x2] sm:$0x1]
      %v2164 = vlaneseq
      %v2165 = vshrl.u32 %v2164, 7
      %v2166 = vsub.s32 0, %v2165
      %v2167 = vrot.slane %v2163, %v2166
      %v2168 = vmul.f32 %v2131, %v2167
      %v2169 = vmul.f32 %v2132, %v2167
      %v2170 = vmul.f32 %v2133, %v2167
      %v2171 = vmul.f32 %v2134, %v2167
      %v2172 = vmul.f32 %v2135, %v2167
      %v2173 = vmul.f32 %v2136, %v2167
      %v2174 = vmul.f32 %v2137, %v2167
      %v2175 = vmul.f32 %v2138, %v2167
      %v2176 = vmul.f32 %v2139, %v2167
      %v2177 = vmul.f32 %v2140, %v2167
      %v2178 = vmul.f32 %v2141, %v2167
      %v2179 = vmul.f32 %v2142, %v2167
      %v2180 = vmul.f32 %v2143, %v2167
      %v2181 = vmul.f32 %v2144, %v2167
      %v2182 = vmul.f32 %v2145, %v2167
      %v2183 = vmul.f32 %v2146, %v2167
      %v2184 = vmul.f32 %v2147, %v2167
      %v2185 = vmul.f32 %v2148, %v2167
      %v2186 = vmul.f32 %v2149, %v2167
      %v2187 = vmul.f32 %v2150, %v2167
      %v2188 = vmul.f32 %v2151, %v2167
      %v2189 = vmul.f32 %v2152, %v2167
      %v2190 = vmul.f32 %v2153, %v2167
      %v2191 = vmul.f32 %v2154, %v2167
      %v2192 = vmul.f32 %v2155, %v2167
      %v2193 = vmul.f32 %v2156, %v2167
      %v2194 = vmul.f32 %v2157, %v2167
      %v2195 = vmul.f32 %v2158, %v2167
      %v2196 = vmul.f32 %v2159, %v2167
      %v2197 = vmul.f32 %v2160, %v2167
      %v2198 = vmul.f32 %v2161, %v2167
      %v2199 = vmul.f32 %v2162, %v2167
      %v2200 = vadd.f32 %v2099, %v2168
      %v2201 = vadd.f32 %v2100, %v2169
      %v2202 = vadd.f32 %v2101, %v2170
      %v2203 = vadd.f32 %v2102, %v2171
      %v2204 = vadd.f32 %v2103, %v2172
      %v2205 = vadd.f32 %v2104, %v2173
      %v2206 = vadd.f32 %v2105, %v2174
      %v2207 = vadd.f32 %v2106, %v2175
      %v2208 = vadd.f32 %v2107, %v2176
      %v2209 = vadd.f32 %v2108, %v2177
      %v2210 = vadd.f32 %v2109, %v2178
      %v2211 = vadd.f32 %v2110, %v2179
      %v2212 = vadd.f32 %v2111, %v2180
      %v2213 = vadd.f32 %v2112, %v2181
      %v2214 = vadd.f32 %v2113, %v2182
      %v2215 = vadd.f32 %v2114, %v2183
      %v2216 = vadd.f32 %v2115, %v2184
      %v2217 = vadd.f32 %v2116, %v2185
      %v2218 = vadd.f32 %v2117, %v2186
      %v2219 = vadd.f32 %v2118, %v2187
      %v2220 = vadd.f32 %v2119, %v2188
      %v2221 = vadd.f32 %v2120, %v2189
      %v2222 = vadd.f32 %v2121, %v2190
      %v2223 = vadd.f32 %v2122, %v2191
      %v2224 = vadd.f32 %v2123, %v2192
      %v2225 = vadd.f32 %v2124, %v2193
      %v2226 = vadd.f32 %v2125, %v2194
      %v2227 = vadd.f32 %v2126, %v2195
      %v2228 = vadd.f32 %v2127, %v2196
      %v2229 = vadd.f32 %v2128, %v2197
      %v2230 = vadd.f32 %v2129, %v2198
      %v2231 = vadd.f32 %v2130, %v2199
      %2232 = vst.msk [vmem:[#allocation4] sm:$0xff] %vm1231, 0.0
      %2233 = vst.msk [vmem:[#allocation4 + $0x8] sm:$0xff] %vm1231, 0.0
      %2234 = vst.msk [vmem:[#allocation4 + $0x10] sm:$0x3] %vm1234, 0.0
      %2235 = vst.msk [vmem:[#allocation4 + $0x18] sm:$0xff] %vm1231, 0.0
      %2236 = vst.msk [vmem:[#allocation4 + $0x20] sm:$0xff] %vm1231, 0.0
      %2237 = vst.msk [vmem:[#allocation4 + $0x28] sm:$0x3] %vm1234, 0.0
      %2238 = vst.msk [vmem:[#allocation4 + $0x30] sm:$0xff] %vm1231, 0.0
      %2239 = vst.msk [vmem:[#allocation4 + $0x38] sm:$0xff] %vm1231, 0.0
      %2240 = vst.msk [vmem:[#allocation4 + $0x40] sm:$0x3] %vm1234, 0.0
      %2241 = vst.msk [vmem:[#allocation4 + $0x48] sm:$0xff] %vm1231, 0.0
      %2242 = vst.msk [vmem:[#allocation4 + $0x50] sm:$0xff] %vm1231, 0.0
      %2243 = vst.msk [vmem:[#allocation4 + $0x58] sm:$0x3] %vm1234, 0.0
      %2244 = vst.msk [vmem:[#allocation4 + $0x60] sm:$0xff] %vm1231, 0.0
      %2245 = vst.msk [vmem:[#allocation4 + $0x68] sm:$0xff] %vm1231, 0.0
      %2246 = vst.msk [vmem:[#allocation4 + $0x70] sm:$0x3] %vm1234, 0.0
      %2247 = vst.msk [vmem:[#allocation4 + $0x78] sm:$0xff] %vm1231, 0.0
      %2248 = vst.msk [vmem:[#allocation4 + $0x80] sm:$0xff] %vm1231, 0.0
      %2249 = vst.msk [vmem:[#allocation4 + $0x88] sm:$0x3] %vm1234, 0.0
      %2250 = vst.msk [vmem:[#allocation4 + $0x90] sm:$0xff] %vm1231, 0.0
      %2251 = vst.msk [vmem:[#allocation4 + $0x98] sm:$0xff] %vm1231, 0.0
      %2252 = vst.msk [vmem:[#allocation4 + $0xa0] sm:$0x3] %vm1234, 0.0
      %2253 = vst.msk [vmem:[#allocation4 + $0xa8] sm:$0xff] %vm1231, 0.0
      %2254 = vst.msk [vmem:[#allocation4 + $0xb0] sm:$0xff] %vm1231, 0.0
      %2255 = vst.msk [vmem:[#allocation4 + $0xb8] sm:$0x3] %vm1234, 0.0
      %2256 = vst.msk [vmem:[#allocation4 + $0xc0] sm:$0xff] %vm1231, 0.0
      %2257 = vst.msk [vmem:[#allocation4 + $0xc8] sm:$0xff] %vm1231, 0.0
      %2258 = vst.msk [vmem:[#allocation4 + $0xd0] sm:$0x3] %vm1234, 0.0
      %2259 = vst.msk [vmem:[#allocation4 + $0xd8] sm:$0xff] %vm1231, 0.0
      %2260 = vst.msk [vmem:[#allocation4 + $0xe0] sm:$0xff] %vm1231, 0.0
      %2261 = vst.msk [vmem:[#allocation4 + $0xe8] sm:$0x3] %vm1234, 0.0
      %2262 = vst.msk [vmem:[#allocation4 + $0xf0] sm:$0xff] %vm1231, 0.0
      %2263 = vst.msk [vmem:[#allocation4 + $0xf8] sm:$0xff] %vm1231, 0.0
      %2264 = vst.msk [vmem:[#allocation4 + $0x100] sm:$0x3] %vm1234, 0.0
      %2265 = vst.msk [vmem:[#allocation4 + $0x108] sm:$0xff] %vm1231, 0.0
      %2266 = vst.msk [vmem:[#allocation4 + $0x110] sm:$0xff] %vm1231, 0.0
      %2267 = vst.msk [vmem:[#allocation4 + $0x118] sm:$0x3] %vm1234, 0.0
      %2268 = vst.msk [vmem:[#allocation4 + $0x120] sm:$0xff] %vm1231, 0.0
      %2269 = vst.msk [vmem:[#allocation4 + $0x128] sm:$0xff] %vm1231, 0.0
      %2270 = vst.msk [vmem:[#allocation4 + $0x130] sm:$0x3] %vm1234, 0.0
      %2271 = vst.msk [vmem:[#allocation4 + $0x138] sm:$0xff] %vm1231, 0.0
      %2272 = vst.msk [vmem:[#allocation4 + $0x140] sm:$0xff] %vm1231, 0.0
      %2273 = vst.msk [vmem:[#allocation4 + $0x148] sm:$0x3] %vm1234, 0.0
      %2274 = vst.msk [vmem:[#allocation4 + $0x150] sm:$0xff] %vm1231, 0.0
      %2275 = vst.msk [vmem:[#allocation4 + $0x158] sm:$0xff] %vm1231, 0.0
      %2276 = vst.msk [vmem:[#allocation4 + $0x160] sm:$0x3] %vm1234, 0.0
      %2277 = vst.msk [vmem:[#allocation4 + $0x168] sm:$0xff] %vm1231, 0.0
      %2278 = vst.msk [vmem:[#allocation4 + $0x170] sm:$0xff] %vm1231, 0.0
      %2279 = vst.msk [vmem:[#allocation4 + $0x178] sm:$0x3] %vm1234, 0.0
      %2280 = vst.msk [vmem:[#allocation4 + $0x180] sm:$0xff] %vm1231, 0.0
      %2281 = vst.msk [vmem:[#allocation4 + $0x188] sm:$0xff] %vm1231, 0.0
      %2282 = vst.msk [vmem:[#allocation4 + $0x190] sm:$0x3] %vm1234, 0.0
      %2283 = vst.msk [vmem:[#allocation4 + $0x198] sm:$0xff] %vm1231, 0.0
      %2284 = vst.msk [vmem:[#allocation4 + $0x1a0] sm:$0xff] %vm1231, 0.0
      %2285 = vst.msk [vmem:[#allocation4 + $0x1a8] sm:$0x3] %vm1234, 0.0
      %2318 = vrot.lane.b32.xlu0 %v1199, 118
      %v2319 = vpop.permute.xlu0 %2318
      %2320 = vrot.lane.b32.xlu0 %v1200, 118
      %v2321 = vpop.permute.xlu0 %2320
      %2322 = vrot.lane.b32.xlu0 %v1201, 118
      %v2323 = vpop.permute.xlu0 %2322
      %2324 = vrot.lane.b32.xlu0 %v1202, 118
      %v2325 = vpop.permute.xlu0 %2324
      %2326 = vrot.lane.b32.xlu0 %v1203, 118
      %v2327 = vpop.permute.xlu0 %2326
      %2328 = vrot.lane.b32.xlu0 %v1204, 118
      %v2329 = vpop.permute.xlu0 %2328
      %2330 = vrot.lane.b32.xlu0 %v1205, 118
      %v2331 = vpop.permute.xlu0 %2330
      %2332 = vrot.lane.b32.xlu0 %v1206, 118
      %v2333 = vpop.permute.xlu0 %2332
      %2334 = vrot.lane.b32.xlu0 %v1207, 118
      %v2335 = vpop.permute.xlu0 %2334
      %2336 = vrot.lane.b32.xlu0 %v1208, 118
      %v2337 = vpop.permute.xlu0 %2336
      %2338 = vrot.lane.b32.xlu0 %v1209, 118
      %v2339 = vpop.permute.xlu0 %2338
      %2340 = vrot.lane.b32.xlu0 %v1210, 118
      %v2341 = vpop.permute.xlu0 %2340
      %2342 = vrot.lane.b32.xlu0 %v1211, 118
      %v2343 = vpop.permute.xlu0 %2342
      %2344 = vrot.lane.b32.xlu0 %v1212, 118
      %v2345 = vpop.permute.xlu0 %2344
      %2346 = vrot.lane.b32.xlu0 %v1213, 118
      %v2347 = vpop.permute.xlu0 %2346
      %2348 = vrot.lane.b32.xlu0 %v1214, 118
      %v2349 = vpop.permute.xlu0 %2348
      %2350 = vrot.lane.b32.xlu0 %v1215, 118
      %v2351 = vpop.permute.xlu0 %2350
      %2352 = vrot.lane.b32.xlu0 %v1216, 118
      %v2353 = vpop.permute.xlu0 %2352
      %2354 = vrot.lane.b32.xlu0 %v1217, 118
      %v2355 = vpop.permute.xlu0 %2354
      %2356 = vrot.lane.b32.xlu0 %v1218, 118
      %v2357 = vpop.permute.xlu0 %2356
      %2358 = vrot.lane.b32.xlu0 %v1219, 118
      %v2359 = vpop.permute.xlu0 %2358
      %2360 = vrot.lane.b32.xlu0 %v1220, 118
      %v2361 = vpop.permute.xlu0 %2360
      %2362 = vrot.lane.b32.xlu0 %v1221, 118
      %v2363 = vpop.permute.xlu0 %2362
      %2364 = vrot.lane.b32.xlu0 %v1222, 118
      %v2365 = vpop.permute.xlu0 %2364
      %2366 = vrot.lane.b32.xlu0 %v1223, 118
      %v2367 = vpop.permute.xlu0 %2366
      %2368 = vrot.lane.b32.xlu0 %v1224, 118
      %v2369 = vpop.permute.xlu0 %2368
      %2370 = vrot.lane.b32.xlu0 %v1225, 118
      %v2371 = vpop.permute.xlu0 %2370
      %2372 = vrot.lane.b32.xlu0 %v1226, 118
      %v2373 = vpop.permute.xlu0 %2372
      %2374 = vrot.lane.b32.xlu0 %v1227, 118
      %v2375 = vpop.permute.xlu0 %2374
      %2376 = vrot.lane.b32.xlu0 %v1228, 118
      %v2377 = vpop.permute.xlu0 %2376
      %2378 = vrot.lane.b32.xlu0 %v1229, 118
      %v2379 = vpop.permute.xlu0 %2378
      %2380 = vrot.lane.b32.xlu0 %v1230, 118
      %v2381 = vpop.permute.xlu0 %2380
      %s2414 = scalar_lea.vmem [#allocation4], 24
      %2415 = vst.msk [vmem:[%s2414 + $0x1] sm:$0xff] %vm1231, %v2319
      %2416 = vst.msk [vmem:[%s2414 + $0x9] sm:$0xff] %vm1231, %v2321
      %2417 = vst.msk [vmem:[%s2414 + $0x19] sm:$0xff] %vm1231, %v2323
      %2418 = vst.msk [vmem:[%s2414 + $0x21] sm:$0xff] %vm1231, %v2325
      %2419 = vst.msk [vmem:[%s2414 + $0x31] sm:$0xff] %vm1231, %v2327
      %2420 = vst.msk [vmem:[%s2414 + $0x39] sm:$0xff] %vm1231, %v2329
      %2421 = vst.msk [vmem:[%s2414 + $0x49] sm:$0xff] %vm1231, %v2331
      %2422 = vst.msk [vmem:[%s2414 + $0x51] sm:$0xff] %vm1231, %v2333
      %2423 = vst.msk [vmem:[%s2414 + $0x61] sm:$0xff] %vm1231, %v2335
      %2424 = vst.msk [vmem:[%s2414 + $0x69] sm:$0xff] %vm1231, %v2337
      %2425 = vst.msk [vmem:[%s2414 + $0x79] sm:$0xff] %vm1231, %v2339
      %2426 = vst.msk [vmem:[%s2414 + $0x81] sm:$0xff] %vm1231, %v2341
      %2427 = vst.msk [vmem:[%s2414 + $0x91] sm:$0xff] %vm1231, %v2343
      %2428 = vst.msk [vmem:[%s2414 + $0x99] sm:$0xff] %vm1231, %v2345
      %2429 = vst.msk [vmem:[%s2414 + $0xa9] sm:$0xff] %vm1231, %v2347
      %2430 = vst.msk [vmem:[%s2414 + $0xb1] sm:$0xff] %vm1231, %v2349
      %2431 = vst.msk [vmem:[%s2414 + $0xc1] sm:$0xff] %vm1231, %v2351
      %2432 = vst.msk [vmem:[%s2414 + $0xc9] sm:$0xff] %vm1231, %v2353
      %2433 = vst.msk [vmem:[%s2414 + $0xd9] sm:$0xff] %vm1231, %v2355
      %2434 = vst.msk [vmem:[%s2414 + $0xe1] sm:$0xff] %vm1231, %v2357
      %2435 = vst.msk [vmem:[%s2414 + $0xf1] sm:$0xff] %vm1231, %v2359
      %2436 = vst.msk [vmem:[%s2414 + $0xf9] sm:$0xff] %vm1231, %v2361
      %2437 = vst.msk [vmem:[%s2414 + $0x109] sm:$0xff] %vm1231, %v2363
      %2438 = vst.msk [vmem:[%s2414 + $0x111] sm:$0xff] %vm1231, %v2365
      %2439 = vst.msk [vmem:[%s2414 + $0x121] sm:$0xff] %vm1231, %v2367
      %2440 = vst.msk [vmem:[%s2414 + $0x129] sm:$0xff] %vm1231, %v2369
      %2441 = vst.msk [vmem:[%s2414 + $0x139] sm:$0xff] %vm1231, %v2371
      %2442 = vst.msk [vmem:[%s2414 + $0x141] sm:$0xff] %vm1231, %v2373
      %2443 = vst.msk [vmem:[%s2414 + $0x151] sm:$0xff] %vm1231, %v2375
      %2444 = vst.msk [vmem:[%s2414 + $0x159] sm:$0xff] %vm1231, %v2377
      %2445 = vst.msk [vmem:[%s2414 + $0x169] sm:$0xff] %vm1231, %v2379
      %2446 = vst.msk [vmem:[%s2414 + $0x171] sm:$0xff] %vm1231, %v2381
      %v2447 = vld [vmem:[#allocation4] sm:$0xff]
      %v2448 = vld [vmem:[#allocation4 + $0x8] sm:$0xff]
      %v2449 = vld [vmem:[#allocation4 + $0x18] sm:$0xff]
      %v2450 = vld [vmem:[#allocation4 + $0x20] sm:$0xff]
      %v2451 = vld [vmem:[#allocation4 + $0x30] sm:$0xff]
      %v2452 = vld [vmem:[#allocation4 + $0x38] sm:$0xff]
      %v2453 = vld [vmem:[#allocation4 + $0x48] sm:$0xff]
      %v2454 = vld [vmem:[#allocation4 + $0x50] sm:$0xff]
      %v2455 = vld [vmem:[#allocation4 + $0x60] sm:$0xff]
      %v2456 = vld [vmem:[#allocation4 + $0x68] sm:$0xff]
      %v2457 = vld [vmem:[#allocation4 + $0x78] sm:$0xff]
      %v2458 = vld [vmem:[#allocation4 + $0x80] sm:$0xff]
      %v2459 = vld [vmem:[#allocation4 + $0x90] sm:$0xff]
      %v2460 = vld [vmem:[#allocation4 + $0x98] sm:$0xff]
      %v2461 = vld [vmem:[#allocation4 + $0xa8] sm:$0xff]
      %v2462 = vld [vmem:[#allocation4 + $0xb0] sm:$0xff]
      %v2463 = vld [vmem:[#allocation4 + $0xc0] sm:$0xff]
      %v2464 = vld [vmem:[#allocation4 + $0xc8] sm:$0xff]
      %v2465 = vld [vmem:[#allocation4 + $0xd8] sm:$0xff]
      %v2466 = vld [vmem:[#allocation4 + $0xe0] sm:$0xff]
      %v2467 = vld [vmem:[#allocation4 + $0xf0] sm:$0xff]
      %v2468 = vld [vmem:[#allocation4 + $0xf8] sm:$0xff]
      %v2469 = vld [vmem:[#allocation4 + $0x108] sm:$0xff]
      %v2470 = vld [vmem:[#allocation4 + $0x110] sm:$0xff]
      %v2471 = vld [vmem:[#allocation4 + $0x120] sm:$0xff]
      %v2472 = vld [vmem:[#allocation4 + $0x128] sm:$0xff]
      %v2473 = vld [vmem:[#allocation4 + $0x138] sm:$0xff]
      %v2474 = vld [vmem:[#allocation4 + $0x140] sm:$0xff]
      %v2475 = vld [vmem:[#allocation4 + $0x150] sm:$0xff]
      %v2476 = vld [vmem:[#allocation4 + $0x158] sm:$0xff]
      %v2477 = vld [vmem:[#allocation4 + $0x168] sm:$0xff]
      %v2478 = vld [vmem:[#allocation4 + $0x170] sm:$0xff]
      %v2479 = vld [vmem:[%s3] sm:$0x1]
      %v2480 = vlaneseq
      %v2481 = vshrl.u32 %v2480, 7
      %v2482 = vsub.s32 0, %v2481
      %v2483 = vrot.slane %v2479, %v2482
      %v2484 = vmul.f32 %v2447, %v2483
      %v2485 = vmul.f32 %v2448, %v2483
      %v2486 = vmul.f32 %v2449, %v2483
      %v2487 = vmul.f32 %v2450, %v2483
      %v2488 = vmul.f32 %v2451, %v2483
      %v2489 = vmul.f32 %v2452, %v2483
      %v2490 = vmul.f32 %v2453, %v2483
      %v2491 = vmul.f32 %v2454, %v2483
      %v2492 = vmul.f32 %v2455, %v2483
      %v2493 = vmul.f32 %v2456, %v2483
      %v2494 = vmul.f32 %v2457, %v2483
      %v2495 = vmul.f32 %v2458, %v2483
      %v2496 = vmul.f32 %v2459, %v2483
      %v2497 = vmul.f32 %v2460, %v2483
      %v2498 = vmul.f32 %v2461, %v2483
      %v2499 = vmul.f32 %v2462, %v2483
      %v2500 = vmul.f32 %v2463, %v2483
      %v2501 = vmul.f32 %v2464, %v2483
      %v2502 = vmul.f32 %v2465, %v2483
      %v2503 = vmul.f32 %v2466, %v2483
      %v2504 = vmul.f32 %v2467, %v2483
      %v2505 = vmul.f32 %v2468, %v2483
      %v2506 = vmul.f32 %v2469, %v2483
      %v2507 = vmul.f32 %v2470, %v2483
      %v2508 = vmul.f32 %v2471, %v2483
      %v2509 = vmul.f32 %v2472, %v2483
      %v2510 = vmul.f32 %v2473, %v2483
      %v2511 = vmul.f32 %v2474, %v2483
      %v2512 = vmul.f32 %v2475, %v2483
      %v2513 = vmul.f32 %v2476, %v2483
      %v2514 = vmul.f32 %v2477, %v2483
      %v2515 = vmul.f32 %v2478, %v2483
      %v2516 = vadd.f32 %v2484, 0.0
      %v2517 = vadd.f32 %v2485, 0.0
      %v2518 = vadd.f32 %v2486, 0.0
      %v2519 = vadd.f32 %v2487, 0.0
      %v2520 = vadd.f32 %v2488, 0.0
      %v2521 = vadd.f32 %v2489, 0.0
      %v2522 = vadd.f32 %v2490, 0.0
      %v2523 = vadd.f32 %v2491, 0.0
      %v2524 = vadd.f32 %v2492, 0.0
      %v2525 = vadd.f32 %v2493, 0.0
      %v2526 = vadd.f32 %v2494, 0.0
      %v2527 = vadd.f32 %v2495, 0.0
      %v2528 = vadd.f32 %v2496, 0.0
      %v2529 = vadd.f32 %v2497, 0.0
      %v2530 = vadd.f32 %v2498, 0.0
      %v2531 = vadd.f32 %v2499, 0.0
      %v2532 = vadd.f32 %v2500, 0.0
      %v2533 = vadd.f32 %v2501, 0.0
      %v2534 = vadd.f32 %v2502, 0.0
      %v2535 = vadd.f32 %v2503, 0.0
      %v2536 = vadd.f32 %v2504, 0.0
      %v2537 = vadd.f32 %v2505, 0.0
      %v2538 = vadd.f32 %v2506, 0.0
      %v2539 = vadd.f32 %v2507, 0.0
      %v2540 = vadd.f32 %v2508, 0.0
      %v2541 = vadd.f32 %v2509, 0.0
      %v2542 = vadd.f32 %v2510, 0.0
      %v2543 = vadd.f32 %v2511, 0.0
      %v2544 = vadd.f32 %v2512, 0.0
      %v2545 = vadd.f32 %v2513, 0.0
      %v2546 = vadd.f32 %v2514, 0.0
      %v2547 = vadd.f32 %v2515, 0.0
      %v2548 = vld [vmem:[#allocation4 + $0x1] sm:$0xff]
      %v2549 = vld [vmem:[#allocation4 + $0x9] sm:$0xff]
      %v2550 = vld [vmem:[#allocation4 + $0x19] sm:$0xff]
      %v2551 = vld [vmem:[#allocation4 + $0x21] sm:$0xff]
      %v2552 = vld [vmem:[#allocation4 + $0x31] sm:$0xff]
      %v2553 = vld [vmem:[#allocation4 + $0x39] sm:$0xff]
      %v2554 = vld [vmem:[#allocation4 + $0x49] sm:$0xff]
      %v2555 = vld [vmem:[#allocation4 + $0x51] sm:$0xff]
      %v2556 = vld [vmem:[#allocation4 + $0x61] sm:$0xff]
      %v2557 = vld [vmem:[#allocation4 + $0x69] sm:$0xff]
      %v2558 = vld [vmem:[#allocation4 + $0x79] sm:$0xff]
      %v2559 = vld [vmem:[#allocation4 + $0x81] sm:$0xff]
      %v2560 = vld [vmem:[#allocation4 + $0x91] sm:$0xff]
      %v2561 = vld [vmem:[#allocation4 + $0x99] sm:$0xff]
      %v2562 = vld [vmem:[#allocation4 + $0xa9] sm:$0xff]
      %v2563 = vld [vmem:[#allocation4 + $0xb1] sm:$0xff]
      %v2564 = vld [vmem:[#allocation4 + $0xc1] sm:$0xff]
      %v2565 = vld [vmem:[#allocation4 + $0xc9] sm:$0xff]
      %v2566 = vld [vmem:[#allocation4 + $0xd9] sm:$0xff]
      %v2567 = vld [vmem:[#allocation4 + $0xe1] sm:$0xff]
      %v2568 = vld [vmem:[#allocation4 + $0xf1] sm:$0xff]
      %v2569 = vld [vmem:[#allocation4 + $0xf9] sm:$0xff]
      %v2570 = vld [vmem:[#allocation4 + $0x109] sm:$0xff]
      %v2571 = vld [vmem:[#allocation4 + $0x111] sm:$0xff]
      %v2572 = vld [vmem:[#allocation4 + $0x121] sm:$0xff]
      %v2573 = vld [vmem:[#allocation4 + $0x129] sm:$0xff]
      %v2574 = vld [vmem:[#allocation4 + $0x139] sm:$0xff]
      %v2575 = vld [vmem:[#allocation4 + $0x141] sm:$0xff]
      %v2576 = vld [vmem:[#allocation4 + $0x151] sm:$0xff]
      %v2577 = vld [vmem:[#allocation4 + $0x159] sm:$0xff]
      %v2578 = vld [vmem:[#allocation4 + $0x169] sm:$0xff]
      %v2579 = vld [vmem:[#allocation4 + $0x171] sm:$0xff]
      %v2580 = vld [vmem:[%s3 + $0x1] sm:$0x1]
      %v2581 = vlaneseq
      %v2582 = vshrl.u32 %v2581, 7
      %v2583 = vsub.s32 0, %v2582
      %v2584 = vrot.slane %v2580, %v2583
      %v2585 = vmul.f32 %v2548, %v2584
      %v2586 = vmul.f32 %v2549, %v2584
      %v2587 = vmul.f32 %v2550, %v2584
      %v2588 = vmul.f32 %v2551, %v2584
      %v2589 = vmul.f32 %v2552, %v2584
      %v2590 = vmul.f32 %v2553, %v2584
      %v2591 = vmul.f32 %v2554, %v2584
      %v2592 = vmul.f32 %v2555, %v2584
      %v2593 = vmul.f32 %v2556, %v2584
      %v2594 = vmul.f32 %v2557, %v2584
      %v2595 = vmul.f32 %v2558, %v2584
      %v2596 = vmul.f32 %v2559, %v2584
      %v2597 = vmul.f32 %v2560, %v2584
      %v2598 = vmul.f32 %v2561, %v2584
      %v2599 = vmul.f32 %v2562, %v2584
      %v2600 = vmul.f32 %v2563, %v2584
      %v2601 = vmul.f32 %v2564, %v2584
      %v2602 = vmul.f32 %v2565, %v2584
      %v2603 = vmul.f32 %v2566, %v2584
      %v2604 = vmul.f32 %v2567, %v2584
      %v2605 = vmul.f32 %v2568, %v2584
      %v2606 = vmul.f32 %v2569, %v2584
      %v2607 = vmul.f32 %v2570, %v2584
      %v2608 = vmul.f32 %v2571, %v2584
      %v2609 = vmul.f32 %v2572, %v2584
      %v2610 = vmul.f32 %v2573, %v2584
      %v2611 = vmul.f32 %v2574, %v2584
      %v2612 = vmul.f32 %v2575, %v2584
      %v2613 = vmul.f32 %v2576, %v2584
      %v2614 = vmul.f32 %v2577, %v2584
      %v2615 = vmul.f32 %v2578, %v2584
      %v2616 = vmul.f32 %v2579, %v2584
      %v2617 = vadd.f32 %v2516, %v2585
      %v2618 = vadd.f32 %v2517, %v2586
      %v2619 = vadd.f32 %v2518, %v2587
      %v2620 = vadd.f32 %v2519, %v2588
      %v2621 = vadd.f32 %v2520, %v2589
      %v2622 = vadd.f32 %v2521, %v2590
      %v2623 = vadd.f32 %v2522, %v2591
      %v2624 = vadd.f32 %v2523, %v2592
      %v2625 = vadd.f32 %v2524, %v2593
      %v2626 = vadd.f32 %v2525, %v2594
      %v2627 = vadd.f32 %v2526, %v2595
      %v2628 = vadd.f32 %v2527, %v2596
      %v2629 = vadd.f32 %v2528, %v2597
      %v2630 = vadd.f32 %v2529, %v2598
      %v2631 = vadd.f32 %v2530, %v2599
      %v2632 = vadd.f32 %v2531, %v2600
      %v2633 = vadd.f32 %v2532, %v2601
      %v2634 = vadd.f32 %v2533, %v2602
      %v2635 = vadd.f32 %v2534, %v2603
      %v2636 = vadd.f32 %v2535, %v2604
      %v2637 = vadd.f32 %v2536, %v2605
      %v2638 = vadd.f32 %v2537, %v2606
      %v2639 = vadd.f32 %v2538, %v2607
      %v2640 = vadd.f32 %v2539, %v2608
      %v2641 = vadd.f32 %v2540, %v2609
      %v2642 = vadd.f32 %v2541, %v2610
      %v2643 = vadd.f32 %v2542, %v2611
      %v2644 = vadd.f32 %v2543, %v2612
      %v2645 = vadd.f32 %v2544, %v2613
      %v2646 = vadd.f32 %v2545, %v2614
      %v2647 = vadd.f32 %v2546, %v2615
      %v2648 = vadd.f32 %v2547, %v2616
      %v2649 = vld [vmem:[#allocation4 + $0x2] sm:$0xff]
      %v2650 = vld [vmem:[#allocation4 + $0xa] sm:$0xff]
      %v2651 = vld [vmem:[#allocation4 + $0x1a] sm:$0xff]
      %v2652 = vld [vmem:[#allocation4 + $0x22] sm:$0xff]
      %v2653 = vld [vmem:[#allocation4 + $0x32] sm:$0xff]
      %v2654 = vld [vmem:[#allocation4 + $0x3a] sm:$0xff]
      %v2655 = vld [vmem:[#allocation4 + $0x4a] sm:$0xff]
      %v2656 = vld [vmem:[#allocation4 + $0x52] sm:$0xff]
      %v2657 = vld [vmem:[#allocation4 + $0x62] sm:$0xff]
      %v2658 = vld [vmem:[#allocation4 + $0x6a] sm:$0xff]
      %v2659 = vld [vmem:[#allocation4 + $0x7a] sm:$0xff]
      %v2660 = vld [vmem:[#allocation4 + $0x82] sm:$0xff]
      %v2661 = vld [vmem:[#allocation4 + $0x92] sm:$0xff]
      %v2662 = vld [vmem:[#allocation4 + $0x9a] sm:$0xff]
      %v2663 = vld [vmem:[#allocation4 + $0xaa] sm:$0xff]
      %v2664 = vld [vmem:[#allocation4 + $0xb2] sm:$0xff]
      %v2665 = vld [vmem:[#allocation4 + $0xc2] sm:$0xff]
      %v2666 = vld [vmem:[#allocation4 + $0xca] sm:$0xff]
      %v2667 = vld [vmem:[#allocation4 + $0xda] sm:$0xff]
      %v2668 = vld [vmem:[#allocation4 + $0xe2] sm:$0xff]
      %v2669 = vld [vmem:[#allocation4 + $0xf2] sm:$0xff]
      %v2670 = vld [vmem:[#allocation4 + $0xfa] sm:$0xff]
      %v2671 = vld [vmem:[#allocation4 + $0x10a] sm:$0xff]
      %v2672 = vld [vmem:[#allocation4 + $0x112] sm:$0xff]
      %v2673 = vld [vmem:[#allocation4 + $0x122] sm:$0xff]
      %v2674 = vld [vmem:[#allocation4 + $0x12a] sm:$0xff]
      %v2675 = vld [vmem:[#allocation4 + $0x13a] sm:$0xff]
      %v2676 = vld [vmem:[#allocation4 + $0x142] sm:$0xff]
      %v2677 = vld [vmem:[#allocation4 + $0x152] sm:$0xff]
      %v2678 = vld [vmem:[#allocation4 + $0x15a] sm:$0xff]
      %v2679 = vld [vmem:[#allocation4 + $0x16a] sm:$0xff]
      %v2680 = vld [vmem:[#allocation4 + $0x172] sm:$0xff]
      %v2681 = vld [vmem:[%s3 + $0x2] sm:$0x1]
      %v2682 = vlaneseq
      %v2683 = vshrl.u32 %v2682, 7
      %v2684 = vsub.s32 0, %v2683
      %v2685 = vrot.slane %v2681, %v2684
      %v2686 = vmul.f32 %v2649, %v2685
      %v2687 = vmul.f32 %v2650, %v2685
      %v2688 = vmul.f32 %v2651, %v2685
      %v2689 = vmul.f32 %v2652, %v2685
      %v2690 = vmul.f32 %v2653, %v2685
      %v2691 = vmul.f32 %v2654, %v2685
      %v2692 = vmul.f32 %v2655, %v2685
      %v2693 = vmul.f32 %v2656, %v2685
      %v2694 = vmul.f32 %v2657, %v2685
      %v2695 = vmul.f32 %v2658, %v2685
      %v2696 = vmul.f32 %v2659, %v2685
      %v2697 = vmul.f32 %v2660, %v2685
      %v2698 = vmul.f32 %v2661, %v2685
      %v2699 = vmul.f32 %v2662, %v2685
      %v2700 = vmul.f32 %v2663, %v2685
      %v2701 = vmul.f32 %v2664, %v2685
      %v2702 = vmul.f32 %v2665, %v2685
      %v2703 = vmul.f32 %v2666, %v2685
      %v2704 = vmul.f32 %v2667, %v2685
      %v2705 = vmul.f32 %v2668, %v2685
      %v2706 = vmul.f32 %v2669, %v2685
      %v2707 = vmul.f32 %v2670, %v2685
      %v2708 = vmul.f32 %v2671, %v2685
      %v2709 = vmul.f32 %v2672, %v2685
      %v2710 = vmul.f32 %v2673, %v2685
      %v2711 = vmul.f32 %v2674, %v2685
      %v2712 = vmul.f32 %v2675, %v2685
      %v2713 = vmul.f32 %v2676, %v2685
      %v2714 = vmul.f32 %v2677, %v2685
      %v2715 = vmul.f32 %v2678, %v2685
      %v2716 = vmul.f32 %v2679, %v2685
      %v2717 = vmul.f32 %v2680, %v2685
      %v2718 = vadd.f32 %v2617, %v2686
      %v2719 = vadd.f32 %v2618, %v2687
      %v2720 = vadd.f32 %v2619, %v2688
      %v2721 = vadd.f32 %v2620, %v2689
      %v2722 = vadd.f32 %v2621, %v2690
      %v2723 = vadd.f32 %v2622, %v2691
      %v2724 = vadd.f32 %v2623, %v2692
      %v2725 = vadd.f32 %v2624, %v2693
      %v2726 = vadd.f32 %v2625, %v2694
      %v2727 = vadd.f32 %v2626, %v2695
      %v2728 = vadd.f32 %v2627, %v2696
      %v2729 = vadd.f32 %v2628, %v2697
      %v2730 = vadd.f32 %v2629, %v2698
      %v2731 = vadd.f32 %v2630, %v2699
      %v2732 = vadd.f32 %v2631, %v2700
      %v2733 = vadd.f32 %v2632, %v2701
      %v2734 = vadd.f32 %v2633, %v2702
      %v2735 = vadd.f32 %v2634, %v2703
      %v2736 = vadd.f32 %v2635, %v2704
      %v2737 = vadd.f32 %v2636, %v2705
      %v2738 = vadd.f32 %v2637, %v2706
      %v2739 = vadd.f32 %v2638, %v2707
      %v2740 = vadd.f32 %v2639, %v2708
      %v2741 = vadd.f32 %v2640, %v2709
      %v2742 = vadd.f32 %v2641, %v2710
      %v2743 = vadd.f32 %v2642, %v2711
      %v2744 = vadd.f32 %v2643, %v2712
      %v2745 = vadd.f32 %v2644, %v2713
      %v2746 = vadd.f32 %v2645, %v2714
      %v2747 = vadd.f32 %v2646, %v2715
      %v2748 = vadd.f32 %v2647, %v2716
      %v2749 = vadd.f32 %v2648, %v2717
      %v2750 = vld [vmem:[%s2414] sm:$0xff]
      %v2751 = vld [vmem:[%s2414 + $0x8] sm:$0xff]
      %v2752 = vld [vmem:[%s2414 + $0x18] sm:$0xff]
      %v2753 = vld [vmem:[%s2414 + $0x20] sm:$0xff]
      %v2754 = vld [vmem:[%s2414 + $0x30] sm:$0xff]
      %v2755 = vld [vmem:[%s2414 + $0x38] sm:$0xff]
      %v2756 = vld [vmem:[%s2414 + $0x48] sm:$0xff]
      %v2757 = vld [vmem:[%s2414 + $0x50] sm:$0xff]
      %v2758 = vld [vmem:[%s2414 + $0x60] sm:$0xff]
      %v2759 = vld [vmem:[%s2414 + $0x68] sm:$0xff]
      %v2760 = vld [vmem:[%s2414 + $0x78] sm:$0xff]
      %v2761 = vld [vmem:[%s2414 + $0x80] sm:$0xff]
      %v2762 = vld [vmem:[%s2414 + $0x90] sm:$0xff]
      %v2763 = vld [vmem:[%s2414 + $0x98] sm:$0xff]
      %v2764 = vld [vmem:[%s2414 + $0xa8] sm:$0xff]
      %v2765 = vld [vmem:[%s2414 + $0xb0] sm:$0xff]
      %v2766 = vld [vmem:[%s2414 + $0xc0] sm:$0xff]
      %v2767 = vld [vmem:[%s2414 + $0xc8] sm:$0xff]
      %v2768 = vld [vmem:[%s2414 + $0xd8] sm:$0xff]
      %v2769 = vld [vmem:[%s2414 + $0xe0] sm:$0xff]
      %v2770 = vld [vmem:[%s2414 + $0xf0] sm:$0xff]
      %v2771 = vld [vmem:[%s2414 + $0xf8] sm:$0xff]
      %v2772 = vld [vmem:[%s2414 + $0x108] sm:$0xff]
      %v2773 = vld [vmem:[%s2414 + $0x110] sm:$0xff]
      %v2774 = vld [vmem:[%s2414 + $0x120] sm:$0xff]
      %v2775 = vld [vmem:[%s2414 + $0x128] sm:$0xff]
      %v2776 = vld [vmem:[%s2414 + $0x138] sm:$0xff]
      %v2777 = vld [vmem:[%s2414 + $0x140] sm:$0xff]
      %v2778 = vld [vmem:[%s2414 + $0x150] sm:$0xff]
      %v2779 = vld [vmem:[%s2414 + $0x158] sm:$0xff]
      %v2780 = vld [vmem:[%s2414 + $0x168] sm:$0xff]
      %v2781 = vld [vmem:[%s2414 + $0x170] sm:$0xff]
      %s2782 = scalar_lea.vmem %s3, 4
      %v2783 = vld [vmem:[%s2782] sm:$0x1]
      %v2784 = vlaneseq
      %v2785 = vshrl.u32 %v2784, 7
      %v2786 = vsub.s32 0, %v2785
      %v2787 = vrot.slane %v2783, %v2786
      %v2788 = vmul.f32 %v2750, %v2787
      %v2789 = vmul.f32 %v2751, %v2787
      %v2790 = vmul.f32 %v2752, %v2787
      %v2791 = vmul.f32 %v2753, %v2787
      %v2792 = vmul.f32 %v2754, %v2787
      %v2793 = vmul.f32 %v2755, %v2787
      %v2794 = vmul.f32 %v2756, %v2787
      %v2795 = vmul.f32 %v2757, %v2787
      %v2796 = vmul.f32 %v2758, %v2787
      %v2797 = vmul.f32 %v2759, %v2787
      %v2798 = vmul.f32 %v2760, %v2787
      %v2799 = vmul.f32 %v2761, %v2787
      %v2800 = vmul.f32 %v2762, %v2787
      %v2801 = vmul.f32 %v2763, %v2787
      %v2802 = vmul.f32 %v2764, %v2787
      %v2803 = vmul.f32 %v2765, %v2787
      %v2804 = vmul.f32 %v2766, %v2787
      %v2805 = vmul.f32 %v2767, %v2787
      %v2806 = vmul.f32 %v2768, %v2787
      %v2807 = vmul.f32 %v2769, %v2787
      %v2808 = vmul.f32 %v2770, %v2787
      %v2809 = vmul.f32 %v2771, %v2787
      %v2810 = vmul.f32 %v2772, %v2787
      %v2811 = vmul.f32 %v2773, %v2787
      %v2812 = vmul.f32 %v2774, %v2787
      %v2813 = vmul.f32 %v2775, %v2787
      %v2814 = vmul.f32 %v2776, %v2787
      %v2815 = vmul.f32 %v2777, %v2787
      %v2816 = vmul.f32 %v2778, %v2787
      %v2817 = vmul.f32 %v2779, %v2787
      %v2818 = vmul.f32 %v2780, %v2787
      %v2819 = vmul.f32 %v2781, %v2787
      %v2820 = vadd.f32 %v2718, %v2788
      %v2821 = vadd.f32 %v2719, %v2789
      %v2822 = vadd.f32 %v2720, %v2790
      %v2823 = vadd.f32 %v2721, %v2791
      %v2824 = vadd.f32 %v2722, %v2792
      %v2825 = vadd.f32 %v2723, %v2793
      %v2826 = vadd.f32 %v2724, %v2794
      %v2827 = vadd.f32 %v2725, %v2795
      %v2828 = vadd.f32 %v2726, %v2796
      %v2829 = vadd.f32 %v2727, %v2797
      %v2830 = vadd.f32 %v2728, %v2798
      %v2831 = vadd.f32 %v2729, %v2799
      %v2832 = vadd.f32 %v2730, %v2800
      %v2833 = vadd.f32 %v2731, %v2801
      %v2834 = vadd.f32 %v2732, %v2802
      %v2835 = vadd.f32 %v2733, %v2803
      %v2836 = vadd.f32 %v2734, %v2804
      %v2837 = vadd.f32 %v2735, %v2805
      %v2838 = vadd.f32 %v2736, %v2806
      %v2839 = vadd.f32 %v2737, %v2807
      %v2840 = vadd.f32 %v2738, %v2808
      %v2841 = vadd.f32 %v2739, %v2809
      %v2842 = vadd.f32 %v2740, %v2810
      %v2843 = vadd.f32 %v2741, %v2811
      %v2844 = vadd.f32 %v2742, %v2812
      %v2845 = vadd.f32 %v2743, %v2813
      %v2846 = vadd.f32 %v2744, %v2814
      %v2847 = vadd.f32 %v2745, %v2815
      %v2848 = vadd.f32 %v2746, %v2816
      %v2849 = vadd.f32 %v2747, %v2817
      %v2850 = vadd.f32 %v2748, %v2818
      %v2851 = vadd.f32 %v2749, %v2819
      %v2852 = vld [vmem:[%s2414 + $0x1] sm:$0xff]
      %v2853 = vld [vmem:[%s2414 + $0x9] sm:$0xff]
      %v2854 = vld [vmem:[%s2414 + $0x19] sm:$0xff]
      %v2855 = vld [vmem:[%s2414 + $0x21] sm:$0xff]
      %v2856 = vld [vmem:[%s2414 + $0x31] sm:$0xff]
      %v2857 = vld [vmem:[%s2414 + $0x39] sm:$0xff]
      %v2858 = vld [vmem:[%s2414 + $0x49] sm:$0xff]
      %v2859 = vld [vmem:[%s2414 + $0x51] sm:$0xff]
      %v2860 = vld [vmem:[%s2414 + $0x61] sm:$0xff]
      %v2861 = vld [vmem:[%s2414 + $0x69] sm:$0xff]
      %v2862 = vld [vmem:[%s2414 + $0x79] sm:$0xff]
      %v2863 = vld [vmem:[%s2414 + $0x81] sm:$0xff]
      %v2864 = vld [vmem:[%s2414 + $0x91] sm:$0xff]
      %v2865 = vld [vmem:[%s2414 + $0x99] sm:$0xff]
      %v2866 = vld [vmem:[%s2414 + $0xa9] sm:$0xff]
      %v2867 = vld [vmem:[%s2414 + $0xb1] sm:$0xff]
      %v2868 = vld [vmem:[%s2414 + $0xc1] sm:$0xff]
      %v2869 = vld [vmem:[%s2414 + $0xc9] sm:$0xff]
      %v2870 = vld [vmem:[%s2414 + $0xd9] sm:$0xff]
      %v2871 = vld [vmem:[%s2414 + $0xe1] sm:$0xff]
      %v2872 = vld [vmem:[%s2414 + $0xf1] sm:$0xff]
      %v2873 = vld [vmem:[%s2414 + $0xf9] sm:$0xff]
      %v2874 = vld [vmem:[%s2414 + $0x109] sm:$0xff]
      %v2875 = vld [vmem:[%s2414 + $0x111] sm:$0xff]
      %v2876 = vld [vmem:[%s2414 + $0x121] sm:$0xff]
      %v2877 = vld [vmem:[%s2414 + $0x129] sm:$0xff]
      %v2878 = vld [vmem:[%s2414 + $0x139] sm:$0xff]
      %v2879 = vld [vmem:[%s2414 + $0x141] sm:$0xff]
      %v2880 = vld [vmem:[%s2414 + $0x151] sm:$0xff]
      %v2881 = vld [vmem:[%s2414 + $0x159] sm:$0xff]
      %v2882 = vld [vmem:[%s2414 + $0x169] sm:$0xff]
      %v2883 = vld [vmem:[%s2414 + $0x171] sm:$0xff]
      %v2884 = vld [vmem:[%s2782 + $0x1] sm:$0x1]
      %v2885 = vlaneseq
      %v2886 = vshrl.u32 %v2885, 7
      %v2887 = vsub.s32 0, %v2886
      %v2888 = vrot.slane %v2884, %v2887
      %v2889 = vmul.f32 %v2852, %v2888
      %v2890 = vmul.f32 %v2853, %v2888
      %v2891 = vmul.f32 %v2854, %v2888
      %v2892 = vmul.f32 %v2855, %v2888
      %v2893 = vmul.f32 %v2856, %v2888
      %v2894 = vmul.f32 %v2857, %v2888
      %v2895 = vmul.f32 %v2858, %v2888
      %v2896 = vmul.f32 %v2859, %v2888
      %v2897 = vmul.f32 %v2860, %v2888
      %v2898 = vmul.f32 %v2861, %v2888
      %v2899 = vmul.f32 %v2862, %v2888
      %v2900 = vmul.f32 %v2863, %v2888
      %v2901 = vmul.f32 %v2864, %v2888
      %v2902 = vmul.f32 %v2865, %v2888
      %v2903 = vmul.f32 %v2866, %v2888
      %v2904 = vmul.f32 %v2867, %v2888
      %v2905 = vmul.f32 %v2868, %v2888
      %v2906 = vmul.f32 %v2869, %v2888
      %v2907 = vmul.f32 %v2870, %v2888
      %v2908 = vmul.f32 %v2871, %v2888
      %v2909 = vmul.f32 %v2872, %v2888
      %v2910 = vmul.f32 %v2873, %v2888
      %v2911 = vmul.f32 %v2874, %v2888
      %v2912 = vmul.f32 %v2875, %v2888
      %v2913 = vmul.f32 %v2876, %v2888
      %v2914 = vmul.f32 %v2877, %v2888
      %v2915 = vmul.f32 %v2878, %v2888
      %v2916 = vmul.f32 %v2879, %v2888
      %v2917 = vmul.f32 %v2880, %v2888
      %v2918 = vmul.f32 %v2881, %v2888
      %v2919 = vmul.f32 %v2882, %v2888
      %v2920 = vmul.f32 %v2883, %v2888
      %v2921 = vadd.f32 %v2820, %v2889
      %v2922 = vadd.f32 %v2821, %v2890
      %v2923 = vadd.f32 %v2822, %v2891
      %v2924 = vadd.f32 %v2823, %v2892
      %v2925 = vadd.f32 %v2824, %v2893
      %v2926 = vadd.f32 %v2825, %v2894
      %v2927 = vadd.f32 %v2826, %v2895
      %v2928 = vadd.f32 %v2827, %v2896
      %v2929 = vadd.f32 %v2828, %v2897
      %v2930 = vadd.f32 %v2829, %v2898
      %v2931 = vadd.f32 %v2830, %v2899
      %v2932 = vadd.f32 %v2831, %v2900
      %v2933 = vadd.f32 %v2832, %v2901
      %v2934 = vadd.f32 %v2833, %v2902
      %v2935 = vadd.f32 %v2834, %v2903
      %v2936 = vadd.f32 %v2835, %v2904
      %v2937 = vadd.f32 %v2836, %v2905
      %v2938 = vadd.f32 %v2837, %v2906
      %v2939 = vadd.f32 %v2838, %v2907
      %v2940 = vadd.f32 %v2839, %v2908
      %v2941 = vadd.f32 %v2840, %v2909
      %v2942 = vadd.f32 %v2841, %v2910
      %v2943 = vadd.f32 %v2842, %v2911
      %v2944 = vadd.f32 %v2843, %v2912
      %v2945 = vadd.f32 %v2844, %v2913
      %v2946 = vadd.f32 %v2845, %v2914
      %v2947 = vadd.f32 %v2846, %v2915
      %v2948 = vadd.f32 %v2847, %v2916
      %v2949 = vadd.f32 %v2848, %v2917
      %v2950 = vadd.f32 %v2849, %v2918
      %v2951 = vadd.f32 %v2850, %v2919
      %v2952 = vadd.f32 %v2851, %v2920
      %v2953 = vld [vmem:[%s2414 + $0x2] sm:$0xff]
      %v2954 = vld [vmem:[%s2414 + $0xa] sm:$0xff]
      %v2955 = vld [vmem:[%s2414 + $0x1a] sm:$0xff]
      %v2956 = vld [vmem:[%s2414 + $0x22] sm:$0xff]
      %v2957 = vld [vmem:[%s2414 + $0x32] sm:$0xff]
      %v2958 = vld [vmem:[%s2414 + $0x3a] sm:$0xff]
      %v2959 = vld [vmem:[%s2414 + $0x4a] sm:$0xff]
      %v2960 = vld [vmem:[%s2414 + $0x52] sm:$0xff]
      %v2961 = vld [vmem:[%s2414 + $0x62] sm:$0xff]
      %v2962 = vld [vmem:[%s2414 + $0x6a] sm:$0xff]
      %v2963 = vld [vmem:[%s2414 + $0x7a] sm:$0xff]
      %v2964 = vld [vmem:[%s2414 + $0x82] sm:$0xff]
      %v2965 = vld [vmem:[%s2414 + $0x92] sm:$0xff]
      %v2966 = vld [vmem:[%s2414 + $0x9a] sm:$0xff]
      %v2967 = vld [vmem:[%s2414 + $0xaa] sm:$0xff]
      %v2968 = vld [vmem:[%s2414 + $0xb2] sm:$0xff]
      %v2969 = vld [vmem:[%s2414 + $0xc2] sm:$0xff]
      %v2970 = vld [vmem:[%s2414 + $0xca] sm:$0xff]
      %v2971 = vld [vmem:[%s2414 + $0xda] sm:$0xff]
      %v2972 = vld [vmem:[%s2414 + $0xe2] sm:$0xff]
      %v2973 = vld [vmem:[%s2414 + $0xf2] sm:$0xff]
      %v2974 = vld [vmem:[%s2414 + $0xfa] sm:$0xff]
      %v2975 = vld [vmem:[%s2414 + $0x10a] sm:$0xff]
      %v2976 = vld [vmem:[%s2414 + $0x112] sm:$0xff]
      %v2977 = vld [vmem:[%s2414 + $0x122] sm:$0xff]
      %v2978 = vld [vmem:[%s2414 + $0x12a] sm:$0xff]
      %v2979 = vld [vmem:[%s2414 + $0x13a] sm:$0xff]
      %v2980 = vld [vmem:[%s2414 + $0x142] sm:$0xff]
      %v2981 = vld [vmem:[%s2414 + $0x152] sm:$0xff]
      %v2982 = vld [vmem:[%s2414 + $0x15a] sm:$0xff]
      %v2983 = vld [vmem:[%s2414 + $0x16a] sm:$0xff]
      %v2984 = vld [vmem:[%s2414 + $0x172] sm:$0xff]
      %v2985 = vld [vmem:[%s2782 + $0x2] sm:$0x1]
      %v2986 = vlaneseq
      %v2987 = vshrl.u32 %v2986, 7
      %v2988 = vsub.s32 0, %v2987
      %v2989 = vrot.slane %v2985, %v2988
      %v2990 = vmul.f32 %v2953, %v2989
      %v2991 = vmul.f32 %v2954, %v2989
      %v2992 = vmul.f32 %v2955, %v2989
      %v2993 = vmul.f32 %v2956, %v2989
      %v2994 = vmul.f32 %v2957, %v2989
      %v2995 = vmul.f32 %v2958, %v2989
      %v2996 = vmul.f32 %v2959, %v2989
      %v2997 = vmul.f32 %v2960, %v2989
      %v2998 = vmul.f32 %v2961, %v2989
      %v2999 = vmul.f32 %v2962, %v2989
      %v3000 = vmul.f32 %v2963, %v2989
      %v3001 = vmul.f32 %v2964, %v2989
      %v3002 = vmul.f32 %v2965, %v2989
      %v3003 = vmul.f32 %v2966, %v2989
      %v3004 = vmul.f32 %v2967, %v2989
      %v3005 = vmul.f32 %v2968, %v2989
      %v3006 = vmul.f32 %v2969, %v2989
      %v3007 = vmul.f32 %v2970, %v2989
      %v3008 = vmul.f32 %v2971, %v2989
      %v3009 = vmul.f32 %v2972, %v2989
      %v3010 = vmul.f32 %v2973, %v2989
      %v3011 = vmul.f32 %v2974, %v2989
      %v3012 = vmul.f32 %v2975, %v2989
      %v3013 = vmul.f32 %v2976, %v2989
      %v3014 = vmul.f32 %v2977, %v2989
      %v3015 = vmul.f32 %v2978, %v2989
      %v3016 = vmul.f32 %v2979, %v2989
      %v3017 = vmul.f32 %v2980, %v2989
      %v3018 = vmul.f32 %v2981, %v2989
      %v3019 = vmul.f32 %v2982, %v2989
      %v3020 = vmul.f32 %v2983, %v2989
      %v3021 = vmul.f32 %v2984, %v2989
      %v3022 = vadd.f32 %v2921, %v2990
      %v3023 = vadd.f32 %v2922, %v2991
      %v3024 = vadd.f32 %v2923, %v2992
      %v3025 = vadd.f32 %v2924, %v2993
      %v3026 = vadd.f32 %v2925, %v2994
      %v3027 = vadd.f32 %v2926, %v2995
      %v3028 = vadd.f32 %v2927, %v2996
      %v3029 = vadd.f32 %v2928, %v2997
      %v3030 = vadd.f32 %v2929, %v2998
      %v3031 = vadd.f32 %v2930, %v2999
      %v3032 = vadd.f32 %v2931, %v3000
      %v3033 = vadd.f32 %v2932, %v3001
      %v3034 = vadd.f32 %v2933, %v3002
      %v3035 = vadd.f32 %v2934, %v3003
      %v3036 = vadd.f32 %v2935, %v3004
      %v3037 = vadd.f32 %v2936, %v3005
      %v3038 = vadd.f32 %v2937, %v3006
      %v3039 = vadd.f32 %v2938, %v3007
      %v3040 = vadd.f32 %v2939, %v3008
      %v3041 = vadd.f32 %v2940, %v3009
      %v3042 = vadd.f32 %v2941, %v3010
      %v3043 = vadd.f32 %v2942, %v3011
      %v3044 = vadd.f32 %v2943, %v3012
      %v3045 = vadd.f32 %v2944, %v3013
      %v3046 = vadd.f32 %v2945, %v3014
      %v3047 = vadd.f32 %v2946, %v3015
      %v3048 = vadd.f32 %v2947, %v3016
      %v3049 = vadd.f32 %v2948, %v3017
      %v3050 = vadd.f32 %v2949, %v3018
      %v3051 = vadd.f32 %v2950, %v3019
      %v3052 = vadd.f32 %v2951, %v3020
      %v3053 = vadd.f32 %v2952, %v3021
      %s3054 = scalar_lea.vmem [#allocation4], 48
      %v3055 = vld [vmem:[%s3054] sm:$0xff]
      %v3056 = vld [vmem:[%s3054 + $0x8] sm:$0xff]
      %v3057 = vld [vmem:[%s3054 + $0x18] sm:$0xff]
      %v3058 = vld [vmem:[%s3054 + $0x20] sm:$0xff]
      %v3059 = vld [vmem:[%s3054 + $0x30] sm:$0xff]
      %v3060 = vld [vmem:[%s3054 + $0x38] sm:$0xff]
      %v3061 = vld [vmem:[%s3054 + $0x48] sm:$0xff]
      %v3062 = vld [vmem:[%s3054 + $0x50] sm:$0xff]
      %v3063 = vld [vmem:[%s3054 + $0x60] sm:$0xff]
      %v3064 = vld [vmem:[%s3054 + $0x68] sm:$0xff]
      %v3065 = vld [vmem:[%s3054 + $0x78] sm:$0xff]
      %v3066 = vld [vmem:[%s3054 + $0x80] sm:$0xff]
      %v3067 = vld [vmem:[%s3054 + $0x90] sm:$0xff]
      %v3068 = vld [vmem:[%s3054 + $0x98] sm:$0xff]
      %v3069 = vld [vmem:[%s3054 + $0xa8] sm:$0xff]
      %v3070 = vld [vmem:[%s3054 + $0xb0] sm:$0xff]
      %v3071 = vld [vmem:[%s3054 + $0xc0] sm:$0xff]
      %v3072 = vld [vmem:[%s3054 + $0xc8] sm:$0xff]
      %v3073 = vld [vmem:[%s3054 + $0xd8] sm:$0xff]
      %v3074 = vld [vmem:[%s3054 + $0xe0] sm:$0xff]
      %v3075 = vld [vmem:[%s3054 + $0xf0] sm:$0xff]
      %v3076 = vld [vmem:[%s3054 + $0xf8] sm:$0xff]
      %v3077 = vld [vmem:[%s3054 + $0x108] sm:$0xff]
      %v3078 = vld [vmem:[%s3054 + $0x110] sm:$0xff]
      %v3079 = vld [vmem:[%s3054 + $0x120] sm:$0xff]
      %v3080 = vld [vmem:[%s3054 + $0x128] sm:$0xff]
      %v3081 = vld [vmem:[%s3054 + $0x138] sm:$0xff]
      %v3082 = vld [vmem:[%s3054 + $0x140] sm:$0xff]
      %v3083 = vld [vmem:[%s3054 + $0x150] sm:$0xff]
      %v3084 = vld [vmem:[%s3054 + $0x158] sm:$0xff]
      %v3085 = vld [vmem:[%s3054 + $0x168] sm:$0xff]
      %v3086 = vld [vmem:[%s3054 + $0x170] sm:$0xff]
      %s3087 = scalar_lea.vmem %s3, 8
      %v3088 = vld [vmem:[%s3087] sm:$0x1]
      %v3089 = vlaneseq
      %v3090 = vshrl.u32 %v3089, 7
      %v3091 = vsub.s32 0, %v3090
      %v3092 = vrot.slane %v3088, %v3091
      %v3093 = vmul.f32 %v3055, %v3092
      %v3094 = vmul.f32 %v3056, %v3092
      %v3095 = vmul.f32 %v3057, %v3092
      %v3096 = vmul.f32 %v3058, %v3092
      %v3097 = vmul.f32 %v3059, %v3092
      %v3098 = vmul.f32 %v3060, %v3092
      %v3099 = vmul.f32 %v3061, %v3092
      %v3100 = vmul.f32 %v3062, %v3092
      %v3101 = vmul.f32 %v3063, %v3092
      %v3102 = vmul.f32 %v3064, %v3092
      %v3103 = vmul.f32 %v3065, %v3092
      %v3104 = vmul.f32 %v3066, %v3092
      %v3105 = vmul.f32 %v3067, %v3092
      %v3106 = vmul.f32 %v3068, %v3092
      %v3107 = vmul.f32 %v3069, %v3092
      %v3108 = vmul.f32 %v3070, %v3092
      %v3109 = vmul.f32 %v3071, %v3092
      %v3110 = vmul.f32 %v3072, %v3092
      %v3111 = vmul.f32 %v3073, %v3092
      %v3112 = vmul.f32 %v3074, %v3092
      %v3113 = vmul.f32 %v3075, %v3092
      %v3114 = vmul.f32 %v3076, %v3092
      %v3115 = vmul.f32 %v3077, %v3092
      %v3116 = vmul.f32 %v3078, %v3092
      %v3117 = vmul.f32 %v3079, %v3092
      %v3118 = vmul.f32 %v3080, %v3092
      %v3119 = vmul.f32 %v3081, %v3092
      %v3120 = vmul.f32 %v3082, %v3092
      %v3121 = vmul.f32 %v3083, %v3092
      %v3122 = vmul.f32 %v3084, %v3092
      %v3123 = vmul.f32 %v3085, %v3092
      %v3124 = vmul.f32 %v3086, %v3092
      %v3125 = vadd.f32 %v3022, %v3093
      %v3126 = vadd.f32 %v3023, %v3094
      %v3127 = vadd.f32 %v3024, %v3095
      %v3128 = vadd.f32 %v3025, %v3096
      %v3129 = vadd.f32 %v3026, %v3097
      %v3130 = vadd.f32 %v3027, %v3098
      %v3131 = vadd.f32 %v3028, %v3099
      %v3132 = vadd.f32 %v3029, %v3100
      %v3133 = vadd.f32 %v3030, %v3101
      %v3134 = vadd.f32 %v3031, %v3102
      %v3135 = vadd.f32 %v3032, %v3103
      %v3136 = vadd.f32 %v3033, %v3104
      %v3137 = vadd.f32 %v3034, %v3105
      %v3138 = vadd.f32 %v3035, %v3106
      %v3139 = vadd.f32 %v3036, %v3107
      %v3140 = vadd.f32 %v3037, %v3108
      %v3141 = vadd.f32 %v3038, %v3109
      %v3142 = vadd.f32 %v3039, %v3110
      %v3143 = vadd.f32 %v3040, %v3111
      %v3144 = vadd.f32 %v3041, %v3112
      %v3145 = vadd.f32 %v3042, %v3113
      %v3146 = vadd.f32 %v3043, %v3114
      %v3147 = vadd.f32 %v3044, %v3115
      %v3148 = vadd.f32 %v3045, %v3116
      %v3149 = vadd.f32 %v3046, %v3117
      %v3150 = vadd.f32 %v3047, %v3118
      %v3151 = vadd.f32 %v3048, %v3119
      %v3152 = vadd.f32 %v3049, %v3120
      %v3153 = vadd.f32 %v3050, %v3121
      %v3154 = vadd.f32 %v3051, %v3122
      %v3155 = vadd.f32 %v3052, %v3123
      %v3156 = vadd.f32 %v3053, %v3124
      %v3157 = vld [vmem:[%s3054 + $0x1] sm:$0xff]
      %v3158 = vld [vmem:[%s3054 + $0x9] sm:$0xff]
      %v3159 = vld [vmem:[%s3054 + $0x19] sm:$0xff]
      %v3160 = vld [vmem:[%s3054 + $0x21] sm:$0xff]
      %v3161 = vld [vmem:[%s3054 + $0x31] sm:$0xff]
      %v3162 = vld [vmem:[%s3054 + $0x39] sm:$0xff]
      %v3163 = vld [vmem:[%s3054 + $0x49] sm:$0xff]
      %v3164 = vld [vmem:[%s3054 + $0x51] sm:$0xff]
      %v3165 = vld [vmem:[%s3054 + $0x61] sm:$0xff]
      %v3166 = vld [vmem:[%s3054 + $0x69] sm:$0xff]
      %v3167 = vld [vmem:[%s3054 + $0x79] sm:$0xff]
      %v3168 = vld [vmem:[%s3054 + $0x81] sm:$0xff]
      %v3169 = vld [vmem:[%s3054 + $0x91] sm:$0xff]
      %v3170 = vld [vmem:[%s3054 + $0x99] sm:$0xff]
      %v3171 = vld [vmem:[%s3054 + $0xa9] sm:$0xff]
      %v3172 = vld [vmem:[%s3054 + $0xb1] sm:$0xff]
      %v3173 = vld [vmem:[%s3054 + $0xc1] sm:$0xff]
      %v3174 = vld [vmem:[%s3054 + $0xc9] sm:$0xff]
      %v3175 = vld [vmem:[%s3054 + $0xd9] sm:$0xff]
      %v3176 = vld [vmem:[%s3054 + $0xe1] sm:$0xff]
      %v3177 = vld [vmem:[%s3054 + $0xf1] sm:$0xff]
      %v3178 = vld [vmem:[%s3054 + $0xf9] sm:$0xff]
      %v3179 = vld [vmem:[%s3054 + $0x109] sm:$0xff]
      %v3180 = vld [vmem:[%s3054 + $0x111] sm:$0xff]
      %v3181 = vld [vmem:[%s3054 + $0x121] sm:$0xff]
      %v3182 = vld [vmem:[%s3054 + $0x129] sm:$0xff]
      %v3183 = vld [vmem:[%s3054 + $0x139] sm:$0xff]
      %v3184 = vld [vmem:[%s3054 + $0x141] sm:$0xff]
      %v3185 = vld [vmem:[%s3054 + $0x151] sm:$0xff]
      %v3186 = vld [vmem:[%s3054 + $0x159] sm:$0xff]
      %v3187 = vld [vmem:[%s3054 + $0x169] sm:$0xff]
      %v3188 = vld [vmem:[%s3054 + $0x171] sm:$0xff]
      %v3189 = vld [vmem:[%s3087 + $0x1] sm:$0x1]
      %v3190 = vlaneseq
      %v3191 = vshrl.u32 %v3190, 7
      %v3192 = vsub.s32 0, %v3191
      %v3193 = vrot.slane %v3189, %v3192
      %v3194 = vmul.f32 %v3157, %v3193
      %v3195 = vmul.f32 %v3158, %v3193
      %v3196 = vmul.f32 %v3159, %v3193
      %v3197 = vmul.f32 %v3160, %v3193
      %v3198 = vmul.f32 %v3161, %v3193
      %v3199 = vmul.f32 %v3162, %v3193
      %v3200 = vmul.f32 %v3163, %v3193
      %v3201 = vmul.f32 %v3164, %v3193
      %v3202 = vmul.f32 %v3165, %v3193
      %v3203 = vmul.f32 %v3166, %v3193
      %v3204 = vmul.f32 %v3167, %v3193
      %v3205 = vmul.f32 %v3168, %v3193
      %v3206 = vmul.f32 %v3169, %v3193
      %v3207 = vmul.f32 %v3170, %v3193
      %v3208 = vmul.f32 %v3171, %v3193
      %v3209 = vmul.f32 %v3172, %v3193
      %v3210 = vmul.f32 %v3173, %v3193
      %v3211 = vmul.f32 %v3174, %v3193
      %v3212 = vmul.f32 %v3175, %v3193
      %v3213 = vmul.f32 %v3176, %v3193
      %v3214 = vmul.f32 %v3177, %v3193
      %v3215 = vmul.f32 %v3178, %v3193
      %v3216 = vmul.f32 %v3179, %v3193
      %v3217 = vmul.f32 %v3180, %v3193
      %v3218 = vmul.f32 %v3181, %v3193
      %v3219 = vmul.f32 %v3182, %v3193
      %v3220 = vmul.f32 %v3183, %v3193
      %v3221 = vmul.f32 %v3184, %v3193
      %v3222 = vmul.f32 %v3185, %v3193
      %v3223 = vmul.f32 %v3186, %v3193
      %v3224 = vmul.f32 %v3187, %v3193
      %v3225 = vmul.f32 %v3188, %v3193
      %v3226 = vadd.f32 %v3125, %v3194
      %v3227 = vadd.f32 %v3126, %v3195
      %v3228 = vadd.f32 %v3127, %v3196
      %v3229 = vadd.f32 %v3128, %v3197
      %v3230 = vadd.f32 %v3129, %v3198
      %v3231 = vadd.f32 %v3130, %v3199
      %v3232 = vadd.f32 %v3131, %v3200
      %v3233 = vadd.f32 %v3132, %v3201
      %v3234 = vadd.f32 %v3133, %v3202
      %v3235 = vadd.f32 %v3134, %v3203
      %v3236 = vadd.f32 %v3135, %v3204
      %v3237 = vadd.f32 %v3136, %v3205
      %v3238 = vadd.f32 %v3137, %v3206
      %v3239 = vadd.f32 %v3138, %v3207
      %v3240 = vadd.f32 %v3139, %v3208
      %v3241 = vadd.f32 %v3140, %v3209
      %v3242 = vadd.f32 %v3141, %v3210
      %v3243 = vadd.f32 %v3142, %v3211
      %v3244 = vadd.f32 %v3143, %v3212
      %v3245 = vadd.f32 %v3144, %v3213
      %v3246 = vadd.f32 %v3145, %v3214
      %v3247 = vadd.f32 %v3146, %v3215
      %v3248 = vadd.f32 %v3147, %v3216
      %v3249 = vadd.f32 %v3148, %v3217
      %v3250 = vadd.f32 %v3149, %v3218
      %v3251 = vadd.f32 %v3150, %v3219
      %v3252 = vadd.f32 %v3151, %v3220
      %v3253 = vadd.f32 %v3152, %v3221
      %v3254 = vadd.f32 %v3153, %v3222
      %v3255 = vadd.f32 %v3154, %v3223
      %v3256 = vadd.f32 %v3155, %v3224
      %v3257 = vadd.f32 %v3156, %v3225
      %v3258 = vld [vmem:[%s3054 + $0x2] sm:$0xff]
      %v3259 = vld [vmem:[%s3054 + $0xa] sm:$0xff]
      %v3260 = vld [vmem:[%s3054 + $0x1a] sm:$0xff]
      %v3261 = vld [vmem:[%s3054 + $0x22] sm:$0xff]
      %v3262 = vld [vmem:[%s3054 + $0x32] sm:$0xff]
      %v3263 = vld [vmem:[%s3054 + $0x3a] sm:$0xff]
      %v3264 = vld [vmem:[%s3054 + $0x4a] sm:$0xff]
      %v3265 = vld [vmem:[%s3054 + $0x52] sm:$0xff]
      %v3266 = vld [vmem:[%s3054 + $0x62] sm:$0xff]
      %v3267 = vld [vmem:[%s3054 + $0x6a] sm:$0xff]
      %v3268 = vld [vmem:[%s3054 + $0x7a] sm:$0xff]
      %v3269 = vld [vmem:[%s3054 + $0x82] sm:$0xff]
      %v3270 = vld [vmem:[%s3054 + $0x92] sm:$0xff]
      %v3271 = vld [vmem:[%s3054 + $0x9a] sm:$0xff]
      %v3272 = vld [vmem:[%s3054 + $0xaa] sm:$0xff]
      %v3273 = vld [vmem:[%s3054 + $0xb2] sm:$0xff]
      %v3274 = vld [vmem:[%s3054 + $0xc2] sm:$0xff]
      %v3275 = vld [vmem:[%s3054 + $0xca] sm:$0xff]
      %v3276 = vld [vmem:[%s3054 + $0xda] sm:$0xff]
      %v3277 = vld [vmem:[%s3054 + $0xe2] sm:$0xff]
      %v3278 = vld [vmem:[%s3054 + $0xf2] sm:$0xff]
      %v3279 = vld [vmem:[%s3054 + $0xfa] sm:$0xff]
      %v3280 = vld [vmem:[%s3054 + $0x10a] sm:$0xff]
      %v3281 = vld [vmem:[%s3054 + $0x112] sm:$0xff]
      %v3282 = vld [vmem:[%s3054 + $0x122] sm:$0xff]
      %v3283 = vld [vmem:[%s3054 + $0x12a] sm:$0xff]
      %v3284 = vld [vmem:[%s3054 + $0x13a] sm:$0xff]
      %v3285 = vld [vmem:[%s3054 + $0x142] sm:$0xff]
      %v3286 = vld [vmem:[%s3054 + $0x152] sm:$0xff]
      %v3287 = vld [vmem:[%s3054 + $0x15a] sm:$0xff]
      %v3288 = vld [vmem:[%s3054 + $0x16a] sm:$0xff]
      %v3289 = vld [vmem:[%s3054 + $0x172] sm:$0xff]
      %v3290 = vld [vmem:[%s3087 + $0x2] sm:$0x1]
      %v3291 = vlaneseq
      %v3292 = vshrl.u32 %v3291, 7
      %v3293 = vsub.s32 0, %v3292
      %v3294 = vrot.slane %v3290, %v3293
      %v3295 = vmul.f32 %v3258, %v3294
      %v3296 = vmul.f32 %v3259, %v3294
      %v3297 = vmul.f32 %v3260, %v3294
      %v3298 = vmul.f32 %v3261, %v3294
      %v3299 = vmul.f32 %v3262, %v3294
      %v3300 = vmul.f32 %v3263, %v3294
      %v3301 = vmul.f32 %v3264, %v3294
      %v3302 = vmul.f32 %v3265, %v3294
      %v3303 = vmul.f32 %v3266, %v3294
      %v3304 = vmul.f32 %v3267, %v3294
      %v3305 = vmul.f32 %v3268, %v3294
      %v3306 = vmul.f32 %v3269, %v3294
      %v3307 = vmul.f32 %v3270, %v3294
      %v3308 = vmul.f32 %v3271, %v3294
      %v3309 = vmul.f32 %v3272, %v3294
      %v3310 = vmul.f32 %v3273, %v3294
      %v3311 = vmul.f32 %v3274, %v3294
      %v3312 = vmul.f32 %v3275, %v3294
      %v3313 = vmul.f32 %v3276, %v3294
      %v3314 = vmul.f32 %v3277, %v3294
      %v3315 = vmul.f32 %v3278, %v3294
      %v3316 = vmul.f32 %v3279, %v3294
      %v3317 = vmul.f32 %v3280, %v3294
      %v3318 = vmul.f32 %v3281, %v3294
      %v3319 = vmul.f32 %v3282, %v3294
      %v3320 = vmul.f32 %v3283, %v3294
      %v3321 = vmul.f32 %v3284, %v3294
      %v3322 = vmul.f32 %v3285, %v3294
      %v3323 = vmul.f32 %v3286, %v3294
      %v3324 = vmul.f32 %v3287, %v3294
      %v3325 = vmul.f32 %v3288, %v3294
      %v3326 = vmul.f32 %v3289, %v3294
      %v3327 = vadd.f32 %v3226, %v3295
      %v3328 = vadd.f32 %v3227, %v3296
      %v3329 = vadd.f32 %v3228, %v3297
      %v3330 = vadd.f32 %v3229, %v3298
      %v3331 = vadd.f32 %v3230, %v3299
      %v3332 = vadd.f32 %v3231, %v3300
      %v3333 = vadd.f32 %v3232, %v3301
      %v3334 = vadd.f32 %v3233, %v3302
      %v3335 = vadd.f32 %v3234, %v3303
      %v3336 = vadd.f32 %v3235, %v3304
      %v3337 = vadd.f32 %v3236, %v3305
      %v3338 = vadd.f32 %v3237, %v3306
      %v3339 = vadd.f32 %v3238, %v3307
      %v3340 = vadd.f32 %v3239, %v3308
      %v3341 = vadd.f32 %v3240, %v3309
      %v3342 = vadd.f32 %v3241, %v3310
      %v3343 = vadd.f32 %v3242, %v3311
      %v3344 = vadd.f32 %v3243, %v3312
      %v3345 = vadd.f32 %v3244, %v3313
      %v3346 = vadd.f32 %v3245, %v3314
      %v3347 = vadd.f32 %v3246, %v3315
      %v3348 = vadd.f32 %v3247, %v3316
      %v3349 = vadd.f32 %v3248, %v3317
      %v3350 = vadd.f32 %v3249, %v3318
      %v3351 = vadd.f32 %v3250, %v3319
      %v3352 = vadd.f32 %v3251, %v3320
      %v3353 = vadd.f32 %v3252, %v3321
      %v3354 = vadd.f32 %v3253, %v3322
      %v3355 = vadd.f32 %v3254, %v3323
      %v3356 = vadd.f32 %v3255, %v3324
      %v3357 = vadd.f32 %v3256, %v3325
      %v3358 = vadd.f32 %v3257, %v3326
      %v3359 = vtanh.pop %v2200
      %v3360 = vtanh.pop %v2201
      %v3361 = vtanh.pop %v2202
      %v3362 = vtanh.pop %v2203
      %v3363 = vtanh.pop %v2204
      %v3364 = vtanh.pop %v2205
      %v3365 = vtanh.pop %v2206
      %v3366 = vtanh.pop %v2207
      %v3367 = vtanh.pop %v2208
      %v3368 = vtanh.pop %v2209
      %v3369 = vtanh.pop %v2210
      %v3370 = vtanh.pop %v2211
      %v3371 = vtanh.pop %v2212
      %v3372 = vtanh.pop %v2213
      %v3373 = vtanh.pop %v2214
      %v3374 = vtanh.pop %v2215
      %v3375 = vtanh.pop %v2216
      %v3376 = vtanh.pop %v2217
      %v3377 = vtanh.pop %v2218
      %v3378 = vtanh.pop %v2219
      %v3379 = vtanh.pop %v2220
      %v3380 = vtanh.pop %v2221
      %v3381 = vtanh.pop %v2222
      %v3382 = vtanh.pop %v2223
      %v3383 = vtanh.pop %v2224
      %v3384 = vtanh.pop %v2225
      %v3385 = vtanh.pop %v2226
      %v3386 = vtanh.pop %v2227
      %v3387 = vtanh.pop %v2228
      %v3388 = vtanh.pop %v2229
      %v3389 = vtanh.pop %v2230
      %v3390 = vtanh.pop %v2231
      %v3391 = vadd.f32 %v3359, %v1199
      %v3392 = vadd.f32 %v3360, %v1200
      %v3393 = vadd.f32 %v3361, %v1201
      %v3394 = vadd.f32 %v3362, %v1202
      %v3395 = vadd.f32 %v3363, %v1203
      %v3396 = vadd.f32 %v3364, %v1204
      %v3397 = vadd.f32 %v3365, %v1205
      %v3398 = vadd.f32 %v3366, %v1206
      %v3399 = vadd.f32 %v3367, %v1207
      %v3400 = vadd.f32 %v3368, %v1208
      %v3401 = vadd.f32 %v3369, %v1209
      %v3402 = vadd.f32 %v3370, %v1210
      %v3403 = vadd.f32 %v3371, %v1211
      %v3404 = vadd.f32 %v3372, %v1212
      %v3405 = vadd.f32 %v3373, %v1213
      %v3406 = vadd.f32 %v3374, %v1214
      %v3407 = vadd.f32 %v3375, %v1215
      %v3408 = vadd.f32 %v3376, %v1216
      %v3409 = vadd.f32 %v3377, %v1217
      %v3410 = vadd.f32 %v3378, %v1218
      %v3411 = vadd.f32 %v3379, %v1219
      %v3412 = vadd.f32 %v3380, %v1220
      %v3413 = vadd.f32 %v3381, %v1221
      %v3414 = vadd.f32 %v3382, %v1222
      %v3415 = vadd.f32 %v3383, %v1223
      %v3416 = vadd.f32 %v3384, %v1224
      %v3417 = vadd.f32 %v3385, %v1225
      %v3418 = vadd.f32 %v3386, %v1226
      %v3419 = vadd.f32 %v3387, %v1227
      %v3420 = vadd.f32 %v3388, %v1228
      %v3421 = vadd.f32 %v3389, %v1229
      %v3422 = vadd.f32 %v3390, %v1230
      %v3423 = vtanh.pop %v3327
      %v3424 = vtanh.pop %v3328
      %v3425 = vtanh.pop %v3329
      %v3426 = vtanh.pop %v3330
      %v3427 = vtanh.pop %v3331
      %v3428 = vtanh.pop %v3332
      %v3429 = vtanh.pop %v3333
      %v3430 = vtanh.pop %v3334
      %v3431 = vtanh.pop %v3335
      %v3432 = vtanh.pop %v3336
      %v3433 = vtanh.pop %v3337
      %v3434 = vtanh.pop %v3338
      %v3435 = vtanh.pop %v3339
      %v3436 = vtanh.pop %v3340
      %v3437 = vtanh.pop %v3341
      %v3438 = vtanh.pop %v3342
      %v3439 = vtanh.pop %v3343
      %v3440 = vtanh.pop %v3344
      %v3441 = vtanh.pop %v3345
      %v3442 = vtanh.pop %v3346
      %v3443 = vtanh.pop %v3347
      %v3444 = vtanh.pop %v3348
      %v3445 = vtanh.pop %v3349
      %v3446 = vtanh.pop %v3350
      %v3447 = vtanh.pop %v3351
      %v3448 = vtanh.pop %v3352
      %v3449 = vtanh.pop %v3353
      %v3450 = vtanh.pop %v3354
      %v3451 = vtanh.pop %v3355
      %v3452 = vtanh.pop %v3356
      %v3453 = vtanh.pop %v3357
      %v3454 = vtanh.pop %v3358
      %v3455 = vadd.f32 %v3423, %v2319
      %v3456 = vadd.f32 %v3424, %v2321
      %v3457 = vadd.f32 %v3425, %v2323
      %v3458 = vadd.f32 %v3426, %v2325
      %v3459 = vadd.f32 %v3427, %v2327
      %v3460 = vadd.f32 %v3428, %v2329
      %v3461 = vadd.f32 %v3429, %v2331
      %v3462 = vadd.f32 %v3430, %v2333
      %v3463 = vadd.f32 %v3431, %v2335
      %v3464 = vadd.f32 %v3432, %v2337
      %v3465 = vadd.f32 %v3433, %v2339
      %v3466 = vadd.f32 %v3434, %v2341
      %v3467 = vadd.f32 %v3435, %v2343
      %v3468 = vadd.f32 %v3436, %v2345
      %v3469 = vadd.f32 %v3437, %v2347
      %v3470 = vadd.f32 %v3438, %v2349
      %v3471 = vadd.f32 %v3439, %v2351
      %v3472 = vadd.f32 %v3440, %v2353
      %v3473 = vadd.f32 %v3441, %v2355
      %v3474 = vadd.f32 %v3442, %v2357
      %v3475 = vadd.f32 %v3443, %v2359
      %v3476 = vadd.f32 %v3444, %v2361
      %v3477 = vadd.f32 %v3445, %v2363
      %v3478 = vadd.f32 %v3446, %v2365
      %v3479 = vadd.f32 %v3447, %v2367
      %v3480 = vadd.f32 %v3448, %v2369
      %v3481 = vadd.f32 %v3449, %v2371
      %v3482 = vadd.f32 %v3450, %v2373
      %v3483 = vadd.f32 %v3451, %v2375
      %v3484 = vadd.f32 %v3452, %v2377
      %v3485 = vadd.f32 %v3453, %v2379
      %v3486 = vadd.f32 %v3454, %v2381
      %v3487 = vmul.f32 %v3391, %v3455
      %v3488 = vmul.f32 %v3392, %v3456
      %v3489 = vmul.f32 %v3393, %v3457
      %v3490 = vmul.f32 %v3394, %v3458
      %v3491 = vmul.f32 %v3395, %v3459
      %v3492 = vmul.f32 %v3396, %v3460
      %v3493 = vmul.f32 %v3397, %v3461
      %v3494 = vmul.f32 %v3398, %v3462
      %v3495 = vmul.f32 %v3399, %v3463
      %v3496 = vmul.f32 %v3400, %v3464
      %v3497 = vmul.f32 %v3401, %v3465
      %v3498 = vmul.f32 %v3402, %v3466
      %v3499 = vmul.f32 %v3403, %v3467
      %v3500 = vmul.f32 %v3404, %v3468
      %v3501 = vmul.f32 %v3405, %v3469
      %v3502 = vmul.f32 %v3406, %v3470
      %v3503 = vmul.f32 %v3407, %v3471
      %v3504 = vmul.f32 %v3408, %v3472
      %v3505 = vmul.f32 %v3409, %v3473
      %v3506 = vmul.f32 %v3410, %v3474
      %v3507 = vmul.f32 %v3411, %v3475
      %v3508 = vmul.f32 %v3412, %v3476
      %v3509 = vmul.f32 %v3413, %v3477
      %v3510 = vmul.f32 %v3414, %v3478
      %v3511 = vmul.f32 %v3415, %v3479
      %v3512 = vmul.f32 %v3416, %v3480
      %v3513 = vmul.f32 %v3417, %v3481
      %v3514 = vmul.f32 %v3418, %v3482
      %v3515 = vmul.f32 %v3419, %v3483
      %v3516 = vmul.f32 %v3420, %v3484
      %v3517 = vmul.f32 %v3421, %v3485
      %v3518 = vmul.f32 %v3422, %v3486
      %3519 = vst.msk [vmem:[%s197] sm:$0xff] %vm1231, %v3487
      %3520 = vst.msk [vmem:[%s197 + $0x8] sm:$0xff] %vm1231, %v3488
      %3521 = vst.msk [vmem:[%s197 + $0x10] sm:$0xff] %vm1231, %v3489
      %3522 = vst.msk [vmem:[%s197 + $0x18] sm:$0xff] %vm1231, %v3490
      %3523 = vst.msk [vmem:[%s197 + $0x20] sm:$0xff] %vm1231, %v3491
      %3524 = vst.msk [vmem:[%s197 + $0x28] sm:$0xff] %vm1231, %v3492
      %3525 = vst.msk [vmem:[%s197 + $0x30] sm:$0xff] %vm1231, %v3493
      %3526 = vst.msk [vmem:[%s197 + $0x38] sm:$0xff] %vm1231, %v3494
      %3527 = vst.msk [vmem:[%s197 + $0x40] sm:$0xff] %vm1231, %v3495
      %3528 = vst.msk [vmem:[%s197 + $0x48] sm:$0xff] %vm1231, %v3496
      %3529 = vst.msk [vmem:[%s197 + $0x50] sm:$0xff] %vm1231, %v3497
      %3530 = vst.msk [vmem:[%s197 + $0x58] sm:$0xff] %vm1231, %v3498
      %3531 = vst.msk [vmem:[%s197 + $0x60] sm:$0xff] %vm1231, %v3499
      %3532 = vst.msk [vmem:[%s197 + $0x68] sm:$0xff] %vm1231, %v3500
      %3533 = vst.msk [vmem:[%s197 + $0x70] sm:$0xff] %vm1231, %v3501
      %3534 = vst.msk [vmem:[%s197 + $0x78] sm:$0xff] %vm1231, %v3502
      %3535 = vst.msk [vmem:[%s197 + $0x80] sm:$0xff] %vm1231, %v3503
      %3536 = vst.msk [vmem:[%s197 + $0x88] sm:$0xff] %vm1231, %v3504
      %3537 = vst.msk [vmem:[%s197 + $0x90] sm:$0xff] %vm1231, %v3505
      %3538 = vst.msk [vmem:[%s197 + $0x98] sm:$0xff] %vm1231, %v3506
      %3539 = vst.msk [vmem:[%s197 + $0xa0] sm:$0xff] %vm1231, %v3507
      %3540 = vst.msk [vmem:[%s197 + $0xa8] sm:$0xff] %vm1231, %v3508
      %3541 = vst.msk [vmem:[%s197 + $0xb0] sm:$0xff] %vm1231, %v3509
      %3542 = vst.msk [vmem:[%s197 + $0xb8] sm:$0xff] %vm1231, %v3510
      %3543 = vst.msk [vmem:[%s197 + $0xc0] sm:$0xff] %vm1231, %v3511
      %3544 = vst.msk [vmem:[%s197 + $0xc8] sm:$0xff] %vm1231, %v3512
      %3545 = vst.msk [vmem:[%s197 + $0xd0] sm:$0xff] %vm1231, %v3513
      %3546 = vst.msk [vmem:[%s197 + $0xd8] sm:$0xff] %vm1231, %v3514
      %3547 = vst.msk [vmem:[%s197 + $0xe0] sm:$0xff] %vm1231, %v3515
      %3548 = vst.msk [vmem:[%s197 + $0xe8] sm:$0xff] %vm1231, %v3516
      %3549 = vst.msk [vmem:[%s197 + $0xf0] sm:$0xff] %vm1231, %v3517
      %3550 = vst.msk [vmem:[%s197 + $0xf8] sm:$0xff] %vm1231, %v3518
      %p3551 = scmp.lt.s32.totalorder %s15, 1
      %s3552 = scalar_select %p3551, %s15, 1
      %s3553 = smul.addr %s3552, 32
      %s3554 = smul.addr %s3553, 8
      %s3555 = scalar_lea.vmem %s4, %s3554
      // Predicated region
      $region37: #{hv_lca_with_mamba.8} parent=35 // pred_check
        %p3556 = pneg %p122
      $region38: #{hv_lca_with_mamba.8} parent=35 // pred_check_branch
        %3558 = sbr.rel (%p3556) target = $region40
      $region39: #{hv_lca_with_mamba.8} parent=35 // pred_region
        _
      $region40: #{hv_lca_with_mamba.8} parent=35 // pred_fallthru
        _
    $region36: #{hv_lca_with_mamba.8} parent=5 // pred_fallthru
      _
    %p3559 = scmp.le.s32.totalorder 2, %s10
    // Predicated region
    $region41: #{hv_lca_with_mamba.8} parent=5 // pred_check
      %p3560 = pneg %p3559
    $region42: #{hv_lca_with_mamba.8} parent=5 // pred_check_branch
      %3562 = sbr.rel (%p3560) target = $region44
    $region43: #{hv_lca_with_mamba.8} parent=5 // pred_region
      %s3563 = ssub.s32 %s10, 2
      // Predicated region
      $region45: #{hv_lca_with_mamba.8} parent=43 // pred_check
        %p3564 = pneg %p128
      $region46: #{hv_lca_with_mamba.8} parent=43 // pred_check_branch
        %3566 = sbr.rel (%p3564) target = $region48
      $region47: #{hv_lca_with_mamba.8} parent=43 // pred_region
        %p3567 = scmp.lt.s32.totalorder %s16, 1
        %s3568 = scalar_select %p3567, %s16, 1
        %s3569 = smul.addr %s3568, 32
        %s3570 = smul.addr %s3569, 8
        %s3571 = scalar_lea.vmem %s4, %s3570
      $region48: #{hv_lca_with_mamba.8} parent=43 // pred_fallthru
        _
    $region44: #{hv_lca_with_mamba.8} parent=5 // pred_fallthru
      _
  $region6: #{hv_lca_with_mamba.8} parent=0 // loop_footer
    %s14 = sadd.s32 1, %s10
  $region7: #{hv_lca_with_mamba.8} parent=0 // loop_footer_branch
    %9 = sbr.rel target = $region3
  $region8: #{hv_lca_with_mamba.8} parent=0 // loop_exit
    _

</llo_original>
